<compile_context>
chip_gen: v5e
topology: v5e:2x2
jax: 0.10.0
libtpu: 0.0.40
codegen_flags: <defaults>
</compile_context>

<pallas_src>
import functools

import jax
import jax.numpy as jnp
from jax.experimental import pallas as pl
from jax.experimental.pallas import tpu as pltpu


_VMEM = pl.BlockSpec(memory_space=pltpu.MemorySpace.VMEM)
_NC_PAD = 128   # lane-dense padding for the final num_classes output dim


# ----------------------------------------------------------------------------
# Kernel 1: per-column bidirectional GRU + fc1 epilogue (grid over columns)
# ----------------------------------------------------------------------------
def _layer1_kernel(x_ref, wih_ref, whh_ref, bih_ref, bhh_ref,
                   fc1w_ref, fc1b_ref, out_ref, hseq_ref, *, T, W, H1):
    """One column of layer-1 (both directions + fc1).

    x_ref    : (T*W, D)     column input, rows t-major (row = t*W + w)
    wih_ref  : (6, D, H1)   W_ih^T per (direction, gate); index d*3+g, gates r,z,n
    whh_ref  : (6, H1, H1)  W_hh^T per (direction, gate)
    bih_ref  : (6, 1, H1)   b_ih per (direction, gate)
    bhh_ref  : (6, 1, H1)   b_hh per (direction, gate)
    fc1w_ref : (2, H1, H2)  fc1 weight^T split into (forward, backward) halves
    fc1b_ref : (1, H2)
    out_ref  : (T*W, H2)
    hseq_ref : (2, T*W, H1) scratch: per-direction hidden states over the sequence
    """
    x = x_ref[...]                                              # (T*W, D)
    for d in range(2):
        # Hoisted input projection: ONE matmul per gate over the whole sequence.
        gi = [jnp.dot(x, wih_ref[d * 3 + g], preferred_element_type=jnp.float32)
              + bih_ref[d * 3 + g] for g in range(3)]           # each (T*W, H1)
        wr, wz, wn = whh_ref[d * 3 + 0], whh_ref[d * 3 + 1], whh_ref[d * 3 + 2]
        br, bz, bn = bhh_ref[d * 3 + 0], bhh_ref[d * 3 + 1], bhh_ref[d * 3 + 2]
        h = jnp.zeros((W, H1), jnp.float32)
        for t in range(T):                                      # fully unrolled (T static)
            ts = t if d == 0 else T - 1 - t
            sl = slice(ts * W, (ts + 1) * W)
            r = jax.nn.sigmoid(
                gi[0][sl] + jnp.dot(h, wr, preferred_element_type=jnp.float32) + br)
            z = jax.nn.sigmoid(
                gi[1][sl] + jnp.dot(h, wz, preferred_element_type=jnp.float32) + bz)
            n = jnp.tanh(
                gi[2][sl] + r * (jnp.dot(h, wn, preferred_element_type=jnp.float32) + bn))
            h = (1.0 - z) * n + z * h
            hseq_ref[d, sl] = h
    # fc1 epilogue on [forward ; backward] hidden states (split-weight form).
    out_ref[...] = (
        jnp.dot(hseq_ref[0], fc1w_ref[0], preferred_element_type=jnp.float32)
        + jnp.dot(hseq_ref[1], fc1w_ref[1], preferred_element_type=jnp.float32)
        + fc1b_ref[...])


def layer1_fused(xc, wih1, whh1, bih1, bhh1, fc1w, fc1b, *, T, W):
    C, TW, D = xc.shape
    H1 = whh1.shape[-1]
    H2 = fc1w.shape[-1]
    kernel = functools.partial(_layer1_kernel, T=T, W=W, H1=H1)
    return pl.pallas_call(
        kernel,
        out_shape=jax.ShapeDtypeStruct((C, TW, H2), jnp.float32),
        grid_spec=pltpu.PrefetchScalarGridSpec(
            num_scalar_prefetch=0,
            grid=(C,),
            in_specs=[
                pl.BlockSpec((None, TW, D), lambda c: (c, 0, 0)),
                pl.BlockSpec((None, 6, D, H1), lambda c: (c, 0, 0, 0)),
                pl.BlockSpec((None, 6, H1, H1), lambda c: (c, 0, 0, 0)),
                pl.BlockSpec((None, 6, 1, H1), lambda c: (c, 0, 0, 0)),
                pl.BlockSpec((None, 6, 1, H1), lambda c: (c, 0, 0, 0)),
                pl.BlockSpec((None, 2, H1, H2), lambda c: (c, 0, 0, 0)),
                pl.BlockSpec((None, 1, H2), lambda c: (c, 0, 0)),
            ],
            out_specs=pl.BlockSpec((None, TW, H2), lambda c: (c, 0, 0)),
            scratch_shapes=[pltpu.VMEM((2, TW, H1), jnp.float32)],
        ),
        compiler_params=pltpu.CompilerParams(
            dimension_semantics=("parallel",),       # v7x: columns split across 2 TCs
            vmem_limit_bytes=32 * 1024 * 1024),
    )(xc, wih1, whh1, bih1, bhh1, fc1w, fc1b)


# ----------------------------------------------------------------------------
# Kernel 2: layer-2 bidirectional GRU + fc2 + flatten + fc3 (single program)
# ----------------------------------------------------------------------------
def _layer2_tail_kernel(z_ref, wih_ref, whh_ref, bih_ref, bhh_ref,
                        fc2w_ref, fc2b_ref, fc3w_ref, fc3b_ref,
                        out_ref, hseq_ref, *, T, W, C, H3):
    """Tail of the network.

    z_ref    : (C, T*W, H2)   layer-1 outputs per column, rows t-major
    wih_ref  : (6*C, H2, H3)  W_ih^T per (direction, gate, column): (d*3+g)*C + c
    whh_ref  : (6, H3, H3)    W_hh^T per (direction, gate)
    bih_ref  : (6, 1, H3)
    bhh_ref  : (6, 1, H3)
    fc2w_ref : (2, H3, H4)    fc2 weight^T split into (forward, backward) halves
    fc2b_ref : (1, H4)
    fc3w_ref : (W, H4, NCP)   fc3 weight^T split per window, lane-padded to NCP
    fc3b_ref : (1, NCP)
    out_ref  : (T, NCP)       lane-dense (sliced to num_classes in the wrapper)
    hseq_ref : (2, T, W, H3)  scratch: per-direction hidden states
    """
    for d in range(2):
        # Input projection = sum over column blocks (no concat needed).
        gi = []
        for g in range(3):
            acc = jnp.dot(z_ref[0], wih_ref[(d * 3 + g) * C + 0],
                          preferred_element_type=jnp.float32)
            for c in range(1, C):
                acc = acc + jnp.dot(z_ref[c], wih_ref[(d * 3 + g) * C + c],
                                    preferred_element_type=jnp.float32)
            gi.append(acc + bih_ref[d * 3 + g])                 # (T*W, H3)
        wr, wz, wn = whh_ref[d * 3 + 0], whh_ref[d * 3 + 1], whh_ref[d * 3 + 2]
        br, bz, bn = bhh_ref[d * 3 + 0], bhh_ref[d * 3 + 1], bhh_ref[d * 3 + 2]
        h = jnp.zeros((W, H3), jnp.float32)
        for t in range(T):                                      # fully unrolled
            ts = t if d == 0 else T - 1 - t
            sl = slice(ts * W, (ts + 1) * W)
            r = jax.nn.sigmoid(
                gi[0][sl] + jnp.dot(h, wr, preferred_element_type=jnp.float32) + br)
            zg = jax.nn.sigmoid(
                gi[1][sl] + jnp.dot(h, wz, preferred_element_type=jnp.float32) + bz)
            n = jnp.tanh(
                gi[2][sl] + r * (jnp.dot(h, wn, preferred_element_type=jnp.float32) + bn))
            h = (1.0 - zg) * n + zg * h
            hseq_ref[d, ts] = h

    # TODO(synk): nn.Dropout is stochastic in training mode; eval-mode identity here.
    # fc2 -> flatten(start_dim=1, end_dim=2) -> fc3, computed per window block
    # (avoids any in-kernel reshape; output slab is lane-dense).
    hf = hseq_ref[0]                                            # (T, W, H3)
    hb = hseq_ref[1]
    acc = None
    for w in range(W):
        yw = (jnp.dot(hf[:, w, :], fc2w_ref[0], preferred_element_type=jnp.float32)
              + jnp.dot(hb[:, w, :], fc2w_ref[1], preferred_element_type=jnp.float32)
              + fc2b_ref[...])                                  # (T, H4)
        part = jnp.dot(yw, fc3w_ref[w], preferred_element_type=jnp.float32)
        acc = part if acc is None else acc + part
    out_ref[...] = acc + fc3b_ref[...]                          # (T, NCP)


def layer2_tail(z, wih2, whh2, bih2, bhh2, fc2w, fc2b, fc3w, fc3b,
                *, T, W, num_classes):
    C, TW, H2 = z.shape
    H3 = whh2.shape[-1]
    NCP = fc3w.shape[-1]
    kernel = functools.partial(_layer2_tail_kernel, T=T, W=W, C=C, H3=H3)
    out = pl.pallas_call(
        kernel,
        out_shape=jax.ShapeDtypeStruct((T, NCP), jnp.float32),
        in_specs=[_VMEM] * 9,
        out_specs=_VMEM,
        scratch_shapes=[pltpu.VMEM((2, T, W, H3), jnp.float32)],
        compiler_params=pltpu.CompilerParams(vmem_limit_bytes=32 * 1024 * 1024),
    )(z, wih2, whh2, bih2, bhh2, fc2w, fc2b, fc3w, fc3b)
    return out[:, :num_classes]


# ----------------------------------------------------------------------------
# Parameter initialization (PyTorch layout, U(-1/sqrt(f), 1/sqrt(f)))
# ----------------------------------------------------------------------------
def init_gru_dir(key, input_size, hidden_size):
    k = 1.0 / float(hidden_size) ** 0.5
    ks = jax.random.split(key, 4)
    w_ih = jax.random.uniform(ks[0], (3 * hidden_size, input_size), minval=-k, maxval=k)
    w_hh = jax.random.uniform(ks[1], (3 * hidden_size, hidden_size), minval=-k, maxval=k)
    b_ih = jax.random.uniform(ks[2], (3 * hidden_size,), minval=-k, maxval=k)
    b_hh = jax.random.uniform(ks[3], (3 * hidden_size,), minval=-k, maxval=k)
    return (w_ih, w_hh, b_ih, b_hh)


def init_bidir_gru(key, input_size, hidden_size):
    k1, k2 = jax.random.split(key)
    return (init_gru_dir(k1, input_size, hidden_size),
            init_gru_dir(k2, input_size, hidden_size))


def init_linear(key, in_f, out_f):
    k = 1.0 / float(in_f) ** 0.5
    k1, k2 = jax.random.split(key)
    w = jax.random.uniform(k1, (out_f, in_f), minval=-k, maxval=k)
    b = jax.random.uniform(k2, (out_f,), minval=-k, maxval=k)
    return (w, b)


def init_two_level_gru(key, num_columns, num_windows, num_classes,
                       num_descriptors, h1, h2, h3, h4):
    keys = jax.random.split(key, 2 * num_columns + 3)
    return {
        "layer1": [init_bidir_gru(keys[i], num_descriptors, h1)
                   for i in range(num_columns)],
        "fc1": [init_linear(keys[num_columns + i], 2 * h1, h2)
                for i in range(num_columns)],
        "layer2": init_bidir_gru(keys[2 * num_columns], h2 * num_columns, h3),
        "fc2": init_linear(keys[2 * num_columns + 1], 2 * h3, h4),
        "fc3": init_linear(keys[2 * num_columns + 2], h4 * num_windows, num_classes),
    }


# ----------------------------------------------------------------------------
# One-time parameter packing (pre-transpose, gate/direction/column split, pad)
# ----------------------------------------------------------------------------
def _split_gates_w(w, H):
    """(3H, K) PyTorch weight -> 3 transposed (K, H) slabs, gate order r, z, n."""
    return [w[g * H:(g + 1) * H, :].T for g in range(3)]


def _split_gates_b(b, H):
    return [b[g * H:(g + 1) * H][None, :] for g in range(3)]


def pack_params(params, *, num_columns, num_windows, num_classes,
                h1, h2, h3, h4, nc_pad=_NC_PAD):
    C, W = num_columns, num_windows

    # layer 1: per column, both directions, gate-split & pre-transposed
    wih1, whh1, bih1, bhh1 = [], [], [], []
    for c in range(C):
        wih_c, whh_c, bih_c, bhh_c = [], [], [], []
        for d in range(2):
            w_ih, w_hh, b_ih, b_hh = params["layer1"][c][d]
            wih_c += _split_gates_w(w_ih, h1)
            whh_c += _split_gates_w(w_hh, h1)
            bih_c += _split_gates_b(b_ih, h1)
            bhh_c += _split_gates_b(b_hh, h1)
        wih1.append(jnp.stack(wih_c))       # (6, D, H1)
        whh1.append(jnp.stack(whh_c))       # (6, H1, H1)
        bih1.append(jnp.stack(bih_c))       # (6, 1, H1)
        bhh1.append(jnp.stack(bhh_c))       # (6, 1, H1)
    wih1, whh1 = jnp.stack(wih1), jnp.stack(whh1)       # (C, 6, ...)
    bih1, bhh1 = jnp.stack(bih1), jnp.stack(bhh1)

    fc1w = jnp.stack([jnp.stack([params["fc1"][c][0][:, :h1].T,
                                 params["fc1"][c][0][:, h1:].T]) for c in range(C)])
    fc1b = jnp.stack([params["fc1"][c][1][None, :] for c in range(C)])   # (C, 1, H2)

    # layer 2: both directions; input weights additionally split per column
    wih2_blocks, whh2, bih2, bhh2 = [], [], [], []
    for d in range(2):
        w_ih, w_hh, b_ih, b_hh = params["layer2"][d]
        for wt in _split_gates_w(w_ih, h3):             # wt: (C*H2, H3)
            for c in range(C):
                wih2_blocks.append(wt[c * h2:(c + 1) * h2, :])
        whh2 += _split_gates_w(w_hh, h3)
        bih2 += _split_gates_b(b_ih, h3)
        bhh2 += _split_gates_b(b_hh, h3)
    wih2 = jnp.stack(wih2_blocks)           # (6*C, H2, H3), index (d*3+g)*C + c
    whh2 = jnp.stack(whh2)                  # (6, H3, H3)
    bih2 = jnp.stack(bih2)                  # (6, 1, H3)
    bhh2 = jnp.stack(bhh2)                  # (6, 1, H3)

    fc2w = jnp.stack([params["fc2"][0][:, :h3].T,
                      params["fc2"][0][:, h3:].T])      # (2, H3, H4)
    fc2b = params["fc2"][1][None, :]                    # (1, H4)

    w3, b3 = params["fc3"]                              # (NC, W*H4), (NC,)
    w3t = w3.T                                          # (W*H4, NC)
    fc3w = jnp.zeros((W, h4, nc_pad), jnp.float32)
    for w in range(W):
        fc3w = fc3w.at[w, :, :num_classes].set(w3t[w * h4:(w + 1) * h4, :])
    fc3b = jnp.zeros((1, nc_pad), jnp.float32).at[0, :num_classes].set(b3)

    return dict(wih1=wih1, whh1=whh1, bih1=bih1, bhh1=bhh1, fc1w=fc1w, fc1b=fc1b,
                wih2=wih2, whh2=whh2, bih2=bih2, bhh2=bhh2,
                fc2w=fc2w, fc2b=fc2b, fc3w=fc3w, fc3b=fc3b)


# ----------------------------------------------------------------------------
# Forward pass (mirrors TwoLevelGRU.forward) — two pallas_calls total
# ----------------------------------------------------------------------------
def two_level_gru_forward(x, packed, *, num_classes):
    T, W, D, C = x.shape
    # (T, W, D, C) -> per-column, t-major flattened rows: (C, T*W, D)
    xc = jnp.transpose(x, (3, 0, 1, 2)).reshape(C, T * W, D)
    z = layer1_fused(xc, packed["wih1"], packed["whh1"], packed["bih1"],
                     packed["bhh1"], packed["fc1w"], packed["fc1b"], T=T, W=W)
    return layer2_tail(z, packed["wih2"], packed["whh2"], packed["bih2"],
                       packed["bhh2"], packed["fc2w"], packed["fc2b"],
                       packed["fc3w"], packed["fc3b"],
                       T=T, W=W, num_classes=num_classes)


# ----------------------------------------------------------------------------
# Pure-JAX reference (PyTorch semantics) for a correctness self-check
# ----------------------------------------------------------------------------
def _ref_gru_dir(x, p, reverse):
    w_ih, w_hh, b_ih, b_hh = p
    H = w_hh.shape[1]
    xs = x[::-1] if reverse else x

    def cell(h, x_t):
        gi = x_t @ w_ih.T + b_ih
        gh = h @ w_hh.T + b_hh
        r = jax.nn.sigmoid(gi[:, :H] + gh[:, :H])
        z = jax.nn.sigmoid(gi[:, H:2 * H] + gh[:, H:2 * H])
        n = jnp.tanh(gi[:, 2 * H:] + r * gh[:, 2 * H:])
        h_new = (1.0 - z) * n + z * h
        return h_new, h_new

    h0 = jnp.zeros((x.shape[1], H), x.dtype)
    _, ys = jax.lax.scan(cell, h0, xs)
    return ys[::-1] if reverse else ys


def _ref_forward(x, params):
    T, W, D, C = x.shape
    outs = []
    for c in range(C):
        t = x[:, :, :, c]
        fwd, bwd = params["layer1"][c]
        t = jnp.concatenate([_ref_gru_dir(t, fwd, False),
                             _ref_gru_dir(t, bwd, True)], axis=-1)
        w, b = params["fc1"][c]
        outs.append(t @ w.T + b)
    h = jnp.concatenate(outs, axis=2)
    fwd2, bwd2 = params["layer2"]
    h = jnp.concatenate([_ref_gru_dir(h, fwd2, False),
                         _ref_gru_dir(h, bwd2, True)], axis=-1)
    w, b = params["fc2"]
    h = h @ w.T + b
    h = h.reshape(T, -1)
    w, b = params["fc3"]
    return h @ w.T + b


# ----------------------------------------------------------------------------
if __name__ == "__main__":
    NUM_COLUMNS = 3
    NUM_WINDOWS = 4
    NUM_CLASSES = 6
    NUM_DESCRIPTORS = 5
    H1, H2, H3, H4 = 32, 16, 32, 16
    T = 8   # GRU sequence axis == final output batch axis

    key = jax.random.PRNGKey(0)
    k_params, k_x = jax.random.split(key)

    params = init_two_level_gru(k_params, NUM_COLUMNS, NUM_WINDOWS, NUM_CLASSES,
                                NUM_DESCRIPTORS, H1, H2, H3, H4)
    packed = pack_params(params, num_columns=NUM_COLUMNS, num_windows=NUM_WINDOWS,
                         num_classes=NUM_CLASSES, h1=H1, h2=H2, h3=H3, h4=H4)

    x = jax.random.normal(k_x, (T, NUM_WINDOWS, NUM_DESCRIPTORS, NUM_COLUMNS),
                          dtype=jnp.float32)

    fwd = jax.jit(functools.partial(two_level_gru_forward, num_classes=NUM_CLASSES))
    out = jax.block_until_ready(fwd(x, packed))

    assert out.shape == (T, NUM_CLASSES), out.shape
    assert out.dtype == jnp.float32

    ref = jax.block_until_ready(_ref_forward(x, params))
    max_err = float(jnp.max(jnp.abs(out - ref)))
    assert max_err < 2e-3, f"mismatch vs reference: max abs err = {max_err}"

    print("KERNEL_OK")
</pallas_src>

<mosaic_0001>
module attributes {stable_mosaic.version = 11 : i64} {
  func.func @_layer1_kernel(%arg0: i32, %arg1: memref<1x32x5xf32, #tpu.memory_space<vmem>>, %arg2: memref<1x6x5x32xf32, #tpu.memory_space<vmem>>, %arg3: memref<1x6x32x32xf32, #tpu.memory_space<vmem>>, %arg4: memref<1x6x1x32xf32, #tpu.memory_space<vmem>>, %arg5: memref<1x6x1x32xf32, #tpu.memory_space<vmem>>, %arg6: memref<1x2x32x16xf32, #tpu.memory_space<vmem>>, %arg7: memref<1x1x16xf32, #tpu.memory_space<vmem>>, %arg8: memref<1x32x16xf32, #tpu.memory_space<vmem>>, %arg9: memref<2x32x32xf32, #tpu.memory_space<vmem>>) attributes {dimension_semantics = [#tpu.dimension_semantics<parallel>], iteration_bounds = array<i64: 3>, scalar_prefetch = 0 : i64, scratch_operands = 1 : i64, tpu.core_type = #tpu.core_type<tc>, window_params = [{transform_indices = @transform_0, window_bounds = array<i64: 1, 32, 5>}, {transform_indices = @transform_1, window_bounds = array<i64: 1, 6, 5, 32>}, {transform_indices = @transform_2, window_bounds = array<i64: 1, 6, 32, 32>}, {transform_indices = @transform_3, window_bounds = array<i64: 1, 6, 1, 32>}, {transform_indices = @transform_4, window_bounds = array<i64: 1, 6, 1, 32>}, {transform_indices = @transform_5, window_bounds = array<i64: 1, 2, 32, 16>}, {transform_indices = @transform_6, window_bounds = array<i64: 1, 1, 16>}, {transform_indices = @transform_7, window_bounds = array<i64: 1, 32, 16>}]} {
    %c0 = arith.constant 0 : index
    %c0_0 = arith.constant 0 : index
    %c0_1 = arith.constant 0 : index
    %0 = vector.load %arg1[%c0, %c0_0, %c0_1] : memref<1x32x5xf32, #tpu.memory_space<vmem>>, vector<1x32x5xf32>
    %1 = vector.shape_cast %0 : vector<1x32x5xf32> to vector<32x5xf32>
    %c0_2 = arith.constant 0 : index
    %c0_3 = arith.constant 0 : index
    %c0_4 = arith.constant 0 : index
    %c0_5 = arith.constant 0 : index
    %2 = vector.load %arg2[%c0_2, %c0_3, %c0_4, %c0_5] : memref<1x6x5x32xf32, #tpu.memory_space<vmem>>, vector<1x1x5x32xf32>
    %3 = vector.shape_cast %2 : vector<1x1x5x32xf32> to vector<5x32xf32>
    %cst = arith.constant dense<0.000000e+00> : vector<32x32xf32>
    %4 = tpu.matmul %1, %3, %cst {dimension_numbers = #tpu.dot_dimension_numbers<[1], [0], [0], [1], [0, 0, 1, 1], [], []>} : vector<32x5xf32>, vector<5x32xf32>, vector<32x32xf32> -> vector<32x32xf32>
    %c0_6 = arith.constant 0 : index
    %c0_7 = arith.constant 0 : index
    %c0_8 = arith.constant 0 : index
    %c0_9 = arith.constant 0 : index
    %5 = vector.load %arg4[%c0_6, %c0_7, %c0_8, %c0_9] : memref<1x6x1x32xf32, #tpu.memory_space<vmem>>, vector<1x1x1x32xf32>
    %6 = vector.shape_cast %5 : vector<1x1x1x32xf32> to vector<1x32xf32>
    %7 = vector.broadcast %6 : vector<1x32xf32> to vector<32x32xf32>
    %8 = arith.addf %4, %7 : vector<32x32xf32>
    %c0_10 = arith.constant 0 : index
    %c1 = arith.constant 1 : index
    %c0_11 = arith.constant 0 : index
    %c0_12 = arith.constant 0 : index
    %9 = vector.load %arg2[%c0_10, %c1, %c0_11, %c0_12] : memref<1x6x5x32xf32, #tpu.memory_space<vmem>>, vector<1x1x5x32xf32>
    %10 = vector.shape_cast %9 : vector<1x1x5x32xf32> to vector<5x32xf32>
    %cst_13 = arith.constant dense<0.000000e+00> : vector<32x32xf32>
    %11 = tpu.matmul %1, %10, %cst_13 {dimension_numbers = #tpu.dot_dimension_numbers<[1], [0], [0], [1], [0, 0, 1, 1], [], []>} : vector<32x5xf32>, vector<5x32xf32>, vector<32x32xf32> -> vector<32x32xf32>
    %c0_14 = arith.constant 0 : index
    %c1_15 = arith.constant 1 : index
    %c0_16 = arith.constant 0 : index
    %c0_17 = arith.constant 0 : index
    %12 = vector.load %arg4[%c0_14, %c1_15, %c0_16, %c0_17] : memref<1x6x1x32xf32, #tpu.memory_space<vmem>>, vector<1x1x1x32xf32>
    %13 = vector.shape_cast %12 : vector<1x1x1x32xf32> to vector<1x32xf32>
    %14 = vector.broadcast %13 : vector<1x32xf32> to vector<32x32xf32>
    %15 = arith.addf %11, %14 : vector<32x32xf32>
    %c0_18 = arith.constant 0 : index
    %c2 = arith.constant 2 : index
    %c0_19 = arith.constant 0 : index
    %c0_20 = arith.constant 0 : index
    %16 = vector.load %arg2[%c0_18, %c2, %c0_19, %c0_20] : memref<1x6x5x32xf32, #tpu.memory_space<vmem>>, vector<1x1x5x32xf32>
    %17 = vector.shape_cast %16 : vector<1x1x5x32xf32> to vector<5x32xf32>
    %cst_21 = arith.constant dense<0.000000e+00> : vector<32x32xf32>
    %18 = tpu.matmul %1, %17, %cst_21 {dimension_numbers = #tpu.dot_dimension_numbers<[1], [0], [0], [1], [0, 0, 1, 1], [], []>} : vector<32x5xf32>, vector<5x32xf32>, vector<32x32xf32> -> vector<32x32xf32>
    %c0_22 = arith.constant 0 : index
    %c2_23 = arith.constant 2 : index
    %c0_24 = arith.constant 0 : index
    %c0_25 = arith.constant 0 : index
    %19 = vector.load %arg4[%c0_22, %c2_23, %c0_24, %c0_25] : memref<1x6x1x32xf32, #tpu.memory_space<vmem>>, vector<1x1x1x32xf32>
    %20 = vector.shape_cast %19 : vector<1x1x1x32xf32> to vector<1x32xf32>
    %21 = vector.broadcast %20 : vector<1x32xf32> to vector<32x32xf32>
    %22 = arith.addf %18, %21 : vector<32x32xf32>
    %c0_26 = arith.constant 0 : index
    %c0_27 = arith.constant 0 : index
    %c0_28 = arith.constant 0 : index
    %c0_29 = arith.constant 0 : index
    %23 = vector.load %arg3[%c0_26, %c0_27, %c0_28, %c0_29] : memref<1x6x32x32xf32, #tpu.memory_space<vmem>>, vector<1x1x32x32xf32>
    %24 = vector.shape_cast %23 : vector<1x1x32x32xf32> to vector<32x32xf32>
    %c0_30 = arith.constant 0 : index
    %c1_31 = arith.constant 1 : index
    %c0_32 = arith.constant 0 : index
    %c0_33 = arith.constant 0 : index
    %25 = vector.load %arg3[%c0_30, %c1_31, %c0_32, %c0_33] : memref<1x6x32x32xf32, #tpu.memory_space<vmem>>, vector<1x1x32x32xf32>
    %26 = vector.shape_cast %25 : vector<1x1x32x32xf32> to vector<32x32xf32>
    %c0_34 = arith.constant 0 : index
    %c2_35 = arith.constant 2 : index
    %c0_36 = arith.constant 0 : index
    %c0_37 = arith.constant 0 : index
    %27 = vector.load %arg3[%c0_34, %c2_35, %c0_36, %c0_37] : memref<1x6x32x32xf32, #tpu.memory_space<vmem>>, vector<1x1x32x32xf32>
    %28 = vector.shape_cast %27 : vector<1x1x32x32xf32> to vector<32x32xf32>
    %c0_38 = arith.constant 0 : index
    %c0_39 = arith.constant 0 : index
    %c0_40 = arith.constant 0 : index
    %c0_41 = arith.constant 0 : index
    %29 = vector.load %arg5[%c0_38, %c0_39, %c0_40, %c0_41] : memref<1x6x1x32xf32, #tpu.memory_space<vmem>>, vector<1x1x1x32xf32>
    %30 = vector.shape_cast %29 : vector<1x1x1x32xf32> to vector<1x32xf32>
    %c0_42 = arith.constant 0 : index
    %c1_43 = arith.constant 1 : index
    %c0_44 = arith.constant 0 : index
    %c0_45 = arith.constant 0 : index
    %31 = vector.load %arg5[%c0_42, %c1_43, %c0_44, %c0_45] : memref<1x6x1x32xf32, #tpu.memory_space<vmem>>, vector<1x1x1x32xf32>
    %32 = vector.shape_cast %31 : vector<1x1x1x32xf32> to vector<1x32xf32>
    %c0_46 = arith.constant 0 : index
    %c2_47 = arith.constant 2 : index
    %c0_48 = arith.constant 0 : index
    %c0_49 = arith.constant 0 : index
    %33 = vector.load %arg5[%c0_46, %c2_47, %c0_48, %c0_49] : memref<1x6x1x32xf32, #tpu.memory_space<vmem>>, vector<1x1x1x32xf32>
    %34 = vector.shape_cast %33 : vector<1x1x1x32xf32> to vector<1x32xf32>
    %cst_50 = arith.constant 0.000000e+00 : f32
    %35 = vector.broadcast %cst_50 : f32 to vector<4x32xf32>
    %36 = vector.extract_strided_slice %8 {offsets = [0, 0], sizes = [4, 32], strides = [1, 1]} : vector<32x32xf32> to vector<4x32xf32>
    %cst_51 = arith.constant dense<0.000000e+00> : vector<4x32xf32>
    %37 = tpu.matmul %35, %24, %cst_51 {dimension_numbers = #tpu.dot_dimension_numbers<[1], [0], [0], [1], [0, 0, 1, 1], [], []>} : vector<4x32xf32>, vector<32x32xf32>, vector<4x32xf32> -> vector<4x32xf32>
    %38 = arith.addf %36, %37 : vector<4x32xf32>
    %39 = vector.broadcast %30 : vector<1x32xf32> to vector<4x32xf32>
    %40 = arith.addf %38, %39 : vector<4x32xf32>
    %41 = arith.negf %40 : vector<4x32xf32>
    %42 = math.exp %41 : vector<4x32xf32>
    %cst_52 = arith.constant 1.000000e+00 : f32
    %43 = vector.broadcast %cst_52 : f32 to vector<4x32xf32>
    %44 = arith.addf %43, %42 : vector<4x32xf32>
    %45 = arith.divf %43, %44 : vector<4x32xf32>
    %46 = vector.extract_strided_slice %15 {offsets = [0, 0], sizes = [4, 32], strides = [1, 1]} : vector<32x32xf32> to vector<4x32xf32>
    %cst_53 = arith.constant dense<0.000000e+00> : vector<4x32xf32>
    %47 = tpu.matmul %35, %26, %cst_53 {dimension_numbers = #tpu.dot_dimension_numbers<[1], [0], [0], [1], [0, 0, 1, 1], [], []>} : vector<4x32xf32>, vector<32x32xf32>, vector<4x32xf32> -> vector<4x32xf32>
    %48 = arith.addf %46, %47 : vector<4x32xf32>
    %49 = vector.broadcast %32 : vector<1x32xf32> to vector<4x32xf32>
    %50 = arith.addf %48, %49 : vector<4x32xf32>
    %51 = arith.negf %50 : vector<4x32xf32>
    %52 = math.exp %51 : vector<4x32xf32>
    %cst_54 = arith.constant 1.000000e+00 : f32
    %53 = vector.broadcast %cst_54 : f32 to vector<4x32xf32>
    %54 = arith.addf %53, %52 : vector<4x32xf32>
    %55 = arith.divf %53, %54 : vector<4x32xf32>
    %56 = vector.extract_strided_slice %22 {offsets = [0, 0], sizes = [4, 32], strides = [1, 1]} : vector<32x32xf32> to vector<4x32xf32>
    %cst_55 = arith.constant dense<0.000000e+00> : vector<4x32xf32>
    %57 = tpu.matmul %35, %28, %cst_55 {dimension_numbers = #tpu.dot_dimension_numbers<[1], [0], [0], [1], [0, 0, 1, 1], [], []>} : vector<4x32xf32>, vector<32x32xf32>, vector<4x32xf32> -> vector<4x32xf32>
    %58 = vector.broadcast %34 : vector<1x32xf32> to vector<4x32xf32>
    %59 = arith.addf %57, %58 : vector<4x32xf32>
    %60 = arith.mulf %45, %59 : vector<4x32xf32>
    %61 = arith.addf %56, %60 : vector<4x32xf32>
    %62 = math.tanh %61 : vector<4x32xf32>
    %cst_56 = arith.constant 1.000000e+00 : f32
    %63 = vector.broadcast %cst_56 : f32 to vector<4x32xf32>
    %64 = arith.subf %63, %55 : vector<4x32xf32>
    %65 = arith.mulf %64, %62 : vector<4x32xf32>
    %66 = arith.mulf %55, %35 : vector<4x32xf32>
    %67 = arith.addf %65, %66 : vector<4x32xf32>
    %c0_57 = arith.constant 0 : index
    %c0_58 = arith.constant 0 : index
    %c0_59 = arith.constant 0 : index
    %68 = vector.load %arg9[%c0_57, %c0_58, %c0_59] : memref<2x32x32xf32, #tpu.memory_space<vmem>>, vector<1x4x32xf32>
    %69 = vector.shape_cast %68 : vector<1x4x32xf32> to vector<4x32xf32>
    %70 = vector.shape_cast %67 : vector<4x32xf32> to vector<1x4x32xf32>
    tpu.vector_store %arg9[%c0_57, %c0_58, %c0_59], %70 {strides = array<i32>} : memref<2x32x32xf32, #tpu.memory_space<vmem>>, vector<1x4x32xf32>,
    %71 = vector.extract_strided_slice %8 {offsets = [4, 0], sizes = [4, 32], strides = [1, 1]} : vector<32x32xf32> to vector<4x32xf32>
    %cst_60 = arith.constant dense<0.000000e+00> : vector<4x32xf32>
    %72 = tpu.matmul %67, %24, %cst_60 {dimension_numbers = #tpu.dot_dimension_numbers<[1], [0], [0], [1], [0, 0, 1, 1], [], []>} : vector<4x32xf32>, vector<32x32xf32>, vector<4x32xf32> -> vector<4x32xf32>
    %73 = arith.addf %71, %72 : vector<4x32xf32>
    %74 = vector.broadcast %30 : vector<1x32xf32> to vector<4x32xf32>
    %75 = arith.addf %73, %74 : vector<4x32xf32>
    %76 = arith.negf %75 : vector<4x32xf32>
    %77 = math.exp %76 : vector<4x32xf32>
    %cst_61 = arith.constant 1.000000e+00 : f32
    %78 = vector.broadcast %cst_61 : f32 to vector<4x32xf32>
    %79 = arith.addf %78, %77 : vector<4x32xf32>
    %80 = arith.divf %78, %79 : vector<4x32xf32>
    %81 = vector.extract_strided_slice %15 {offsets = [4, 0], sizes = [4, 32], strides = [1, 1]} : vector<32x32xf32> to vector<4x32xf32>
    %cst_62 = arith.constant dense<0.000000e+00> : vector<4x32xf32>
    %82 = tpu.matmul %67, %26, %cst_62 {dimension_numbers = #tpu.dot_dimension_numbers<[1], [0], [0], [1], [0, 0, 1, 1], [], []>} : vector<4x32xf32>, vector<32x32xf32>, vector<4x32xf32> -> vector<4x32xf32>
    %83 = arith.addf %81, %82 : vector<4x32xf32>
    %84 = vector.broadcast %32 : vector<1x32xf32> to vector<4x32xf32>
    %85 = arith.addf %83, %84 : vector<4x32xf32>
    %86 = arith.negf %85 : vector<4x32xf32>
    %87 = math.exp %86 : vector<4x32xf32>
    %cst_63 = arith.constant 1.000000e+00 : f32
    %88 = vector.broadcast %cst_63 : f32 to vector<4x32xf32>
    %89 = arith.addf %88, %87 : vector<4x32xf32>
    %90 = arith.divf %88, %89 : vector<4x32xf32>
    %91 = vector.extract_strided_slice %22 {offsets = [4, 0], sizes = [4, 32], strides = [1, 1]} : vector<32x32xf32> to vector<4x32xf32>
    %cst_64 = arith.constant dense<0.000000e+00> : vector<4x32xf32>
    %92 = tpu.matmul %67, %28, %cst_64 {dimension_numbers = #tpu.dot_dimension_numbers<[1], [0], [0], [1], [0, 0, 1, 1], [], []>} : vector<4x32xf32>, vector<32x32xf32>, vector<4x32xf32> -> vector<4x32xf32>
    %93 = vector.broadcast %34 : vector<1x32xf32> to vector<4x32xf32>
    %94 = arith.addf %92, %93 : vector<4x32xf32>
    %95 = arith.mulf %80, %94 : vector<4x32xf32>
    %96 = arith.addf %91, %95 : vector<4x32xf32>
    %97 = math.tanh %96 : vector<4x32xf32>
    %cst_65 = arith.constant 1.000000e+00 : f32
    %98 = vector.broadcast %cst_65 : f32 to vector<4x32xf32>
    %99 = arith.subf %98, %90 : vector<4x32xf32>
    %100 = arith.mulf %99, %97 : vector<4x32xf32>
    %101 = arith.mulf %90, %67 : vector<4x32xf32>
    %102 = arith.addf %100, %101 : vector<4x32xf32>
    %c0_66 = arith.constant 0 : index
    %c4 = arith.constant 4 : index
    %c0_67 = arith.constant 0 : index
    %103 = vector.load %arg9[%c0_66, %c4, %c0_67] : memref<2x32x32xf32, #tpu.memory_space<vmem>>, vector<1x4x32xf32>
    %104 = vector.shape_cast %103 : vector<1x4x32xf32> to vector<4x32xf32>
    %105 = vector.shape_cast %102 : vector<4x32xf32> to vector<1x4x32xf32>
    tpu.vector_store %arg9[%c0_66, %c4, %c0_67], %105 {strides = array<i32>} : memref<2x32x32xf32, #tpu.memory_space<vmem>>, vector<1x4x32xf32>,
    %106 = vector.extract_strided_slice %8 {offsets = [8, 0], sizes = [4, 32], strides = [1, 1]} : vector<32x32xf32> to vector<4x32xf32>
    %cst_68 = arith.constant dense<0.000000e+00> : vector<4x32xf32>
    %107 = tpu.matmul %102, %24, %cst_68 {dimension_numbers = #tpu.dot_dimension_numbers<[1], [0], [0], [1], [0, 0, 1, 1], [], []>} : vector<4x32xf32>, vector<32x32xf32>, vector<4x32xf32> -> vector<4x32xf32>
    %108 = arith.addf %106, %107 : vector<4x32xf32>
    %109 = vector.broadcast %30 : vector<1x32xf32> to vector<4x32xf32>
    %110 = arith.addf %108, %109 : vector<4x32xf32>
    %111 = arith.negf %110 : vector<4x32xf32>
    %112 = math.exp %111 : vector<4x32xf32>
    %cst_69 = arith.constant 1.000000e+00 : f32
    %113 = vector.broadcast %cst_69 : f32 to vector<4x32xf32>
    %114 = arith.addf %113, %112 : vector<4x32xf32>
    %115 = arith.divf %113, %114 : vector<4x32xf32>
    %116 = vector.extract_strided_slice %15 {offsets = [8, 0], sizes = [4, 32], strides = [1, 1]} : vector<32x32xf32> to vector<4x32xf32>
    %cst_70 = arith.constant dense<0.000000e+00> : vector<4x32xf32>
    %117 = tpu.matmul %102, %26, %cst_70 {dimension_numbers = #tpu.dot_dimension_numbers<[1], [0], [0], [1], [0, 0, 1, 1], [], []>} : vector<4x32xf32>, vector<32x32xf32>, vector<4x32xf32> -> vector<4x32xf32>
    %118 = arith.addf %116, %117 : vector<4x32xf32>
    %119 = vector.broadcast %32 : vector<1x32xf32> to vector<4x32xf32>
    %120 = arith.addf %118, %119 : vector<4x32xf32>
    %121 = arith.negf %120 : vector<4x32xf32>
    %122 = math.exp %121 : vector<4x32xf32>
    %cst_71 = arith.constant 1.000000e+00 : f32
    %123 = vector.broadcast %cst_71 : f32 to vector<4x32xf32>
    %124 = arith.addf %123, %122 : vector<4x32xf32>
    %125 = arith.divf %123, %124 : vector<4x32xf32>
    %126 = vector.extract_strided_slice %22 {offsets = [8, 0], sizes = [4, 32], strides = [1, 1]} : vector<32x32xf32> to vector<4x32xf32>
    %cst_72 = arith.constant dense<0.000000e+00> : vector<4x32xf32>
    %127 = tpu.matmul %102, %28, %cst_72 {dimension_numbers = #tpu.dot_dimension_numbers<[1], [0], [0], [1], [0, 0, 1, 1], [], []>} : vector<4x32xf32>, vector<32x32xf32>, vector<4x32xf32> -> vector<4x32xf32>
    %128 = vector.broadcast %34 : vector<1x32xf32> to vector<4x32xf32>
    %129 = arith.addf %127, %128 : vector<4x32xf32>
    %130 = arith.mulf %115, %129 : vector<4x32xf32>
    %131 = arith.addf %126, %130 : vector<4x32xf32>
    %132 = math.tanh %131 : vector<4x32xf32>
    %cst_73 = arith.constant 1.000000e+00 : f32
    %133 = vector.broadcast %cst_73 : f32 to vector<4x32xf32>
    %134 = arith.subf %133, %125 : vector<4x32xf32>
    %135 = arith.mulf %134, %132 : vector<4x32xf32>
    %136 = arith.mulf %125, %102 : vector<4x32xf32>
    %137 = arith.addf %135, %136 : vector<4x32xf32>
    %c0_74 = arith.constant 0 : index
    %c8 = arith.constant 8 : index
    %c0_75 = arith.constant 0 : index
    %138 = vector.load %arg9[%c0_74, %c8, %c0_75] : memref<2x32x32xf32, #tpu.memory_space<vmem>>, vector<1x4x32xf32>
    %139 = vector.shape_cast %138 : vector<1x4x32xf32> to vector<4x32xf32>
    %140 = vector.shape_cast %137 : vector<4x32xf32> to vector<1x4x32xf32>
    tpu.vector_store %arg9[%c0_74, %c8, %c0_75], %140 {strides = array<i32>} : memref<2x32x32xf32, #tpu.memory_space<vmem>>, vector<1x4x32xf32>,
    %141 = vector.extract_strided_slice %8 {offsets = [12, 0], sizes = [4, 32], strides = [1, 1]} : vector<32x32xf32> to vector<4x32xf32>
    %cst_76 = arith.constant dense<0.000000e+00> : vector<4x32xf32>
    %142 = tpu.matmul %137, %24, %cst_76 {dimension_numbers = #tpu.dot_dimension_numbers<[1], [0], [0], [1], [0, 0, 1, 1], [], []>} : vector<4x32xf32>, vector<32x32xf32>, vector<4x32xf32> -> vector<4x32xf32>
    %143 = arith.addf %141, %142 : vector<4x32xf32>
    %144 = vector.broadcast %30 : vector<1x32xf32> to vector<4x32xf32>
    %145 = arith.addf %143, %144 : vector<4x32xf32>
    %146 = arith.negf %145 : vector<4x32xf32>
    %147 = math.exp %146 : vector<4x32xf32>
    %cst_77 = arith.constant 1.000000e+00 : f32
    %148 = vector.broadcast %cst_77 : f32 to vector<4x32xf32>
    %149 = arith.addf %148, %147 : vector<4x32xf32>
    %150 = arith.divf %148, %149 : vector<4x32xf32>
    %151 = vector.extract_strided_slice %15 {offsets = [12, 0], sizes = [4, 32], strides = [1, 1]} : vector<32x32xf32> to vector<4x32xf32>
    %cst_78 = arith.constant dense<0.000000e+00> : vector<4x32xf32>
    %152 = tpu.matmul %137, %26, %cst_78 {dimension_numbers = #tpu.dot_dimension_numbers<[1], [0], [0], [1], [0, 0, 1, 1], [], []>} : vector<4x32xf32>, vector<32x32xf32>, vector<4x32xf32> -> vector<4x32xf32>
    %153 = arith.addf %151, %152 : vector<4x32xf32>
    %154 = vector.broadcast %32 : vector<1x32xf32> to vector<4x32xf32>
    %155 = arith.addf %153, %154 : vector<4x32xf32>
    %156 = arith.negf %155 : vector<4x32xf32>
    %157 = math.exp %156 : vector<4x32xf32>
    %cst_79 = arith.constant 1.000000e+00 : f32
    %158 = vector.broadcast %cst_79 : f32 to vector<4x32xf32>
    %159 = arith.addf %158, %157 : vector<4x32xf32>
    %160 = arith.divf %158, %159 : vector<4x32xf32>
    %161 = vector.extract_strided_slice %22 {offsets = [12, 0], sizes = [4, 32], strides = [1, 1]} : vector<32x32xf32> to vector<4x32xf32>
    %cst_80 = arith.constant dense<0.000000e+00> : vector<4x32xf32>
    %162 = tpu.matmul %137, %28, %cst_80 {dimension_numbers = #tpu.dot_dimension_numbers<[1], [0], [0], [1], [0, 0, 1, 1], [], []>} : vector<4x32xf32>, vector<32x32xf32>, vector<4x32xf32> -> vector<4x32xf32>
    %163 = vector.broadcast %34 : vector<1x32xf32> to vector<4x32xf32>
    %164 = arith.addf %162, %163 : vector<4x32xf32>
    %165 = arith.mulf %150, %164 : vector<4x32xf32>
    %166 = arith.addf %161, %165 : vector<4x32xf32>
    %167 = math.tanh %166 : vector<4x32xf32>
    %cst_81 = arith.constant 1.000000e+00 : f32
    %168 = vector.broadcast %cst_81 : f32 to vector<4x32xf32>
    %169 = arith.subf %168, %160 : vector<4x32xf32>
    %170 = arith.mulf %169, %167 : vector<4x32xf32>
    %171 = arith.mulf %160, %137 : vector<4x32xf32>
    %172 = arith.addf %170, %171 : vector<4x32xf32>
    %c0_82 = arith.constant 0 : index
    %c12 = arith.constant 12 : index
    %c0_83 = arith.constant 0 : index
    %173 = vector.load %arg9[%c0_82, %c12, %c0_83] : memref<2x32x32xf32, #tpu.memory_space<vmem>>, vector<1x4x32xf32>
    %174 = vector.shape_cast %173 : vector<1x4x32xf32> to vector<4x32xf32>
    %175 = vector.shape_cast %172 : vector<4x32xf32> to vector<1x4x32xf32>
    tpu.vector_store %arg9[%c0_82, %c12, %c0_83], %175 {strides = array<i32>} : memref<2x32x32xf32, #tpu.memory_space<vmem>>, vector<1x4x32xf32>,
    %176 = vector.extract_strided_slice %8 {offsets = [16, 0], sizes = [4, 32], strides = [1, 1]} : vector<32x32xf32> to vector<4x32xf32>
    %cst_84 = arith.constant dense<0.000000e+00> : vector<4x32xf32>
    %177 = tpu.matmul %172, %24, %cst_84 {dimension_numbers = #tpu.dot_dimension_numbers<[1], [0], [0], [1], [0, 0, 1, 1], [], []>} : vector<4x32xf32>, vector<32x32xf32>, vector<4x32xf32> -> vector<4x32xf32>
    %178 = arith.addf %176, %177 : vector<4x32xf32>
    %179 = vector.broadcast %30 : vector<1x32xf32> to vector<4x32xf32>
    %180 = arith.addf %178, %179 : vector<4x32xf32>
    %181 = arith.negf %180 : vector<4x32xf32>
    %182 = math.exp %181 : vector<4x32xf32>
    %cst_85 = arith.constant 1.000000e+00 : f32
    %183 = vector.broadcast %cst_85 : f32 to vector<4x32xf32>
    %184 = arith.addf %183, %182 : vector<4x32xf32>
    %185 = arith.divf %183, %184 : vector<4x32xf32>
    %186 = vector.extract_strided_slice %15 {offsets = [16, 0], sizes = [4, 32], strides = [1, 1]} : vector<32x32xf32> to vector<4x32xf32>
    %cst_86 = arith.constant dense<0.000000e+00> : vector<4x32xf32>
    %187 = tpu.matmul %172, %26, %cst_86 {dimension_numbers = #tpu.dot_dimension_numbers<[1], [0], [0], [1], [0, 0, 1, 1], [], []>} : vector<4x32xf32>, vector<32x32xf32>, vector<4x32xf32> -> vector<4x32xf32>
    %188 = arith.addf %186, %187 : vector<4x32xf32>
    %189 = vector.broadcast %32 : vector<1x32xf32> to vector<4x32xf32>
    %190 = arith.addf %188, %189 : vector<4x32xf32>
    %191 = arith.negf %190 : vector<4x32xf32>
    %192 = math.exp %191 : vector<4x32xf32>
    %cst_87 = arith.constant 1.000000e+00 : f32
    %193 = vector.broadcast %cst_87 : f32 to vector<4x32xf32>
    %194 = arith.addf %193, %192 : vector<4x32xf32>
    %195 = arith.divf %193, %194 : vector<4x32xf32>
    %196 = vector.extract_strided_slice %22 {offsets = [16, 0], sizes = [4, 32], strides = [1, 1]} : vector<32x32xf32> to vector<4x32xf32>
    %cst_88 = arith.constant dense<0.000000e+00> : vector<4x32xf32>
    %197 = tpu.matmul %172, %28, %cst_88 {dimension_numbers = #tpu.dot_dimension_numbers<[1], [0], [0], [1], [0, 0, 1, 1], [], []>} : vector<4x32xf32>, vector<32x32xf32>, vector<4x32xf32> -> vector<4x32xf32>
    %198 = vector.broadcast %34 : vector<1x32xf32> to vector<4x32xf32>
    %199 = arith.addf %197, %198 : vector<4x32xf32>
    %200 = arith.mulf %185, %199 : vector<4x32xf32>
    %201 = arith.addf %196, %200 : vector<4x32xf32>
    %202 = math.tanh %201 : vector<4x32xf32>
    %cst_89 = arith.constant 1.000000e+00 : f32
    %203 = vector.broadcast %cst_89 : f32 to vector<4x32xf32>
    %204 = arith.subf %203, %195 : vector<4x32xf32>
    %205 = arith.mulf %204, %202 : vector<4x32xf32>
    %206 = arith.mulf %195, %172 : vector<4x32xf32>
    %207 = arith.addf %205, %206 : vector<4x32xf32>
    %c0_90 = arith.constant 0 : index
    %c16 = arith.constant 16 : index
    %c0_91 = arith.constant 0 : index
    %208 = vector.load %arg9[%c0_90, %c16, %c0_91] : memref<2x32x32xf32, #tpu.memory_space<vmem>>, vector<1x4x32xf32>
    %209 = vector.shape_cast %208 : vector<1x4x32xf32> to vector<4x32xf32>
    %210 = vector.shape_cast %207 : vector<4x32xf32> to vector<1x4x32xf32>
    tpu.vector_store %arg9[%c0_90, %c16, %c0_91], %210 {strides = array<i32>} : memref<2x32x32xf32, #tpu.memory_space<vmem>>, vector<1x4x32xf32>,
    %211 = vector.extract_strided_slice %8 {offsets = [20, 0], sizes = [4, 32], strides = [1, 1]} : vector<32x32xf32> to vector<4x32xf32>
    %cst_92 = arith.constant dense<0.000000e+00> : vector<4x32xf32>
    %212 = tpu.matmul %207, %24, %cst_92 {dimension_numbers = #tpu.dot_dimension_numbers<[1], [0], [0], [1], [0, 0, 1, 1], [], []>} : vector<4x32xf32>, vector<32x32xf32>, vector<4x32xf32> -> vector<4x32xf32>
    %213 = arith.addf %211, %212 : vector<4x32xf32>
    %214 = vector.broadcast %30 : vector<1x32xf32> to vector<4x32xf32>
    %215 = arith.addf %213, %214 : vector<4x32xf32>
    %216 = arith.negf %215 : vector<4x32xf32>
    %217 = math.exp %216 : vector<4x32xf32>
    %cst_93 = arith.constant 1.000000e+00 : f32
    %218 = vector.broadcast %cst_93 : f32 to vector<4x32xf32>
    %219 = arith.addf %218, %217 : vector<4x32xf32>
    %220 = arith.divf %218, %219 : vector<4x32xf32>
    %221 = vector.extract_strided_slice %15 {offsets = [20, 0], sizes = [4, 32], strides = [1, 1]} : vector<32x32xf32> to vector<4x32xf32>
    %cst_94 = arith.constant dense<0.000000e+00> : vector<4x32xf32>
    %222 = tpu.matmul %207, %26, %cst_94 {dimension_numbers = #tpu.dot_dimension_numbers<[1], [0], [0], [1], [0, 0, 1, 1], [], []>} : vector<4x32xf32>, vector<32x32xf32>, vector<4x32xf32> -> vector<4x32xf32>
    %223 = arith.addf %221, %222 : vector<4x32xf32>
    %224 = vector.broadcast %32 : vector<1x32xf32> to vector<4x32xf32>
    %225 = arith.addf %223, %224 : vector<4x32xf32>
    %226 = arith.negf %225 : vector<4x32xf32>
    %227 = math.exp %226 : vector<4x32xf32>
    %cst_95 = arith.constant 1.000000e+00 : f32
    %228 = vector.broadcast %cst_95 : f32 to vector<4x32xf32>
    %229 = arith.addf %228, %227 : vector<4x32xf32>
    %230 = arith.divf %228, %229 : vector<4x32xf32>
    %231 = vector.extract_strided_slice %22 {offsets = [20, 0], sizes = [4, 32], strides = [1, 1]} : vector<32x32xf32> to vector<4x32xf32>
    %cst_96 = arith.constant dense<0.000000e+00> : vector<4x32xf32>
    %232 = tpu.matmul %207, %28, %cst_96 {dimension_numbers = #tpu.dot_dimension_numbers<[1], [0], [0], [1], [0, 0, 1, 1], [], []>} : vector<4x32xf32>, vector<32x32xf32>, vector<4x32xf32> -> vector<4x32xf32>
    %233 = vector.broadcast %34 : vector<1x32xf32> to vector<4x32xf32>
    %234 = arith.addf %232, %233 : vector<4x32xf32>
    %235 = arith.mulf %220, %234 : vector<4x32xf32>
    %236 = arith.addf %231, %235 : vector<4x32xf32>
    %237 = math.tanh %236 : vector<4x32xf32>
    %cst_97 = arith.constant 1.000000e+00 : f32
    %238 = vector.broadcast %cst_97 : f32 to vector<4x32xf32>
    %239 = arith.subf %238, %230 : vector<4x32xf32>
    %240 = arith.mulf %239, %237 : vector<4x32xf32>
    %241 = arith.mulf %230, %207 : vector<4x32xf32>
    %242 = arith.addf %240, %241 : vector<4x32xf32>
    %c0_98 = arith.constant 0 : index
    %c20 = arith.constant 20 : index
    %c0_99 = arith.constant 0 : index
    %243 = vector.load %arg9[%c0_98, %c20, %c0_99] : memref<2x32x32xf32, #tpu.memory_space<vmem>>, vector<1x4x32xf32>
    %244 = vector.shape_cast %243 : vector<1x4x32xf32> to vector<4x32xf32>
    %245 = vector.shape_cast %242 : vector<4x32xf32> to vector<1x4x32xf32>
    tpu.vector_store %arg9[%c0_98, %c20, %c0_99], %245 {strides = array<i32>} : memref<2x32x32xf32, #tpu.memory_space<vmem>>, vector<1x4x32xf32>,
    %246 = vector.extract_strided_slice %8 {offsets = [24, 0], sizes = [4, 32], strides = [1, 1]} : vector<32x32xf32> to vector<4x32xf32>
    %cst_100 = arith.constant dense<0.000000e+00> : vector<4x32xf32>
    %247 = tpu.matmul %242, %24, %cst_100 {dimension_numbers = #tpu.dot_dimension_numbers<[1], [0], [0], [1], [0, 0, 1, 1], [], []>} : vector<4x32xf32>, vector<32x32xf32>, vector<4x32xf32> -> vector<4x32xf32>
    %248 = arith.addf %246, %247 : vector<4x32xf32>
    %249 = vector.broadcast %30 : vector<1x32xf32> to vector<4x32xf32>
    %250 = arith.addf %248, %249 : vector<4x32xf32>
    %251 = arith.negf %250 : vector<4x32xf32>
    %252 = math.exp %251 : vector<4x32xf32>
    %cst_101 = arith.constant 1.000000e+00 : f32
    %253 = vector.broadcast %cst_101 : f32 to vector<4x32xf32>
    %254 = arith.addf %253, %252 : vector<4x32xf32>
    %255 = arith.divf %253, %254 : vector<4x32xf32>
    %256 = vector.extract_strided_slice %15 {offsets = [24, 0], sizes = [4, 32], strides = [1, 1]} : vector<32x32xf32> to vector<4x32xf32>
    %cst_102 = arith.constant dense<0.000000e+00> : vector<4x32xf32>
    %257 = tpu.matmul %242, %26, %cst_102 {dimension_numbers = #tpu.dot_dimension_numbers<[1], [0], [0], [1], [0, 0, 1, 1], [], []>} : vector<4x32xf32>, vector<32x32xf32>, vector<4x32xf32> -> vector<4x32xf32>
    %258 = arith.addf %256, %257 : vector<4x32xf32>
    %259 = vector.broadcast %32 : vector<1x32xf32> to vector<4x32xf32>
    %260 = arith.addf %258, %259 : vector<4x32xf32>
    %261 = arith.negf %260 : vector<4x32xf32>
    %262 = math.exp %261 : vector<4x32xf32>
    %cst_103 = arith.constant 1.000000e+00 : f32
    %263 = vector.broadcast %cst_103 : f32 to vector<4x32xf32>
    %264 = arith.addf %263, %262 : vector<4x32xf32>
    %265 = arith.divf %263, %264 : vector<4x32xf32>
    %266 = vector.extract_strided_slice %22 {offsets = [24, 0], sizes = [4, 32], strides = [1, 1]} : vector<32x32xf32> to vector<4x32xf32>
    %cst_104 = arith.constant dense<0.000000e+00> : vector<4x32xf32>
    %267 = tpu.matmul %242, %28, %cst_104 {dimension_numbers = #tpu.dot_dimension_numbers<[1], [0], [0], [1], [0, 0, 1, 1], [], []>} : vector<4x32xf32>, vector<32x32xf32>, vector<4x32xf32> -> vector<4x32xf32>
    %268 = vector.broadcast %34 : vector<1x32xf32> to vector<4x32xf32>
    %269 = arith.addf %267, %268 : vector<4x32xf32>
    %270 = arith.mulf %255, %269 : vector<4x32xf32>
    %271 = arith.addf %266, %270 : vector<4x32xf32>
    %272 = math.tanh %271 : vector<4x32xf32>
    %cst_105 = arith.constant 1.000000e+00 : f32
    %273 = vector.broadcast %cst_105 : f32 to vector<4x32xf32>
    %274 = arith.subf %273, %265 : vector<4x32xf32>
    %275 = arith.mulf %274, %272 : vector<4x32xf32>
    %276 = arith.mulf %265, %242 : vector<4x32xf32>
    %277 = arith.addf %275, %276 : vector<4x32xf32>
    %c0_106 = arith.constant 0 : index
    %c24 = arith.constant 24 : index
    %c0_107 = arith.constant 0 : index
    %278 = vector.load %arg9[%c0_106, %c24, %c0_107] : memref<2x32x32xf32, #tpu.memory_space<vmem>>, vector<1x4x32xf32>
    %279 = vector.shape_cast %278 : vector<1x4x32xf32> to vector<4x32xf32>
    %280 = vector.shape_cast %277 : vector<4x32xf32> to vector<1x4x32xf32>
    tpu.vector_store %arg9[%c0_106, %c24, %c0_107], %280 {strides = array<i32>} : memref<2x32x32xf32, #tpu.memory_space<vmem>>, vector<1x4x32xf32>,
    %281 = vector.extract_strided_slice %8 {offsets = [28, 0], sizes = [4, 32], strides = [1, 1]} : vector<32x32xf32> to vector<4x32xf32>
    %cst_108 = arith.constant dense<0.000000e+00> : vector<4x32xf32>
    %282 = tpu.matmul %277, %24, %cst_108 {dimension_numbers = #tpu.dot_dimension_numbers<[1], [0], [0], [1], [0, 0, 1, 1], [], []>} : vector<4x32xf32>, vector<32x32xf32>, vector<4x32xf32> -> vector<4x32xf32>
    %283 = arith.addf %281, %282 : vector<4x32xf32>
    %284 = vector.broadcast %30 : vector<1x32xf32> to vector<4x32xf32>
    %285 = arith.addf %283, %284 : vector<4x32xf32>
    %286 = arith.negf %285 : vector<4x32xf32>
    %287 = math.exp %286 : vector<4x32xf32>
    %cst_109 = arith.constant 1.000000e+00 : f32
    %288 = vector.broadcast %cst_109 : f32 to vector<4x32xf32>
    %289 = arith.addf %288, %287 : vector<4x32xf32>
    %290 = arith.divf %288, %289 : vector<4x32xf32>
    %291 = vector.extract_strided_slice %15 {offsets = [28, 0], sizes = [4, 32], strides = [1, 1]} : vector<32x32xf32> to vector<4x32xf32>
    %cst_110 = arith.constant dense<0.000000e+00> : vector<4x32xf32>
    %292 = tpu.matmul %277, %26, %cst_110 {dimension_numbers = #tpu.dot_dimension_numbers<[1], [0], [0], [1], [0, 0, 1, 1], [], []>} : vector<4x32xf32>, vector<32x32xf32>, vector<4x32xf32> -> vector<4x32xf32>
    %293 = arith.addf %291, %292 : vector<4x32xf32>
    %294 = vector.broadcast %32 : vector<1x32xf32> to vector<4x32xf32>
    %295 = arith.addf %293, %294 : vector<4x32xf32>
    %296 = arith.negf %295 : vector<4x32xf32>
    %297 = math.exp %296 : vector<4x32xf32>
    %cst_111 = arith.constant 1.000000e+00 : f32
    %298 = vector.broadcast %cst_111 : f32 to vector<4x32xf32>
    %299 = arith.addf %298, %297 : vector<4x32xf32>
    %300 = arith.divf %298, %299 : vector<4x32xf32>
    %301 = vector.extract_strided_slice %22 {offsets = [28, 0], sizes = [4, 32], strides = [1, 1]} : vector<32x32xf32> to vector<4x32xf32>
    %cst_112 = arith.constant dense<0.000000e+00> : vector<4x32xf32>
    %302 = tpu.matmul %277, %28, %cst_112 {dimension_numbers = #tpu.dot_dimension_numbers<[1], [0], [0], [1], [0, 0, 1, 1], [], []>} : vector<4x32xf32>, vector<32x32xf32>, vector<4x32xf32> -> vector<4x32xf32>
    %303 = vector.broadcast %34 : vector<1x32xf32> to vector<4x32xf32>
    %304 = arith.addf %302, %303 : vector<4x32xf32>
    %305 = arith.mulf %290, %304 : vector<4x32xf32>
    %306 = arith.addf %301, %305 : vector<4x32xf32>
    %307 = math.tanh %306 : vector<4x32xf32>
    %cst_113 = arith.constant 1.000000e+00 : f32
    %308 = vector.broadcast %cst_113 : f32 to vector<4x32xf32>
    %309 = arith.subf %308, %300 : vector<4x32xf32>
    %310 = arith.mulf %309, %307 : vector<4x32xf32>
    %311 = arith.mulf %300, %277 : vector<4x32xf32>
    %312 = arith.addf %310, %311 : vector<4x32xf32>
    %c0_114 = arith.constant 0 : index
    %c28 = arith.constant 28 : index
    %c0_115 = arith.constant 0 : index
    %313 = vector.load %arg9[%c0_114, %c28, %c0_115] : memref<2x32x32xf32, #tpu.memory_space<vmem>>, vector<1x4x32xf32>
    %314 = vector.shape_cast %313 : vector<1x4x32xf32> to vector<4x32xf32>
    %315 = vector.shape_cast %312 : vector<4x32xf32> to vector<1x4x32xf32>
    tpu.vector_store %arg9[%c0_114, %c28, %c0_115], %315 {strides = array<i32>} : memref<2x32x32xf32, #tpu.memory_space<vmem>>, vector<1x4x32xf32>,
    %c0_116 = arith.constant 0 : index
    %c3 = arith.constant 3 : index
    %c0_117 = arith.constant 0 : index
    %c0_118 = arith.constant 0 : index
    %316 = vector.load %arg2[%c0_116, %c3, %c0_117, %c0_118] : memref<1x6x5x32xf32, #tpu.memory_space<vmem>>, vector<1x1x5x32xf32>
    %317 = vector.shape_cast %316 : vector<1x1x5x32xf32> to vector<5x32xf32>
    %cst_119 = arith.constant dense<0.000000e+00> : vector<32x32xf32>
    %318 = tpu.matmul %1, %317, %cst_119 {dimension_numbers = #tpu.dot_dimension_numbers<[1], [0], [0], [1], [0, 0, 1, 1], [], []>} : vector<32x5xf32>, vector<5x32xf32>, vector<32x32xf32> -> vector<32x32xf32>
    %c0_120 = arith.constant 0 : index
    %c3_121 = arith.constant 3 : index
    %c0_122 = arith.constant 0 : index
    %c0_123 = arith.constant 0 : index
    %319 = vector.load %arg4[%c0_120, %c3_121, %c0_122, %c0_123] : memref<1x6x1x32xf32, #tpu.memory_space<vmem>>, vector<1x1x1x32xf32>
    %320 = vector.shape_cast %319 : vector<1x1x1x32xf32> to vector<1x32xf32>
    %321 = vector.broadcast %320 : vector<1x32xf32> to vector<32x32xf32>
    %322 = arith.addf %318, %321 : vector<32x32xf32>
    %c0_124 = arith.constant 0 : index
    %c4_125 = arith.constant 4 : index
    %c0_126 = arith.constant 0 : index
    %c0_127 = arith.constant 0 : index
    %323 = vector.load %arg2[%c0_124, %c4_125, %c0_126, %c0_127] : memref<1x6x5x32xf32, #tpu.memory_space<vmem>>, vector<1x1x5x32xf32>
    %324 = vector.shape_cast %323 : vector<1x1x5x32xf32> to vector<5x32xf32>
    %cst_128 = arith.constant dense<0.000000e+00> : vector<32x32xf32>
    %325 = tpu.matmul %1, %324, %cst_128 {dimension_numbers = #tpu.dot_dimension_numbers<[1], [0], [0], [1], [0, 0, 1, 1], [], []>} : vector<32x5xf32>, vector<5x32xf32>, vector<32x32xf32> -> vector<32x32xf32>
    %c0_129 = arith.constant 0 : index
    %c4_130 = arith.constant 4 : index
    %c0_131 = arith.constant 0 : index
    %c0_132 = arith.constant 0 : index
    %326 = vector.load %arg4[%c0_129, %c4_130, %c0_131, %c0_132] : memref<1x6x1x32xf32, #tpu.memory_space<vmem>>, vector<1x1x1x32xf32>
    %327 = vector.shape_cast %326 : vector<1x1x1x32xf32> to vector<1x32xf32>
    %328 = vector.broadcast %327 : vector<1x32xf32> to vector<32x32xf32>
    %329 = arith.addf %325, %328 : vector<32x32xf32>
    %c0_133 = arith.constant 0 : index
    %c5 = arith.constant 5 : index
    %c0_134 = arith.constant 0 : index
    %c0_135 = arith.constant 0 : index
    %330 = vector.load %arg2[%c0_133, %c5, %c0_134, %c0_135] : memref<1x6x5x32xf32, #tpu.memory_space<vmem>>, vector<1x1x5x32xf32>
    %331 = vector.shape_cast %330 : vector<1x1x5x32xf32> to vector<5x32xf32>
    %cst_136 = arith.constant dense<0.000000e+00> : vector<32x32xf32>
    %332 = tpu.matmul %1, %331, %cst_136 {dimension_numbers = #tpu.dot_dimension_numbers<[1], [0], [0], [1], [0, 0, 1, 1], [], []>} : vector<32x5xf32>, vector<5x32xf32>, vector<32x32xf32> -> vector<32x32xf32>
    %c0_137 = arith.constant 0 : index
    %c5_138 = arith.constant 5 : index
    %c0_139 = arith.constant 0 : index
    %c0_140 = arith.constant 0 : index
    %333 = vector.load %arg4[%c0_137, %c5_138, %c0_139, %c0_140] : memref<1x6x1x32xf32, #tpu.memory_space<vmem>>, vector<1x1x1x32xf32>
    %334 = vector.shape_cast %333 : vector<1x1x1x32xf32> to vector<1x32xf32>
    %335 = vector.broadcast %334 : vector<1x32xf32> to vector<32x32xf32>
    %336 = arith.addf %332, %335 : vector<32x32xf32>
    %c0_141 = arith.constant 0 : index
    %c3_142 = arith.constant 3 : index
    %c0_143 = arith.constant 0 : index
    %c0_144 = arith.constant 0 : index
    %337 = vector.load %arg3[%c0_141, %c3_142, %c0_143, %c0_144] : memref<1x6x32x32xf32, #tpu.memory_space<vmem>>, vector<1x1x32x32xf32>
    %338 = vector.shape_cast %337 : vector<1x1x32x32xf32> to vector<32x32xf32>
    %c0_145 = arith.constant 0 : index
    %c4_146 = arith.constant 4 : index
    %c0_147 = arith.constant 0 : index
    %c0_148 = arith.constant 0 : index
    %339 = vector.load %arg3[%c0_145, %c4_146, %c0_147, %c0_148] : memref<1x6x32x32xf32, #tpu.memory_space<vmem>>, vector<1x1x32x32xf32>
    %340 = vector.shape_cast %339 : vector<1x1x32x32xf32> to vector<32x32xf32>
    %c0_149 = arith.constant 0 : index
    %c5_150 = arith.constant 5 : index
    %c0_151 = arith.constant 0 : index
    %c0_152 = arith.constant 0 : index
    %341 = vector.load %arg3[%c0_149, %c5_150, %c0_151, %c0_152] : memref<1x6x32x32xf32, #tpu.memory_space<vmem>>, vector<1x1x32x32xf32>
    %342 = vector.shape_cast %341 : vector<1x1x32x32xf32> to vector<32x32xf32>
    %c0_153 = arith.constant 0 : index
    %c3_154 = arith.constant 3 : index
    %c0_155 = arith.constant 0 : index
    %c0_156 = arith.constant 0 : index
    %343 = vector.load %arg5[%c0_153, %c3_154, %c0_155, %c0_156] : memref<1x6x1x32xf32, #tpu.memory_space<vmem>>, vector<1x1x1x32xf32>
    %344 = vector.shape_cast %343 : vector<1x1x1x32xf32> to vector<1x32xf32>
    %c0_157 = arith.constant 0 : index
    %c4_158 = arith.constant 4 : index
    %c0_159 = arith.constant 0 : index
    %c0_160 = arith.constant 0 : index
    %345 = vector.load %arg5[%c0_157, %c4_158, %c0_159, %c0_160] : memref<1x6x1x32xf32, #tpu.memory_space<vmem>>, vector<1x1x1x32xf32>
    %346 = vector.shape_cast %345 : vector<1x1x1x32xf32> to vector<1x32xf32>
    %c0_161 = arith.constant 0 : index
    %c5_162 = arith.constant 5 : index
    %c0_163 = arith.constant 0 : index
    %c0_164 = arith.constant 0 : index
    %347 = vector.load %arg5[%c0_161, %c5_162, %c0_163, %c0_164] : memref<1x6x1x32xf32, #tpu.memory_space<vmem>>, vector<1x1x1x32xf32>
    %348 = vector.shape_cast %347 : vector<1x1x1x32xf32> to vector<1x32xf32>
    %cst_165 = arith.constant 0.000000e+00 : f32
    %349 = vector.broadcast %cst_165 : f32 to vector<4x32xf32>
    %350 = vector.extract_strided_slice %322 {offsets = [28, 0], sizes = [4, 32], strides = [1, 1]} : vector<32x32xf32> to vector<4x32xf32>
    %cst_166 = arith.constant dense<0.000000e+00> : vector<4x32xf32>
    %351 = tpu.matmul %349, %338, %cst_166 {dimension_numbers = #tpu.dot_dimension_numbers<[1], [0], [0], [1], [0, 0, 1, 1], [], []>} : vector<4x32xf32>, vector<32x32xf32>, vector<4x32xf32> -> vector<4x32xf32>
    %352 = arith.addf %350, %351 : vector<4x32xf32>
    %353 = vector.broadcast %344 : vector<1x32xf32> to vector<4x32xf32>
    %354 = arith.addf %352, %353 : vector<4x32xf32>
    %355 = arith.negf %354 : vector<4x32xf32>
    %356 = math.exp %355 : vector<4x32xf32>
    %cst_167 = arith.constant 1.000000e+00 : f32
    %357 = vector.broadcast %cst_167 : f32 to vector<4x32xf32>
    %358 = arith.addf %357, %356 : vector<4x32xf32>
    %359 = arith.divf %357, %358 : vector<4x32xf32>
    %360 = vector.extract_strided_slice %329 {offsets = [28, 0], sizes = [4, 32], strides = [1, 1]} : vector<32x32xf32> to vector<4x32xf32>
    %cst_168 = arith.constant dense<0.000000e+00> : vector<4x32xf32>
    %361 = tpu.matmul %349, %340, %cst_168 {dimension_numbers = #tpu.dot_dimension_numbers<[1], [0], [0], [1], [0, 0, 1, 1], [], []>} : vector<4x32xf32>, vector<32x32xf32>, vector<4x32xf32> -> vector<4x32xf32>
    %362 = arith.addf %360, %361 : vector<4x32xf32>
    %363 = vector.broadcast %346 : vector<1x32xf32> to vector<4x32xf32>
    %364 = arith.addf %362, %363 : vector<4x32xf32>
    %365 = arith.negf %364 : vector<4x32xf32>
    %366 = math.exp %365 : vector<4x32xf32>
    %cst_169 = arith.constant 1.000000e+00 : f32
    %367 = vector.broadcast %cst_169 : f32 to vector<4x32xf32>
    %368 = arith.addf %367, %366 : vector<4x32xf32>
    %369 = arith.divf %367, %368 : vector<4x32xf32>
    %370 = vector.extract_strided_slice %336 {offsets = [28, 0], sizes = [4, 32], strides = [1, 1]} : vector<32x32xf32> to vector<4x32xf32>
    %cst_170 = arith.constant dense<0.000000e+00> : vector<4x32xf32>
    %371 = tpu.matmul %349, %342, %cst_170 {dimension_numbers = #tpu.dot_dimension_numbers<[1], [0], [0], [1], [0, 0, 1, 1], [], []>} : vector<4x32xf32>, vector<32x32xf32>, vector<4x32xf32> -> vector<4x32xf32>
    %372 = vector.broadcast %348 : vector<1x32xf32> to vector<4x32xf32>
    %373 = arith.addf %371, %372 : vector<4x32xf32>
    %374 = arith.mulf %359, %373 : vector<4x32xf32>
    %375 = arith.addf %370, %374 : vector<4x32xf32>
    %376 = math.tanh %375 : vector<4x32xf32>
    %cst_171 = arith.constant 1.000000e+00 : f32
    %377 = vector.broadcast %cst_171 : f32 to vector<4x32xf32>
    %378 = arith.subf %377, %369 : vector<4x32xf32>
    %379 = arith.mulf %378, %376 : vector<4x32xf32>
    %380 = arith.mulf %369, %349 : vector<4x32xf32>
    %381 = arith.addf %379, %380 : vector<4x32xf32>
    %c1_172 = arith.constant 1 : index
    %c28_173 = arith.constant 28 : index
    %c0_174 = arith.constant 0 : index
    %382 = vector.load %arg9[%c1_172, %c28_173, %c0_174] : memref<2x32x32xf32, #tpu.memory_space<vmem>>, vector<1x4x32xf32>
    %383 = vector.shape_cast %382 : vector<1x4x32xf32> to vector<4x32xf32>
    %384 = vector.shape_cast %381 : vector<4x32xf32> to vector<1x4x32xf32>
    tpu.vector_store %arg9[%c1_172, %c28_173, %c0_174], %384 {strides = array<i32>} : memref<2x32x32xf32, #tpu.memory_space<vmem>>, vector<1x4x32xf32>,
    %385 = vector.extract_strided_slice %322 {offsets = [24, 0], sizes = [4, 32], strides = [1, 1]} : vector<32x32xf32> to vector<4x32xf32>
    %cst_175 = arith.constant dense<0.000000e+00> : vector<4x32xf32>
    %386 = tpu.matmul %381, %338, %cst_175 {dimension_numbers = #tpu.dot_dimension_numbers<[1], [0], [0], [1], [0, 0, 1, 1], [], []>} : vector<4x32xf32>, vector<32x32xf32>, vector<4x32xf32> -> vector<4x32xf32>
    %387 = arith.addf %385, %386 : vector<4x32xf32>
    %388 = vector.broadcast %344 : vector<1x32xf32> to vector<4x32xf32>
    %389 = arith.addf %387, %388 : vector<4x32xf32>
    %390 = arith.negf %389 : vector<4x32xf32>
    %391 = math.exp %390 : vector<4x32xf32>
    %cst_176 = arith.constant 1.000000e+00 : f32
    %392 = vector.broadcast %cst_176 : f32 to vector<4x32xf32>
    %393 = arith.addf %392, %391 : vector<4x32xf32>
    %394 = arith.divf %392, %393 : vector<4x32xf32>
    %395 = vector.extract_strided_slice %329 {offsets = [24, 0], sizes = [4, 32], strides = [1, 1]} : vector<32x32xf32> to vector<4x32xf32>
    %cst_177 = arith.constant dense<0.000000e+00> : vector<4x32xf32>
    %396 = tpu.matmul %381, %340, %cst_177 {dimension_numbers = #tpu.dot_dimension_numbers<[1], [0], [0], [1], [0, 0, 1, 1], [], []>} : vector<4x32xf32>, vector<32x32xf32>, vector<4x32xf32> -> vector<4x32xf32>
    %397 = arith.addf %395, %396 : vector<4x32xf32>
    %398 = vector.broadcast %346 : vector<1x32xf32> to vector<4x32xf32>
    %399 = arith.addf %397, %398 : vector<4x32xf32>
    %400 = arith.negf %399 : vector<4x32xf32>
    %401 = math.exp %400 : vector<4x32xf32>
    %cst_178 = arith.constant 1.000000e+00 : f32
    %402 = vector.broadcast %cst_178 : f32 to vector<4x32xf32>
    %403 = arith.addf %402, %401 : vector<4x32xf32>
    %404 = arith.divf %402, %403 : vector<4x32xf32>
    %405 = vector.extract_strided_slice %336 {offsets = [24, 0], sizes = [4, 32], strides = [1, 1]} : vector<32x32xf32> to vector<4x32xf32>
    %cst_179 = arith.constant dense<0.000000e+00> : vector<4x32xf32>
    %406 = tpu.matmul %381, %342, %cst_179 {dimension_numbers = #tpu.dot_dimension_numbers<[1], [0], [0], [1], [0, 0, 1, 1], [], []>} : vector<4x32xf32>, vector<32x32xf32>, vector<4x32xf32> -> vector<4x32xf32>
    %407 = vector.broadcast %348 : vector<1x32xf32> to vector<4x32xf32>
    %408 = arith.addf %406, %407 : vector<4x32xf32>
    %409 = arith.mulf %394, %408 : vector<4x32xf32>
    %410 = arith.addf %405, %409 : vector<4x32xf32>
    %411 = math.tanh %410 : vector<4x32xf32>
    %cst_180 = arith.constant 1.000000e+00 : f32
    %412 = vector.broadcast %cst_180 : f32 to vector<4x32xf32>
    %413 = arith.subf %412, %404 : vector<4x32xf32>
    %414 = arith.mulf %413, %411 : vector<4x32xf32>
    %415 = arith.mulf %404, %381 : vector<4x32xf32>
    %416 = arith.addf %414, %415 : vector<4x32xf32>
    %c1_181 = arith.constant 1 : index
    %c24_182 = arith.constant 24 : index
    %c0_183 = arith.constant 0 : index
    %417 = vector.load %arg9[%c1_181, %c24_182, %c0_183] : memref<2x32x32xf32, #tpu.memory_space<vmem>>, vector<1x4x32xf32>
    %418 = vector.shape_cast %417 : vector<1x4x32xf32> to vector<4x32xf32>
    %419 = vector.shape_cast %416 : vector<4x32xf32> to vector<1x4x32xf32>
    tpu.vector_store %arg9[%c1_181, %c24_182, %c0_183], %419 {strides = array<i32>} : memref<2x32x32xf32, #tpu.memory_space<vmem>>, vector<1x4x32xf32>,
    %420 = vector.extract_strided_slice %322 {offsets = [20, 0], sizes = [4, 32], strides = [1, 1]} : vector<32x32xf32> to vector<4x32xf32>
    %cst_184 = arith.constant dense<0.000000e+00> : vector<4x32xf32>
    %421 = tpu.matmul %416, %338, %cst_184 {dimension_numbers = #tpu.dot_dimension_numbers<[1], [0], [0], [1], [0, 0, 1, 1], [], []>} : vector<4x32xf32>, vector<32x32xf32>, vector<4x32xf32> -> vector<4x32xf32>
    %422 = arith.addf %420, %421 : vector<4x32xf32>
    %423 = vector.broadcast %344 : vector<1x32xf32> to vector<4x32xf32>
    %424 = arith.addf %422, %423 : vector<4x32xf32>
    %425 = arith.negf %424 : vector<4x32xf32>
    %426 = math.exp %425 : vector<4x32xf32>
    %cst_185 = arith.constant 1.000000e+00 : f32
    %427 = vector.broadcast %cst_185 : f32 to vector<4x32xf32>
    %428 = arith.addf %427, %426 : vector<4x32xf32>
    %429 = arith.divf %427, %428 : vector<4x32xf32>
    %430 = vector.extract_strided_slice %329 {offsets = [20, 0], sizes = [4, 32], strides = [1, 1]} : vector<32x32xf32> to vector<4x32xf32>
    %cst_186 = arith.constant dense<0.000000e+00> : vector<4x32xf32>
    %431 = tpu.matmul %416, %340, %cst_186 {dimension_numbers = #tpu.dot_dimension_numbers<[1], [0], [0], [1], [0, 0, 1, 1], [], []>} : vector<4x32xf32>, vector<32x32xf32>, vector<4x32xf32> -> vector<4x32xf32>
    %432 = arith.addf %430, %431 : vector<4x32xf32>
    %433 = vector.broadcast %346 : vector<1x32xf32> to vector<4x32xf32>
    %434 = arith.addf %432, %433 : vector<4x32xf32>
    %435 = arith.negf %434 : vector<4x32xf32>
    %436 = math.exp %435 : vector<4x32xf32>
    %cst_187 = arith.constant 1.000000e+00 : f32
    %437 = vector.broadcast %cst_187 : f32 to vector<4x32xf32>
    %438 = arith.addf %437, %436 : vector<4x32xf32>
    %439 = arith.divf %437, %438 : vector<4x32xf32>
    %440 = vector.extract_strided_slice %336 {offsets = [20, 0], sizes = [4, 32], strides = [1, 1]} : vector<32x32xf32> to vector<4x32xf32>
    %cst_188 = arith.constant dense<0.000000e+00> : vector<4x32xf32>
    %441 = tpu.matmul %416, %342, %cst_188 {dimension_numbers = #tpu.dot_dimension_numbers<[1], [0], [0], [1], [0, 0, 1, 1], [], []>} : vector<4x32xf32>, vector<32x32xf32>, vector<4x32xf32> -> vector<4x32xf32>
    %442 = vector.broadcast %348 : vector<1x32xf32> to vector<4x32xf32>
    %443 = arith.addf %441, %442 : vector<4x32xf32>
    %444 = arith.mulf %429, %443 : vector<4x32xf32>
    %445 = arith.addf %440, %444 : vector<4x32xf32>
    %446 = math.tanh %445 : vector<4x32xf32>
    %cst_189 = arith.constant 1.000000e+00 : f32
    %447 = vector.broadcast %cst_189 : f32 to vector<4x32xf32>
    %448 = arith.subf %447, %439 : vector<4x32xf32>
    %449 = arith.mulf %448, %446 : vector<4x32xf32>
    %450 = arith.mulf %439, %416 : vector<4x32xf32>
    %451 = arith.addf %449, %450 : vector<4x32xf32>
    %c1_190 = arith.constant 1 : index
    %c20_191 = arith.constant 20 : index
    %c0_192 = arith.constant 0 : index
    %452 = vector.load %arg9[%c1_190, %c20_191, %c0_192] : memref<2x32x32xf32, #tpu.memory_space<vmem>>, vector<1x4x32xf32>
    %453 = vector.shape_cast %452 : vector<1x4x32xf32> to vector<4x32xf32>
    %454 = vector.shape_cast %451 : vector<4x32xf32> to vector<1x4x32xf32>
    tpu.vector_store %arg9[%c1_190, %c20_191, %c0_192], %454 {strides = array<i32>} : memref<2x32x32xf32, #tpu.memory_space<vmem>>, vector<1x4x32xf32>,
    %455 = vector.extract_strided_slice %322 {offsets = [16, 0], sizes = [4, 32], strides = [1, 1]} : vector<32x32xf32> to vector<4x32xf32>
    %cst_193 = arith.constant dense<0.000000e+00> : vector<4x32xf32>
    %456 = tpu.matmul %451, %338, %cst_193 {dimension_numbers = #tpu.dot_dimension_numbers<[1], [0], [0], [1], [0, 0, 1, 1], [], []>} : vector<4x32xf32>, vector<32x32xf32>, vector<4x32xf32> -> vector<4x32xf32>
    %457 = arith.addf %455, %456 : vector<4x32xf32>
    %458 = vector.broadcast %344 : vector<1x32xf32> to vector<4x32xf32>
    %459 = arith.addf %457, %458 : vector<4x32xf32>
    %460 = arith.negf %459 : vector<4x32xf32>
    %461 = math.exp %460 : vector<4x32xf32>
    %cst_194 = arith.constant 1.000000e+00 : f32
    %462 = vector.broadcast %cst_194 : f32 to vector<4x32xf32>
    %463 = arith.addf %462, %461 : vector<4x32xf32>
    %464 = arith.divf %462, %463 : vector<4x32xf32>
    %465 = vector.extract_strided_slice %329 {offsets = [16, 0], sizes = [4, 32], strides = [1, 1]} : vector<32x32xf32> to vector<4x32xf32>
    %cst_195 = arith.constant dense<0.000000e+00> : vector<4x32xf32>
    %466 = tpu.matmul %451, %340, %cst_195 {dimension_numbers = #tpu.dot_dimension_numbers<[1], [0], [0], [1], [0, 0, 1, 1], [], []>} : vector<4x32xf32>, vector<32x32xf32>, vector<4x32xf32> -> vector<4x32xf32>
    %467 = arith.addf %465, %466 : vector<4x32xf32>
    %468 = vector.broadcast %346 : vector<1x32xf32> to vector<4x32xf32>
    %469 = arith.addf %467, %468 : vector<4x32xf32>
    %470 = arith.negf %469 : vector<4x32xf32>
    %471 = math.exp %470 : vector<4x32xf32>
    %cst_196 = arith.constant 1.000000e+00 : f32
    %472 = vector.broadcast %cst_196 : f32 to vector<4x32xf32>
    %473 = arith.addf %472, %471 : vector<4x32xf32>
    %474 = arith.divf %472, %473 : vector<4x32xf32>
    %475 = vector.extract_strided_slice %336 {offsets = [16, 0], sizes = [4, 32], strides = [1, 1]} : vector<32x32xf32> to vector<4x32xf32>
    %cst_197 = arith.constant dense<0.000000e+00> : vector<4x32xf32>
    %476 = tpu.matmul %451, %342, %cst_197 {dimension_numbers = #tpu.dot_dimension_numbers<[1], [0], [0], [1], [0, 0, 1, 1], [], []>} : vector<4x32xf32>, vector<32x32xf32>, vector<4x32xf32> -> vector<4x32xf32>
    %477 = vector.broadcast %348 : vector<1x32xf32> to vector<4x32xf32>
    %478 = arith.addf %476, %477 : vector<4x32xf32>
    %479 = arith.mulf %464, %478 : vector<4x32xf32>
    %480 = arith.addf %475, %479 : vector<4x32xf32>
    %481 = math.tanh %480 : vector<4x32xf32>
    %cst_198 = arith.constant 1.000000e+00 : f32
    %482 = vector.broadcast %cst_198 : f32 to vector<4x32xf32>
    %483 = arith.subf %482, %474 : vector<4x32xf32>
    %484 = arith.mulf %483, %481 : vector<4x32xf32>
    %485 = arith.mulf %474, %451 : vector<4x32xf32>
    %486 = arith.addf %484, %485 : vector<4x32xf32>
    %c1_199 = arith.constant 1 : index
    %c16_200 = arith.constant 16 : index
    %c0_201 = arith.constant 0 : index
    %487 = vector.load %arg9[%c1_199, %c16_200, %c0_201] : memref<2x32x32xf32, #tpu.memory_space<vmem>>, vector<1x4x32xf32>
    %488 = vector.shape_cast %487 : vector<1x4x32xf32> to vector<4x32xf32>
    %489 = vector.shape_cast %486 : vector<4x32xf32> to vector<1x4x32xf32>
    tpu.vector_store %arg9[%c1_199, %c16_200, %c0_201], %489 {strides = array<i32>} : memref<2x32x32xf32, #tpu.memory_space<vmem>>, vector<1x4x32xf32>,
    %490 = vector.extract_strided_slice %322 {offsets = [12, 0], sizes = [4, 32], strides = [1, 1]} : vector<32x32xf32> to vector<4x32xf32>
    %cst_202 = arith.constant dense<0.000000e+00> : vector<4x32xf32>
    %491 = tpu.matmul %486, %338, %cst_202 {dimension_numbers = #tpu.dot_dimension_numbers<[1], [0], [0], [1], [0, 0, 1, 1], [], []>} : vector<4x32xf32>, vector<32x32xf32>, vector<4x32xf32> -> vector<4x32xf32>
    %492 = arith.addf %490, %491 : vector<4x32xf32>
    %493 = vector.broadcast %344 : vector<1x32xf32> to vector<4x32xf32>
    %494 = arith.addf %492, %493 : vector<4x32xf32>
    %495 = arith.negf %494 : vector<4x32xf32>
    %496 = math.exp %495 : vector<4x32xf32>
    %cst_203 = arith.constant 1.000000e+00 : f32
    %497 = vector.broadcast %cst_203 : f32 to vector<4x32xf32>
    %498 = arith.addf %497, %496 : vector<4x32xf32>
    %499 = arith.divf %497, %498 : vector<4x32xf32>
    %500 = vector.extract_strided_slice %329 {offsets = [12, 0], sizes = [4, 32], strides = [1, 1]} : vector<32x32xf32> to vector<4x32xf32>
    %cst_204 = arith.constant dense<0.000000e+00> : vector<4x32xf32>
    %501 = tpu.matmul %486, %340, %cst_204 {dimension_numbers = #tpu.dot_dimension_numbers<[1], [0], [0], [1], [0, 0, 1, 1], [], []>} : vector<4x32xf32>, vector<32x32xf32>, vector<4x32xf32> -> vector<4x32xf32>
    %502 = arith.addf %500, %501 : vector<4x32xf32>
    %503 = vector.broadcast %346 : vector<1x32xf32> to vector<4x32xf32>
    %504 = arith.addf %502, %503 : vector<4x32xf32>
    %505 = arith.negf %504 : vector<4x32xf32>
    %506 = math.exp %505 : vector<4x32xf32>
    %cst_205 = arith.constant 1.000000e+00 : f32
    %507 = vector.broadcast %cst_205 : f32 to vector<4x32xf32>
    %508 = arith.addf %507, %506 : vector<4x32xf32>
    %509 = arith.divf %507, %508 : vector<4x32xf32>
    %510 = vector.extract_strided_slice %336 {offsets = [12, 0], sizes = [4, 32], strides = [1, 1]} : vector<32x32xf32> to vector<4x32xf32>
    %cst_206 = arith.constant dense<0.000000e+00> : vector<4x32xf32>
    %511 = tpu.matmul %486, %342, %cst_206 {dimension_numbers = #tpu.dot_dimension_numbers<[1], [0], [0], [1], [0, 0, 1, 1], [], []>} : vector<4x32xf32>, vector<32x32xf32>, vector<4x32xf32> -> vector<4x32xf32>
    %512 = vector.broadcast %348 : vector<1x32xf32> to vector<4x32xf32>
    %513 = arith.addf %511, %512 : vector<4x32xf32>
    %514 = arith.mulf %499, %513 : vector<4x32xf32>
    %515 = arith.addf %510, %514 : vector<4x32xf32>
    %516 = math.tanh %515 : vector<4x32xf32>
    %cst_207 = arith.constant 1.000000e+00 : f32
    %517 = vector.broadcast %cst_207 : f32 to vector<4x32xf32>
    %518 = arith.subf %517, %509 : vector<4x32xf32>
    %519 = arith.mulf %518, %516 : vector<4x32xf32>
    %520 = arith.mulf %509, %486 : vector<4x32xf32>
    %521 = arith.addf %519, %520 : vector<4x32xf32>
    %c1_208 = arith.constant 1 : index
    %c12_209 = arith.constant 12 : index
    %c0_210 = arith.constant 0 : index
    %522 = vector.load %arg9[%c1_208, %c12_209, %c0_210] : memref<2x32x32xf32, #tpu.memory_space<vmem>>, vector<1x4x32xf32>
    %523 = vector.shape_cast %522 : vector<1x4x32xf32> to vector<4x32xf32>
    %524 = vector.shape_cast %521 : vector<4x32xf32> to vector<1x4x32xf32>
    tpu.vector_store %arg9[%c1_208, %c12_209, %c0_210], %524 {strides = array<i32>} : memref<2x32x32xf32, #tpu.memory_space<vmem>>, vector<1x4x32xf32>,
    %525 = vector.extract_strided_slice %322 {offsets = [8, 0], sizes = [4, 32], strides = [1, 1]} : vector<32x32xf32> to vector<4x32xf32>
    %cst_211 = arith.constant dense<0.000000e+00> : vector<4x32xf32>
    %526 = tpu.matmul %521, %338, %cst_211 {dimension_numbers = #tpu.dot_dimension_numbers<[1], [0], [0], [1], [0, 0, 1, 1], [], []>} : vector<4x32xf32>, vector<32x32xf32>, vector<4x32xf32> -> vector<4x32xf32>
    %527 = arith.addf %525, %526 : vector<4x32xf32>
    %528 = vector.broadcast %344 : vector<1x32xf32> to vector<4x32xf32>
    %529 = arith.addf %527, %528 : vector<4x32xf32>
    %530 = arith.negf %529 : vector<4x32xf32>
    %531 = math.exp %530 : vector<4x32xf32>
    %cst_212 = arith.constant 1.000000e+00 : f32
    %532 = vector.broadcast %cst_212 : f32 to vector<4x32xf32>
    %533 = arith.addf %532, %531 : vector<4x32xf32>
    %534 = arith.divf %532, %533 : vector<4x32xf32>
    %535 = vector.extract_strided_slice %329 {offsets = [8, 0], sizes = [4, 32], strides = [1, 1]} : vector<32x32xf32> to vector<4x32xf32>
    %cst_213 = arith.constant dense<0.000000e+00> : vector<4x32xf32>
    %536 = tpu.matmul %521, %340, %cst_213 {dimension_numbers = #tpu.dot_dimension_numbers<[1], [0], [0], [1], [0, 0, 1, 1], [], []>} : vector<4x32xf32>, vector<32x32xf32>, vector<4x32xf32> -> vector<4x32xf32>
    %537 = arith.addf %535, %536 : vector<4x32xf32>
    %538 = vector.broadcast %346 : vector<1x32xf32> to vector<4x32xf32>
    %539 = arith.addf %537, %538 : vector<4x32xf32>
    %540 = arith.negf %539 : vector<4x32xf32>
    %541 = math.exp %540 : vector<4x32xf32>
    %cst_214 = arith.constant 1.000000e+00 : f32
    %542 = vector.broadcast %cst_214 : f32 to vector<4x32xf32>
    %543 = arith.addf %542, %541 : vector<4x32xf32>
    %544 = arith.divf %542, %543 : vector<4x32xf32>
    %545 = vector.extract_strided_slice %336 {offsets = [8, 0], sizes = [4, 32], strides = [1, 1]} : vector<32x32xf32> to vector<4x32xf32>
    %cst_215 = arith.constant dense<0.000000e+00> : vector<4x32xf32>
    %546 = tpu.matmul %521, %342, %cst_215 {dimension_numbers = #tpu.dot_dimension_numbers<[1], [0], [0], [1], [0, 0, 1, 1], [], []>} : vector<4x32xf32>, vector<32x32xf32>, vector<4x32xf32> -> vector<4x32xf32>
    %547 = vector.broadcast %348 : vector<1x32xf32> to vector<4x32xf32>
    %548 = arith.addf %546, %547 : vector<4x32xf32>
    %549 = arith.mulf %534, %548 : vector<4x32xf32>
    %550 = arith.addf %545, %549 : vector<4x32xf32>
    %551 = math.tanh %550 : vector<4x32xf32>
    %cst_216 = arith.constant 1.000000e+00 : f32
    %552 = vector.broadcast %cst_216 : f32 to vector<4x32xf32>
    %553 = arith.subf %552, %544 : vector<4x32xf32>
    %554 = arith.mulf %553, %551 : vector<4x32xf32>
    %555 = arith.mulf %544, %521 : vector<4x32xf32>
    %556 = arith.addf %554, %555 : vector<4x32xf32>
    %c1_217 = arith.constant 1 : index
    %c8_218 = arith.constant 8 : index
    %c0_219 = arith.constant 0 : index
    %557 = vector.load %arg9[%c1_217, %c8_218, %c0_219] : memref<2x32x32xf32, #tpu.memory_space<vmem>>, vector<1x4x32xf32>
    %558 = vector.shape_cast %557 : vector<1x4x32xf32> to vector<4x32xf32>
    %559 = vector.shape_cast %556 : vector<4x32xf32> to vector<1x4x32xf32>
    tpu.vector_store %arg9[%c1_217, %c8_218, %c0_219], %559 {strides = array<i32>} : memref<2x32x32xf32, #tpu.memory_space<vmem>>, vector<1x4x32xf32>,
    %560 = vector.extract_strided_slice %322 {offsets = [4, 0], sizes = [4, 32], strides = [1, 1]} : vector<32x32xf32> to vector<4x32xf32>
    %cst_220 = arith.constant dense<0.000000e+00> : vector<4x32xf32>
    %561 = tpu.matmul %556, %338, %cst_220 {dimension_numbers = #tpu.dot_dimension_numbers<[1], [0], [0], [1], [0, 0, 1, 1], [], []>} : vector<4x32xf32>, vector<32x32xf32>, vector<4x32xf32> -> vector<4x32xf32>
    %562 = arith.addf %560, %561 : vector<4x32xf32>
    %563 = vector.broadcast %344 : vector<1x32xf32> to vector<4x32xf32>
    %564 = arith.addf %562, %563 : vector<4x32xf32>
    %565 = arith.negf %564 : vector<4x32xf32>
    %566 = math.exp %565 : vector<4x32xf32>
    %cst_221 = arith.constant 1.000000e+00 : f32
    %567 = vector.broadcast %cst_221 : f32 to vector<4x32xf32>
    %568 = arith.addf %567, %566 : vector<4x32xf32>
    %569 = arith.divf %567, %568 : vector<4x32xf32>
    %570 = vector.extract_strided_slice %329 {offsets = [4, 0], sizes = [4, 32], strides = [1, 1]} : vector<32x32xf32> to vector<4x32xf32>
    %cst_222 = arith.constant dense<0.000000e+00> : vector<4x32xf32>
    %571 = tpu.matmul %556, %340, %cst_222 {dimension_numbers = #tpu.dot_dimension_numbers<[1], [0], [0], [1], [0, 0, 1, 1], [], []>} : vector<4x32xf32>, vector<32x32xf32>, vector<4x32xf32> -> vector<4x32xf32>
    %572 = arith.addf %570, %571 : vector<4x32xf32>
    %573 = vector.broadcast %346 : vector<1x32xf32> to vector<4x32xf32>
    %574 = arith.addf %572, %573 : vector<4x32xf32>
    %575 = arith.negf %574 : vector<4x32xf32>
    %576 = math.exp %575 : vector<4x32xf32>
    %cst_223 = arith.constant 1.000000e+00 : f32
    %577 = vector.broadcast %cst_223 : f32 to vector<4x32xf32>
    %578 = arith.addf %577, %576 : vector<4x32xf32>
    %579 = arith.divf %577, %578 : vector<4x32xf32>
    %580 = vector.extract_strided_slice %336 {offsets = [4, 0], sizes = [4, 32], strides = [1, 1]} : vector<32x32xf32> to vector<4x32xf32>
    %cst_224 = arith.constant dense<0.000000e+00> : vector<4x32xf32>
    %581 = tpu.matmul %556, %342, %cst_224 {dimension_numbers = #tpu.dot_dimension_numbers<[1], [0], [0], [1], [0, 0, 1, 1], [], []>} : vector<4x32xf32>, vector<32x32xf32>, vector<4x32xf32> -> vector<4x32xf32>
    %582 = vector.broadcast %348 : vector<1x32xf32> to vector<4x32xf32>
    %583 = arith.addf %581, %582 : vector<4x32xf32>
    %584 = arith.mulf %569, %583 : vector<4x32xf32>
    %585 = arith.addf %580, %584 : vector<4x32xf32>
    %586 = math.tanh %585 : vector<4x32xf32>
    %cst_225 = arith.constant 1.000000e+00 : f32
    %587 = vector.broadcast %cst_225 : f32 to vector<4x32xf32>
    %588 = arith.subf %587, %579 : vector<4x32xf32>
    %589 = arith.mulf %588, %586 : vector<4x32xf32>
    %590 = arith.mulf %579, %556 : vector<4x32xf32>
    %591 = arith.addf %589, %590 : vector<4x32xf32>
    %c1_226 = arith.constant 1 : index
    %c4_227 = arith.constant 4 : index
    %c0_228 = arith.constant 0 : index
    %592 = vector.load %arg9[%c1_226, %c4_227, %c0_228] : memref<2x32x32xf32, #tpu.memory_space<vmem>>, vector<1x4x32xf32>
    %593 = vector.shape_cast %592 : vector<1x4x32xf32> to vector<4x32xf32>
    %594 = vector.shape_cast %591 : vector<4x32xf32> to vector<1x4x32xf32>
    tpu.vector_store %arg9[%c1_226, %c4_227, %c0_228], %594 {strides = array<i32>} : memref<2x32x32xf32, #tpu.memory_space<vmem>>, vector<1x4x32xf32>,
    %595 = vector.extract_strided_slice %322 {offsets = [0, 0], sizes = [4, 32], strides = [1, 1]} : vector<32x32xf32> to vector<4x32xf32>
    %cst_229 = arith.constant dense<0.000000e+00> : vector<4x32xf32>
    %596 = tpu.matmul %591, %338, %cst_229 {dimension_numbers = #tpu.dot_dimension_numbers<[1], [0], [0], [1], [0, 0, 1, 1], [], []>} : vector<4x32xf32>, vector<32x32xf32>, vector<4x32xf32> -> vector<4x32xf32>
    %597 = arith.addf %595, %596 : vector<4x32xf32>
    %598 = vector.broadcast %344 : vector<1x32xf32> to vector<4x32xf32>
    %599 = arith.addf %597, %598 : vector<4x32xf32>
    %600 = arith.negf %599 : vector<4x32xf32>
    %601 = math.exp %600 : vector<4x32xf32>
    %cst_230 = arith.constant 1.000000e+00 : f32
    %602 = vector.broadcast %cst_230 : f32 to vector<4x32xf32>
    %603 = arith.addf %602, %601 : vector<4x32xf32>
    %604 = arith.divf %602, %603 : vector<4x32xf32>
    %605 = vector.extract_strided_slice %329 {offsets = [0, 0], sizes = [4, 32], strides = [1, 1]} : vector<32x32xf32> to vector<4x32xf32>
    %cst_231 = arith.constant dense<0.000000e+00> : vector<4x32xf32>
    %606 = tpu.matmul %591, %340, %cst_231 {dimension_numbers = #tpu.dot_dimension_numbers<[1], [0], [0], [1], [0, 0, 1, 1], [], []>} : vector<4x32xf32>, vector<32x32xf32>, vector<4x32xf32> -> vector<4x32xf32>
    %607 = arith.addf %605, %606 : vector<4x32xf32>
    %608 = vector.broadcast %346 : vector<1x32xf32> to vector<4x32xf32>
    %609 = arith.addf %607, %608 : vector<4x32xf32>
    %610 = arith.negf %609 : vector<4x32xf32>
    %611 = math.exp %610 : vector<4x32xf32>
    %cst_232 = arith.constant 1.000000e+00 : f32
    %612 = vector.broadcast %cst_232 : f32 to vector<4x32xf32>
    %613 = arith.addf %612, %611 : vector<4x32xf32>
    %614 = arith.divf %612, %613 : vector<4x32xf32>
    %615 = vector.extract_strided_slice %336 {offsets = [0, 0], sizes = [4, 32], strides = [1, 1]} : vector<32x32xf32> to vector<4x32xf32>
    %cst_233 = arith.constant dense<0.000000e+00> : vector<4x32xf32>
    %616 = tpu.matmul %591, %342, %cst_233 {dimension_numbers = #tpu.dot_dimension_numbers<[1], [0], [0], [1], [0, 0, 1, 1], [], []>} : vector<4x32xf32>, vector<32x32xf32>, vector<4x32xf32> -> vector<4x32xf32>
    %617 = vector.broadcast %348 : vector<1x32xf32> to vector<4x32xf32>
    %618 = arith.addf %616, %617 : vector<4x32xf32>
    %619 = arith.mulf %604, %618 : vector<4x32xf32>
    %620 = arith.addf %615, %619 : vector<4x32xf32>
    %621 = math.tanh %620 : vector<4x32xf32>
    %cst_234 = arith.constant 1.000000e+00 : f32
    %622 = vector.broadcast %cst_234 : f32 to vector<4x32xf32>
    %623 = arith.subf %622, %614 : vector<4x32xf32>
    %624 = arith.mulf %623, %621 : vector<4x32xf32>
    %625 = arith.mulf %614, %591 : vector<4x32xf32>
    %626 = arith.addf %624, %625 : vector<4x32xf32>
    %c1_235 = arith.constant 1 : index
    %c0_236 = arith.constant 0 : index
    %c0_237 = arith.constant 0 : index
    %627 = vector.load %arg9[%c1_235, %c0_236, %c0_237] : memref<2x32x32xf32, #tpu.memory_space<vmem>>, vector<1x4x32xf32>
    %628 = vector.shape_cast %627 : vector<1x4x32xf32> to vector<4x32xf32>
    %629 = vector.shape_cast %626 : vector<4x32xf32> to vector<1x4x32xf32>
    tpu.vector_store %arg9[%c1_235, %c0_236, %c0_237], %629 {strides = array<i32>} : memref<2x32x32xf32, #tpu.memory_space<vmem>>, vector<1x4x32xf32>,
    %c0_238 = arith.constant 0 : index
    %c0_239 = arith.constant 0 : index
    %c0_240 = arith.constant 0 : index
    %630 = vector.load %arg9[%c0_238, %c0_239, %c0_240] : memref<2x32x32xf32, #tpu.memory_space<vmem>>, vector<1x32x32xf32>
    %631 = vector.shape_cast %630 : vector<1x32x32xf32> to vector<32x32xf32>
    %c0_241 = arith.constant 0 : index
    %c0_242 = arith.constant 0 : index
    %c0_243 = arith.constant 0 : index
    %c0_244 = arith.constant 0 : index
    %632 = vector.load %arg6[%c0_241, %c0_242, %c0_243, %c0_244] : memref<1x2x32x16xf32, #tpu.memory_space<vmem>>, vector<1x1x32x16xf32>
    %633 = vector.shape_cast %632 : vector<1x1x32x16xf32> to vector<32x16xf32>
    %cst_245 = arith.constant dense<0.000000e+00> : vector<32x16xf32>
    %634 = tpu.matmul %631, %633, %cst_245 {dimension_numbers = #tpu.dot_dimension_numbers<[1], [0], [0], [1], [0, 0, 1, 1], [], []>} : vector<32x32xf32>, vector<32x16xf32>, vector<32x16xf32> -> vector<32x16xf32>
    %c1_246 = arith.constant 1 : index
    %c0_247 = arith.constant 0 : index
    %c0_248 = arith.constant 0 : index
    %635 = vector.load %arg9[%c1_246, %c0_247, %c0_248] : memref<2x32x32xf32, #tpu.memory_space<vmem>>, vector<1x32x32xf32>
    %636 = vector.shape_cast %635 : vector<1x32x32xf32> to vector<32x32xf32>
    %c0_249 = arith.constant 0 : index
    %c1_250 = arith.constant 1 : index
    %c0_251 = arith.constant 0 : index
    %c0_252 = arith.constant 0 : index
    %637 = vector.load %arg6[%c0_249, %c1_250, %c0_251, %c0_252] : memref<1x2x32x16xf32, #tpu.memory_space<vmem>>, vector<1x1x32x16xf32>
    %638 = vector.shape_cast %637 : vector<1x1x32x16xf32> to vector<32x16xf32>
    %cst_253 = arith.constant dense<0.000000e+00> : vector<32x16xf32>
    %639 = tpu.matmul %636, %638, %cst_253 {dimension_numbers = #tpu.dot_dimension_numbers<[1], [0], [0], [1], [0, 0, 1, 1], [], []>} : vector<32x32xf32>, vector<32x16xf32>, vector<32x16xf32> -> vector<32x16xf32>
    %640 = arith.addf %634, %639 : vector<32x16xf32>
    %c0_254 = arith.constant 0 : index
    %c0_255 = arith.constant 0 : index
    %c0_256 = arith.constant 0 : index
    %641 = vector.load %arg7[%c0_254, %c0_255, %c0_256] : memref<1x1x16xf32, #tpu.memory_space<vmem>>, vector<1x1x16xf32>
    %642 = vector.shape_cast %641 : vector<1x1x16xf32> to vector<1x16xf32>
    %643 = vector.broadcast %642 : vector<1x16xf32> to vector<32x16xf32>
    %644 = arith.addf %640, %643 : vector<32x16xf32>
    %c0_257 = arith.constant 0 : index
    %c0_258 = arith.constant 0 : index
    %c0_259 = arith.constant 0 : index
    %645 = vector.load %arg8[%c0_257, %c0_258, %c0_259] : memref<1x32x16xf32, #tpu.memory_space<vmem>>, vector<1x32x16xf32>
    %646 = vector.shape_cast %645 : vector<1x32x16xf32> to vector<32x16xf32>
    %647 = vector.shape_cast %644 : vector<32x16xf32> to vector<1x32x16xf32>
    tpu.vector_store %arg8[%c0_257, %c0_258, %c0_259], %647 {strides = array<i32>} : memref<1x32x16xf32, #tpu.memory_space<vmem>>, vector<1x32x16xf32>,
    return
  }
  func.func @transform_0(%arg0: i32) -> (i32, i32, i32) {
    %c0_i32 = arith.constant 0 : i32
    %c0_i32_0 = arith.constant 0 : i32
    %c0_i32_1 = arith.constant 0 : i32
    return %arg0, %c0_i32, %c0_i32_0 : i32, i32, i32
  }
  func.func @transform_1(%arg0: i32) -> (i32, i32, i32, i32) {
    %c0_i32 = arith.constant 0 : i32
    %c0_i32_0 = arith.constant 0 : i32
    %c0_i32_1 = arith.constant 0 : i32
    %c0_i32_2 = arith.constant 0 : i32
    return %arg0, %c0_i32, %c0_i32_0, %c0_i32_1 : i32, i32, i32, i32
  }
  func.func @transform_2(%arg0: i32) -> (i32, i32, i32, i32) {
    %c0_i32 = arith.constant 0 : i32
    %c0_i32_0 = arith.constant 0 : i32
    %c0_i32_1 = arith.constant 0 : i32
    %c0_i32_2 = arith.constant 0 : i32
    return %arg0, %c0_i32, %c0_i32_0, %c0_i32_1 : i32, i32, i32, i32
  }
  func.func @transform_3(%arg0: i32) -> (i32, i32, i32, i32) {
    %c0_i32 = arith.constant 0 : i32
    %c0_i32_0 = arith.constant 0 : i32
    %c0_i32_1 = arith.constant 0 : i32
    %c0_i32_2 = arith.constant 0 : i32
    return %arg0, %c0_i32, %c0_i32_0, %c0_i32_1 : i32, i32, i32, i32
  }
  func.func @transform_4(%arg0: i32) -> (i32, i32, i32, i32) {
    %c0_i32 = arith.constant 0 : i32
    %c0_i32_0 = arith.constant 0 : i32
    %c0_i32_1 = arith.constant 0 : i32
    %c0_i32_2 = arith.constant 0 : i32
    return %arg0, %c0_i32, %c0_i32_0, %c0_i32_1 : i32, i32, i32, i32
  }
  func.func @transform_5(%arg0: i32) -> (i32, i32, i32, i32) {
    %c0_i32 = arith.constant 0 : i32
    %c0_i32_0 = arith.constant 0 : i32
    %c0_i32_1 = arith.constant 0 : i32
    %c0_i32_2 = arith.constant 0 : i32
    return %arg0, %c0_i32, %c0_i32_0, %c0_i32_1 : i32, i32, i32, i32
  }
  func.func @transform_6(%arg0: i32) -> (i32, i32, i32) {
    %c0_i32 = arith.constant 0 : i32
    %c0_i32_0 = arith.constant 0 : i32
    %c0_i32_1 = arith.constant 0 : i32
    return %arg0, %c0_i32, %c0_i32_0 : i32, i32, i32
  }
  func.func @transform_7(%arg0: i32) -> (i32, i32, i32) {
    %c0_i32 = arith.constant 0 : i32
    %c0_i32_0 = arith.constant 0 : i32
    %c0_i32_1 = arith.constant 0 : i32
    return %arg0, %c0_i32, %c0_i32_0 : i32, i32, i32
  }
}

module attributes {stable_mosaic.version = 11 : i64} {
  func.func @_layer2_tail_kernel(%arg0: memref<3x32x16xf32, #tpu.memory_space<vmem>>, %arg1: memref<18x16x32xf32, #tpu.memory_space<vmem>>, %arg2: memref<6x32x32xf32, #tpu.memory_space<vmem>>, %arg3: memref<6x1x32xf32, #tpu.memory_space<vmem>>, %arg4: memref<6x1x32xf32, #tpu.memory_space<vmem>>, %arg5: memref<2x32x16xf32, #tpu.memory_space<vmem>>, %arg6: memref<1x16xf32, #tpu.memory_space<vmem>>, %arg7: memref<4x16x128xf32, #tpu.memory_space<vmem>>, %arg8: memref<1x128xf32, #tpu.memory_space<vmem>>, %arg9: memref<8x128xf32, #tpu.memory_space<vmem>>, %arg10: memref<2x8x4x32xf32, #tpu.memory_space<vmem>>) attributes {dimension_semantics = [], scalar_prefetch = 0 : i64, scratch_operands = 1 : i64, tpu.core_type = #tpu.core_type<tc>} {
    %c0 = arith.constant 0 : index
    %c0_0 = arith.constant 0 : index
    %c0_1 = arith.constant 0 : index
    %0 = vector.load %arg0[%c0, %c0_0, %c0_1] : memref<3x32x16xf32, #tpu.memory_space<vmem>>, vector<1x32x16xf32>
    %1 = vector.shape_cast %0 : vector<1x32x16xf32> to vector<32x16xf32>
    %c0_2 = arith.constant 0 : index
    %c0_3 = arith.constant 0 : index
    %c0_4 = arith.constant 0 : index
    %2 = vector.load %arg1[%c0_2, %c0_3, %c0_4] : memref<18x16x32xf32, #tpu.memory_space<vmem>>, vector<1x16x32xf32>
    %3 = vector.shape_cast %2 : vector<1x16x32xf32> to vector<16x32xf32>
    %cst = arith.constant dense<0.000000e+00> : vector<32x32xf32>
    %4 = tpu.matmul %1, %3, %cst {dimension_numbers = #tpu.dot_dimension_numbers<[1], [0], [0], [1], [0, 0, 1, 1], [], []>} : vector<32x16xf32>, vector<16x32xf32>, vector<32x32xf32> -> vector<32x32xf32>
    %c1 = arith.constant 1 : index
    %c0_5 = arith.constant 0 : index
    %c0_6 = arith.constant 0 : index
    %5 = vector.load %arg0[%c1, %c0_5, %c0_6] : memref<3x32x16xf32, #tpu.memory_space<vmem>>, vector<1x32x16xf32>
    %6 = vector.shape_cast %5 : vector<1x32x16xf32> to vector<32x16xf32>
    %c1_7 = arith.constant 1 : index
    %c0_8 = arith.constant 0 : index
    %c0_9 = arith.constant 0 : index
    %7 = vector.load %arg1[%c1_7, %c0_8, %c0_9] : memref<18x16x32xf32, #tpu.memory_space<vmem>>, vector<1x16x32xf32>
    %8 = vector.shape_cast %7 : vector<1x16x32xf32> to vector<16x32xf32>
    %cst_10 = arith.constant dense<0.000000e+00> : vector<32x32xf32>
    %9 = tpu.matmul %6, %8, %cst_10 {dimension_numbers = #tpu.dot_dimension_numbers<[1], [0], [0], [1], [0, 0, 1, 1], [], []>} : vector<32x16xf32>, vector<16x32xf32>, vector<32x32xf32> -> vector<32x32xf32>
    %10 = arith.addf %4, %9 : vector<32x32xf32>
    %c2 = arith.constant 2 : index
    %c0_11 = arith.constant 0 : index
    %c0_12 = arith.constant 0 : index
    %11 = vector.load %arg0[%c2, %c0_11, %c0_12] : memref<3x32x16xf32, #tpu.memory_space<vmem>>, vector<1x32x16xf32>
    %12 = vector.shape_cast %11 : vector<1x32x16xf32> to vector<32x16xf32>
    %c2_13 = arith.constant 2 : index
    %c0_14 = arith.constant 0 : index
    %c0_15 = arith.constant 0 : index
    %13 = vector.load %arg1[%c2_13, %c0_14, %c0_15] : memref<18x16x32xf32, #tpu.memory_space<vmem>>, vector<1x16x32xf32>
    %14 = vector.shape_cast %13 : vector<1x16x32xf32> to vector<16x32xf32>
    %cst_16 = arith.constant dense<0.000000e+00> : vector<32x32xf32>
    %15 = tpu.matmul %12, %14, %cst_16 {dimension_numbers = #tpu.dot_dimension_numbers<[1], [0], [0], [1], [0, 0, 1, 1], [], []>} : vector<32x16xf32>, vector<16x32xf32>, vector<32x32xf32> -> vector<32x32xf32>
    %16 = arith.addf %10, %15 : vector<32x32xf32>
    %c0_17 = arith.constant 0 : index
    %c0_18 = arith.constant 0 : index
    %c0_19 = arith.constant 0 : index
    %17 = vector.load %arg3[%c0_17, %c0_18, %c0_19] : memref<6x1x32xf32, #tpu.memory_space<vmem>>, vector<1x1x32xf32>
    %18 = vector.shape_cast %17 : vector<1x1x32xf32> to vector<1x32xf32>
    %19 = vector.broadcast %18 : vector<1x32xf32> to vector<32x32xf32>
    %20 = arith.addf %16, %19 : vector<32x32xf32>
    %c0_20 = arith.constant 0 : index
    %c0_21 = arith.constant 0 : index
    %c0_22 = arith.constant 0 : index
    %21 = vector.load %arg0[%c0_20, %c0_21, %c0_22] : memref<3x32x16xf32, #tpu.memory_space<vmem>>, vector<1x32x16xf32>
    %22 = vector.shape_cast %21 : vector<1x32x16xf32> to vector<32x16xf32>
    %c3 = arith.constant 3 : index
    %c0_23 = arith.constant 0 : index
    %c0_24 = arith.constant 0 : index
    %23 = vector.load %arg1[%c3, %c0_23, %c0_24] : memref<18x16x32xf32, #tpu.memory_space<vmem>>, vector<1x16x32xf32>
    %24 = vector.shape_cast %23 : vector<1x16x32xf32> to vector<16x32xf32>
    %cst_25 = arith.constant dense<0.000000e+00> : vector<32x32xf32>
    %25 = tpu.matmul %22, %24, %cst_25 {dimension_numbers = #tpu.dot_dimension_numbers<[1], [0], [0], [1], [0, 0, 1, 1], [], []>} : vector<32x16xf32>, vector<16x32xf32>, vector<32x32xf32> -> vector<32x32xf32>
    %c1_26 = arith.constant 1 : index
    %c0_27 = arith.constant 0 : index
    %c0_28 = arith.constant 0 : index
    %26 = vector.load %arg0[%c1_26, %c0_27, %c0_28] : memref<3x32x16xf32, #tpu.memory_space<vmem>>, vector<1x32x16xf32>
    %27 = vector.shape_cast %26 : vector<1x32x16xf32> to vector<32x16xf32>
    %c4 = arith.constant 4 : index
    %c0_29 = arith.constant 0 : index
    %c0_30 = arith.constant 0 : index
    %28 = vector.load %arg1[%c4, %c0_29, %c0_30] : memref<18x16x32xf32, #tpu.memory_space<vmem>>, vector<1x16x32xf32>
    %29 = vector.shape_cast %28 : vector<1x16x32xf32> to vector<16x32xf32>
    %cst_31 = arith.constant dense<0.000000e+00> : vector<32x32xf32>
    %30 = tpu.matmul %27, %29, %cst_31 {dimension_numbers = #tpu.dot_dimension_numbers<[1], [0], [0], [1], [0, 0, 1, 1], [], []>} : vector<32x16xf32>, vector<16x32xf32>, vector<32x32xf32> -> vector<32x32xf32>
    %31 = arith.addf %25, %30 : vector<32x32xf32>
    %c2_32 = arith.constant 2 : index
    %c0_33 = arith.constant 0 : index
    %c0_34 = arith.constant 0 : index
    %32 = vector.load %arg0[%c2_32, %c0_33, %c0_34] : memref<3x32x16xf32, #tpu.memory_space<vmem>>, vector<1x32x16xf32>
    %33 = vector.shape_cast %32 : vector<1x32x16xf32> to vector<32x16xf32>
    %c5 = arith.constant 5 : index
    %c0_35 = arith.constant 0 : index
    %c0_36 = arith.constant 0 : index
    %34 = vector.load %arg1[%c5, %c0_35, %c0_36] : memref<18x16x32xf32, #tpu.memory_space<vmem>>, vector<1x16x32xf32>
    %35 = vector.shape_cast %34 : vector<1x16x32xf32> to vector<16x32xf32>
    %cst_37 = arith.constant dense<0.000000e+00> : vector<32x32xf32>
    %36 = tpu.matmul %33, %35, %cst_37 {dimension_numbers = #tpu.dot_dimension_numbers<[1], [0], [0], [1], [0, 0, 1, 1], [], []>} : vector<32x16xf32>, vector<16x32xf32>, vector<32x32xf32> -> vector<32x32xf32>
    %37 = arith.addf %31, %36 : vector<32x32xf32>
    %c1_38 = arith.constant 1 : index
    %c0_39 = arith.constant 0 : index
    %c0_40 = arith.constant 0 : index
    %38 = vector.load %arg3[%c1_38, %c0_39, %c0_40] : memref<6x1x32xf32, #tpu.memory_space<vmem>>, vector<1x1x32xf32>
    %39 = vector.shape_cast %38 : vector<1x1x32xf32> to vector<1x32xf32>
    %40 = vector.broadcast %39 : vector<1x32xf32> to vector<32x32xf32>
    %41 = arith.addf %37, %40 : vector<32x32xf32>
    %c0_41 = arith.constant 0 : index
    %c0_42 = arith.constant 0 : index
    %c0_43 = arith.constant 0 : index
    %42 = vector.load %arg0[%c0_41, %c0_42, %c0_43] : memref<3x32x16xf32, #tpu.memory_space<vmem>>, vector<1x32x16xf32>
    %43 = vector.shape_cast %42 : vector<1x32x16xf32> to vector<32x16xf32>
    %c6 = arith.constant 6 : index
    %c0_44 = arith.constant 0 : index
    %c0_45 = arith.constant 0 : index
    %44 = vector.load %arg1[%c6, %c0_44, %c0_45] : memref<18x16x32xf32, #tpu.memory_space<vmem>>, vector<1x16x32xf32>
    %45 = vector.shape_cast %44 : vector<1x16x32xf32> to vector<16x32xf32>
    %cst_46 = arith.constant dense<0.000000e+00> : vector<32x32xf32>
    %46 = tpu.matmul %43, %45, %cst_46 {dimension_numbers = #tpu.dot_dimension_numbers<[1], [0], [0], [1], [0, 0, 1, 1], [], []>} : vector<32x16xf32>, vector<16x32xf32>, vector<32x32xf32> -> vector<32x32xf32>
    %c1_47 = arith.constant 1 : index
    %c0_48 = arith.constant 0 : index
    %c0_49 = arith.constant 0 : index
    %47 = vector.load %arg0[%c1_47, %c0_48, %c0_49] : memref<3x32x16xf32, #tpu.memory_space<vmem>>, vector<1x32x16xf32>
    %48 = vector.shape_cast %47 : vector<1x32x16xf32> to vector<32x16xf32>
    %c7 = arith.constant 7 : index
    %c0_50 = arith.constant 0 : index
    %c0_51 = arith.constant 0 : index
    %49 = vector.load %arg1[%c7, %c0_50, %c0_51] : memref<18x16x32xf32, #tpu.memory_space<vmem>>, vector<1x16x32xf32>
    %50 = vector.shape_cast %49 : vector<1x16x32xf32> to vector<16x32xf32>
    %cst_52 = arith.constant dense<0.000000e+00> : vector<32x32xf32>
    %51 = tpu.matmul %48, %50, %cst_52 {dimension_numbers = #tpu.dot_dimension_numbers<[1], [0], [0], [1], [0, 0, 1, 1], [], []>} : vector<32x16xf32>, vector<16x32xf32>, vector<32x32xf32> -> vector<32x32xf32>
    %52 = arith.addf %46, %51 : vector<32x32xf32>
    %c2_53 = arith.constant 2 : index
    %c0_54 = arith.constant 0 : index
    %c0_55 = arith.constant 0 : index
    %53 = vector.load %arg0[%c2_53, %c0_54, %c0_55] : memref<3x32x16xf32, #tpu.memory_space<vmem>>, vector<1x32x16xf32>
    %54 = vector.shape_cast %53 : vector<1x32x16xf32> to vector<32x16xf32>
    %c8 = arith.constant 8 : index
    %c0_56 = arith.constant 0 : index
    %c0_57 = arith.constant 0 : index
    %55 = vector.load %arg1[%c8, %c0_56, %c0_57] : memref<18x16x32xf32, #tpu.memory_space<vmem>>, vector<1x16x32xf32>
    %56 = vector.shape_cast %55 : vector<1x16x32xf32> to vector<16x32xf32>
    %cst_58 = arith.constant dense<0.000000e+00> : vector<32x32xf32>
    %57 = tpu.matmul %54, %56, %cst_58 {dimension_numbers = #tpu.dot_dimension_numbers<[1], [0], [0], [1], [0, 0, 1, 1], [], []>} : vector<32x16xf32>, vector<16x32xf32>, vector<32x32xf32> -> vector<32x32xf32>
    %58 = arith.addf %52, %57 : vector<32x32xf32>
    %c2_59 = arith.constant 2 : index
    %c0_60 = arith.constant 0 : index
    %c0_61 = arith.constant 0 : index
    %59 = vector.load %arg3[%c2_59, %c0_60, %c0_61] : memref<6x1x32xf32, #tpu.memory_space<vmem>>, vector<1x1x32xf32>
    %60 = vector.shape_cast %59 : vector<1x1x32xf32> to vector<1x32xf32>
    %61 = vector.broadcast %60 : vector<1x32xf32> to vector<32x32xf32>
    %62 = arith.addf %58, %61 : vector<32x32xf32>
    %c0_62 = arith.constant 0 : index
    %c0_63 = arith.constant 0 : index
    %c0_64 = arith.constant 0 : index
    %63 = vector.load %arg2[%c0_62, %c0_63, %c0_64] : memref<6x32x32xf32, #tpu.memory_space<vmem>>, vector<1x32x32xf32>
    %64 = vector.shape_cast %63 : vector<1x32x32xf32> to vector<32x32xf32>
    %c1_65 = arith.constant 1 : index
    %c0_66 = arith.constant 0 : index
    %c0_67 = arith.constant 0 : index
    %65 = vector.load %arg2[%c1_65, %c0_66, %c0_67] : memref<6x32x32xf32, #tpu.memory_space<vmem>>, vector<1x32x32xf32>
    %66 = vector.shape_cast %65 : vector<1x32x32xf32> to vector<32x32xf32>
    %c2_68 = arith.constant 2 : index
    %c0_69 = arith.constant 0 : index
    %c0_70 = arith.constant 0 : index
    %67 = vector.load %arg2[%c2_68, %c0_69, %c0_70] : memref<6x32x32xf32, #tpu.memory_space<vmem>>, vector<1x32x32xf32>
    %68 = vector.shape_cast %67 : vector<1x32x32xf32> to vector<32x32xf32>
    %c0_71 = arith.constant 0 : index
    %c0_72 = arith.constant 0 : index
    %c0_73 = arith.constant 0 : index
    %69 = vector.load %arg4[%c0_71, %c0_72, %c0_73] : memref<6x1x32xf32, #tpu.memory_space<vmem>>, vector<1x1x32xf32>
    %70 = vector.shape_cast %69 : vector<1x1x32xf32> to vector<1x32xf32>
    %c1_74 = arith.constant 1 : index
    %c0_75 = arith.constant 0 : index
    %c0_76 = arith.constant 0 : index
    %71 = vector.load %arg4[%c1_74, %c0_75, %c0_76] : memref<6x1x32xf32, #tpu.memory_space<vmem>>, vector<1x1x32xf32>
    %72 = vector.shape_cast %71 : vector<1x1x32xf32> to vector<1x32xf32>
    %c2_77 = arith.constant 2 : index
    %c0_78 = arith.constant 0 : index
    %c0_79 = arith.constant 0 : index
    %73 = vector.load %arg4[%c2_77, %c0_78, %c0_79] : memref<6x1x32xf32, #tpu.memory_space<vmem>>, vector<1x1x32xf32>
    %74 = vector.shape_cast %73 : vector<1x1x32xf32> to vector<1x32xf32>
    %cst_80 = arith.constant 0.000000e+00 : f32
    %75 = vector.broadcast %cst_80 : f32 to vector<4x32xf32>
    %76 = vector.extract_strided_slice %20 {offsets = [0, 0], sizes = [4, 32], strides = [1, 1]} : vector<32x32xf32> to vector<4x32xf32>
    %cst_81 = arith.constant dense<0.000000e+00> : vector<4x32xf32>
    %77 = tpu.matmul %75, %64, %cst_81 {dimension_numbers = #tpu.dot_dimension_numbers<[1], [0], [0], [1], [0, 0, 1, 1], [], []>} : vector<4x32xf32>, vector<32x32xf32>, vector<4x32xf32> -> vector<4x32xf32>
    %78 = arith.addf %76, %77 : vector<4x32xf32>
    %79 = vector.broadcast %70 : vector<1x32xf32> to vector<4x32xf32>
    %80 = arith.addf %78, %79 : vector<4x32xf32>
    %81 = arith.negf %80 : vector<4x32xf32>
    %82 = math.exp %81 : vector<4x32xf32>
    %cst_82 = arith.constant 1.000000e+00 : f32
    %83 = vector.broadcast %cst_82 : f32 to vector<4x32xf32>
    %84 = arith.addf %83, %82 : vector<4x32xf32>
    %85 = arith.divf %83, %84 : vector<4x32xf32>
    %86 = vector.extract_strided_slice %41 {offsets = [0, 0], sizes = [4, 32], strides = [1, 1]} : vector<32x32xf32> to vector<4x32xf32>
    %cst_83 = arith.constant dense<0.000000e+00> : vector<4x32xf32>
    %87 = tpu.matmul %75, %66, %cst_83 {dimension_numbers = #tpu.dot_dimension_numbers<[1], [0], [0], [1], [0, 0, 1, 1], [], []>} : vector<4x32xf32>, vector<32x32xf32>, vector<4x32xf32> -> vector<4x32xf32>
    %88 = arith.addf %86, %87 : vector<4x32xf32>
    %89 = vector.broadcast %72 : vector<1x32xf32> to vector<4x32xf32>
    %90 = arith.addf %88, %89 : vector<4x32xf32>
    %91 = arith.negf %90 : vector<4x32xf32>
    %92 = math.exp %91 : vector<4x32xf32>
    %cst_84 = arith.constant 1.000000e+00 : f32
    %93 = vector.broadcast %cst_84 : f32 to vector<4x32xf32>
    %94 = arith.addf %93, %92 : vector<4x32xf32>
    %95 = arith.divf %93, %94 : vector<4x32xf32>
    %96 = vector.extract_strided_slice %62 {offsets = [0, 0], sizes = [4, 32], strides = [1, 1]} : vector<32x32xf32> to vector<4x32xf32>
    %cst_85 = arith.constant dense<0.000000e+00> : vector<4x32xf32>
    %97 = tpu.matmul %75, %68, %cst_85 {dimension_numbers = #tpu.dot_dimension_numbers<[1], [0], [0], [1], [0, 0, 1, 1], [], []>} : vector<4x32xf32>, vector<32x32xf32>, vector<4x32xf32> -> vector<4x32xf32>
    %98 = vector.broadcast %74 : vector<1x32xf32> to vector<4x32xf32>
    %99 = arith.addf %97, %98 : vector<4x32xf32>
    %100 = arith.mulf %85, %99 : vector<4x32xf32>
    %101 = arith.addf %96, %100 : vector<4x32xf32>
    %102 = math.tanh %101 : vector<4x32xf32>
    %cst_86 = arith.constant 1.000000e+00 : f32
    %103 = vector.broadcast %cst_86 : f32 to vector<4x32xf32>
    %104 = arith.subf %103, %95 : vector<4x32xf32>
    %105 = arith.mulf %104, %102 : vector<4x32xf32>
    %106 = arith.mulf %95, %75 : vector<4x32xf32>
    %107 = arith.addf %105, %106 : vector<4x32xf32>
    %c0_87 = arith.constant 0 : index
    %c0_88 = arith.constant 0 : index
    %c0_89 = arith.constant 0 : index
    %c0_90 = arith.constant 0 : index
    %108 = vector.load %arg10[%c0_87, %c0_88, %c0_89, %c0_90] : memref<2x8x4x32xf32, #tpu.memory_space<vmem>>, vector<1x1x4x32xf32>
    %109 = vector.shape_cast %108 : vector<1x1x4x32xf32> to vector<4x32xf32>
    %110 = vector.shape_cast %107 : vector<4x32xf32> to vector<1x1x4x32xf32>
    tpu.vector_store %arg10[%c0_87, %c0_88, %c0_89, %c0_90], %110 {strides = array<i32>} : memref<2x8x4x32xf32, #tpu.memory_space<vmem>>, vector<1x1x4x32xf32>,
    %111 = vector.extract_strided_slice %20 {offsets = [4, 0], sizes = [4, 32], strides = [1, 1]} : vector<32x32xf32> to vector<4x32xf32>
    %cst_91 = arith.constant dense<0.000000e+00> : vector<4x32xf32>
    %112 = tpu.matmul %107, %64, %cst_91 {dimension_numbers = #tpu.dot_dimension_numbers<[1], [0], [0], [1], [0, 0, 1, 1], [], []>} : vector<4x32xf32>, vector<32x32xf32>, vector<4x32xf32> -> vector<4x32xf32>
    %113 = arith.addf %111, %112 : vector<4x32xf32>
    %114 = vector.broadcast %70 : vector<1x32xf32> to vector<4x32xf32>
    %115 = arith.addf %113, %114 : vector<4x32xf32>
    %116 = arith.negf %115 : vector<4x32xf32>
    %117 = math.exp %116 : vector<4x32xf32>
    %cst_92 = arith.constant 1.000000e+00 : f32
    %118 = vector.broadcast %cst_92 : f32 to vector<4x32xf32>
    %119 = arith.addf %118, %117 : vector<4x32xf32>
    %120 = arith.divf %118, %119 : vector<4x32xf32>
    %121 = vector.extract_strided_slice %41 {offsets = [4, 0], sizes = [4, 32], strides = [1, 1]} : vector<32x32xf32> to vector<4x32xf32>
    %cst_93 = arith.constant dense<0.000000e+00> : vector<4x32xf32>
    %122 = tpu.matmul %107, %66, %cst_93 {dimension_numbers = #tpu.dot_dimension_numbers<[1], [0], [0], [1], [0, 0, 1, 1], [], []>} : vector<4x32xf32>, vector<32x32xf32>, vector<4x32xf32> -> vector<4x32xf32>
    %123 = arith.addf %121, %122 : vector<4x32xf32>
    %124 = vector.broadcast %72 : vector<1x32xf32> to vector<4x32xf32>
    %125 = arith.addf %123, %124 : vector<4x32xf32>
    %126 = arith.negf %125 : vector<4x32xf32>
    %127 = math.exp %126 : vector<4x32xf32>
    %cst_94 = arith.constant 1.000000e+00 : f32
    %128 = vector.broadcast %cst_94 : f32 to vector<4x32xf32>
    %129 = arith.addf %128, %127 : vector<4x32xf32>
    %130 = arith.divf %128, %129 : vector<4x32xf32>
    %131 = vector.extract_strided_slice %62 {offsets = [4, 0], sizes = [4, 32], strides = [1, 1]} : vector<32x32xf32> to vector<4x32xf32>
    %cst_95 = arith.constant dense<0.000000e+00> : vector<4x32xf32>
    %132 = tpu.matmul %107, %68, %cst_95 {dimension_numbers = #tpu.dot_dimension_numbers<[1], [0], [0], [1], [0, 0, 1, 1], [], []>} : vector<4x32xf32>, vector<32x32xf32>, vector<4x32xf32> -> vector<4x32xf32>
    %133 = vector.broadcast %74 : vector<1x32xf32> to vector<4x32xf32>
    %134 = arith.addf %132, %133 : vector<4x32xf32>
    %135 = arith.mulf %120, %134 : vector<4x32xf32>
    %136 = arith.addf %131, %135 : vector<4x32xf32>
    %137 = math.tanh %136 : vector<4x32xf32>
    %cst_96 = arith.constant 1.000000e+00 : f32
    %138 = vector.broadcast %cst_96 : f32 to vector<4x32xf32>
    %139 = arith.subf %138, %130 : vector<4x32xf32>
    %140 = arith.mulf %139, %137 : vector<4x32xf32>
    %141 = arith.mulf %130, %107 : vector<4x32xf32>
    %142 = arith.addf %140, %141 : vector<4x32xf32>
    %c0_97 = arith.constant 0 : index
    %c1_98 = arith.constant 1 : index
    %c0_99 = arith.constant 0 : index
    %c0_100 = arith.constant 0 : index
    %143 = vector.load %arg10[%c0_97, %c1_98, %c0_99, %c0_100] : memref<2x8x4x32xf32, #tpu.memory_space<vmem>>, vector<1x1x4x32xf32>
    %144 = vector.shape_cast %143 : vector<1x1x4x32xf32> to vector<4x32xf32>
    %145 = vector.shape_cast %142 : vector<4x32xf32> to vector<1x1x4x32xf32>
    tpu.vector_store %arg10[%c0_97, %c1_98, %c0_99, %c0_100], %145 {strides = array<i32>} : memref<2x8x4x32xf32, #tpu.memory_space<vmem>>, vector<1x1x4x32xf32>,
    %146 = vector.extract_strided_slice %20 {offsets = [8, 0], sizes = [4, 32], strides = [1, 1]} : vector<32x32xf32> to vector<4x32xf32>
    %cst_101 = arith.constant dense<0.000000e+00> : vector<4x32xf32>
    %147 = tpu.matmul %142, %64, %cst_101 {dimension_numbers = #tpu.dot_dimension_numbers<[1], [0], [0], [1], [0, 0, 1, 1], [], []>} : vector<4x32xf32>, vector<32x32xf32>, vector<4x32xf32> -> vector<4x32xf32>
    %148 = arith.addf %146, %147 : vector<4x32xf32>
    %149 = vector.broadcast %70 : vector<1x32xf32> to vector<4x32xf32>
    %150 = arith.addf %148, %149 : vector<4x32xf32>
    %151 = arith.negf %150 : vector<4x32xf32>
    %152 = math.exp %151 : vector<4x32xf32>
    %cst_102 = arith.constant 1.000000e+00 : f32
    %153 = vector.broadcast %cst_102 : f32 to vector<4x32xf32>
    %154 = arith.addf %153, %152 : vector<4x32xf32>
    %155 = arith.divf %153, %154 : vector<4x32xf32>
    %156 = vector.extract_strided_slice %41 {offsets = [8, 0], sizes = [4, 32], strides = [1, 1]} : vector<32x32xf32> to vector<4x32xf32>
    %cst_103 = arith.constant dense<0.000000e+00> : vector<4x32xf32>
    %157 = tpu.matmul %142, %66, %cst_103 {dimension_numbers = #tpu.dot_dimension_numbers<[1], [0], [0], [1], [0, 0, 1, 1], [], []>} : vector<4x32xf32>, vector<32x32xf32>, vector<4x32xf32> -> vector<4x32xf32>
    %158 = arith.addf %156, %157 : vector<4x32xf32>
    %159 = vector.broadcast %72 : vector<1x32xf32> to vector<4x32xf32>
    %160 = arith.addf %158, %159 : vector<4x32xf32>
    %161 = arith.negf %160 : vector<4x32xf32>
    %162 = math.exp %161 : vector<4x32xf32>
    %cst_104 = arith.constant 1.000000e+00 : f32
    %163 = vector.broadcast %cst_104 : f32 to vector<4x32xf32>
    %164 = arith.addf %163, %162 : vector<4x32xf32>
    %165 = arith.divf %163, %164 : vector<4x32xf32>
    %166 = vector.extract_strided_slice %62 {offsets = [8, 0], sizes = [4, 32], strides = [1, 1]} : vector<32x32xf32> to vector<4x32xf32>
    %cst_105 = arith.constant dense<0.000000e+00> : vector<4x32xf32>
    %167 = tpu.matmul %142, %68, %cst_105 {dimension_numbers = #tpu.dot_dimension_numbers<[1], [0], [0], [1], [0, 0, 1, 1], [], []>} : vector<4x32xf32>, vector<32x32xf32>, vector<4x32xf32> -> vector<4x32xf32>
    %168 = vector.broadcast %74 : vector<1x32xf32> to vector<4x32xf32>
    %169 = arith.addf %167, %168 : vector<4x32xf32>
    %170 = arith.mulf %155, %169 : vector<4x32xf32>
    %171 = arith.addf %166, %170 : vector<4x32xf32>
    %172 = math.tanh %171 : vector<4x32xf32>
    %cst_106 = arith.constant 1.000000e+00 : f32
    %173 = vector.broadcast %cst_106 : f32 to vector<4x32xf32>
    %174 = arith.subf %173, %165 : vector<4x32xf32>
    %175 = arith.mulf %174, %172 : vector<4x32xf32>
    %176 = arith.mulf %165, %142 : vector<4x32xf32>
    %177 = arith.addf %175, %176 : vector<4x32xf32>
    %c0_107 = arith.constant 0 : index
    %c2_108 = arith.constant 2 : index
    %c0_109 = arith.constant 0 : index
    %c0_110 = arith.constant 0 : index
    %178 = vector.load %arg10[%c0_107, %c2_108, %c0_109, %c0_110] : memref<2x8x4x32xf32, #tpu.memory_space<vmem>>, vector<1x1x4x32xf32>
    %179 = vector.shape_cast %178 : vector<1x1x4x32xf32> to vector<4x32xf32>
    %180 = vector.shape_cast %177 : vector<4x32xf32> to vector<1x1x4x32xf32>
    tpu.vector_store %arg10[%c0_107, %c2_108, %c0_109, %c0_110], %180 {strides = array<i32>} : memref<2x8x4x32xf32, #tpu.memory_space<vmem>>, vector<1x1x4x32xf32>,
    %181 = vector.extract_strided_slice %20 {offsets = [12, 0], sizes = [4, 32], strides = [1, 1]} : vector<32x32xf32> to vector<4x32xf32>
    %cst_111 = arith.constant dense<0.000000e+00> : vector<4x32xf32>
    %182 = tpu.matmul %177, %64, %cst_111 {dimension_numbers = #tpu.dot_dimension_numbers<[1], [0], [0], [1], [0, 0, 1, 1], [], []>} : vector<4x32xf32>, vector<32x32xf32>, vector<4x32xf32> -> vector<4x32xf32>
    %183 = arith.addf %181, %182 : vector<4x32xf32>
    %184 = vector.broadcast %70 : vector<1x32xf32> to vector<4x32xf32>
    %185 = arith.addf %183, %184 : vector<4x32xf32>
    %186 = arith.negf %185 : vector<4x32xf32>
    %187 = math.exp %186 : vector<4x32xf32>
    %cst_112 = arith.constant 1.000000e+00 : f32
    %188 = vector.broadcast %cst_112 : f32 to vector<4x32xf32>
    %189 = arith.addf %188, %187 : vector<4x32xf32>
    %190 = arith.divf %188, %189 : vector<4x32xf32>
    %191 = vector.extract_strided_slice %41 {offsets = [12, 0], sizes = [4, 32], strides = [1, 1]} : vector<32x32xf32> to vector<4x32xf32>
    %cst_113 = arith.constant dense<0.000000e+00> : vector<4x32xf32>
    %192 = tpu.matmul %177, %66, %cst_113 {dimension_numbers = #tpu.dot_dimension_numbers<[1], [0], [0], [1], [0, 0, 1, 1], [], []>} : vector<4x32xf32>, vector<32x32xf32>, vector<4x32xf32> -> vector<4x32xf32>
    %193 = arith.addf %191, %192 : vector<4x32xf32>
    %194 = vector.broadcast %72 : vector<1x32xf32> to vector<4x32xf32>
    %195 = arith.addf %193, %194 : vector<4x32xf32>
    %196 = arith.negf %195 : vector<4x32xf32>
    %197 = math.exp %196 : vector<4x32xf32>
    %cst_114 = arith.constant 1.000000e+00 : f32
    %198 = vector.broadcast %cst_114 : f32 to vector<4x32xf32>
    %199 = arith.addf %198, %197 : vector<4x32xf32>
    %200 = arith.divf %198, %199 : vector<4x32xf32>
    %201 = vector.extract_strided_slice %62 {offsets = [12, 0], sizes = [4, 32], strides = [1, 1]} : vector<32x32xf32> to vector<4x32xf32>
    %cst_115 = arith.constant dense<0.000000e+00> : vector<4x32xf32>
    %202 = tpu.matmul %177, %68, %cst_115 {dimension_numbers = #tpu.dot_dimension_numbers<[1], [0], [0], [1], [0, 0, 1, 1], [], []>} : vector<4x32xf32>, vector<32x32xf32>, vector<4x32xf32> -> vector<4x32xf32>
    %203 = vector.broadcast %74 : vector<1x32xf32> to vector<4x32xf32>
    %204 = arith.addf %202, %203 : vector<4x32xf32>
    %205 = arith.mulf %190, %204 : vector<4x32xf32>
    %206 = arith.addf %201, %205 : vector<4x32xf32>
    %207 = math.tanh %206 : vector<4x32xf32>
    %cst_116 = arith.constant 1.000000e+00 : f32
    %208 = vector.broadcast %cst_116 : f32 to vector<4x32xf32>
    %209 = arith.subf %208, %200 : vector<4x32xf32>
    %210 = arith.mulf %209, %207 : vector<4x32xf32>
    %211 = arith.mulf %200, %177 : vector<4x32xf32>
    %212 = arith.addf %210, %211 : vector<4x32xf32>
    %c0_117 = arith.constant 0 : index
    %c3_118 = arith.constant 3 : index
    %c0_119 = arith.constant 0 : index
    %c0_120 = arith.constant 0 : index
    %213 = vector.load %arg10[%c0_117, %c3_118, %c0_119, %c0_120] : memref<2x8x4x32xf32, #tpu.memory_space<vmem>>, vector<1x1x4x32xf32>
    %214 = vector.shape_cast %213 : vector<1x1x4x32xf32> to vector<4x32xf32>
    %215 = vector.shape_cast %212 : vector<4x32xf32> to vector<1x1x4x32xf32>
    tpu.vector_store %arg10[%c0_117, %c3_118, %c0_119, %c0_120], %215 {strides = array<i32>} : memref<2x8x4x32xf32, #tpu.memory_space<vmem>>, vector<1x1x4x32xf32>,
    %216 = vector.extract_strided_slice %20 {offsets = [16, 0], sizes = [4, 32], strides = [1, 1]} : vector<32x32xf32> to vector<4x32xf32>
    %cst_121 = arith.constant dense<0.000000e+00> : vector<4x32xf32>
    %217 = tpu.matmul %212, %64, %cst_121 {dimension_numbers = #tpu.dot_dimension_numbers<[1], [0], [0], [1], [0, 0, 1, 1], [], []>} : vector<4x32xf32>, vector<32x32xf32>, vector<4x32xf32> -> vector<4x32xf32>
    %218 = arith.addf %216, %217 : vector<4x32xf32>
    %219 = vector.broadcast %70 : vector<1x32xf32> to vector<4x32xf32>
    %220 = arith.addf %218, %219 : vector<4x32xf32>
    %221 = arith.negf %220 : vector<4x32xf32>
    %222 = math.exp %221 : vector<4x32xf32>
    %cst_122 = arith.constant 1.000000e+00 : f32
    %223 = vector.broadcast %cst_122 : f32 to vector<4x32xf32>
    %224 = arith.addf %223, %222 : vector<4x32xf32>
    %225 = arith.divf %223, %224 : vector<4x32xf32>
    %226 = vector.extract_strided_slice %41 {offsets = [16, 0], sizes = [4, 32], strides = [1, 1]} : vector<32x32xf32> to vector<4x32xf32>
    %cst_123 = arith.constant dense<0.000000e+00> : vector<4x32xf32>
    %227 = tpu.matmul %212, %66, %cst_123 {dimension_numbers = #tpu.dot_dimension_numbers<[1], [0], [0], [1], [0, 0, 1, 1], [], []>} : vector<4x32xf32>, vector<32x32xf32>, vector<4x32xf32> -> vector<4x32xf32>
    %228 = arith.addf %226, %227 : vector<4x32xf32>
    %229 = vector.broadcast %72 : vector<1x32xf32> to vector<4x32xf32>
    %230 = arith.addf %228, %229 : vector<4x32xf32>
    %231 = arith.negf %230 : vector<4x32xf32>
    %232 = math.exp %231 : vector<4x32xf32>
    %cst_124 = arith.constant 1.000000e+00 : f32
    %233 = vector.broadcast %cst_124 : f32 to vector<4x32xf32>
    %234 = arith.addf %233, %232 : vector<4x32xf32>
    %235 = arith.divf %233, %234 : vector<4x32xf32>
    %236 = vector.extract_strided_slice %62 {offsets = [16, 0], sizes = [4, 32], strides = [1, 1]} : vector<32x32xf32> to vector<4x32xf32>
    %cst_125 = arith.constant dense<0.000000e+00> : vector<4x32xf32>
    %237 = tpu.matmul %212, %68, %cst_125 {dimension_numbers = #tpu.dot_dimension_numbers<[1], [0], [0], [1], [0, 0, 1, 1], [], []>} : vector<4x32xf32>, vector<32x32xf32>, vector<4x32xf32> -> vector<4x32xf32>
    %238 = vector.broadcast %74 : vector<1x32xf32> to vector<4x32xf32>
    %239 = arith.addf %237, %238 : vector<4x32xf32>
    %240 = arith.mulf %225, %239 : vector<4x32xf32>
    %241 = arith.addf %236, %240 : vector<4x32xf32>
    %242 = math.tanh %241 : vector<4x32xf32>
    %cst_126 = arith.constant 1.000000e+00 : f32
    %243 = vector.broadcast %cst_126 : f32 to vector<4x32xf32>
    %244 = arith.subf %243, %235 : vector<4x32xf32>
    %245 = arith.mulf %244, %242 : vector<4x32xf32>
    %246 = arith.mulf %235, %212 : vector<4x32xf32>
    %247 = arith.addf %245, %246 : vector<4x32xf32>
    %c0_127 = arith.constant 0 : index
    %c4_128 = arith.constant 4 : index
    %c0_129 = arith.constant 0 : index
    %c0_130 = arith.constant 0 : index
    %248 = vector.load %arg10[%c0_127, %c4_128, %c0_129, %c0_130] : memref<2x8x4x32xf32, #tpu.memory_space<vmem>>, vector<1x1x4x32xf32>
    %249 = vector.shape_cast %248 : vector<1x1x4x32xf32> to vector<4x32xf32>
    %250 = vector.shape_cast %247 : vector<4x32xf32> to vector<1x1x4x32xf32>
    tpu.vector_store %arg10[%c0_127, %c4_128, %c0_129, %c0_130], %250 {strides = array<i32>} : memref<2x8x4x32xf32, #tpu.memory_space<vmem>>, vector<1x1x4x32xf32>,
    %251 = vector.extract_strided_slice %20 {offsets = [20, 0], sizes = [4, 32], strides = [1, 1]} : vector<32x32xf32> to vector<4x32xf32>
    %cst_131 = arith.constant dense<0.000000e+00> : vector<4x32xf32>
    %252 = tpu.matmul %247, %64, %cst_131 {dimension_numbers = #tpu.dot_dimension_numbers<[1], [0], [0], [1], [0, 0, 1, 1], [], []>} : vector<4x32xf32>, vector<32x32xf32>, vector<4x32xf32> -> vector<4x32xf32>
    %253 = arith.addf %251, %252 : vector<4x32xf32>
    %254 = vector.broadcast %70 : vector<1x32xf32> to vector<4x32xf32>
    %255 = arith.addf %253, %254 : vector<4x32xf32>
    %256 = arith.negf %255 : vector<4x32xf32>
    %257 = math.exp %256 : vector<4x32xf32>
    %cst_132 = arith.constant 1.000000e+00 : f32
    %258 = vector.broadcast %cst_132 : f32 to vector<4x32xf32>
    %259 = arith.addf %258, %257 : vector<4x32xf32>
    %260 = arith.divf %258, %259 : vector<4x32xf32>
    %261 = vector.extract_strided_slice %41 {offsets = [20, 0], sizes = [4, 32], strides = [1, 1]} : vector<32x32xf32> to vector<4x32xf32>
    %cst_133 = arith.constant dense<0.000000e+00> : vector<4x32xf32>
    %262 = tpu.matmul %247, %66, %cst_133 {dimension_numbers = #tpu.dot_dimension_numbers<[1], [0], [0], [1], [0, 0, 1, 1], [], []>} : vector<4x32xf32>, vector<32x32xf32>, vector<4x32xf32> -> vector<4x32xf32>
    %263 = arith.addf %261, %262 : vector<4x32xf32>
    %264 = vector.broadcast %72 : vector<1x32xf32> to vector<4x32xf32>
    %265 = arith.addf %263, %264 : vector<4x32xf32>
    %266 = arith.negf %265 : vector<4x32xf32>
    %267 = math.exp %266 : vector<4x32xf32>
    %cst_134 = arith.constant 1.000000e+00 : f32
    %268 = vector.broadcast %cst_134 : f32 to vector<4x32xf32>
    %269 = arith.addf %268, %267 : vector<4x32xf32>
    %270 = arith.divf %268, %269 : vector<4x32xf32>
    %271 = vector.extract_strided_slice %62 {offsets = [20, 0], sizes = [4, 32], strides = [1, 1]} : vector<32x32xf32> to vector<4x32xf32>
    %cst_135 = arith.constant dense<0.000000e+00> : vector<4x32xf32>
    %272 = tpu.matmul %247, %68, %cst_135 {dimension_numbers = #tpu.dot_dimension_numbers<[1], [0], [0], [1], [0, 0, 1, 1], [], []>} : vector<4x32xf32>, vector<32x32xf32>, vector<4x32xf32> -> vector<4x32xf32>
    %273 = vector.broadcast %74 : vector<1x32xf32> to vector<4x32xf32>
    %274 = arith.addf %272, %273 : vector<4x32xf32>
    %275 = arith.mulf %260, %274 : vector<4x32xf32>
    %276 = arith.addf %271, %275 : vector<4x32xf32>
    %277 = math.tanh %276 : vector<4x32xf32>
    %cst_136 = arith.constant 1.000000e+00 : f32
    %278 = vector.broadcast %cst_136 : f32 to vector<4x32xf32>
    %279 = arith.subf %278, %270 : vector<4x32xf32>
    %280 = arith.mulf %279, %277 : vector<4x32xf32>
    %281 = arith.mulf %270, %247 : vector<4x32xf32>
    %282 = arith.addf %280, %281 : vector<4x32xf32>
    %c0_137 = arith.constant 0 : index
    %c5_138 = arith.constant 5 : index
    %c0_139 = arith.constant 0 : index
    %c0_140 = arith.constant 0 : index
    %283 = vector.load %arg10[%c0_137, %c5_138, %c0_139, %c0_140] : memref<2x8x4x32xf32, #tpu.memory_space<vmem>>, vector<1x1x4x32xf32>
    %284 = vector.shape_cast %283 : vector<1x1x4x32xf32> to vector<4x32xf32>
    %285 = vector.shape_cast %282 : vector<4x32xf32> to vector<1x1x4x32xf32>
    tpu.vector_store %arg10[%c0_137, %c5_138, %c0_139, %c0_140], %285 {strides = array<i32>} : memref<2x8x4x32xf32, #tpu.memory_space<vmem>>, vector<1x1x4x32xf32>,
    %286 = vector.extract_strided_slice %20 {offsets = [24, 0], sizes = [4, 32], strides = [1, 1]} : vector<32x32xf32> to vector<4x32xf32>
    %cst_141 = arith.constant dense<0.000000e+00> : vector<4x32xf32>
    %287 = tpu.matmul %282, %64, %cst_141 {dimension_numbers = #tpu.dot_dimension_numbers<[1], [0], [0], [1], [0, 0, 1, 1], [], []>} : vector<4x32xf32>, vector<32x32xf32>, vector<4x32xf32> -> vector<4x32xf32>
    %288 = arith.addf %286, %287 : vector<4x32xf32>
    %289 = vector.broadcast %70 : vector<1x32xf32> to vector<4x32xf32>
    %290 = arith.addf %288, %289 : vector<4x32xf32>
    %291 = arith.negf %290 : vector<4x32xf32>
    %292 = math.exp %291 : vector<4x32xf32>
    %cst_142 = arith.constant 1.000000e+00 : f32
    %293 = vector.broadcast %cst_142 : f32 to vector<4x32xf32>
    %294 = arith.addf %293, %292 : vector<4x32xf32>
    %295 = arith.divf %293, %294 : vector<4x32xf32>
    %296 = vector.extract_strided_slice %41 {offsets = [24, 0], sizes = [4, 32], strides = [1, 1]} : vector<32x32xf32> to vector<4x32xf32>
    %cst_143 = arith.constant dense<0.000000e+00> : vector<4x32xf32>
    %297 = tpu.matmul %282, %66, %cst_143 {dimension_numbers = #tpu.dot_dimension_numbers<[1], [0], [0], [1], [0, 0, 1, 1], [], []>} : vector<4x32xf32>, vector<32x32xf32>, vector<4x32xf32> -> vector<4x32xf32>
    %298 = arith.addf %296, %297 : vector<4x32xf32>
    %299 = vector.broadcast %72 : vector<1x32xf32> to vector<4x32xf32>
    %300 = arith.addf %298, %299 : vector<4x32xf32>
    %301 = arith.negf %300 : vector<4x32xf32>
    %302 = math.exp %301 : vector<4x32xf32>
    %cst_144 = arith.constant 1.000000e+00 : f32
    %303 = vector.broadcast %cst_144 : f32 to vector<4x32xf32>
    %304 = arith.addf %303, %302 : vector<4x32xf32>
    %305 = arith.divf %303, %304 : vector<4x32xf32>
    %306 = vector.extract_strided_slice %62 {offsets = [24, 0], sizes = [4, 32], strides = [1, 1]} : vector<32x32xf32> to vector<4x32xf32>
    %cst_145 = arith.constant dense<0.000000e+00> : vector<4x32xf32>
    %307 = tpu.matmul %282, %68, %cst_145 {dimension_numbers = #tpu.dot_dimension_numbers<[1], [0], [0], [1], [0, 0, 1, 1], [], []>} : vector<4x32xf32>, vector<32x32xf32>, vector<4x32xf32> -> vector<4x32xf32>
    %308 = vector.broadcast %74 : vector<1x32xf32> to vector<4x32xf32>
    %309 = arith.addf %307, %308 : vector<4x32xf32>
    %310 = arith.mulf %295, %309 : vector<4x32xf32>
    %311 = arith.addf %306, %310 : vector<4x32xf32>
    %312 = math.tanh %311 : vector<4x32xf32>
    %cst_146 = arith.constant 1.000000e+00 : f32
    %313 = vector.broadcast %cst_146 : f32 to vector<4x32xf32>
    %314 = arith.subf %313, %305 : vector<4x32xf32>
    %315 = arith.mulf %314, %312 : vector<4x32xf32>
    %316 = arith.mulf %305, %282 : vector<4x32xf32>
    %317 = arith.addf %315, %316 : vector<4x32xf32>
    %c0_147 = arith.constant 0 : index
    %c6_148 = arith.constant 6 : index
    %c0_149 = arith.constant 0 : index
    %c0_150 = arith.constant 0 : index
    %318 = vector.load %arg10[%c0_147, %c6_148, %c0_149, %c0_150] : memref<2x8x4x32xf32, #tpu.memory_space<vmem>>, vector<1x1x4x32xf32>
    %319 = vector.shape_cast %318 : vector<1x1x4x32xf32> to vector<4x32xf32>
    %320 = vector.shape_cast %317 : vector<4x32xf32> to vector<1x1x4x32xf32>
    tpu.vector_store %arg10[%c0_147, %c6_148, %c0_149, %c0_150], %320 {strides = array<i32>} : memref<2x8x4x32xf32, #tpu.memory_space<vmem>>, vector<1x1x4x32xf32>,
    %321 = vector.extract_strided_slice %20 {offsets = [28, 0], sizes = [4, 32], strides = [1, 1]} : vector<32x32xf32> to vector<4x32xf32>
    %cst_151 = arith.constant dense<0.000000e+00> : vector<4x32xf32>
    %322 = tpu.matmul %317, %64, %cst_151 {dimension_numbers = #tpu.dot_dimension_numbers<[1], [0], [0], [1], [0, 0, 1, 1], [], []>} : vector<4x32xf32>, vector<32x32xf32>, vector<4x32xf32> -> vector<4x32xf32>
    %323 = arith.addf %321, %322 : vector<4x32xf32>
    %324 = vector.broadcast %70 : vector<1x32xf32> to vector<4x32xf32>
    %325 = arith.addf %323, %324 : vector<4x32xf32>
    %326 = arith.negf %325 : vector<4x32xf32>
    %327 = math.exp %326 : vector<4x32xf32>
    %cst_152 = arith.constant 1.000000e+00 : f32
    %328 = vector.broadcast %cst_152 : f32 to vector<4x32xf32>
    %329 = arith.addf %328, %327 : vector<4x32xf32>
    %330 = arith.divf %328, %329 : vector<4x32xf32>
    %331 = vector.extract_strided_slice %41 {offsets = [28, 0], sizes = [4, 32], strides = [1, 1]} : vector<32x32xf32> to vector<4x32xf32>
    %cst_153 = arith.constant dense<0.000000e+00> : vector<4x32xf32>
    %332 = tpu.matmul %317, %66, %cst_153 {dimension_numbers = #tpu.dot_dimension_numbers<[1], [0], [0], [1], [0, 0, 1, 1], [], []>} : vector<4x32xf32>, vector<32x32xf32>, vector<4x32xf32> -> vector<4x32xf32>
    %333 = arith.addf %331, %332 : vector<4x32xf32>
    %334 = vector.broadcast %72 : vector<1x32xf32> to vector<4x32xf32>
    %335 = arith.addf %333, %334 : vector<4x32xf32>
    %336 = arith.negf %335 : vector<4x32xf32>
    %337 = math.exp %336 : vector<4x32xf32>
    %cst_154 = arith.constant 1.000000e+00 : f32
    %338 = vector.broadcast %cst_154 : f32 to vector<4x32xf32>
    %339 = arith.addf %338, %337 : vector<4x32xf32>
    %340 = arith.divf %338, %339 : vector<4x32xf32>
    %341 = vector.extract_strided_slice %62 {offsets = [28, 0], sizes = [4, 32], strides = [1, 1]} : vector<32x32xf32> to vector<4x32xf32>
    %cst_155 = arith.constant dense<0.000000e+00> : vector<4x32xf32>
    %342 = tpu.matmul %317, %68, %cst_155 {dimension_numbers = #tpu.dot_dimension_numbers<[1], [0], [0], [1], [0, 0, 1, 1], [], []>} : vector<4x32xf32>, vector<32x32xf32>, vector<4x32xf32> -> vector<4x32xf32>
    %343 = vector.broadcast %74 : vector<1x32xf32> to vector<4x32xf32>
    %344 = arith.addf %342, %343 : vector<4x32xf32>
    %345 = arith.mulf %330, %344 : vector<4x32xf32>
    %346 = arith.addf %341, %345 : vector<4x32xf32>
    %347 = math.tanh %346 : vector<4x32xf32>
    %cst_156 = arith.constant 1.000000e+00 : f32
    %348 = vector.broadcast %cst_156 : f32 to vector<4x32xf32>
    %349 = arith.subf %348, %340 : vector<4x32xf32>
    %350 = arith.mulf %349, %347 : vector<4x32xf32>
    %351 = arith.mulf %340, %317 : vector<4x32xf32>
    %352 = arith.addf %350, %351 : vector<4x32xf32>
    %c0_157 = arith.constant 0 : index
    %c7_158 = arith.constant 7 : index
    %c0_159 = arith.constant 0 : index
    %c0_160 = arith.constant 0 : index
    %353 = vector.load %arg10[%c0_157, %c7_158, %c0_159, %c0_160] : memref<2x8x4x32xf32, #tpu.memory_space<vmem>>, vector<1x1x4x32xf32>
    %354 = vector.shape_cast %353 : vector<1x1x4x32xf32> to vector<4x32xf32>
    %355 = vector.shape_cast %352 : vector<4x32xf32> to vector<1x1x4x32xf32>
    tpu.vector_store %arg10[%c0_157, %c7_158, %c0_159, %c0_160], %355 {strides = array<i32>} : memref<2x8x4x32xf32, #tpu.memory_space<vmem>>, vector<1x1x4x32xf32>,
    %c0_161 = arith.constant 0 : index
    %c0_162 = arith.constant 0 : index
    %c0_163 = arith.constant 0 : index
    %356 = vector.load %arg0[%c0_161, %c0_162, %c0_163] : memref<3x32x16xf32, #tpu.memory_space<vmem>>, vector<1x32x16xf32>
    %357 = vector.shape_cast %356 : vector<1x32x16xf32> to vector<32x16xf32>
    %c9 = arith.constant 9 : index
    %c0_164 = arith.constant 0 : index
    %c0_165 = arith.constant 0 : index
    %358 = vector.load %arg1[%c9, %c0_164, %c0_165] : memref<18x16x32xf32, #tpu.memory_space<vmem>>, vector<1x16x32xf32>
    %359 = vector.shape_cast %358 : vector<1x16x32xf32> to vector<16x32xf32>
    %cst_166 = arith.constant dense<0.000000e+00> : vector<32x32xf32>
    %360 = tpu.matmul %357, %359, %cst_166 {dimension_numbers = #tpu.dot_dimension_numbers<[1], [0], [0], [1], [0, 0, 1, 1], [], []>} : vector<32x16xf32>, vector<16x32xf32>, vector<32x32xf32> -> vector<32x32xf32>
    %c1_167 = arith.constant 1 : index
    %c0_168 = arith.constant 0 : index
    %c0_169 = arith.constant 0 : index
    %361 = vector.load %arg0[%c1_167, %c0_168, %c0_169] : memref<3x32x16xf32, #tpu.memory_space<vmem>>, vector<1x32x16xf32>
    %362 = vector.shape_cast %361 : vector<1x32x16xf32> to vector<32x16xf32>
    %c10 = arith.constant 10 : index
    %c0_170 = arith.constant 0 : index
    %c0_171 = arith.constant 0 : index
    %363 = vector.load %arg1[%c10, %c0_170, %c0_171] : memref<18x16x32xf32, #tpu.memory_space<vmem>>, vector<1x16x32xf32>
    %364 = vector.shape_cast %363 : vector<1x16x32xf32> to vector<16x32xf32>
    %cst_172 = arith.constant dense<0.000000e+00> : vector<32x32xf32>
    %365 = tpu.matmul %362, %364, %cst_172 {dimension_numbers = #tpu.dot_dimension_numbers<[1], [0], [0], [1], [0, 0, 1, 1], [], []>} : vector<32x16xf32>, vector<16x32xf32>, vector<32x32xf32> -> vector<32x32xf32>
    %366 = arith.addf %360, %365 : vector<32x32xf32>
    %c2_173 = arith.constant 2 : index
    %c0_174 = arith.constant 0 : index
    %c0_175 = arith.constant 0 : index
    %367 = vector.load %arg0[%c2_173, %c0_174, %c0_175] : memref<3x32x16xf32, #tpu.memory_space<vmem>>, vector<1x32x16xf32>
    %368 = vector.shape_cast %367 : vector<1x32x16xf32> to vector<32x16xf32>
    %c11 = arith.constant 11 : index
    %c0_176 = arith.constant 0 : index
    %c0_177 = arith.constant 0 : index
    %369 = vector.load %arg1[%c11, %c0_176, %c0_177] : memref<18x16x32xf32, #tpu.memory_space<vmem>>, vector<1x16x32xf32>
    %370 = vector.shape_cast %369 : vector<1x16x32xf32> to vector<16x32xf32>
    %cst_178 = arith.constant dense<0.000000e+00> : vector<32x32xf32>
    %371 = tpu.matmul %368, %370, %cst_178 {dimension_numbers = #tpu.dot_dimension_numbers<[1], [0], [0], [1], [0, 0, 1, 1], [], []>} : vector<32x16xf32>, vector<16x32xf32>, vector<32x32xf32> -> vector<32x32xf32>
    %372 = arith.addf %366, %371 : vector<32x32xf32>
    %c3_179 = arith.constant 3 : index
    %c0_180 = arith.constant 0 : index
    %c0_181 = arith.constant 0 : index
    %373 = vector.load %arg3[%c3_179, %c0_180, %c0_181] : memref<6x1x32xf32, #tpu.memory_space<vmem>>, vector<1x1x32xf32>
    %374 = vector.shape_cast %373 : vector<1x1x32xf32> to vector<1x32xf32>
    %375 = vector.broadcast %374 : vector<1x32xf32> to vector<32x32xf32>
    %376 = arith.addf %372, %375 : vector<32x32xf32>
    %c0_182 = arith.constant 0 : index
    %c0_183 = arith.constant 0 : index
    %c0_184 = arith.constant 0 : index
    %377 = vector.load %arg0[%c0_182, %c0_183, %c0_184] : memref<3x32x16xf32, #tpu.memory_space<vmem>>, vector<1x32x16xf32>
    %378 = vector.shape_cast %377 : vector<1x32x16xf32> to vector<32x16xf32>
    %c12 = arith.constant 12 : index
    %c0_185 = arith.constant 0 : index
    %c0_186 = arith.constant 0 : index
    %379 = vector.load %arg1[%c12, %c0_185, %c0_186] : memref<18x16x32xf32, #tpu.memory_space<vmem>>, vector<1x16x32xf32>
    %380 = vector.shape_cast %379 : vector<1x16x32xf32> to vector<16x32xf32>
    %cst_187 = arith.constant dense<0.000000e+00> : vector<32x32xf32>
    %381 = tpu.matmul %378, %380, %cst_187 {dimension_numbers = #tpu.dot_dimension_numbers<[1], [0], [0], [1], [0, 0, 1, 1], [], []>} : vector<32x16xf32>, vector<16x32xf32>, vector<32x32xf32> -> vector<32x32xf32>
    %c1_188 = arith.constant 1 : index
    %c0_189 = arith.constant 0 : index
    %c0_190 = arith.constant 0 : index
    %382 = vector.load %arg0[%c1_188, %c0_189, %c0_190] : memref<3x32x16xf32, #tpu.memory_space<vmem>>, vector<1x32x16xf32>
    %383 = vector.shape_cast %382 : vector<1x32x16xf32> to vector<32x16xf32>
    %c13 = arith.constant 13 : index
    %c0_191 = arith.constant 0 : index
    %c0_192 = arith.constant 0 : index
    %384 = vector.load %arg1[%c13, %c0_191, %c0_192] : memref<18x16x32xf32, #tpu.memory_space<vmem>>, vector<1x16x32xf32>
    %385 = vector.shape_cast %384 : vector<1x16x32xf32> to vector<16x32xf32>
    %cst_193 = arith.constant dense<0.000000e+00> : vector<32x32xf32>
    %386 = tpu.matmul %383, %385, %cst_193 {dimension_numbers = #tpu.dot_dimension_numbers<[1], [0], [0], [1], [0, 0, 1, 1], [], []>} : vector<32x16xf32>, vector<16x32xf32>, vector<32x32xf32> -> vector<32x32xf32>
    %387 = arith.addf %381, %386 : vector<32x32xf32>
    %c2_194 = arith.constant 2 : index
    %c0_195 = arith.constant 0 : index
    %c0_196 = arith.constant 0 : index
    %388 = vector.load %arg0[%c2_194, %c0_195, %c0_196] : memref<3x32x16xf32, #tpu.memory_space<vmem>>, vector<1x32x16xf32>
    %389 = vector.shape_cast %388 : vector<1x32x16xf32> to vector<32x16xf32>
    %c14 = arith.constant 14 : index
    %c0_197 = arith.constant 0 : index
    %c0_198 = arith.constant 0 : index
    %390 = vector.load %arg1[%c14, %c0_197, %c0_198] : memref<18x16x32xf32, #tpu.memory_space<vmem>>, vector<1x16x32xf32>
    %391 = vector.shape_cast %390 : vector<1x16x32xf32> to vector<16x32xf32>
    %cst_199 = arith.constant dense<0.000000e+00> : vector<32x32xf32>
    %392 = tpu.matmul %389, %391, %cst_199 {dimension_numbers = #tpu.dot_dimension_numbers<[1], [0], [0], [1], [0, 0, 1, 1], [], []>} : vector<32x16xf32>, vector<16x32xf32>, vector<32x32xf32> -> vector<32x32xf32>
    %393 = arith.addf %387, %392 : vector<32x32xf32>
    %c4_200 = arith.constant 4 : index
    %c0_201 = arith.constant 0 : index
    %c0_202 = arith.constant 0 : index
    %394 = vector.load %arg3[%c4_200, %c0_201, %c0_202] : memref<6x1x32xf32, #tpu.memory_space<vmem>>, vector<1x1x32xf32>
    %395 = vector.shape_cast %394 : vector<1x1x32xf32> to vector<1x32xf32>
    %396 = vector.broadcast %395 : vector<1x32xf32> to vector<32x32xf32>
    %397 = arith.addf %393, %396 : vector<32x32xf32>
    %c0_203 = arith.constant 0 : index
    %c0_204 = arith.constant 0 : index
    %c0_205 = arith.constant 0 : index
    %398 = vector.load %arg0[%c0_203, %c0_204, %c0_205] : memref<3x32x16xf32, #tpu.memory_space<vmem>>, vector<1x32x16xf32>
    %399 = vector.shape_cast %398 : vector<1x32x16xf32> to vector<32x16xf32>
    %c15 = arith.constant 15 : index
    %c0_206 = arith.constant 0 : index
    %c0_207 = arith.constant 0 : index
    %400 = vector.load %arg1[%c15, %c0_206, %c0_207] : memref<18x16x32xf32, #tpu.memory_space<vmem>>, vector<1x16x32xf32>
    %401 = vector.shape_cast %400 : vector<1x16x32xf32> to vector<16x32xf32>
    %cst_208 = arith.constant dense<0.000000e+00> : vector<32x32xf32>
    %402 = tpu.matmul %399, %401, %cst_208 {dimension_numbers = #tpu.dot_dimension_numbers<[1], [0], [0], [1], [0, 0, 1, 1], [], []>} : vector<32x16xf32>, vector<16x32xf32>, vector<32x32xf32> -> vector<32x32xf32>
    %c1_209 = arith.constant 1 : index
    %c0_210 = arith.constant 0 : index
    %c0_211 = arith.constant 0 : index
    %403 = vector.load %arg0[%c1_209, %c0_210, %c0_211] : memref<3x32x16xf32, #tpu.memory_space<vmem>>, vector<1x32x16xf32>
    %404 = vector.shape_cast %403 : vector<1x32x16xf32> to vector<32x16xf32>
    %c16 = arith.constant 16 : index
    %c0_212 = arith.constant 0 : index
    %c0_213 = arith.constant 0 : index
    %405 = vector.load %arg1[%c16, %c0_212, %c0_213] : memref<18x16x32xf32, #tpu.memory_space<vmem>>, vector<1x16x32xf32>
    %406 = vector.shape_cast %405 : vector<1x16x32xf32> to vector<16x32xf32>
    %cst_214 = arith.constant dense<0.000000e+00> : vector<32x32xf32>
    %407 = tpu.matmul %404, %406, %cst_214 {dimension_numbers = #tpu.dot_dimension_numbers<[1], [0], [0], [1], [0, 0, 1, 1], [], []>} : vector<32x16xf32>, vector<16x32xf32>, vector<32x32xf32> -> vector<32x32xf32>
    %408 = arith.addf %402, %407 : vector<32x32xf32>
    %c2_215 = arith.constant 2 : index
    %c0_216 = arith.constant 0 : index
    %c0_217 = arith.constant 0 : index
    %409 = vector.load %arg0[%c2_215, %c0_216, %c0_217] : memref<3x32x16xf32, #tpu.memory_space<vmem>>, vector<1x32x16xf32>
    %410 = vector.shape_cast %409 : vector<1x32x16xf32> to vector<32x16xf32>
    %c17 = arith.constant 17 : index
    %c0_218 = arith.constant 0 : index
    %c0_219 = arith.constant 0 : index
    %411 = vector.load %arg1[%c17, %c0_218, %c0_219] : memref<18x16x32xf32, #tpu.memory_space<vmem>>, vector<1x16x32xf32>
    %412 = vector.shape_cast %411 : vector<1x16x32xf32> to vector<16x32xf32>
    %cst_220 = arith.constant dense<0.000000e+00> : vector<32x32xf32>
    %413 = tpu.matmul %410, %412, %cst_220 {dimension_numbers = #tpu.dot_dimension_numbers<[1], [0], [0], [1], [0, 0, 1, 1], [], []>} : vector<32x16xf32>, vector<16x32xf32>, vector<32x32xf32> -> vector<32x32xf32>
    %414 = arith.addf %408, %413 : vector<32x32xf32>
    %c5_221 = arith.constant 5 : index
    %c0_222 = arith.constant 0 : index
    %c0_223 = arith.constant 0 : index
    %415 = vector.load %arg3[%c5_221, %c0_222, %c0_223] : memref<6x1x32xf32, #tpu.memory_space<vmem>>, vector<1x1x32xf32>
    %416 = vector.shape_cast %415 : vector<1x1x32xf32> to vector<1x32xf32>
    %417 = vector.broadcast %416 : vector<1x32xf32> to vector<32x32xf32>
    %418 = arith.addf %414, %417 : vector<32x32xf32>
    %c3_224 = arith.constant 3 : index
    %c0_225 = arith.constant 0 : index
    %c0_226 = arith.constant 0 : index
    %419 = vector.load %arg2[%c3_224, %c0_225, %c0_226] : memref<6x32x32xf32, #tpu.memory_space<vmem>>, vector<1x32x32xf32>
    %420 = vector.shape_cast %419 : vector<1x32x32xf32> to vector<32x32xf32>
    %c4_227 = arith.constant 4 : index
    %c0_228 = arith.constant 0 : index
    %c0_229 = arith.constant 0 : index
    %421 = vector.load %arg2[%c4_227, %c0_228, %c0_229] : memref<6x32x32xf32, #tpu.memory_space<vmem>>, vector<1x32x32xf32>
    %422 = vector.shape_cast %421 : vector<1x32x32xf32> to vector<32x32xf32>
    %c5_230 = arith.constant 5 : index
    %c0_231 = arith.constant 0 : index
    %c0_232 = arith.constant 0 : index
    %423 = vector.load %arg2[%c5_230, %c0_231, %c0_232] : memref<6x32x32xf32, #tpu.memory_space<vmem>>, vector<1x32x32xf32>
    %424 = vector.shape_cast %423 : vector<1x32x32xf32> to vector<32x32xf32>
    %c3_233 = arith.constant 3 : index
    %c0_234 = arith.constant 0 : index
    %c0_235 = arith.constant 0 : index
    %425 = vector.load %arg4[%c3_233, %c0_234, %c0_235] : memref<6x1x32xf32, #tpu.memory_space<vmem>>, vector<1x1x32xf32>
    %426 = vector.shape_cast %425 : vector<1x1x32xf32> to vector<1x32xf32>
    %c4_236 = arith.constant 4 : index
    %c0_237 = arith.constant 0 : index
    %c0_238 = arith.constant 0 : index
    %427 = vector.load %arg4[%c4_236, %c0_237, %c0_238] : memref<6x1x32xf32, #tpu.memory_space<vmem>>, vector<1x1x32xf32>
    %428 = vector.shape_cast %427 : vector<1x1x32xf32> to vector<1x32xf32>
    %c5_239 = arith.constant 5 : index
    %c0_240 = arith.constant 0 : index
    %c0_241 = arith.constant 0 : index
    %429 = vector.load %arg4[%c5_239, %c0_240, %c0_241] : memref<6x1x32xf32, #tpu.memory_space<vmem>>, vector<1x1x32xf32>
    %430 = vector.shape_cast %429 : vector<1x1x32xf32> to vector<1x32xf32>
    %cst_242 = arith.constant 0.000000e+00 : f32
    %431 = vector.broadcast %cst_242 : f32 to vector<4x32xf32>
    %432 = vector.extract_strided_slice %376 {offsets = [28, 0], sizes = [4, 32], strides = [1, 1]} : vector<32x32xf32> to vector<4x32xf32>
    %cst_243 = arith.constant dense<0.000000e+00> : vector<4x32xf32>
    %433 = tpu.matmul %431, %420, %cst_243 {dimension_numbers = #tpu.dot_dimension_numbers<[1], [0], [0], [1], [0, 0, 1, 1], [], []>} : vector<4x32xf32>, vector<32x32xf32>, vector<4x32xf32> -> vector<4x32xf32>
    %434 = arith.addf %432, %433 : vector<4x32xf32>
    %435 = vector.broadcast %426 : vector<1x32xf32> to vector<4x32xf32>
    %436 = arith.addf %434, %435 : vector<4x32xf32>
    %437 = arith.negf %436 : vector<4x32xf32>
    %438 = math.exp %437 : vector<4x32xf32>
    %cst_244 = arith.constant 1.000000e+00 : f32
    %439 = vector.broadcast %cst_244 : f32 to vector<4x32xf32>
    %440 = arith.addf %439, %438 : vector<4x32xf32>
    %441 = arith.divf %439, %440 : vector<4x32xf32>
    %442 = vector.extract_strided_slice %397 {offsets = [28, 0], sizes = [4, 32], strides = [1, 1]} : vector<32x32xf32> to vector<4x32xf32>
    %cst_245 = arith.constant dense<0.000000e+00> : vector<4x32xf32>
    %443 = tpu.matmul %431, %422, %cst_245 {dimension_numbers = #tpu.dot_dimension_numbers<[1], [0], [0], [1], [0, 0, 1, 1], [], []>} : vector<4x32xf32>, vector<32x32xf32>, vector<4x32xf32> -> vector<4x32xf32>
    %444 = arith.addf %442, %443 : vector<4x32xf32>
    %445 = vector.broadcast %428 : vector<1x32xf32> to vector<4x32xf32>
    %446 = arith.addf %444, %445 : vector<4x32xf32>
    %447 = arith.negf %446 : vector<4x32xf32>
    %448 = math.exp %447 : vector<4x32xf32>
    %cst_246 = arith.constant 1.000000e+00 : f32
    %449 = vector.broadcast %cst_246 : f32 to vector<4x32xf32>
    %450 = arith.addf %449, %448 : vector<4x32xf32>
    %451 = arith.divf %449, %450 : vector<4x32xf32>
    %452 = vector.extract_strided_slice %418 {offsets = [28, 0], sizes = [4, 32], strides = [1, 1]} : vector<32x32xf32> to vector<4x32xf32>
    %cst_247 = arith.constant dense<0.000000e+00> : vector<4x32xf32>
    %453 = tpu.matmul %431, %424, %cst_247 {dimension_numbers = #tpu.dot_dimension_numbers<[1], [0], [0], [1], [0, 0, 1, 1], [], []>} : vector<4x32xf32>, vector<32x32xf32>, vector<4x32xf32> -> vector<4x32xf32>
    %454 = vector.broadcast %430 : vector<1x32xf32> to vector<4x32xf32>
    %455 = arith.addf %453, %454 : vector<4x32xf32>
    %456 = arith.mulf %441, %455 : vector<4x32xf32>
    %457 = arith.addf %452, %456 : vector<4x32xf32>
    %458 = math.tanh %457 : vector<4x32xf32>
    %cst_248 = arith.constant 1.000000e+00 : f32
    %459 = vector.broadcast %cst_248 : f32 to vector<4x32xf32>
    %460 = arith.subf %459, %451 : vector<4x32xf32>
    %461 = arith.mulf %460, %458 : vector<4x32xf32>
    %462 = arith.mulf %451, %431 : vector<4x32xf32>
    %463 = arith.addf %461, %462 : vector<4x32xf32>
    %c1_249 = arith.constant 1 : index
    %c7_250 = arith.constant 7 : index
    %c0_251 = arith.constant 0 : index
    %c0_252 = arith.constant 0 : index
    %464 = vector.load %arg10[%c1_249, %c7_250, %c0_251, %c0_252] : memref<2x8x4x32xf32, #tpu.memory_space<vmem>>, vector<1x1x4x32xf32>
    %465 = vector.shape_cast %464 : vector<1x1x4x32xf32> to vector<4x32xf32>
    %466 = vector.shape_cast %463 : vector<4x32xf32> to vector<1x1x4x32xf32>
    tpu.vector_store %arg10[%c1_249, %c7_250, %c0_251, %c0_252], %466 {strides = array<i32>} : memref<2x8x4x32xf32, #tpu.memory_space<vmem>>, vector<1x1x4x32xf32>,
    %467 = vector.extract_strided_slice %376 {offsets = [24, 0], sizes = [4, 32], strides = [1, 1]} : vector<32x32xf32> to vector<4x32xf32>
    %cst_253 = arith.constant dense<0.000000e+00> : vector<4x32xf32>
    %468 = tpu.matmul %463, %420, %cst_253 {dimension_numbers = #tpu.dot_dimension_numbers<[1], [0], [0], [1], [0, 0, 1, 1], [], []>} : vector<4x32xf32>, vector<32x32xf32>, vector<4x32xf32> -> vector<4x32xf32>
    %469 = arith.addf %467, %468 : vector<4x32xf32>
    %470 = vector.broadcast %426 : vector<1x32xf32> to vector<4x32xf32>
    %471 = arith.addf %469, %470 : vector<4x32xf32>
    %472 = arith.negf %471 : vector<4x32xf32>
    %473 = math.exp %472 : vector<4x32xf32>
    %cst_254 = arith.constant 1.000000e+00 : f32
    %474 = vector.broadcast %cst_254 : f32 to vector<4x32xf32>
    %475 = arith.addf %474, %473 : vector<4x32xf32>
    %476 = arith.divf %474, %475 : vector<4x32xf32>
    %477 = vector.extract_strided_slice %397 {offsets = [24, 0], sizes = [4, 32], strides = [1, 1]} : vector<32x32xf32> to vector<4x32xf32>
    %cst_255 = arith.constant dense<0.000000e+00> : vector<4x32xf32>
    %478 = tpu.matmul %463, %422, %cst_255 {dimension_numbers = #tpu.dot_dimension_numbers<[1], [0], [0], [1], [0, 0, 1, 1], [], []>} : vector<4x32xf32>, vector<32x32xf32>, vector<4x32xf32> -> vector<4x32xf32>
    %479 = arith.addf %477, %478 : vector<4x32xf32>
    %480 = vector.broadcast %428 : vector<1x32xf32> to vector<4x32xf32>
    %481 = arith.addf %479, %480 : vector<4x32xf32>
    %482 = arith.negf %481 : vector<4x32xf32>
    %483 = math.exp %482 : vector<4x32xf32>
    %cst_256 = arith.constant 1.000000e+00 : f32
    %484 = vector.broadcast %cst_256 : f32 to vector<4x32xf32>
    %485 = arith.addf %484, %483 : vector<4x32xf32>
    %486 = arith.divf %484, %485 : vector<4x32xf32>
    %487 = vector.extract_strided_slice %418 {offsets = [24, 0], sizes = [4, 32], strides = [1, 1]} : vector<32x32xf32> to vector<4x32xf32>
    %cst_257 = arith.constant dense<0.000000e+00> : vector<4x32xf32>
    %488 = tpu.matmul %463, %424, %cst_257 {dimension_numbers = #tpu.dot_dimension_numbers<[1], [0], [0], [1], [0, 0, 1, 1], [], []>} : vector<4x32xf32>, vector<32x32xf32>, vector<4x32xf32> -> vector<4x32xf32>
    %489 = vector.broadcast %430 : vector<1x32xf32> to vector<4x32xf32>
    %490 = arith.addf %488, %489 : vector<4x32xf32>
    %491 = arith.mulf %476, %490 : vector<4x32xf32>
    %492 = arith.addf %487, %491 : vector<4x32xf32>
    %493 = math.tanh %492 : vector<4x32xf32>
    %cst_258 = arith.constant 1.000000e+00 : f32
    %494 = vector.broadcast %cst_258 : f32 to vector<4x32xf32>
    %495 = arith.subf %494, %486 : vector<4x32xf32>
    %496 = arith.mulf %495, %493 : vector<4x32xf32>
    %497 = arith.mulf %486, %463 : vector<4x32xf32>
    %498 = arith.addf %496, %497 : vector<4x32xf32>
    %c1_259 = arith.constant 1 : index
    %c6_260 = arith.constant 6 : index
    %c0_261 = arith.constant 0 : index
    %c0_262 = arith.constant 0 : index
    %499 = vector.load %arg10[%c1_259, %c6_260, %c0_261, %c0_262] : memref<2x8x4x32xf32, #tpu.memory_space<vmem>>, vector<1x1x4x32xf32>
    %500 = vector.shape_cast %499 : vector<1x1x4x32xf32> to vector<4x32xf32>
    %501 = vector.shape_cast %498 : vector<4x32xf32> to vector<1x1x4x32xf32>
    tpu.vector_store %arg10[%c1_259, %c6_260, %c0_261, %c0_262], %501 {strides = array<i32>} : memref<2x8x4x32xf32, #tpu.memory_space<vmem>>, vector<1x1x4x32xf32>,
    %502 = vector.extract_strided_slice %376 {offsets = [20, 0], sizes = [4, 32], strides = [1, 1]} : vector<32x32xf32> to vector<4x32xf32>
    %cst_263 = arith.constant dense<0.000000e+00> : vector<4x32xf32>
    %503 = tpu.matmul %498, %420, %cst_263 {dimension_numbers = #tpu.dot_dimension_numbers<[1], [0], [0], [1], [0, 0, 1, 1], [], []>} : vector<4x32xf32>, vector<32x32xf32>, vector<4x32xf32> -> vector<4x32xf32>
    %504 = arith.addf %502, %503 : vector<4x32xf32>
    %505 = vector.broadcast %426 : vector<1x32xf32> to vector<4x32xf32>
    %506 = arith.addf %504, %505 : vector<4x32xf32>
    %507 = arith.negf %506 : vector<4x32xf32>
    %508 = math.exp %507 : vector<4x32xf32>
    %cst_264 = arith.constant 1.000000e+00 : f32
    %509 = vector.broadcast %cst_264 : f32 to vector<4x32xf32>
    %510 = arith.addf %509, %508 : vector<4x32xf32>
    %511 = arith.divf %509, %510 : vector<4x32xf32>
    %512 = vector.extract_strided_slice %397 {offsets = [20, 0], sizes = [4, 32], strides = [1, 1]} : vector<32x32xf32> to vector<4x32xf32>
    %cst_265 = arith.constant dense<0.000000e+00> : vector<4x32xf32>
    %513 = tpu.matmul %498, %422, %cst_265 {dimension_numbers = #tpu.dot_dimension_numbers<[1], [0], [0], [1], [0, 0, 1, 1], [], []>} : vector<4x32xf32>, vector<32x32xf32>, vector<4x32xf32> -> vector<4x32xf32>
    %514 = arith.addf %512, %513 : vector<4x32xf32>
    %515 = vector.broadcast %428 : vector<1x32xf32> to vector<4x32xf32>
    %516 = arith.addf %514, %515 : vector<4x32xf32>
    %517 = arith.negf %516 : vector<4x32xf32>
    %518 = math.exp %517 : vector<4x32xf32>
    %cst_266 = arith.constant 1.000000e+00 : f32
    %519 = vector.broadcast %cst_266 : f32 to vector<4x32xf32>
    %520 = arith.addf %519, %518 : vector<4x32xf32>
    %521 = arith.divf %519, %520 : vector<4x32xf32>
    %522 = vector.extract_strided_slice %418 {offsets = [20, 0], sizes = [4, 32], strides = [1, 1]} : vector<32x32xf32> to vector<4x32xf32>
    %cst_267 = arith.constant dense<0.000000e+00> : vector<4x32xf32>
    %523 = tpu.matmul %498, %424, %cst_267 {dimension_numbers = #tpu.dot_dimension_numbers<[1], [0], [0], [1], [0, 0, 1, 1], [], []>} : vector<4x32xf32>, vector<32x32xf32>, vector<4x32xf32> -> vector<4x32xf32>
    %524 = vector.broadcast %430 : vector<1x32xf32> to vector<4x32xf32>
    %525 = arith.addf %523, %524 : vector<4x32xf32>
    %526 = arith.mulf %511, %525 : vector<4x32xf32>
    %527 = arith.addf %522, %526 : vector<4x32xf32>
    %528 = math.tanh %527 : vector<4x32xf32>
    %cst_268 = arith.constant 1.000000e+00 : f32
    %529 = vector.broadcast %cst_268 : f32 to vector<4x32xf32>
    %530 = arith.subf %529, %521 : vector<4x32xf32>
    %531 = arith.mulf %530, %528 : vector<4x32xf32>
    %532 = arith.mulf %521, %498 : vector<4x32xf32>
    %533 = arith.addf %531, %532 : vector<4x32xf32>
    %c1_269 = arith.constant 1 : index
    %c5_270 = arith.constant 5 : index
    %c0_271 = arith.constant 0 : index
    %c0_272 = arith.constant 0 : index
    %534 = vector.load %arg10[%c1_269, %c5_270, %c0_271, %c0_272] : memref<2x8x4x32xf32, #tpu.memory_space<vmem>>, vector<1x1x4x32xf32>
    %535 = vector.shape_cast %534 : vector<1x1x4x32xf32> to vector<4x32xf32>
    %536 = vector.shape_cast %533 : vector<4x32xf32> to vector<1x1x4x32xf32>
    tpu.vector_store %arg10[%c1_269, %c5_270, %c0_271, %c0_272], %536 {strides = array<i32>} : memref<2x8x4x32xf32, #tpu.memory_space<vmem>>, vector<1x1x4x32xf32>,
    %537 = vector.extract_strided_slice %376 {offsets = [16, 0], sizes = [4, 32], strides = [1, 1]} : vector<32x32xf32> to vector<4x32xf32>
    %cst_273 = arith.constant dense<0.000000e+00> : vector<4x32xf32>
    %538 = tpu.matmul %533, %420, %cst_273 {dimension_numbers = #tpu.dot_dimension_numbers<[1], [0], [0], [1], [0, 0, 1, 1], [], []>} : vector<4x32xf32>, vector<32x32xf32>, vector<4x32xf32> -> vector<4x32xf32>
    %539 = arith.addf %537, %538 : vector<4x32xf32>
    %540 = vector.broadcast %426 : vector<1x32xf32> to vector<4x32xf32>
    %541 = arith.addf %539, %540 : vector<4x32xf32>
    %542 = arith.negf %541 : vector<4x32xf32>
    %543 = math.exp %542 : vector<4x32xf32>
    %cst_274 = arith.constant 1.000000e+00 : f32
    %544 = vector.broadcast %cst_274 : f32 to vector<4x32xf32>
    %545 = arith.addf %544, %543 : vector<4x32xf32>
    %546 = arith.divf %544, %545 : vector<4x32xf32>
    %547 = vector.extract_strided_slice %397 {offsets = [16, 0], sizes = [4, 32], strides = [1, 1]} : vector<32x32xf32> to vector<4x32xf32>
    %cst_275 = arith.constant dense<0.000000e+00> : vector<4x32xf32>
    %548 = tpu.matmul %533, %422, %cst_275 {dimension_numbers = #tpu.dot_dimension_numbers<[1], [0], [0], [1], [0, 0, 1, 1], [], []>} : vector<4x32xf32>, vector<32x32xf32>, vector<4x32xf32> -> vector<4x32xf32>
    %549 = arith.addf %547, %548 : vector<4x32xf32>
    %550 = vector.broadcast %428 : vector<1x32xf32> to vector<4x32xf32>
    %551 = arith.addf %549, %550 : vector<4x32xf32>
    %552 = arith.negf %551 : vector<4x32xf32>
    %553 = math.exp %552 : vector<4x32xf32>
    %cst_276 = arith.constant 1.000000e+00 : f32
    %554 = vector.broadcast %cst_276 : f32 to vector<4x32xf32>
    %555 = arith.addf %554, %553 : vector<4x32xf32>
    %556 = arith.divf %554, %555 : vector<4x32xf32>
    %557 = vector.extract_strided_slice %418 {offsets = [16, 0], sizes = [4, 32], strides = [1, 1]} : vector<32x32xf32> to vector<4x32xf32>
    %cst_277 = arith.constant dense<0.000000e+00> : vector<4x32xf32>
    %558 = tpu.matmul %533, %424, %cst_277 {dimension_numbers = #tpu.dot_dimension_numbers<[1], [0], [0], [1], [0, 0, 1, 1], [], []>} : vector<4x32xf32>, vector<32x32xf32>, vector<4x32xf32> -> vector<4x32xf32>
    %559 = vector.broadcast %430 : vector<1x32xf32> to vector<4x32xf32>
    %560 = arith.addf %558, %559 : vector<4x32xf32>
    %561 = arith.mulf %546, %560 : vector<4x32xf32>
    %562 = arith.addf %557, %561 : vector<4x32xf32>
    %563 = math.tanh %562 : vector<4x32xf32>
    %cst_278 = arith.constant 1.000000e+00 : f32
    %564 = vector.broadcast %cst_278 : f32 to vector<4x32xf32>
    %565 = arith.subf %564, %556 : vector<4x32xf32>
    %566 = arith.mulf %565, %563 : vector<4x32xf32>
    %567 = arith.mulf %556, %533 : vector<4x32xf32>
    %568 = arith.addf %566, %567 : vector<4x32xf32>
    %c1_279 = arith.constant 1 : index
    %c4_280 = arith.constant 4 : index
    %c0_281 = arith.constant 0 : index
    %c0_282 = arith.constant 0 : index
    %569 = vector.load %arg10[%c1_279, %c4_280, %c0_281, %c0_282] : memref<2x8x4x32xf32, #tpu.memory_space<vmem>>, vector<1x1x4x32xf32>
    %570 = vector.shape_cast %569 : vector<1x1x4x32xf32> to vector<4x32xf32>
    %571 = vector.shape_cast %568 : vector<4x32xf32> to vector<1x1x4x32xf32>
    tpu.vector_store %arg10[%c1_279, %c4_280, %c0_281, %c0_282], %571 {strides = array<i32>} : memref<2x8x4x32xf32, #tpu.memory_space<vmem>>, vector<1x1x4x32xf32>,
    %572 = vector.extract_strided_slice %376 {offsets = [12, 0], sizes = [4, 32], strides = [1, 1]} : vector<32x32xf32> to vector<4x32xf32>
    %cst_283 = arith.constant dense<0.000000e+00> : vector<4x32xf32>
    %573 = tpu.matmul %568, %420, %cst_283 {dimension_numbers = #tpu.dot_dimension_numbers<[1], [0], [0], [1], [0, 0, 1, 1], [], []>} : vector<4x32xf32>, vector<32x32xf32>, vector<4x32xf32> -> vector<4x32xf32>
    %574 = arith.addf %572, %573 : vector<4x32xf32>
    %575 = vector.broadcast %426 : vector<1x32xf32> to vector<4x32xf32>
    %576 = arith.addf %574, %575 : vector<4x32xf32>
    %577 = arith.negf %576 : vector<4x32xf32>
    %578 = math.exp %577 : vector<4x32xf32>
    %cst_284 = arith.constant 1.000000e+00 : f32
    %579 = vector.broadcast %cst_284 : f32 to vector<4x32xf32>
    %580 = arith.addf %579, %578 : vector<4x32xf32>
    %581 = arith.divf %579, %580 : vector<4x32xf32>
    %582 = vector.extract_strided_slice %397 {offsets = [12, 0], sizes = [4, 32], strides = [1, 1]} : vector<32x32xf32> to vector<4x32xf32>
    %cst_285 = arith.constant dense<0.000000e+00> : vector<4x32xf32>
    %583 = tpu.matmul %568, %422, %cst_285 {dimension_numbers = #tpu.dot_dimension_numbers<[1], [0], [0], [1], [0, 0, 1, 1], [], []>} : vector<4x32xf32>, vector<32x32xf32>, vector<4x32xf32> -> vector<4x32xf32>
    %584 = arith.addf %582, %583 : vector<4x32xf32>
    %585 = vector.broadcast %428 : vector<1x32xf32> to vector<4x32xf32>
    %586 = arith.addf %584, %585 : vector<4x32xf32>
    %587 = arith.negf %586 : vector<4x32xf32>
    %588 = math.exp %587 : vector<4x32xf32>
    %cst_286 = arith.constant 1.000000e+00 : f32
    %589 = vector.broadcast %cst_286 : f32 to vector<4x32xf32>
    %590 = arith.addf %589, %588 : vector<4x32xf32>
    %591 = arith.divf %589, %590 : vector<4x32xf32>
    %592 = vector.extract_strided_slice %418 {offsets = [12, 0], sizes = [4, 32], strides = [1, 1]} : vector<32x32xf32> to vector<4x32xf32>
    %cst_287 = arith.constant dense<0.000000e+00> : vector<4x32xf32>
    %593 = tpu.matmul %568, %424, %cst_287 {dimension_numbers = #tpu.dot_dimension_numbers<[1], [0], [0], [1], [0, 0, 1, 1], [], []>} : vector<4x32xf32>, vector<32x32xf32>, vector<4x32xf32> -> vector<4x32xf32>
    %594 = vector.broadcast %430 : vector<1x32xf32> to vector<4x32xf32>
    %595 = arith.addf %593, %594 : vector<4x32xf32>
    %596 = arith.mulf %581, %595 : vector<4x32xf32>
    %597 = arith.addf %592, %596 : vector<4x32xf32>
    %598 = math.tanh %597 : vector<4x32xf32>
    %cst_288 = arith.constant 1.000000e+00 : f32
    %599 = vector.broadcast %cst_288 : f32 to vector<4x32xf32>
    %600 = arith.subf %599, %591 : vector<4x32xf32>
    %601 = arith.mulf %600, %598 : vector<4x32xf32>
    %602 = arith.mulf %591, %568 : vector<4x32xf32>
    %603 = arith.addf %601, %602 : vector<4x32xf32>
    %c1_289 = arith.constant 1 : index
    %c3_290 = arith.constant 3 : index
    %c0_291 = arith.constant 0 : index
    %c0_292 = arith.constant 0 : index
    %604 = vector.load %arg10[%c1_289, %c3_290, %c0_291, %c0_292] : memref<2x8x4x32xf32, #tpu.memory_space<vmem>>, vector<1x1x4x32xf32>
    %605 = vector.shape_cast %604 : vector<1x1x4x32xf32> to vector<4x32xf32>
    %606 = vector.shape_cast %603 : vector<4x32xf32> to vector<1x1x4x32xf32>
    tpu.vector_store %arg10[%c1_289, %c3_290, %c0_291, %c0_292], %606 {strides = array<i32>} : memref<2x8x4x32xf32, #tpu.memory_space<vmem>>, vector<1x1x4x32xf32>,
    %607 = vector.extract_strided_slice %376 {offsets = [8, 0], sizes = [4, 32], strides = [1, 1]} : vector<32x32xf32> to vector<4x32xf32>
    %cst_293 = arith.constant dense<0.000000e+00> : vector<4x32xf32>
    %608 = tpu.matmul %603, %420, %cst_293 {dimension_numbers = #tpu.dot_dimension_numbers<[1], [0], [0], [1], [0, 0, 1, 1], [], []>} : vector<4x32xf32>, vector<32x32xf32>, vector<4x32xf32> -> vector<4x32xf32>
    %609 = arith.addf %607, %608 : vector<4x32xf32>
    %610 = vector.broadcast %426 : vector<1x32xf32> to vector<4x32xf32>
    %611 = arith.addf %609, %610 : vector<4x32xf32>
    %612 = arith.negf %611 : vector<4x32xf32>
    %613 = math.exp %612 : vector<4x32xf32>
    %cst_294 = arith.constant 1.000000e+00 : f32
    %614 = vector.broadcast %cst_294 : f32 to vector<4x32xf32>
    %615 = arith.addf %614, %613 : vector<4x32xf32>
    %616 = arith.divf %614, %615 : vector<4x32xf32>
    %617 = vector.extract_strided_slice %397 {offsets = [8, 0], sizes = [4, 32], strides = [1, 1]} : vector<32x32xf32> to vector<4x32xf32>
    %cst_295 = arith.constant dense<0.000000e+00> : vector<4x32xf32>
    %618 = tpu.matmul %603, %422, %cst_295 {dimension_numbers = #tpu.dot_dimension_numbers<[1], [0], [0], [1], [0, 0, 1, 1], [], []>} : vector<4x32xf32>, vector<32x32xf32>, vector<4x32xf32> -> vector<4x32xf32>
    %619 = arith.addf %617, %618 : vector<4x32xf32>
    %620 = vector.broadcast %428 : vector<1x32xf32> to vector<4x32xf32>
    %621 = arith.addf %619, %620 : vector<4x32xf32>
    %622 = arith.negf %621 : vector<4x32xf32>
    %623 = math.exp %622 : vector<4x32xf32>
    %cst_296 = arith.constant 1.000000e+00 : f32
    %624 = vector.broadcast %cst_296 : f32 to vector<4x32xf32>
    %625 = arith.addf %624, %623 : vector<4x32xf32>
    %626 = arith.divf %624, %625 : vector<4x32xf32>
    %627 = vector.extract_strided_slice %418 {offsets = [8, 0], sizes = [4, 32], strides = [1, 1]} : vector<32x32xf32> to vector<4x32xf32>
    %cst_297 = arith.constant dense<0.000000e+00> : vector<4x32xf32>
    %628 = tpu.matmul %603, %424, %cst_297 {dimension_numbers = #tpu.dot_dimension_numbers<[1], [0], [0], [1], [0, 0, 1, 1], [], []>} : vector<4x32xf32>, vector<32x32xf32>, vector<4x32xf32> -> vector<4x32xf32>
    %629 = vector.broadcast %430 : vector<1x32xf32> to vector<4x32xf32>
    %630 = arith.addf %628, %629 : vector<4x32xf32>
    %631 = arith.mulf %616, %630 : vector<4x32xf32>
    %632 = arith.addf %627, %631 : vector<4x32xf32>
    %633 = math.tanh %632 : vector<4x32xf32>
    %cst_298 = arith.constant 1.000000e+00 : f32
    %634 = vector.broadcast %cst_298 : f32 to vector<4x32xf32>
    %635 = arith.subf %634, %626 : vector<4x32xf32>
    %636 = arith.mulf %635, %633 : vector<4x32xf32>
    %637 = arith.mulf %626, %603 : vector<4x32xf32>
    %638 = arith.addf %636, %637 : vector<4x32xf32>
    %c1_299 = arith.constant 1 : index
    %c2_300 = arith.constant 2 : index
    %c0_301 = arith.constant 0 : index
    %c0_302 = arith.constant 0 : index
    %639 = vector.load %arg10[%c1_299, %c2_300, %c0_301, %c0_302] : memref<2x8x4x32xf32, #tpu.memory_space<vmem>>, vector<1x1x4x32xf32>
    %640 = vector.shape_cast %639 : vector<1x1x4x32xf32> to vector<4x32xf32>
    %641 = vector.shape_cast %638 : vector<4x32xf32> to vector<1x1x4x32xf32>
    tpu.vector_store %arg10[%c1_299, %c2_300, %c0_301, %c0_302], %641 {strides = array<i32>} : memref<2x8x4x32xf32, #tpu.memory_space<vmem>>, vector<1x1x4x32xf32>,
    %642 = vector.extract_strided_slice %376 {offsets = [4, 0], sizes = [4, 32], strides = [1, 1]} : vector<32x32xf32> to vector<4x32xf32>
    %cst_303 = arith.constant dense<0.000000e+00> : vector<4x32xf32>
    %643 = tpu.matmul %638, %420, %cst_303 {dimension_numbers = #tpu.dot_dimension_numbers<[1], [0], [0], [1], [0, 0, 1, 1], [], []>} : vector<4x32xf32>, vector<32x32xf32>, vector<4x32xf32> -> vector<4x32xf32>
    %644 = arith.addf %642, %643 : vector<4x32xf32>
    %645 = vector.broadcast %426 : vector<1x32xf32> to vector<4x32xf32>
    %646 = arith.addf %644, %645 : vector<4x32xf32>
    %647 = arith.negf %646 : vector<4x32xf32>
    %648 = math.exp %647 : vector<4x32xf32>
    %cst_304 = arith.constant 1.000000e+00 : f32
    %649 = vector.broadcast %cst_304 : f32 to vector<4x32xf32>
    %650 = arith.addf %649, %648 : vector<4x32xf32>
    %651 = arith.divf %649, %650 : vector<4x32xf32>
    %652 = vector.extract_strided_slice %397 {offsets = [4, 0], sizes = [4, 32], strides = [1, 1]} : vector<32x32xf32> to vector<4x32xf32>
    %cst_305 = arith.constant dense<0.000000e+00> : vector<4x32xf32>
    %653 = tpu.matmul %638, %422, %cst_305 {dimension_numbers = #tpu.dot_dimension_numbers<[1], [0], [0], [1], [0, 0, 1, 1], [], []>} : vector<4x32xf32>, vector<32x32xf32>, vector<4x32xf32> -> vector<4x32xf32>
    %654 = arith.addf %652, %653 : vector<4x32xf32>
    %655 = vector.broadcast %428 : vector<1x32xf32> to vector<4x32xf32>
    %656 = arith.addf %654, %655 : vector<4x32xf32>
    %657 = arith.negf %656 : vector<4x32xf32>
    %658 = math.exp %657 : vector<4x32xf32>
    %cst_306 = arith.constant 1.000000e+00 : f32
    %659 = vector.broadcast %cst_306 : f32 to vector<4x32xf32>
    %660 = arith.addf %659, %658 : vector<4x32xf32>
    %661 = arith.divf %659, %660 : vector<4x32xf32>
    %662 = vector.extract_strided_slice %418 {offsets = [4, 0], sizes = [4, 32], strides = [1, 1]} : vector<32x32xf32> to vector<4x32xf32>
    %cst_307 = arith.constant dense<0.000000e+00> : vector<4x32xf32>
    %663 = tpu.matmul %638, %424, %cst_307 {dimension_numbers = #tpu.dot_dimension_numbers<[1], [0], [0], [1], [0, 0, 1, 1], [], []>} : vector<4x32xf32>, vector<32x32xf32>, vector<4x32xf32> -> vector<4x32xf32>
    %664 = vector.broadcast %430 : vector<1x32xf32> to vector<4x32xf32>
    %665 = arith.addf %663, %664 : vector<4x32xf32>
    %666 = arith.mulf %651, %665 : vector<4x32xf32>
    %667 = arith.addf %662, %666 : vector<4x32xf32>
    %668 = math.tanh %667 : vector<4x32xf32>
    %cst_308 = arith.constant 1.000000e+00 : f32
    %669 = vector.broadcast %cst_308 : f32 to vector<4x32xf32>
    %670 = arith.subf %669, %661 : vector<4x32xf32>
    %671 = arith.mulf %670, %668 : vector<4x32xf32>
    %672 = arith.mulf %661, %638 : vector<4x32xf32>
    %673 = arith.addf %671, %672 : vector<4x32xf32>
    %c1_309 = arith.constant 1 : index
    %c1_310 = arith.constant 1 : index
    %c0_311 = arith.constant 0 : index
    %c0_312 = arith.constant 0 : index
    %674 = vector.load %arg10[%c1_309, %c1_310, %c0_311, %c0_312] : memref<2x8x4x32xf32, #tpu.memory_space<vmem>>, vector<1x1x4x32xf32>
    %675 = vector.shape_cast %674 : vector<1x1x4x32xf32> to vector<4x32xf32>
    %676 = vector.shape_cast %673 : vector<4x32xf32> to vector<1x1x4x32xf32>
    tpu.vector_store %arg10[%c1_309, %c1_310, %c0_311, %c0_312], %676 {strides = array<i32>} : memref<2x8x4x32xf32, #tpu.memory_space<vmem>>, vector<1x1x4x32xf32>,
    %677 = vector.extract_strided_slice %376 {offsets = [0, 0], sizes = [4, 32], strides = [1, 1]} : vector<32x32xf32> to vector<4x32xf32>
    %cst_313 = arith.constant dense<0.000000e+00> : vector<4x32xf32>
    %678 = tpu.matmul %673, %420, %cst_313 {dimension_numbers = #tpu.dot_dimension_numbers<[1], [0], [0], [1], [0, 0, 1, 1], [], []>} : vector<4x32xf32>, vector<32x32xf32>, vector<4x32xf32> -> vector<4x32xf32>
    %679 = arith.addf %677, %678 : vector<4x32xf32>
    %680 = vector.broadcast %426 : vector<1x32xf32> to vector<4x32xf32>
    %681 = arith.addf %679, %680 : vector<4x32xf32>
    %682 = arith.negf %681 : vector<4x32xf32>
    %683 = math.exp %682 : vector<4x32xf32>
    %cst_314 = arith.constant 1.000000e+00 : f32
    %684 = vector.broadcast %cst_314 : f32 to vector<4x32xf32>
    %685 = arith.addf %684, %683 : vector<4x32xf32>
    %686 = arith.divf %684, %685 : vector<4x32xf32>
    %687 = vector.extract_strided_slice %397 {offsets = [0, 0], sizes = [4, 32], strides = [1, 1]} : vector<32x32xf32> to vector<4x32xf32>
    %cst_315 = arith.constant dense<0.000000e+00> : vector<4x32xf32>
    %688 = tpu.matmul %673, %422, %cst_315 {dimension_numbers = #tpu.dot_dimension_numbers<[1], [0], [0], [1], [0, 0, 1, 1], [], []>} : vector<4x32xf32>, vector<32x32xf32>, vector<4x32xf32> -> vector<4x32xf32>
    %689 = arith.addf %687, %688 : vector<4x32xf32>
    %690 = vector.broadcast %428 : vector<1x32xf32> to vector<4x32xf32>
    %691 = arith.addf %689, %690 : vector<4x32xf32>
    %692 = arith.negf %691 : vector<4x32xf32>
    %693 = math.exp %692 : vector<4x32xf32>
    %cst_316 = arith.constant 1.000000e+00 : f32
    %694 = vector.broadcast %cst_316 : f32 to vector<4x32xf32>
    %695 = arith.addf %694, %693 : vector<4x32xf32>
    %696 = arith.divf %694, %695 : vector<4x32xf32>
    %697 = vector.extract_strided_slice %418 {offsets = [0, 0], sizes = [4, 32], strides = [1, 1]} : vector<32x32xf32> to vector<4x32xf32>
    %cst_317 = arith.constant dense<0.000000e+00> : vector<4x32xf32>
    %698 = tpu.matmul %673, %424, %cst_317 {dimension_numbers = #tpu.dot_dimension_numbers<[1], [0], [0], [1], [0, 0, 1, 1], [], []>} : vector<4x32xf32>, vector<32x32xf32>, vector<4x32xf32> -> vector<4x32xf32>
    %699 = vector.broadcast %430 : vector<1x32xf32> to vector<4x32xf32>
    %700 = arith.addf %698, %699 : vector<4x32xf32>
    %701 = arith.mulf %686, %700 : vector<4x32xf32>
    %702 = arith.addf %697, %701 : vector<4x32xf32>
    %703 = math.tanh %702 : vector<4x32xf32>
    %cst_318 = arith.constant 1.000000e+00 : f32
    %704 = vector.broadcast %cst_318 : f32 to vector<4x32xf32>
    %705 = arith.subf %704, %696 : vector<4x32xf32>
    %706 = arith.mulf %705, %703 : vector<4x32xf32>
    %707 = arith.mulf %696, %673 : vector<4x32xf32>
    %708 = arith.addf %706, %707 : vector<4x32xf32>
    %c1_319 = arith.constant 1 : index
    %c0_320 = arith.constant 0 : index
    %c0_321 = arith.constant 0 : index
    %c0_322 = arith.constant 0 : index
    %709 = vector.load %arg10[%c1_319, %c0_320, %c0_321, %c0_322] : memref<2x8x4x32xf32, #tpu.memory_space<vmem>>, vector<1x1x4x32xf32>
    %710 = vector.shape_cast %709 : vector<1x1x4x32xf32> to vector<4x32xf32>
    %711 = vector.shape_cast %708 : vector<4x32xf32> to vector<1x1x4x32xf32>
    tpu.vector_store %arg10[%c1_319, %c0_320, %c0_321, %c0_322], %711 {strides = array<i32>} : memref<2x8x4x32xf32, #tpu.memory_space<vmem>>, vector<1x1x4x32xf32>,
    %c0_323 = arith.constant 0 : index
    %c0_324 = arith.constant 0 : index
    %c0_325 = arith.constant 0 : index
    %c0_326 = arith.constant 0 : index
    %712 = vector.load %arg10[%c0_323, %c0_324, %c0_325, %c0_326] : memref<2x8x4x32xf32, #tpu.memory_space<vmem>>, vector<1x8x4x32xf32>
    %713 = vector.shape_cast %712 : vector<1x8x4x32xf32> to vector<8x4x32xf32>
    %c1_327 = arith.constant 1 : index
    %c0_328 = arith.constant 0 : index
    %c0_329 = arith.constant 0 : index
    %c0_330 = arith.constant 0 : index
    %714 = vector.load %arg10[%c1_327, %c0_328, %c0_329, %c0_330] : memref<2x8x4x32xf32, #tpu.memory_space<vmem>>, vector<1x8x4x32xf32>
    %715 = vector.shape_cast %714 : vector<1x8x4x32xf32> to vector<8x4x32xf32>
    %716 = vector.extract_strided_slice %713 {offsets = [0, 0, 0], sizes = [8, 1, 32], strides = [1, 1, 1]} : vector<8x4x32xf32> to vector<8x1x32xf32>
    %717 = vector.shape_cast %716 : vector<8x1x32xf32> to vector<8x32xf32>
    %c0_331 = arith.constant 0 : index
    %c0_332 = arith.constant 0 : index
    %c0_333 = arith.constant 0 : index
    %718 = vector.load %arg5[%c0_331, %c0_332, %c0_333] : memref<2x32x16xf32, #tpu.memory_space<vmem>>, vector<1x32x16xf32>
    %719 = vector.shape_cast %718 : vector<1x32x16xf32> to vector<32x16xf32>
    %cst_334 = arith.constant dense<0.000000e+00> : vector<8x16xf32>
    %720 = tpu.matmul %717, %719, %cst_334 {dimension_numbers = #tpu.dot_dimension_numbers<[1], [0], [0], [1], [0, 0, 1, 1], [], []>} : vector<8x32xf32>, vector<32x16xf32>, vector<8x16xf32> -> vector<8x16xf32>
    %721 = vector.extract_strided_slice %715 {offsets = [0, 0, 0], sizes = [8, 1, 32], strides = [1, 1, 1]} : vector<8x4x32xf32> to vector<8x1x32xf32>
    %722 = vector.shape_cast %721 : vector<8x1x32xf32> to vector<8x32xf32>
    %c1_335 = arith.constant 1 : index
    %c0_336 = arith.constant 0 : index
    %c0_337 = arith.constant 0 : index
    %723 = vector.load %arg5[%c1_335, %c0_336, %c0_337] : memref<2x32x16xf32, #tpu.memory_space<vmem>>, vector<1x32x16xf32>
    %724 = vector.shape_cast %723 : vector<1x32x16xf32> to vector<32x16xf32>
    %cst_338 = arith.constant dense<0.000000e+00> : vector<8x16xf32>
    %725 = tpu.matmul %722, %724, %cst_338 {dimension_numbers = #tpu.dot_dimension_numbers<[1], [0], [0], [1], [0, 0, 1, 1], [], []>} : vector<8x32xf32>, vector<32x16xf32>, vector<8x16xf32> -> vector<8x16xf32>
    %726 = arith.addf %720, %725 : vector<8x16xf32>
    %c0_339 = arith.constant 0 : index
    %c0_340 = arith.constant 0 : index
    %727 = vector.load %arg6[%c0_339, %c0_340] : memref<1x16xf32, #tpu.memory_space<vmem>>, vector<1x16xf32>
    %728 = vector.broadcast %727 : vector<1x16xf32> to vector<8x16xf32>
    %729 = arith.addf %726, %728 : vector<8x16xf32>
    %c0_341 = arith.constant 0 : index
    %c0_342 = arith.constant 0 : index
    %c0_343 = arith.constant 0 : index
    %730 = vector.load %arg7[%c0_341, %c0_342, %c0_343] : memref<4x16x128xf32, #tpu.memory_space<vmem>>, vector<1x16x128xf32>
    %731 = vector.shape_cast %730 : vector<1x16x128xf32> to vector<16x128xf32>
    %cst_344 = arith.constant dense<0.000000e+00> : vector<8x128xf32>
    %732 = tpu.matmul %729, %731, %cst_344 {dimension_numbers = #tpu.dot_dimension_numbers<[1], [0], [0], [1], [0, 0, 1, 1], [], []>} : vector<8x16xf32>, vector<16x128xf32>, vector<8x128xf32> -> vector<8x128xf32>
    %733 = vector.extract_strided_slice %713 {offsets = [0, 1, 0], sizes = [8, 1, 32], strides = [1, 1, 1]} : vector<8x4x32xf32> to vector<8x1x32xf32>
    %734 = vector.shape_cast %733 : vector<8x1x32xf32> to vector<8x32xf32>
    %c0_345 = arith.constant 0 : index
    %c0_346 = arith.constant 0 : index
    %c0_347 = arith.constant 0 : index
    %735 = vector.load %arg5[%c0_345, %c0_346, %c0_347] : memref<2x32x16xf32, #tpu.memory_space<vmem>>, vector<1x32x16xf32>
    %736 = vector.shape_cast %735 : vector<1x32x16xf32> to vector<32x16xf32>
    %cst_348 = arith.constant dense<0.000000e+00> : vector<8x16xf32>
    %737 = tpu.matmul %734, %736, %cst_348 {dimension_numbers = #tpu.dot_dimension_numbers<[1], [0], [0], [1], [0, 0, 1, 1], [], []>} : vector<8x32xf32>, vector<32x16xf32>, vector<8x16xf32> -> vector<8x16xf32>
    %738 = vector.extract_strided_slice %715 {offsets = [0, 1, 0], sizes = [8, 1, 32], strides = [1, 1, 1]} : vector<8x4x32xf32> to vector<8x1x32xf32>
    %739 = vector.shape_cast %738 : vector<8x1x32xf32> to vector<8x32xf32>
    %c1_349 = arith.constant 1 : index
    %c0_350 = arith.constant 0 : index
    %c0_351 = arith.constant 0 : index
    %740 = vector.load %arg5[%c1_349, %c0_350, %c0_351] : memref<2x32x16xf32, #tpu.memory_space<vmem>>, vector<1x32x16xf32>
    %741 = vector.shape_cast %740 : vector<1x32x16xf32> to vector<32x16xf32>
    %cst_352 = arith.constant dense<0.000000e+00> : vector<8x16xf32>
    %742 = tpu.matmul %739, %741, %cst_352 {dimension_numbers = #tpu.dot_dimension_numbers<[1], [0], [0], [1], [0, 0, 1, 1], [], []>} : vector<8x32xf32>, vector<32x16xf32>, vector<8x16xf32> -> vector<8x16xf32>
    %743 = arith.addf %737, %742 : vector<8x16xf32>
    %c0_353 = arith.constant 0 : index
    %c0_354 = arith.constant 0 : index
    %744 = vector.load %arg6[%c0_353, %c0_354] : memref<1x16xf32, #tpu.memory_space<vmem>>, vector<1x16xf32>
    %745 = vector.broadcast %744 : vector<1x16xf32> to vector<8x16xf32>
    %746 = arith.addf %743, %745 : vector<8x16xf32>
    %c1_355 = arith.constant 1 : index
    %c0_356 = arith.constant 0 : index
    %c0_357 = arith.constant 0 : index
    %747 = vector.load %arg7[%c1_355, %c0_356, %c0_357] : memref<4x16x128xf32, #tpu.memory_space<vmem>>, vector<1x16x128xf32>
    %748 = vector.shape_cast %747 : vector<1x16x128xf32> to vector<16x128xf32>
    %cst_358 = arith.constant dense<0.000000e+00> : vector<8x128xf32>
    %749 = tpu.matmul %746, %748, %cst_358 {dimension_numbers = #tpu.dot_dimension_numbers<[1], [0], [0], [1], [0, 0, 1, 1], [], []>} : vector<8x16xf32>, vector<16x128xf32>, vector<8x128xf32> -> vector<8x128xf32>
    %750 = arith.addf %732, %749 : vector<8x128xf32>
    %751 = vector.extract_strided_slice %713 {offsets = [0, 2, 0], sizes = [8, 1, 32], strides = [1, 1, 1]} : vector<8x4x32xf32> to vector<8x1x32xf32>
    %752 = vector.shape_cast %751 : vector<8x1x32xf32> to vector<8x32xf32>
    %c0_359 = arith.constant 0 : index
    %c0_360 = arith.constant 0 : index
    %c0_361 = arith.constant 0 : index
    %753 = vector.load %arg5[%c0_359, %c0_360, %c0_361] : memref<2x32x16xf32, #tpu.memory_space<vmem>>, vector<1x32x16xf32>
    %754 = vector.shape_cast %753 : vector<1x32x16xf32> to vector<32x16xf32>
    %cst_362 = arith.constant dense<0.000000e+00> : vector<8x16xf32>
    %755 = tpu.matmul %752, %754, %cst_362 {dimension_numbers = #tpu.dot_dimension_numbers<[1], [0], [0], [1], [0, 0, 1, 1], [], []>} : vector<8x32xf32>, vector<32x16xf32>, vector<8x16xf32> -> vector<8x16xf32>
    %756 = vector.extract_strided_slice %715 {offsets = [0, 2, 0], sizes = [8, 1, 32], strides = [1, 1, 1]} : vector<8x4x32xf32> to vector<8x1x32xf32>
    %757 = vector.shape_cast %756 : vector<8x1x32xf32> to vector<8x32xf32>
    %c1_363 = arith.constant 1 : index
    %c0_364 = arith.constant 0 : index
    %c0_365 = arith.constant 0 : index
    %758 = vector.load %arg5[%c1_363, %c0_364, %c0_365] : memref<2x32x16xf32, #tpu.memory_space<vmem>>, vector<1x32x16xf32>
    %759 = vector.shape_cast %758 : vector<1x32x16xf32> to vector<32x16xf32>
    %cst_366 = arith.constant dense<0.000000e+00> : vector<8x16xf32>
    %760 = tpu.matmul %757, %759, %cst_366 {dimension_numbers = #tpu.dot_dimension_numbers<[1], [0], [0], [1], [0, 0, 1, 1], [], []>} : vector<8x32xf32>, vector<32x16xf32>, vector<8x16xf32> -> vector<8x16xf32>
    %761 = arith.addf %755, %760 : vector<8x16xf32>
    %c0_367 = arith.constant 0 : index
    %c0_368 = arith.constant 0 : index
    %762 = vector.load %arg6[%c0_367, %c0_368] : memref<1x16xf32, #tpu.memory_space<vmem>>, vector<1x16xf32>
    %763 = vector.broadcast %762 : vector<1x16xf32> to vector<8x16xf32>
    %764 = arith.addf %761, %763 : vector<8x16xf32>
    %c2_369 = arith.constant 2 : index
    %c0_370 = arith.constant 0 : index
    %c0_371 = arith.constant 0 : index
    %765 = vector.load %arg7[%c2_369, %c0_370, %c0_371] : memref<4x16x128xf32, #tpu.memory_space<vmem>>, vector<1x16x128xf32>
    %766 = vector.shape_cast %765 : vector<1x16x128xf32> to vector<16x128xf32>
    %cst_372 = arith.constant dense<0.000000e+00> : vector<8x128xf32>
    %767 = tpu.matmul %764, %766, %cst_372 {dimension_numbers = #tpu.dot_dimension_numbers<[1], [0], [0], [1], [0, 0, 1, 1], [], []>} : vector<8x16xf32>, vector<16x128xf32>, vector<8x128xf32> -> vector<8x128xf32>
    %768 = arith.addf %750, %767 : vector<8x128xf32>
    %769 = vector.extract_strided_slice %713 {offsets = [0, 3, 0], sizes = [8, 1, 32], strides = [1, 1, 1]} : vector<8x4x32xf32> to vector<8x1x32xf32>
    %770 = vector.shape_cast %769 : vector<8x1x32xf32> to vector<8x32xf32>
    %c0_373 = arith.constant 0 : index
    %c0_374 = arith.constant 0 : index
    %c0_375 = arith.constant 0 : index
    %771 = vector.load %arg5[%c0_373, %c0_374, %c0_375] : memref<2x32x16xf32, #tpu.memory_space<vmem>>, vector<1x32x16xf32>
    %772 = vector.shape_cast %771 : vector<1x32x16xf32> to vector<32x16xf32>
    %cst_376 = arith.constant dense<0.000000e+00> : vector<8x16xf32>
    %773 = tpu.matmul %770, %772, %cst_376 {dimension_numbers = #tpu.dot_dimension_numbers<[1], [0], [0], [1], [0, 0, 1, 1], [], []>} : vector<8x32xf32>, vector<32x16xf32>, vector<8x16xf32> -> vector<8x16xf32>
    %774 = vector.extract_strided_slice %715 {offsets = [0, 3, 0], sizes = [8, 1, 32], strides = [1, 1, 1]} : vector<8x4x32xf32> to vector<8x1x32xf32>
    %775 = vector.shape_cast %774 : vector<8x1x32xf32> to vector<8x32xf32>
    %c1_377 = arith.constant 1 : index
    %c0_378 = arith.constant 0 : index
    %c0_379 = arith.constant 0 : index
    %776 = vector.load %arg5[%c1_377, %c0_378, %c0_379] : memref<2x32x16xf32, #tpu.memory_space<vmem>>, vector<1x32x16xf32>
    %777 = vector.shape_cast %776 : vector<1x32x16xf32> to vector<32x16xf32>
    %cst_380 = arith.constant dense<0.000000e+00> : vector<8x16xf32>
    %778 = tpu.matmul %775, %777, %cst_380 {dimension_numbers = #tpu.dot_dimension_numbers<[1], [0], [0], [1], [0, 0, 1, 1], [], []>} : vector<8x32xf32>, vector<32x16xf32>, vector<8x16xf32> -> vector<8x16xf32>
    %779 = arith.addf %773, %778 : vector<8x16xf32>
    %c0_381 = arith.constant 0 : index
    %c0_382 = arith.constant 0 : index
    %780 = vector.load %arg6[%c0_381, %c0_382] : memref<1x16xf32, #tpu.memory_space<vmem>>, vector<1x16xf32>
    %781 = vector.broadcast %780 : vector<1x16xf32> to vector<8x16xf32>
    %782 = arith.addf %779, %781 : vector<8x16xf32>
    %c3_383 = arith.constant 3 : index
    %c0_384 = arith.constant 0 : index
    %c0_385 = arith.constant 0 : index
    %783 = vector.load %arg7[%c3_383, %c0_384, %c0_385] : memref<4x16x128xf32, #tpu.memory_space<vmem>>, vector<1x16x128xf32>
    %784 = vector.shape_cast %783 : vector<1x16x128xf32> to vector<16x128xf32>
    %cst_386 = arith.constant dense<0.000000e+00> : vector<8x128xf32>
    %785 = tpu.matmul %782, %784, %cst_386 {dimension_numbers = #tpu.dot_dimension_numbers<[1], [0], [0], [1], [0, 0, 1, 1], [], []>} : vector<8x16xf32>, vector<16x128xf32>, vector<8x128xf32> -> vector<8x128xf32>
    %786 = arith.addf %768, %785 : vector<8x128xf32>
    %c0_387 = arith.constant 0 : index
    %c0_388 = arith.constant 0 : index
    %787 = vector.load %arg8[%c0_387, %c0_388] : memref<1x128xf32, #tpu.memory_space<vmem>>, vector<1x128xf32>
    %788 = vector.broadcast %787 : vector<1x128xf32> to vector<8x128xf32>
    %789 = arith.addf %786, %788 : vector<8x128xf32>
    %c0_389 = arith.constant 0 : index
    %c0_390 = arith.constant 0 : index
    %790 = vector.load %arg9[%c0_389, %c0_390] : memref<8x128xf32, #tpu.memory_space<vmem>>, vector<8x128xf32>
    tpu.vector_store %arg9[%c0_389, %c0_390], %789 {strides = array<i32>} : memref<8x128xf32, #tpu.memory_space<vmem>>, vector<8x128xf32>,
    return
  }
}

</mosaic_0001>

<llo_original>
// kernel: two_level_gru_forward.2
$region0: #{two_level_gru_forward.2}
  #allocation0 [shape = 'u32[]', space=smem, size = 0x4, offset = 0x4, fixed_abs, tag = 'smem constant byte address 0x4 - core index']
  #allocation1 [shape = 'u32[72,128]{1,0:T(1,128)}', space=vmem, size = 0x9000, scoped, tag = 'internal scratch']
  #allocation2 [shape = 'f32[2,32,32]{2,1,0:T(8,128)}', space=vmem, size = 0x8000, scoped, tag = 'scratch operand']
  %s0 = inlined_call_operand.vmem [shape: f32[3,32,5], index: 0, kind: input, shape index: {}]
  %s1 = inlined_call_operand.vmem [shape: f32[3,6,5,32], index: 1, kind: input, shape index: {}]
  %s2 = inlined_call_operand.hbm [shape: f32[3,6,32,32], index: 2, kind: input, shape index: {}]
  %s3 = inlined_call_operand.vmem [shape: f32[3,6,1,32], index: 3, kind: input, shape index: {}]
  %s4 = inlined_call_operand.hbm [shape: f32[3,6,1,32], index: 4, kind: input, shape index: {}]
  %s5 = inlined_call_operand.vmem [shape: f32[3,2,32,16], index: 5, kind: input, shape index: {}]
  %s6 = inlined_call_operand.vmem [shape: f32[3,1,16], index: 6, kind: input, shape index: {}]
  %s7 = inlined_call_operand.vmem [shape: f32[3,32,16], index: 7, kind: output, shape index: {}]
  %s8 = sld [smem:[#allocation0]]
  $region69: #{two_level_gru_forward.2} parent=0
    _
  %s10 = ssub.s32 1, %s8
  %s11 = scalar_select 0, %s10, %s8
  $region1: #{two_level_gru_forward.2} parent=0
    #allocation3 [shape = 'u8[196608]{0}', space=vmem, size = 0x30000, scoped, tag = 'input window, operand 2']
    #allocation4 [shape = 's32[2]{0}', space=sflag, size = 0x8, scoped, tag = 'scoped memory for two_level_gru_forward.2']
    #allocation5 [shape = 'u8[6144]{0}', space=vmem, size = 0x1800, scoped, tag = 'input window, operand 4']
    #allocation6 [shape = 's32[2]{0}', space=sflag, size = 0x8, scoped, tag = 'scoped memory for two_level_gru_forward.2']
    %12 = vsyncpa [#allocation4], 0
    %s13 = scalar_lea.sflag [#allocation4], 1
    %14 = vsyncpa %s13, 0
    %15 = vsyncpa [#allocation6], 0
    %s16 = scalar_lea.sflag [#allocation6], 1
    %17 = vsyncpa %s16, 0
    loop: start=0, step=1, limit=5
    $region2: #{two_level_gru_forward.2} parent=1 // loop_pre_header
      _
    $region3: #{two_level_gru_forward.2} parent=1 // loop_header
      %s19 = sphi 0, %s23
      %p20 = scmp.ge.s32.totalorder %s19, 5
      %s29 = sphi 0, %s31
      %s32 = sphi 0, %s29
      %s33 = sphi 0, %s32
      %s49 = sphi 0, %s33
      %s55 = sphi 0, %s57
      %s58 = sphi 0, %s55
      %s59 = sphi 0, %s58
      %s75 = sphi 0, %s59
      %s81 = sphi 0, %s83
      %s84 = sphi 0, %s81
      %s85 = sphi 0, %s84
      %s101 = sphi 0, %s85
      %s107 = sphi 0, %s109
      %s110 = sphi 0, %s107
      %s111 = sphi 0, %s110
      %s127 = sphi 0, %s111
      %s133 = sphi 0, %s135
      %s136 = sphi 0, %s133
      %s137 = sphi 0, %s136
      %s153 = sphi 0, %s137
      %s159 = sphi 0, %s161
      %s162 = sphi 0, %s159
      %s163 = sphi 0, %s162
      %s179 = sphi 0, %s163
      %s185 = sphi 0, %s187
      %s188 = sphi 0, %s185
      %s189 = sphi 0, %s188
      %s205 = sphi 0, %s189
      %s211 = sphi 0, %s213
      %s214 = sphi 0, %s211
      %s215 = sphi 0, %s214
      %s231 = sphi 0, %s215
    $region4: #{two_level_gru_forward.2} parent=1 // loop_header_branch
      %22 = sbr.rel (%p20) target = $region8
    $region5: #{two_level_gru_forward.2} parent=1 // loop_body
      %s24 = ssub.s32 %s19, 1
      %s25 = ssub.s32 %s19, 2
      %s26 = sadd.s32 %s19, 1
      %s27 = ssub.s32 %s19, %s26
      %p28 = scmp.eq.s32.totalorder %s27, 0
      %s30 = sadd.s32 %s29, 1
      %s31 = scalar_select %p28, %s29, %s30
      %p34 = pneg %p28
      %p35 = scmp.eq.s32.totalorder %s19, 2
      %p36 = por %p34, %p35
      %p37 = scmp.ne.s32.totalorder %s29, %s32
      %p38 = scmp.eq.s32.totalorder %s19, 0
      %p39 = por %p37, %p38
      %p40 = scmp.ne.s32.totalorder %s29, %s32
      %p41 = scmp.eq.s32.totalorder %s24, 2
      %p42 = por %p40, %p41
      %p43 = scmp.ne.s32.totalorder %s32, %s33
      %p44 = scmp.eq.s32.totalorder %s24, 0
      %p45 = por %p43, %p44
      %p46 = scmp.ne.s32.totalorder %s32, %s33
      %p47 = scmp.eq.s32.totalorder %s25, 2
      %p48 = por %p46, %p47
      %p50 = scmp.ne.s32.totalorder %s33, %s49
      %p51 = scmp.eq.s32.totalorder %s25, 0
      %p52 = por %p50, %p51
      %s53 = ssub.s32 %s19, %s26
      %p54 = scmp.eq.s32.totalorder %s53, 0
      %s56 = sadd.s32 %s55, 1
      %s57 = scalar_select %p54, %s55, %s56
      %p60 = pneg %p54
      %p61 = scmp.eq.s32.totalorder %s19, 2
      %p62 = por %p60, %p61
      %p63 = scmp.ne.s32.totalorder %s55, %s58
      %p64 = scmp.eq.s32.totalorder %s19, 0
      %p65 = por %p63, %p64
      %p66 = scmp.ne.s32.totalorder %s55, %s58
      %p67 = scmp.eq.s32.totalorder %s24, 2
      %p68 = por %p66, %p67
      %p69 = scmp.ne.s32.totalorder %s58, %s59
      %p70 = scmp.eq.s32.totalorder %s24, 0
      %p71 = por %p69, %p70
      %p72 = scmp.ne.s32.totalorder %s58, %s59
      %p73 = scmp.eq.s32.totalorder %s25, 2
      %p74 = por %p72, %p73
      %p76 = scmp.ne.s32.totalorder %s59, %s75
      %p77 = scmp.eq.s32.totalorder %s25, 0
      %p78 = por %p76, %p77
      %s79 = ssub.s32 %s19, %s26
      %p80 = scmp.eq.s32.totalorder %s79, 0
      %s82 = sadd.s32 %s81, 1
      %s83 = scalar_select %p80, %s81, %s82
      %p86 = pneg %p80
      %p87 = scmp.eq.s32.totalorder %s19, 2
      %p88 = por %p86, %p87
      %p89 = scmp.ne.s32.totalorder %s81, %s84
      %p90 = scmp.eq.s32.totalorder %s19, 0
      %p91 = por %p89, %p90
      %p92 = scmp.ne.s32.totalorder %s81, %s84
      %p93 = scmp.eq.s32.totalorder %s24, 2
      %p94 = por %p92, %p93
      %p95 = scmp.ne.s32.totalorder %s84, %s85
      %p96 = scmp.eq.s32.totalorder %s24, 0
      %p97 = por %p95, %p96
      %p98 = scmp.ne.s32.totalorder %s84, %s85
      %p99 = scmp.eq.s32.totalorder %s25, 2
      %p100 = por %p98, %p99
      %p102 = scmp.ne.s32.totalorder %s85, %s101
      %p103 = scmp.eq.s32.totalorder %s25, 0
      %p104 = por %p102, %p103
      %s105 = ssub.s32 %s19, %s26
      %p106 = scmp.eq.s32.totalorder %s105, 0
      %s108 = sadd.s32 %s107, 1
      %s109 = scalar_select %p106, %s107, %s108
      %p112 = pneg %p106
      %p113 = scmp.eq.s32.totalorder %s19, 2
      %p114 = por %p112, %p113
      %p115 = scmp.ne.s32.totalorder %s107, %s110
      %p116 = scmp.eq.s32.totalorder %s19, 0
      %p117 = por %p115, %p116
      %p118 = scmp.ne.s32.totalorder %s107, %s110
      %p119 = scmp.eq.s32.totalorder %s24, 2
      %p120 = por %p118, %p119
      %p121 = scmp.ne.s32.totalorder %s110, %s111
      %p122 = scmp.eq.s32.totalorder %s24, 0
      %p123 = por %p121, %p122
      %p124 = scmp.ne.s32.totalorder %s110, %s111
      %p125 = scmp.eq.s32.totalorder %s25, 2
      %p126 = por %p124, %p125
      %p128 = scmp.ne.s32.totalorder %s111, %s127
      %p129 = scmp.eq.s32.totalorder %s25, 0
      %p130 = por %p128, %p129
      %s131 = ssub.s32 %s19, %s26
      %p132 = scmp.eq.s32.totalorder %s131, 0
      %s134 = sadd.s32 %s133, 1
      %s135 = scalar_select %p132, %s133, %s134
      %p138 = pneg %p132
      %p139 = scmp.eq.s32.totalorder %s19, 2
      %p140 = por %p138, %p139
      %p141 = scmp.ne.s32.totalorder %s133, %s136
      %p142 = scmp.eq.s32.totalorder %s19, 0
      %p143 = por %p141, %p142
      %p144 = scmp.ne.s32.totalorder %s133, %s136
      %p145 = scmp.eq.s32.totalorder %s24, 2
      %p146 = por %p144, %p145
      %p147 = scmp.ne.s32.totalorder %s136, %s137
      %p148 = scmp.eq.s32.totalorder %s24, 0
      %p149 = por %p147, %p148
      %p150 = scmp.ne.s32.totalorder %s136, %s137
      %p151 = scmp.eq.s32.totalorder %s25, 2
      %p152 = por %p150, %p151
      %p154 = scmp.ne.s32.totalorder %s137, %s153
      %p155 = scmp.eq.s32.totalorder %s25, 0
      %p156 = por %p154, %p155
      %s157 = ssub.s32 %s19, %s26
      %p158 = scmp.eq.s32.totalorder %s157, 0
      %s160 = sadd.s32 %s159, 1
      %s161 = scalar_select %p158, %s159, %s160
      %p164 = pneg %p158
      %p165 = scmp.eq.s32.totalorder %s19, 2
      %p166 = por %p164, %p165
      %p167 = scmp.ne.s32.totalorder %s159, %s162
      %p168 = scmp.eq.s32.totalorder %s19, 0
      %p169 = por %p167, %p168
      %p170 = scmp.ne.s32.totalorder %s159, %s162
      %p171 = scmp.eq.s32.totalorder %s24, 2
      %p172 = por %p170, %p171
      %p173 = scmp.ne.s32.totalorder %s162, %s163
      %p174 = scmp.eq.s32.totalorder %s24, 0
      %p175 = por %p173, %p174
      %p176 = scmp.ne.s32.totalorder %s162, %s163
      %p177 = scmp.eq.s32.totalorder %s25, 2
      %p178 = por %p176, %p177
      %p180 = scmp.ne.s32.totalorder %s163, %s179
      %p181 = scmp.eq.s32.totalorder %s25, 0
      %p182 = por %p180, %p181
      %s183 = ssub.s32 %s19, %s26
      %p184 = scmp.eq.s32.totalorder %s183, 0
      %s186 = sadd.s32 %s185, 1
      %s187 = scalar_select %p184, %s185, %s186
      %p190 = pneg %p184
      %p191 = scmp.eq.s32.totalorder %s19, 2
      %p192 = por %p190, %p191
      %p193 = scmp.ne.s32.totalorder %s185, %s188
      %p194 = scmp.eq.s32.totalorder %s19, 0
      %p195 = por %p193, %p194
      %p196 = scmp.ne.s32.totalorder %s185, %s188
      %p197 = scmp.eq.s32.totalorder %s24, 2
      %p198 = por %p196, %p197
      %p199 = scmp.ne.s32.totalorder %s188, %s189
      %p200 = scmp.eq.s32.totalorder %s24, 0
      %p201 = por %p199, %p200
      %p202 = scmp.ne.s32.totalorder %s188, %s189
      %p203 = scmp.eq.s32.totalorder %s25, 2
      %p204 = por %p202, %p203
      %p206 = scmp.ne.s32.totalorder %s189, %s205
      %p207 = scmp.eq.s32.totalorder %s25, 0
      %p208 = por %p206, %p207
      %s209 = ssub.s32 %s19, %s26
      %p210 = scmp.eq.s32.totalorder %s209, 0
      %s212 = sadd.s32 %s211, 1
      %s213 = scalar_select %p210, %s211, %s212
      %p216 = pneg %p210
      %p217 = scmp.eq.s32.totalorder %s19, 2
      %p218 = por %p216, %p217
      %p219 = scmp.ne.s32.totalorder %s211, %s214
      %p220 = scmp.eq.s32.totalorder %s19, 0
      %p221 = por %p219, %p220
      %p222 = scmp.ne.s32.totalorder %s211, %s214
      %p223 = scmp.eq.s32.totalorder %s24, 2
      %p224 = por %p222, %p223
      %p225 = scmp.ne.s32.totalorder %s214, %s215
      %p226 = scmp.eq.s32.totalorder %s24, 0
      %p227 = por %p225, %p226
      %p228 = scmp.ne.s32.totalorder %s214, %s215
      %p229 = scmp.eq.s32.totalorder %s25, 2
      %p230 = por %p228, %p229
      %p232 = scmp.ne.s32.totalorder %s215, %s231
      %p233 = scmp.eq.s32.totalorder %s25, 0
      %p234 = por %p232, %p233
      %p235 = scmp.le.s32.totalorder 1, %s19
      %p236 = scmp.lt.s32.totalorder %s19, 4
      %p237 = pnand %p235, %p236
      %p238 = pneg %p237
      // Predicated region
      $region9: #{two_level_gru_forward.2} parent=5 // pred_check
        _
      $region10: #{two_level_gru_forward.2} parent=5 // pred_check_branch
        %240 = sbr.rel (%p237) target = $region12
      $region11: #{two_level_gru_forward.2} parent=5 // pred_region
        %s241 = ssub.s32 %s19, 1
      $region12: #{two_level_gru_forward.2} parent=5 // pred_fallthru
        _
      %p242 = scmp.lt.s32.totalorder %s19, 3
      // Predicated region
      $region13: #{two_level_gru_forward.2} parent=5 // pred_check
        %p243 = pneg %p242
      $region14: #{two_level_gru_forward.2} parent=5 // pred_check_branch
        %245 = sbr.rel (%p243) target = $region16
      $region15: #{two_level_gru_forward.2} parent=5 // pred_region
        // Predicated region
        $region17: #{two_level_gru_forward.2} parent=15 // pred_check
          %p246 = pneg %p39
        $region18: #{two_level_gru_forward.2} parent=15 // pred_check_branch
          %248 = sbr.rel (%p246) target = $region20
        $region19: #{two_level_gru_forward.2} parent=15 // pred_region
          %p249 = scmp.lt.s32.totalorder %s19, 2
          %s250 = scalar_select %p249, %s19, 2
          %s251 = smul.addr %s250, 4
          %s252 = smul.addr %s251, 8
          %s253 = scalar_lea.vmem %s0, %s252
        $region20: #{two_level_gru_forward.2} parent=15 // pred_fallthru
          _
        // Predicated region
        $region21: #{two_level_gru_forward.2} parent=15 // pred_check
          %p254 = pneg %p65
        $region22: #{two_level_gru_forward.2} parent=15 // pred_check_branch
          %256 = sbr.rel (%p254) target = $region24
        $region23: #{two_level_gru_forward.2} parent=15 // pred_region
          %p257 = scmp.lt.s32.totalorder %s19, 2
          %s258 = scalar_select %p257, %s19, 2
          %s259 = smul.addr %s258, 6
          %s260 = smul.addr %s259, 8
          %s261 = scalar_lea.vmem %s1, %s260
        $region24: #{two_level_gru_forward.2} parent=15 // pred_fallthru
          _
        // Predicated region
        $region25: #{two_level_gru_forward.2} parent=15 // pred_check
          %p262 = pneg %p91
        $region26: #{two_level_gru_forward.2} parent=15 // pred_check_branch
          %264 = sbr.rel (%p262) target = $region28
        $region27: #{two_level_gru_forward.2} parent=15 // pred_region
          %s265 = sand.u32 %s81, 1
          %s266 = scalar_lea.sflag [#allocation4], %s265
          %s267 = sand.u32 %s81, 1
          %s268 = smul.addr %s267, 192
          %s269 = scalar_lea.vmem [#allocation3], %s268
          %271 = vsyncadd %s266, 0
          %s272 = smul.addr %s19, 24
          %s273 = smul.addr %s272, 8
          %s274 = scalar_lea.hbm %s2, %s273
          %s275 = sshll.u32 %s274, 4
          %s276 = int_to_ptr.hbm [resolvable:$true] %s275
          %s277 = sshll.u32 %s269, 4
          %s278 = int_to_ptr.vmem [resolvable:$true] %s277
          %283 = dma.hbm_to_vmem [thread:$0]  %s276, 3072, %s278, %s266, 128, 128, 8
        $region28: #{two_level_gru_forward.2} parent=15 // pred_fallthru
          _
        // Predicated region
        $region29: #{two_level_gru_forward.2} parent=15 // pred_check
          %p284 = pneg %p117
        $region30: #{two_level_gru_forward.2} parent=15 // pred_check_branch
          %286 = sbr.rel (%p284) target = $region32
        $region31: #{two_level_gru_forward.2} parent=15 // pred_region
          %p287 = scmp.lt.s32.totalorder %s19, 2
          %s288 = scalar_select %p287, %s19, 2
          %s289 = smul.addr %s288, 6
          %s290 = scalar_lea.vmem %s3, %s289
        $region32: #{two_level_gru_forward.2} parent=15 // pred_fallthru
          _
        // Predicated region
        $region33: #{two_level_gru_forward.2} parent=15 // pred_check
          %p291 = pneg %p143
        $region34: #{two_level_gru_forward.2} parent=15 // pred_check_branch
          %293 = sbr.rel (%p291) target = $region36
        $region35: #{two_level_gru_forward.2} parent=15 // pred_region
          %s294 = sand.u32 %s133, 1
          %s295 = scalar_lea.sflag [#allocation6], %s294
          %s296 = sand.u32 %s133, 1
          %s297 = smul.addr %s296, 6
          %s298 = scalar_lea.vmem [#allocation5], %s297
          %300 = vsyncadd %s295, 0
          %s301 = smul.addr %s19, 6
          %s302 = scalar_lea.hbm %s4, %s301
          %s303 = sshll.u32 %s302, 4
          %s304 = int_to_ptr.hbm [resolvable:$true] %s303
          %s305 = sshll.u32 %s298, 4
          %s306 = int_to_ptr.vmem [resolvable:$true] %s305
          %311 = dma.hbm_to_vmem [thread:$0]  %s304, 96, %s306, %s295, 16, 16, 1
        $region36: #{two_level_gru_forward.2} parent=15 // pred_fallthru
          _
        // Predicated region
        $region37: #{two_level_gru_forward.2} parent=15 // pred_check
          %p312 = pneg %p169
        $region38: #{two_level_gru_forward.2} parent=15 // pred_check_branch
          %314 = sbr.rel (%p312) target = $region40
        $region39: #{two_level_gru_forward.2} parent=15 // pred_region
          %p315 = scmp.lt.s32.totalorder %s19, 2
          %s316 = scalar_select %p315, %s19, 2
          %s317 = smul.addr %s316, 8
          %s318 = smul.addr %s317, 8
          %s319 = scalar_lea.vmem %s5, %s318
        $region40: #{two_level_gru_forward.2} parent=15 // pred_fallthru
          _
        // Predicated region
        $region41: #{two_level_gru_forward.2} parent=15 // pred_check
          %p320 = pneg %p195
        $region42: #{two_level_gru_forward.2} parent=15 // pred_check_branch
          %322 = sbr.rel (%p320) target = $region44
        $region43: #{two_level_gru_forward.2} parent=15 // pred_region
          %p323 = scmp.lt.s32.totalorder %s19, 2
          %s324 = scalar_select %p323, %s19, 2
          %s325 = scalar_lea.vmem %s6, %s324
        $region44: #{two_level_gru_forward.2} parent=15 // pred_fallthru
          _
      $region16: #{two_level_gru_forward.2} parent=5 // pred_fallthru
        _
      %p326 = scmp.le.s32.totalorder 1, %s19
      %p327 = scmp.lt.s32.totalorder %s19, 4
      %p328 = pnand %p326, %p327
      %p329 = pneg %p328
      // Predicated region
      $region45: #{two_level_gru_forward.2} parent=5 // pred_check
        _
      $region46: #{two_level_gru_forward.2} parent=5 // pred_check_branch
        %331 = sbr.rel (%p328) target = $region48
      $region47: #{two_level_gru_forward.2} parent=5 // pred_region
        %s332 = ssub.s32 %s19, 1
        %s333 = sand.u32 %s84, 1
        %s334 = scalar_lea.sflag [#allocation4], %s333
        %s335 = sand.u32 %s84, 1
        %s336 = smul.addr %s335, 192
        %s337 = scalar_lea.vmem [#allocation3], %s336
        // Predicated region
        $region49: #{two_level_gru_forward.2} parent=47 // pred_check
          %p338 = pneg %p97
        $region50: #{two_level_gru_forward.2} parent=47 // pred_check_branch
          %340 = sbr.rel (%p338) target = $region52
        $region51: #{two_level_gru_forward.2} parent=47 // pred_region
          %342 = dma.done %s334, 3072
        $region52: #{two_level_gru_forward.2} parent=47 // pred_fallthru
          _
        %s343 = sand.u32 %s136, 1
        %s344 = scalar_lea.sflag [#allocation6], %s343
        %s345 = sand.u32 %s136, 1
        %s346 = smul.addr %s345, 6
        %s347 = scalar_lea.vmem [#allocation5], %s346
        // Predicated region
        $region53: #{two_level_gru_forward.2} parent=47 // pred_check
          %p348 = pneg %p149
        $region54: #{two_level_gru_forward.2} parent=47 // pred_check_branch
          %350 = sbr.rel (%p348) target = $region56
        $region55: #{two_level_gru_forward.2} parent=47 // pred_region
          %352 = dma.done %s344, 96
        $region56: #{two_level_gru_forward.2} parent=47 // pred_fallthru
          _
        %p353 = scmp.lt.s32.totalorder %s24, 2
        %s354 = scalar_select %p353, %s24, 2
        %s355 = smul.addr %s354, 4
        %s356 = smul.addr %s355, 8
        %s357 = scalar_lea.vmem %s0, %s356
        %p358 = pneg %p45
        %p359 = pneg %p42
        %p360 = scmp.lt.s32.totalorder %s24, 2
        %s361 = scalar_select %p360, %s24, 2
        %s362 = smul.addr %s361, 6
        %s363 = smul.addr %s362, 8
        %s364 = scalar_lea.vmem %s1, %s363
        %p365 = pneg %p71
        %p366 = pneg %p68
        %s367 = sand.u32 %s84, 1
        %s368 = scalar_lea.sflag [#allocation4], %s367
        %s369 = sand.u32 %s84, 1
        %s370 = smul.addr %s369, 192
        %s371 = scalar_lea.vmem [#allocation3], %s370
        %p372 = pneg %p97
        %p373 = pneg %p94
        %p374 = scmp.lt.s32.totalorder %s24, 2
        %s375 = scalar_select %p374, %s24, 2
        %s376 = smul.addr %s375, 6
        %s377 = scalar_lea.vmem %s3, %s376
        %p378 = pneg %p123
        %p379 = pneg %p120
        %s380 = sand.u32 %s136, 1
        %s381 = scalar_lea.sflag [#allocation6], %s380
        %s382 = sand.u32 %s136, 1
        %s383 = smul.addr %s382, 6
        %s384 = scalar_lea.vmem [#allocation5], %s383
        %p385 = pneg %p149
        %p386 = pneg %p146
        %p387 = scmp.lt.s32.totalorder %s24, 2
        %s388 = scalar_select %p387, %s24, 2
        %s389 = smul.addr %s388, 8
        %s390 = smul.addr %s389, 8
        %s391 = scalar_lea.vmem %s5, %s390
        %p392 = pneg %p175
        %p393 = pneg %p172
        %p394 = scmp.lt.s32.totalorder %s24, 2
        %s395 = scalar_select %p394, %s24, 2
        %s396 = scalar_lea.vmem %s6, %s395
        %p397 = pneg %p201
        %p398 = pneg %p198
        %p399 = pneg %p227
        %p400 = pneg %p224
        %p401 = scmp.lt.s32.totalorder %s24, 2
        %s402 = scalar_select %p401, %s24, 2
        %s403 = smul.addr %s402, 4
        %s404 = smul.addr %s403, 8
        %s405 = scalar_lea.vmem %s7, %s404
        %p406 = scmp.lt.s32.totalorder %s24, 2
        %s407 = scalar_select %p406, %s24, 2
        %s408 = smul.addr %s407, 4
        %s409 = smul.addr %s408, 8
        %s410 = scalar_lea.vmem %s0, %s409
        %p411 = scmp.lt.s32.totalorder %s24, 2
        %s412 = scalar_select %p411, %s24, 2
        %s413 = smul.addr %s412, 6
        %s414 = smul.addr %s413, 8
        %s415 = scalar_lea.vmem %s1, %s414
        %p416 = scmp.lt.s32.totalorder %s24, 2
        %s417 = scalar_select %p416, %s24, 2
        %s418 = smul.addr %s417, 6
        %s419 = scalar_lea.vmem %s3, %s418
        %p420 = scmp.lt.s32.totalorder %s24, 2
        %s421 = scalar_select %p420, %s24, 2
        %s422 = smul.addr %s421, 8
        %s423 = smul.addr %s422, 8
        %s424 = scalar_lea.vmem %s5, %s423
        %p425 = scmp.lt.s32.totalorder %s24, 2
        %s426 = scalar_select %p425, %s24, 2
        %s427 = scalar_lea.vmem %s6, %s426
        %p428 = scmp.lt.s32.totalorder %s24, 2
        %s429 = scalar_select %p428, %s24, 2
        %s430 = smul.addr %s429, 4
        %s431 = smul.addr %s430, 8
        %s432 = scalar_lea.vmem %s7, %s431
        %v433 = vld [vmem:[%s410] sm:$0xff]
        %v434 = vld [vmem:[%s410 + $0x8] sm:$0xff]
        %v435 = vld [vmem:[%s410 + $0x10] sm:$0xff]
        %v436 = vld [vmem:[%s410 + $0x18] sm:$0xff]
        %v437 = vld [vmem:[%s415] sm:$0x1f]
        %v438 = vld [vmem:[%s419] sm:$0x1]
        %v440 = vperm.slane %v438, 0
        %vm442 = vcmask 39936
        %v444 = vsel %vm442, %v433, 0
        %v447 = vsel %vm442, %v434, 0
        %v450 = vsel %vm442, %v435, 0
        %v453 = vsel %vm442, %v436, 0
        %vm455 = vcmask 1044480
        %v457 = vsel %vm455, %v437, 0
        %459 = vmatpush.msra.mxu0 0.0
        %460 = vmatpush.msra.mxu0 0.0
        %461 = vmatpush.msra.mxu0 0.0
        %462 = vmatpush.msra.mxu0 0.0
        %463 = vmatpush.msra.mxu0 0.0
        %464 = vmatpush.msra.mxu0 0.0
        %465 = vmatpush.msra.mxu0 0.0
        %466 = vmatpush.msra.mxu0 0.0
        %467 = vmatpush.msra.mxu0 0.0
        %468 = vmatpush.msra.mxu0 0.0
        %469 = vmatpush.msra.mxu0 0.0
        %470 = vmatpush.msra.mxu0 0.0
        %471 = vmatpush.msra.mxu0 0.0
        %472 = vmatpush.msra.mxu0 0.0
        %473 = vmatpush.msra.mxu0 0.0
        %474 = vmatpush.msra.mxu0 %v457
        %475 = vmatmul.f32.gmra.mxu0 %v444
        %v476 = vpop.f32.mrf.mxu0
        %v477 = vadd.f32 %v440, %v476
        %478 = vmatmul.f32.gmra.mxu0 %v447
        %v479 = vpop.f32.mrf.mxu0
        %v480 = vadd.f32 %v440, %v479
        %481 = vmatmul.f32.gmra.mxu0 %v450
        %v482 = vpop.f32.mrf.mxu0
        %v483 = vadd.f32 %v440, %v482
        %484 = vmatmul.f32.gmra.mxu0 %v453
        %v485 = vpop.f32.mrf.mxu0
        %v486 = vadd.f32 %v440, %v485
        %487 = vdwg.mxu0
        %s488 = scalar_lea.vmem %s415, 8
        %v489 = vld [vmem:[%s488] sm:$0x1f]
        %s490 = scalar_lea.vmem %s419, 1
        %v491 = vld [vmem:[%s490] sm:$0x1]
        %v493 = vperm.slane %v491, 0
        %v496 = vsel %vm455, %v489, 0
        %498 = vmatpush.msra.mxu0 0.0
        %499 = vmatpush.msra.mxu0 0.0
        %500 = vmatpush.msra.mxu0 0.0
        %501 = vmatpush.msra.mxu0 0.0
        %502 = vmatpush.msra.mxu0 0.0
        %503 = vmatpush.msra.mxu0 0.0
        %504 = vmatpush.msra.mxu0 0.0
        %505 = vmatpush.msra.mxu0 0.0
        %506 = vmatpush.msra.mxu0 0.0
        %507 = vmatpush.msra.mxu0 0.0
        %508 = vmatpush.msra.mxu0 0.0
        %509 = vmatpush.msra.mxu0 0.0
        %510 = vmatpush.msra.mxu0 0.0
        %511 = vmatpush.msra.mxu0 0.0
        %512 = vmatpush.msra.mxu0 0.0
        %513 = vmatpush.msra.mxu0 %v496
        %514 = vmatmul.f32.gmra.mxu0 %v444
        %v515 = vpop.f32.mrf.mxu0
        %v516 = vadd.f32 %v493, %v515
        %517 = vmatmul.f32.gmra.mxu0 %v447
        %v518 = vpop.f32.mrf.mxu0
        %v519 = vadd.f32 %v493, %v518
        %520 = vmatmul.f32.gmra.mxu0 %v450
        %v521 = vpop.f32.mrf.mxu0
        %v522 = vadd.f32 %v493, %v521
        %523 = vmatmul.f32.gmra.mxu0 %v453
        %v524 = vpop.f32.mrf.mxu0
        %v525 = vadd.f32 %v493, %v524
        %526 = vdwg.mxu0
        %s527 = scalar_lea.vmem %s415, 16
        %v528 = vld [vmem:[%s527] sm:$0x1f]
        %s529 = scalar_lea.vmem %s419, 2
        %v530 = vld [vmem:[%s529] sm:$0x1]
        %v532 = vperm.slane %v530, 0
        %v535 = vsel %vm455, %v528, 0
        %537 = vmatpush.msra.mxu0 0.0
        %538 = vmatpush.msra.mxu0 0.0
        %539 = vmatpush.msra.mxu0 0.0
        %540 = vmatpush.msra.mxu0 0.0
        %541 = vmatpush.msra.mxu0 0.0
        %542 = vmatpush.msra.mxu0 0.0
        %543 = vmatpush.msra.mxu0 0.0
        %544 = vmatpush.msra.mxu0 0.0
        %545 = vmatpush.msra.mxu0 0.0
        %546 = vmatpush.msra.mxu0 0.0
        %547 = vmatpush.msra.mxu0 0.0
        %548 = vmatpush.msra.mxu0 0.0
        %549 = vmatpush.msra.mxu0 0.0
        %550 = vmatpush.msra.mxu0 0.0
        %551 = vmatpush.msra.mxu0 0.0
        %552 = vmatpush.msra.mxu0 %v535
        %553 = vmatmul.f32.gmra.mxu0 %v444
        %v554 = vpop.f32.mrf.mxu0
        %v555 = vadd.f32 %v532, %v554
        %556 = vmatmul.f32.gmra.mxu0 %v447
        %v557 = vpop.f32.mrf.mxu0
        %v558 = vadd.f32 %v532, %v557
        %559 = vmatmul.f32.gmra.mxu0 %v450
        %v560 = vpop.f32.mrf.mxu0
        %v561 = vadd.f32 %v532, %v560
        %562 = vmatmul.f32.gmra.mxu0 %v453
        %v563 = vpop.f32.mrf.mxu0
        %v564 = vadd.f32 %v532, %v563
        %565 = vdwg.mxu0
        %v566 = vld [vmem:[%s337] sm:$0xff]
        %v567 = vld [vmem:[%s337 + $0x8] sm:$0xff]
        %v568 = vld [vmem:[%s337 + $0x10] sm:$0xff]
        %v569 = vld [vmem:[%s337 + $0x18] sm:$0xff]
        %s570 = scalar_lea.vmem %s337, 32 [#allocation3]
        %v571 = vld [vmem:[%s570] sm:$0xff]
        %v572 = vld [vmem:[%s570 + $0x8] sm:$0xff]
        %v573 = vld [vmem:[%s570 + $0x10] sm:$0xff]
        %v574 = vld [vmem:[%s570 + $0x18] sm:$0xff]
        %s575 = scalar_lea.vmem %s337, 64 [#allocation3]
        %v576 = vld [vmem:[%s575] sm:$0xff]
        %v577 = vld [vmem:[%s575 + $0x8] sm:$0xff]
        %v578 = vld [vmem:[%s575 + $0x10] sm:$0xff]
        %v579 = vld [vmem:[%s575 + $0x18] sm:$0xff]
        %v580 = vld [vmem:[%s347] sm:$0x1]
        %s581 = scalar_lea.vmem %s347, 1 [#allocation5]
        %v582 = vld [vmem:[%s581] sm:$0x1]
        %s583 = scalar_lea.vmem %s347, 2 [#allocation5]
        %v584 = vld [vmem:[%s583] sm:$0x1]
        %vm585 = vcmask 261120
        %v587 = vsel %vm585, 0.0, 0
        %589 = vmatpush.msra.mxu0 0.0
        %590 = vmatpush.msra.mxu0 0.0
        %591 = vmatpush.msra.mxu0 0.0
        %592 = vmatpush.msra.mxu0 0.0
        %593 = vmatpush.msra.mxu0 0.0
        %594 = vmatpush.msra.mxu0 0.0
        %595 = vmatpush.msra.mxu0 0.0
        %596 = vmatpush.msra.mxu0 0.0
        %597 = vmatpush.msra.mxu0 0.0
        %598 = vmatpush.msra.mxu0 0.0
        %599 = vmatpush.msra.mxu0 0.0
        %600 = vmatpush.msra.mxu0 0.0
        %601 = vmatpush.msra.mxu0 %v569
        %602 = vmatpush.msra.mxu0 %v568
        %603 = vmatpush.msra.mxu0 %v567
        %604 = vmatpush.msra.mxu0 %v566
        %605 = vmatmul.f32.gmra.mxu0 %v587
        %v606 = vpop.f32.mrf.mxu0
        %v607 = vadd.f32 0.0, %v606
        %608 = vdwg.mxu0
        %v609 = vadd.f32 %v477, %v607
        %v611 = vperm.slane %v580, 0
        %v613 = vadd.f32 %v609, %v611
        %v614 = vxor.u32 %v613, 2147483648
        %v615 = vmul.f32 %v614, 1.442695
        %v616 = vpow.pop %v615
        %v617 = vadd.f32 %v616, 1.0
        %v618 = vrcp.pop %v617
        %v619 = vmul.f32 %v617, %v618
        %v620 = vsub.f32 1.0, %v619
        %v621 = vmul.f32 %v618, %v620
        %v622 = vadd.f32 %v618, %v621
        %vm623 = vweird.f32 %v617
        %vm624 = vweird.f32 %v618
        %vm625 = vmor %vm623, %vm624
        %v626 = vsel %vm625, %v618, %v622
        %v627 = vand.u32 2147483647, %v617
        %vm628 = vcmp.eq.f32.partialorder %v627, 8.507059e+37
        %v629 = vand.u32 %v617, 2147483648
        %v630 = vor.u32 1.1754944e-38, %v629
        %v631 = vsel %vm628, %v630, %v626
        %v632 = vmul.f32 1.0, %v631
        %633 = vmatpush.msra.mxu0 0.0
        %634 = vmatpush.msra.mxu0 0.0
        %635 = vmatpush.msra.mxu0 0.0
        %636 = vmatpush.msra.mxu0 0.0
        %637 = vmatpush.msra.mxu0 0.0
        %638 = vmatpush.msra.mxu0 0.0
        %639 = vmatpush.msra.mxu0 0.0
        %640 = vmatpush.msra.mxu0 0.0
        %641 = vmatpush.msra.mxu0 0.0
        %642 = vmatpush.msra.mxu0 0.0
        %643 = vmatpush.msra.mxu0 0.0
        %644 = vmatpush.msra.mxu0 0.0
        %645 = vmatpush.msra.mxu0 %v574
        %646 = vmatpush.msra.mxu0 %v573
        %647 = vmatpush.msra.mxu0 %v572
        %648 = vmatpush.msra.mxu0 %v571
        %649 = vmatmul.f32.gmra.mxu0 %v587
        %v650 = vpop.f32.mrf.mxu0
        %v651 = vadd.f32 0.0, %v650
        %652 = vdwg.mxu0
        %v653 = vadd.f32 %v516, %v651
        %v655 = vperm.slane %v582, 0
        %v657 = vadd.f32 %v653, %v655
        %v658 = vxor.u32 %v657, 2147483648
        %v659 = vmul.f32 %v658, 1.442695
        %v660 = vpow.pop %v659
        %v661 = vadd.f32 %v660, 1.0
        %v662 = vrcp.pop %v661
        %v663 = vmul.f32 %v661, %v662
        %v664 = vsub.f32 1.0, %v663
        %v665 = vmul.f32 %v662, %v664
        %v666 = vadd.f32 %v662, %v665
        %vm667 = vweird.f32 %v661
        %vm668 = vweird.f32 %v662
        %vm669 = vmor %vm667, %vm668
        %v670 = vsel %vm669, %v662, %v666
        %v671 = vand.u32 2147483647, %v661
        %vm672 = vcmp.eq.f32.partialorder %v671, 8.507059e+37
        %v673 = vand.u32 %v661, 2147483648
        %v674 = vor.u32 1.1754944e-38, %v673
        %v675 = vsel %vm672, %v674, %v670
        %v676 = vmul.f32 1.0, %v675
        %v678 = vperm.slane %v584, 0
        %680 = vmatpush.msra.mxu0 0.0
        %681 = vmatpush.msra.mxu0 0.0
        %682 = vmatpush.msra.mxu0 0.0
        %683 = vmatpush.msra.mxu0 0.0
        %684 = vmatpush.msra.mxu0 0.0
        %685 = vmatpush.msra.mxu0 0.0
        %686 = vmatpush.msra.mxu0 0.0
        %687 = vmatpush.msra.mxu0 0.0
        %688 = vmatpush.msra.mxu0 0.0
        %689 = vmatpush.msra.mxu0 0.0
        %690 = vmatpush.msra.mxu0 0.0
        %691 = vmatpush.msra.mxu0 0.0
        %692 = vmatpush.msra.mxu0 %v579
        %693 = vmatpush.msra.mxu0 %v578
        %694 = vmatpush.msra.mxu0 %v577
        %695 = vmatpush.msra.mxu0 %v576
        %696 = vmatmul.f32.gmra.mxu0 %v587
        %v697 = vpop.f32.mrf.mxu0
        %v698 = vadd.f32 %v678, %v697
        %699 = vdwg.mxu0
        %v700 = vmul.f32 %v632, %v698
        %v701 = vadd.f32 %v555, %v700
        %v702 = vtanh.pop %v701
        %v703 = vsub.f32 1.0, %v676
        %v704 = vmul.f32 %v703, %v702
        %v705 = vmul.f32 %v676, 0.0
        %v706 = vadd.f32 %v704, %v705
        %vm707 = vcmask 257024
        %708 = vst.msk [vmem:[#allocation2] sm:$0xf] %vm707, %v706
        %v710 = vsel %vm585, %v706, 0
        %712 = vmatpush.msra.mxu0 0.0
        %713 = vmatpush.msra.mxu0 0.0
        %714 = vmatpush.msra.mxu0 0.0
        %715 = vmatpush.msra.mxu0 0.0
        %716 = vmatpush.msra.mxu0 0.0
        %717 = vmatpush.msra.mxu0 0.0
        %718 = vmatpush.msra.mxu0 0.0
        %719 = vmatpush.msra.mxu0 0.0
        %720 = vmatpush.msra.mxu0 0.0
        %721 = vmatpush.msra.mxu0 0.0
        %722 = vmatpush.msra.mxu0 0.0
        %723 = vmatpush.msra.mxu0 0.0
        %724 = vmatpush.msra.mxu0 %v569
        %725 = vmatpush.msra.mxu0 %v568
        %726 = vmatpush.msra.mxu0 %v567
        %727 = vmatpush.msra.mxu0 %v566
        %728 = vmatmul.f32.gmra.mxu0 %v710
        %v729 = vpop.f32.mrf.mxu0
        %v730 = vadd.f32 0.0, %v729
        %731 = vdwg.mxu0
        %v733 = vrot.slane %v730, 4
        %v735 = vadd.f32 %v477, %v733
        %v736 = vadd.f32 %v735, %v611
        %v737 = vxor.u32 %v736, 2147483648
        %v738 = vmul.f32 %v737, 1.442695
        %v739 = vpow.pop %v738
        %v740 = vadd.f32 %v739, 1.0
        %v741 = vrcp.pop %v740
        %v742 = vmul.f32 %v740, %v741
        %v743 = vsub.f32 1.0, %v742
        %v744 = vmul.f32 %v741, %v743
        %v745 = vadd.f32 %v741, %v744
        %vm746 = vweird.f32 %v740
        %vm747 = vweird.f32 %v741
        %vm748 = vmor %vm746, %vm747
        %v749 = vsel %vm748, %v741, %v745
        %v750 = vand.u32 2147483647, %v740
        %vm751 = vcmp.eq.f32.partialorder %v750, 8.507059e+37
        %v752 = vand.u32 %v740, 2147483648
        %v753 = vor.u32 1.1754944e-38, %v752
        %v754 = vsel %vm751, %v753, %v749
        %v755 = vmul.f32 1.0, %v754
        %756 = vmatpush.msra.mxu0 0.0
        %757 = vmatpush.msra.mxu0 0.0
        %758 = vmatpush.msra.mxu0 0.0
        %759 = vmatpush.msra.mxu0 0.0
        %760 = vmatpush.msra.mxu0 0.0
        %761 = vmatpush.msra.mxu0 0.0
        %762 = vmatpush.msra.mxu0 0.0
        %763 = vmatpush.msra.mxu0 0.0
        %764 = vmatpush.msra.mxu0 0.0
        %765 = vmatpush.msra.mxu0 0.0
        %766 = vmatpush.msra.mxu0 0.0
        %767 = vmatpush.msra.mxu0 0.0
        %768 = vmatpush.msra.mxu0 %v574
        %769 = vmatpush.msra.mxu0 %v573
        %770 = vmatpush.msra.mxu0 %v572
        %771 = vmatpush.msra.mxu0 %v571
        %772 = vmatmul.f32.gmra.mxu0 %v710
        %v773 = vpop.f32.mrf.mxu0
        %v774 = vadd.f32 0.0, %v773
        %775 = vdwg.mxu0
        %v777 = vrot.slane %v774, 4
        %v779 = vadd.f32 %v516, %v777
        %v780 = vadd.f32 %v779, %v655
        %v781 = vxor.u32 %v780, 2147483648
        %v782 = vmul.f32 %v781, 1.442695
        %v783 = vpow.pop %v782
        %v784 = vadd.f32 %v783, 1.0
        %v785 = vrcp.pop %v784
        %v786 = vmul.f32 %v784, %v785
        %v787 = vsub.f32 1.0, %v786
        %v788 = vmul.f32 %v785, %v787
        %v789 = vadd.f32 %v785, %v788
        %vm790 = vweird.f32 %v784
        %vm791 = vweird.f32 %v785
        %vm792 = vmor %vm790, %vm791
        %v793 = vsel %vm792, %v785, %v789
        %v794 = vand.u32 2147483647, %v784
        %vm795 = vcmp.eq.f32.partialorder %v794, 8.507059e+37
        %v796 = vand.u32 %v784, 2147483648
        %v797 = vor.u32 1.1754944e-38, %v796
        %v798 = vsel %vm795, %v797, %v793
        %v799 = vmul.f32 1.0, %v798
        %800 = vmatpush.msra.mxu0 0.0
        %801 = vmatpush.msra.mxu0 0.0
        %802 = vmatpush.msra.mxu0 0.0
        %803 = vmatpush.msra.mxu0 0.0
        %804 = vmatpush.msra.mxu0 0.0
        %805 = vmatpush.msra.mxu0 0.0
        %806 = vmatpush.msra.mxu0 0.0
        %807 = vmatpush.msra.mxu0 0.0
        %808 = vmatpush.msra.mxu0 0.0
        %809 = vmatpush.msra.mxu0 0.0
        %810 = vmatpush.msra.mxu0 0.0
        %811 = vmatpush.msra.mxu0 0.0
        %812 = vmatpush.msra.mxu0 %v579
        %813 = vmatpush.msra.mxu0 %v578
        %814 = vmatpush.msra.mxu0 %v577
        %815 = vmatpush.msra.mxu0 %v576
        %816 = vmatmul.f32.gmra.mxu0 %v710
        %v817 = vpop.f32.mrf.mxu0
        %v818 = vadd.f32 %v678, %v817
        %819 = vdwg.mxu0
        %v821 = vrot.slane %v818, 4
        %v823 = vmul.f32 %v755, %v821
        %v824 = vadd.f32 %v555, %v823
        %v825 = vtanh.pop %v824
        %v826 = vsub.f32 1.0, %v799
        %v827 = vmul.f32 %v826, %v825
        %v828 = vrot.slane %v706, 4
        %v830 = vmul.f32 %v799, %v828
        %v831 = vadd.f32 %v827, %v830
        %vm832 = vcmask 261124
        %833 = vst.msk [vmem:[#allocation2] sm:$0xf0] %vm832, %v831
        %v835 = vrot.slane %v831, 4
        %v836 = vsel %vm585, %v835, 0
        %838 = vmatpush.msra.mxu0 0.0
        %839 = vmatpush.msra.mxu0 0.0
        %840 = vmatpush.msra.mxu0 0.0
        %841 = vmatpush.msra.mxu0 0.0
        %842 = vmatpush.msra.mxu0 0.0
        %843 = vmatpush.msra.mxu0 0.0
        %844 = vmatpush.msra.mxu0 0.0
        %845 = vmatpush.msra.mxu0 0.0
        %846 = vmatpush.msra.mxu0 0.0
        %847 = vmatpush.msra.mxu0 0.0
        %848 = vmatpush.msra.mxu0 0.0
        %849 = vmatpush.msra.mxu0 0.0
        %850 = vmatpush.msra.mxu0 %v569
        %851 = vmatpush.msra.mxu0 %v568
        %852 = vmatpush.msra.mxu0 %v567
        %853 = vmatpush.msra.mxu0 %v566
        %854 = vmatmul.f32.gmra.mxu0 %v836
        %v855 = vpop.f32.mrf.mxu0
        %v856 = vadd.f32 0.0, %v855
        %857 = vdwg.mxu0
        %v858 = vadd.f32 %v480, %v856
        %v859 = vadd.f32 %v858, %v611
        %v860 = vxor.u32 %v859, 2147483648
        %v861 = vmul.f32 %v860, 1.442695
        %v862 = vpow.pop %v861
        %v863 = vadd.f32 %v862, 1.0
        %v864 = vrcp.pop %v863
        %v865 = vmul.f32 %v863, %v864
        %v866 = vsub.f32 1.0, %v865
        %v867 = vmul.f32 %v864, %v866
        %v868 = vadd.f32 %v864, %v867
        %vm869 = vweird.f32 %v863
        %vm870 = vweird.f32 %v864
        %vm871 = vmor %vm869, %vm870
        %v872 = vsel %vm871, %v864, %v868
        %v873 = vand.u32 2147483647, %v863
        %vm874 = vcmp.eq.f32.partialorder %v873, 8.507059e+37
        %v875 = vand.u32 %v863, 2147483648
        %v876 = vor.u32 1.1754944e-38, %v875
        %v877 = vsel %vm874, %v876, %v872
        %v878 = vmul.f32 1.0, %v877
        %879 = vmatpush.msra.mxu0 0.0
        %880 = vmatpush.msra.mxu0 0.0
        %881 = vmatpush.msra.mxu0 0.0
        %882 = vmatpush.msra.mxu0 0.0
        %883 = vmatpush.msra.mxu0 0.0
        %884 = vmatpush.msra.mxu0 0.0
        %885 = vmatpush.msra.mxu0 0.0
        %886 = vmatpush.msra.mxu0 0.0
        %887 = vmatpush.msra.mxu0 0.0
        %888 = vmatpush.msra.mxu0 0.0
        %889 = vmatpush.msra.mxu0 0.0
        %890 = vmatpush.msra.mxu0 0.0
        %891 = vmatpush.msra.mxu0 %v574
        %892 = vmatpush.msra.mxu0 %v573
        %893 = vmatpush.msra.mxu0 %v572
        %894 = vmatpush.msra.mxu0 %v571
        %895 = vmatmul.f32.gmra.mxu0 %v836
        %v896 = vpop.f32.mrf.mxu0
        %v897 = vadd.f32 0.0, %v896
        %898 = vdwg.mxu0
        %v899 = vadd.f32 %v519, %v897
        %v900 = vadd.f32 %v899, %v655
        %v901 = vxor.u32 %v900, 2147483648
        %v902 = vmul.f32 %v901, 1.442695
        %v903 = vpow.pop %v902
        %v904 = vadd.f32 %v903, 1.0
        %v905 = vrcp.pop %v904
        %v906 = vmul.f32 %v904, %v905
        %v907 = vsub.f32 1.0, %v906
        %v908 = vmul.f32 %v905, %v907
        %v909 = vadd.f32 %v905, %v908
        %vm910 = vweird.f32 %v904
        %vm911 = vweird.f32 %v905
        %vm912 = vmor %vm910, %vm911
        %v913 = vsel %vm912, %v905, %v909
        %v914 = vand.u32 2147483647, %v904
        %vm915 = vcmp.eq.f32.partialorder %v914, 8.507059e+37
        %v916 = vand.u32 %v904, 2147483648
        %v917 = vor.u32 1.1754944e-38, %v916
        %v918 = vsel %vm915, %v917, %v913
        %v919 = vmul.f32 1.0, %v918
        %920 = vmatpush.msra.mxu0 0.0
        %921 = vmatpush.msra.mxu0 0.0
        %922 = vmatpush.msra.mxu0 0.0
        %923 = vmatpush.msra.mxu0 0.0
        %924 = vmatpush.msra.mxu0 0.0
        %925 = vmatpush.msra.mxu0 0.0
        %926 = vmatpush.msra.mxu0 0.0
        %927 = vmatpush.msra.mxu0 0.0
        %928 = vmatpush.msra.mxu0 0.0
        %929 = vmatpush.msra.mxu0 0.0
        %930 = vmatpush.msra.mxu0 0.0
        %931 = vmatpush.msra.mxu0 0.0
        %932 = vmatpush.msra.mxu0 %v579
        %933 = vmatpush.msra.mxu0 %v578
        %934 = vmatpush.msra.mxu0 %v577
        %935 = vmatpush.msra.mxu0 %v576
        %936 = vmatmul.f32.gmra.mxu0 %v836
        %v937 = vpop.f32.mrf.mxu0
        %v938 = vadd.f32 %v678, %v937
        %939 = vdwg.mxu0
        %v940 = vmul.f32 %v878, %v938
        %v941 = vadd.f32 %v558, %v940
        %v942 = vtanh.pop %v941
        %v943 = vsub.f32 1.0, %v919
        %v944 = vmul.f32 %v943, %v942
        %v946 = vmul.f32 %v919, %v835
        %v947 = vadd.f32 %v944, %v946
        %948 = vst.msk [vmem:[#allocation2 + $0x8] sm:$0xf] %vm707, %v947
        %v950 = vsel %vm585, %v947, 0
        %952 = vmatpush.msra.mxu0 0.0
        %953 = vmatpush.msra.mxu0 0.0
        %954 = vmatpush.msra.mxu0 0.0
        %955 = vmatpush.msra.mxu0 0.0
        %956 = vmatpush.msra.mxu0 0.0
        %957 = vmatpush.msra.mxu0 0.0
        %958 = vmatpush.msra.mxu0 0.0
        %959 = vmatpush.msra.mxu0 0.0
        %960 = vmatpush.msra.mxu0 0.0
        %961 = vmatpush.msra.mxu0 0.0
        %962 = vmatpush.msra.mxu0 0.0
        %963 = vmatpush.msra.mxu0 0.0
        %964 = vmatpush.msra.mxu0 %v569
        %965 = vmatpush.msra.mxu0 %v568
        %966 = vmatpush.msra.mxu0 %v567
        %967 = vmatpush.msra.mxu0 %v566
        %968 = vmatmul.f32.gmra.mxu0 %v950
        %v969 = vpop.f32.mrf.mxu0
        %v970 = vadd.f32 0.0, %v969
        %971 = vdwg.mxu0
        %v973 = vrot.slane %v970, 4
        %v975 = vadd.f32 %v480, %v973
        %v976 = vadd.f32 %v975, %v611
        %v977 = vxor.u32 %v976, 2147483648
        %v978 = vmul.f32 %v977, 1.442695
        %v979 = vpow.pop %v978
        %v980 = vadd.f32 %v979, 1.0
        %v981 = vrcp.pop %v980
        %v982 = vmul.f32 %v980, %v981
        %v983 = vsub.f32 1.0, %v982
        %v984 = vmul.f32 %v981, %v983
        %v985 = vadd.f32 %v981, %v984
        %vm986 = vweird.f32 %v980
        %vm987 = vweird.f32 %v981
        %vm988 = vmor %vm986, %vm987
        %v989 = vsel %vm988, %v981, %v985
        %v990 = vand.u32 2147483647, %v980
        %vm991 = vcmp.eq.f32.partialorder %v990, 8.507059e+37
        %v992 = vand.u32 %v980, 2147483648
        %v993 = vor.u32 1.1754944e-38, %v992
        %v994 = vsel %vm991, %v993, %v989
        %v995 = vmul.f32 1.0, %v994
        %996 = vmatpush.msra.mxu0 0.0
        %997 = vmatpush.msra.mxu0 0.0
        %998 = vmatpush.msra.mxu0 0.0
        %999 = vmatpush.msra.mxu0 0.0
        %1000 = vmatpush.msra.mxu0 0.0
        %1001 = vmatpush.msra.mxu0 0.0
        %1002 = vmatpush.msra.mxu0 0.0
        %1003 = vmatpush.msra.mxu0 0.0
        %1004 = vmatpush.msra.mxu0 0.0
        %1005 = vmatpush.msra.mxu0 0.0
        %1006 = vmatpush.msra.mxu0 0.0
        %1007 = vmatpush.msra.mxu0 0.0
        %1008 = vmatpush.msra.mxu0 %v574
        %1009 = vmatpush.msra.mxu0 %v573
        %1010 = vmatpush.msra.mxu0 %v572
        %1011 = vmatpush.msra.mxu0 %v571
        %1012 = vmatmul.f32.gmra.mxu0 %v950
        %v1013 = vpop.f32.mrf.mxu0
        %v1014 = vadd.f32 0.0, %v1013
        %1015 = vdwg.mxu0
        %v1017 = vrot.slane %v1014, 4
        %v1019 = vadd.f32 %v519, %v1017
        %v1020 = vadd.f32 %v1019, %v655
        %v1021 = vxor.u32 %v1020, 2147483648
        %v1022 = vmul.f32 %v1021, 1.442695
        %v1023 = vpow.pop %v1022
        %v1024 = vadd.f32 %v1023, 1.0
        %v1025 = vrcp.pop %v1024
        %v1026 = vmul.f32 %v1024, %v1025
        %v1027 = vsub.f32 1.0, %v1026
        %v1028 = vmul.f32 %v1025, %v1027
        %v1029 = vadd.f32 %v1025, %v1028
        %vm1030 = vweird.f32 %v1024
        %vm1031 = vweird.f32 %v1025
        %vm1032 = vmor %vm1030, %vm1031
        %v1033 = vsel %vm1032, %v1025, %v1029
        %v1034 = vand.u32 2147483647, %v1024
        %vm1035 = vcmp.eq.f32.partialorder %v1034, 8.507059e+37
        %v1036 = vand.u32 %v1024, 2147483648
        %v1037 = vor.u32 1.1754944e-38, %v1036
        %v1038 = vsel %vm1035, %v1037, %v1033
        %v1039 = vmul.f32 1.0, %v1038
        %1040 = vmatpush.msra.mxu0 0.0
        %1041 = vmatpush.msra.mxu0 0.0
        %1042 = vmatpush.msra.mxu0 0.0
        %1043 = vmatpush.msra.mxu0 0.0
        %1044 = vmatpush.msra.mxu0 0.0
        %1045 = vmatpush.msra.mxu0 0.0
        %1046 = vmatpush.msra.mxu0 0.0
        %1047 = vmatpush.msra.mxu0 0.0
        %1048 = vmatpush.msra.mxu0 0.0
        %1049 = vmatpush.msra.mxu0 0.0
        %1050 = vmatpush.msra.mxu0 0.0
        %1051 = vmatpush.msra.mxu0 0.0
        %1052 = vmatpush.msra.mxu0 %v579
        %1053 = vmatpush.msra.mxu0 %v578
        %1054 = vmatpush.msra.mxu0 %v577
        %1055 = vmatpush.msra.mxu0 %v576
        %1056 = vmatmul.f32.gmra.mxu0 %v950
        %v1057 = vpop.f32.mrf.mxu0
        %v1058 = vadd.f32 %v678, %v1057
        %1059 = vdwg.mxu0
        %v1061 = vrot.slane %v1058, 4
        %v1063 = vmul.f32 %v995, %v1061
        %v1064 = vadd.f32 %v558, %v1063
        %v1065 = vtanh.pop %v1064
        %v1066 = vsub.f32 1.0, %v1039
        %v1067 = vmul.f32 %v1066, %v1065
        %v1068 = vrot.slane %v947, 4
        %v1070 = vmul.f32 %v1039, %v1068
        %v1071 = vadd.f32 %v1067, %v1070
        %1072 = vst.msk [vmem:[#allocation2 + $0x8] sm:$0xf0] %vm832, %v1071
        %v1074 = vrot.slane %v1071, 4
        %v1075 = vsel %vm585, %v1074, 0
        %1077 = vmatpush.msra.mxu0 0.0
        %1078 = vmatpush.msra.mxu0 0.0
        %1079 = vmatpush.msra.mxu0 0.0
        %1080 = vmatpush.msra.mxu0 0.0
        %1081 = vmatpush.msra.mxu0 0.0
        %1082 = vmatpush.msra.mxu0 0.0
        %1083 = vmatpush.msra.mxu0 0.0
        %1084 = vmatpush.msra.mxu0 0.0
        %1085 = vmatpush.msra.mxu0 0.0
        %1086 = vmatpush.msra.mxu0 0.0
        %1087 = vmatpush.msra.mxu0 0.0
        %1088 = vmatpush.msra.mxu0 0.0
        %1089 = vmatpush.msra.mxu0 %v569
        %1090 = vmatpush.msra.mxu0 %v568
        %1091 = vmatpush.msra.mxu0 %v567
        %1092 = vmatpush.msra.mxu0 %v566
        %1093 = vmatmul.f32.gmra.mxu0 %v1075
        %v1094 = vpop.f32.mrf.mxu0
        %v1095 = vadd.f32 0.0, %v1094
        %1096 = vdwg.mxu0
        %v1097 = vadd.f32 %v483, %v1095
        %v1098 = vadd.f32 %v1097, %v611
        %v1099 = vxor.u32 %v1098, 2147483648
        %v1100 = vmul.f32 %v1099, 1.442695
        %v1101 = vpow.pop %v1100
        %v1102 = vadd.f32 %v1101, 1.0
        %v1103 = vrcp.pop %v1102
        %v1104 = vmul.f32 %v1102, %v1103
        %v1105 = vsub.f32 1.0, %v1104
        %v1106 = vmul.f32 %v1103, %v1105
        %v1107 = vadd.f32 %v1103, %v1106
        %vm1108 = vweird.f32 %v1102
        %vm1109 = vweird.f32 %v1103
        %vm1110 = vmor %vm1108, %vm1109
        %v1111 = vsel %vm1110, %v1103, %v1107
        %v1112 = vand.u32 2147483647, %v1102
        %vm1113 = vcmp.eq.f32.partialorder %v1112, 8.507059e+37
        %v1114 = vand.u32 %v1102, 2147483648
        %v1115 = vor.u32 1.1754944e-38, %v1114
        %v1116 = vsel %vm1113, %v1115, %v1111
        %v1117 = vmul.f32 1.0, %v1116
        %1118 = vmatpush.msra.mxu0 0.0
        %1119 = vmatpush.msra.mxu0 0.0
        %1120 = vmatpush.msra.mxu0 0.0
        %1121 = vmatpush.msra.mxu0 0.0
        %1122 = vmatpush.msra.mxu0 0.0
        %1123 = vmatpush.msra.mxu0 0.0
        %1124 = vmatpush.msra.mxu0 0.0
        %1125 = vmatpush.msra.mxu0 0.0
        %1126 = vmatpush.msra.mxu0 0.0
        %1127 = vmatpush.msra.mxu0 0.0
        %1128 = vmatpush.msra.mxu0 0.0
        %1129 = vmatpush.msra.mxu0 0.0
        %1130 = vmatpush.msra.mxu0 %v574
        %1131 = vmatpush.msra.mxu0 %v573
        %1132 = vmatpush.msra.mxu0 %v572
        %1133 = vmatpush.msra.mxu0 %v571
        %1134 = vmatmul.f32.gmra.mxu0 %v1075
        %v1135 = vpop.f32.mrf.mxu0
        %v1136 = vadd.f32 0.0, %v1135
        %1137 = vdwg.mxu0
        %v1138 = vadd.f32 %v522, %v1136
        %v1139 = vadd.f32 %v1138, %v655
        %v1140 = vxor.u32 %v1139, 2147483648
        %v1141 = vmul.f32 %v1140, 1.442695
        %v1142 = vpow.pop %v1141
        %v1143 = vadd.f32 %v1142, 1.0
        %v1144 = vrcp.pop %v1143
        %v1145 = vmul.f32 %v1143, %v1144
        %v1146 = vsub.f32 1.0, %v1145
        %v1147 = vmul.f32 %v1144, %v1146
        %v1148 = vadd.f32 %v1144, %v1147
        %vm1149 = vweird.f32 %v1143
        %vm1150 = vweird.f32 %v1144
        %vm1151 = vmor %vm1149, %vm1150
        %v1152 = vsel %vm1151, %v1144, %v1148
        %v1153 = vand.u32 2147483647, %v1143
        %vm1154 = vcmp.eq.f32.partialorder %v1153, 8.507059e+37
        %v1155 = vand.u32 %v1143, 2147483648
        %v1156 = vor.u32 1.1754944e-38, %v1155
        %v1157 = vsel %vm1154, %v1156, %v1152
        %v1158 = vmul.f32 1.0, %v1157
        %1159 = vmatpush.msra.mxu0 0.0
        %1160 = vmatpush.msra.mxu0 0.0
        %1161 = vmatpush.msra.mxu0 0.0
        %1162 = vmatpush.msra.mxu0 0.0
        %1163 = vmatpush.msra.mxu0 0.0
        %1164 = vmatpush.msra.mxu0 0.0
        %1165 = vmatpush.msra.mxu0 0.0
        %1166 = vmatpush.msra.mxu0 0.0
        %1167 = vmatpush.msra.mxu0 0.0
        %1168 = vmatpush.msra.mxu0 0.0
        %1169 = vmatpush.msra.mxu0 0.0
        %1170 = vmatpush.msra.mxu0 0.0
        %1171 = vmatpush.msra.mxu0 %v579
        %1172 = vmatpush.msra.mxu0 %v578
        %1173 = vmatpush.msra.mxu0 %v577
        %1174 = vmatpush.msra.mxu0 %v576
        %1175 = vmatmul.f32.gmra.mxu0 %v1075
        %v1176 = vpop.f32.mrf.mxu0
        %v1177 = vadd.f32 %v678, %v1176
        %1178 = vdwg.mxu0
        %v1179 = vmul.f32 %v1117, %v1177
        %v1180 = vadd.f32 %v561, %v1179
        %v1181 = vtanh.pop %v1180
        %v1182 = vsub.f32 1.0, %v1158
        %v1183 = vmul.f32 %v1182, %v1181
        %v1185 = vmul.f32 %v1158, %v1074
        %v1186 = vadd.f32 %v1183, %v1185
        %1187 = vst.msk [vmem:[#allocation2 + $0x10] sm:$0xf] %vm707, %v1186
        %v1189 = vsel %vm585, %v1186, 0
        %1191 = vmatpush.msra.mxu0 0.0
        %1192 = vmatpush.msra.mxu0 0.0
        %1193 = vmatpush.msra.mxu0 0.0
        %1194 = vmatpush.msra.mxu0 0.0
        %1195 = vmatpush.msra.mxu0 0.0
        %1196 = vmatpush.msra.mxu0 0.0
        %1197 = vmatpush.msra.mxu0 0.0
        %1198 = vmatpush.msra.mxu0 0.0
        %1199 = vmatpush.msra.mxu0 0.0
        %1200 = vmatpush.msra.mxu0 0.0
        %1201 = vmatpush.msra.mxu0 0.0
        %1202 = vmatpush.msra.mxu0 0.0
        %1203 = vmatpush.msra.mxu0 %v569
        %1204 = vmatpush.msra.mxu0 %v568
        %1205 = vmatpush.msra.mxu0 %v567
        %1206 = vmatpush.msra.mxu0 %v566
        %1207 = vmatmul.f32.gmra.mxu0 %v1189
        %v1208 = vpop.f32.mrf.mxu0
        %v1209 = vadd.f32 0.0, %v1208
        %1210 = vdwg.mxu0
        %v1212 = vrot.slane %v1209, 4
        %v1214 = vadd.f32 %v483, %v1212
        %v1215 = vadd.f32 %v1214, %v611
        %v1216 = vxor.u32 %v1215, 2147483648
        %v1217 = vmul.f32 %v1216, 1.442695
        %v1218 = vpow.pop %v1217
        %v1219 = vadd.f32 %v1218, 1.0
        %v1220 = vrcp.pop %v1219
        %v1221 = vmul.f32 %v1219, %v1220
        %v1222 = vsub.f32 1.0, %v1221
        %v1223 = vmul.f32 %v1220, %v1222
        %v1224 = vadd.f32 %v1220, %v1223
        %vm1225 = vweird.f32 %v1219
        %vm1226 = vweird.f32 %v1220
        %vm1227 = vmor %vm1225, %vm1226
        %v1228 = vsel %vm1227, %v1220, %v1224
        %v1229 = vand.u32 2147483647, %v1219
        %vm1230 = vcmp.eq.f32.partialorder %v1229, 8.507059e+37
        %v1231 = vand.u32 %v1219, 2147483648
        %v1232 = vor.u32 1.1754944e-38, %v1231
        %v1233 = vsel %vm1230, %v1232, %v1228
        %v1234 = vmul.f32 1.0, %v1233
        %1235 = vmatpush.msra.mxu0 0.0
        %1236 = vmatpush.msra.mxu0 0.0
        %1237 = vmatpush.msra.mxu0 0.0
        %1238 = vmatpush.msra.mxu0 0.0
        %1239 = vmatpush.msra.mxu0 0.0
        %1240 = vmatpush.msra.mxu0 0.0
        %1241 = vmatpush.msra.mxu0 0.0
        %1242 = vmatpush.msra.mxu0 0.0
        %1243 = vmatpush.msra.mxu0 0.0
        %1244 = vmatpush.msra.mxu0 0.0
        %1245 = vmatpush.msra.mxu0 0.0
        %1246 = vmatpush.msra.mxu0 0.0
        %1247 = vmatpush.msra.mxu0 %v574
        %1248 = vmatpush.msra.mxu0 %v573
        %1249 = vmatpush.msra.mxu0 %v572
        %1250 = vmatpush.msra.mxu0 %v571
        %1251 = vmatmul.f32.gmra.mxu0 %v1189
        %v1252 = vpop.f32.mrf.mxu0
        %v1253 = vadd.f32 0.0, %v1252
        %1254 = vdwg.mxu0
        %v1256 = vrot.slane %v1253, 4
        %v1258 = vadd.f32 %v522, %v1256
        %v1259 = vadd.f32 %v1258, %v655
        %v1260 = vxor.u32 %v1259, 2147483648
        %v1261 = vmul.f32 %v1260, 1.442695
        %v1262 = vpow.pop %v1261
        %v1263 = vadd.f32 %v1262, 1.0
        %v1264 = vrcp.pop %v1263
        %v1265 = vmul.f32 %v1263, %v1264
        %v1266 = vsub.f32 1.0, %v1265
        %v1267 = vmul.f32 %v1264, %v1266
        %v1268 = vadd.f32 %v1264, %v1267
        %vm1269 = vweird.f32 %v1263
        %vm1270 = vweird.f32 %v1264
        %vm1271 = vmor %vm1269, %vm1270
        %v1272 = vsel %vm1271, %v1264, %v1268
        %v1273 = vand.u32 2147483647, %v1263
        %vm1274 = vcmp.eq.f32.partialorder %v1273, 8.507059e+37
        %v1275 = vand.u32 %v1263, 2147483648
        %v1276 = vor.u32 1.1754944e-38, %v1275
        %v1277 = vsel %vm1274, %v1276, %v1272
        %v1278 = vmul.f32 1.0, %v1277
        %1279 = vmatpush.msra.mxu0 0.0
        %1280 = vmatpush.msra.mxu0 0.0
        %1281 = vmatpush.msra.mxu0 0.0
        %1282 = vmatpush.msra.mxu0 0.0
        %1283 = vmatpush.msra.mxu0 0.0
        %1284 = vmatpush.msra.mxu0 0.0
        %1285 = vmatpush.msra.mxu0 0.0
        %1286 = vmatpush.msra.mxu0 0.0
        %1287 = vmatpush.msra.mxu0 0.0
        %1288 = vmatpush.msra.mxu0 0.0
        %1289 = vmatpush.msra.mxu0 0.0
        %1290 = vmatpush.msra.mxu0 0.0
        %1291 = vmatpush.msra.mxu0 %v579
        %1292 = vmatpush.msra.mxu0 %v578
        %1293 = vmatpush.msra.mxu0 %v577
        %1294 = vmatpush.msra.mxu0 %v576
        %1295 = vmatmul.f32.gmra.mxu0 %v1189
        %v1296 = vpop.f32.mrf.mxu0
        %v1297 = vadd.f32 %v678, %v1296
        %1298 = vdwg.mxu0
        %v1300 = vrot.slane %v1297, 4
        %v1302 = vmul.f32 %v1234, %v1300
        %v1303 = vadd.f32 %v561, %v1302
        %v1304 = vtanh.pop %v1303
        %v1305 = vsub.f32 1.0, %v1278
        %v1306 = vmul.f32 %v1305, %v1304
        %v1307 = vrot.slane %v1186, 4
        %v1309 = vmul.f32 %v1278, %v1307
        %v1310 = vadd.f32 %v1306, %v1309
        %1311 = vst.msk [vmem:[#allocation2 + $0x10] sm:$0xf0] %vm832, %v1310
        %v1313 = vrot.slane %v1310, 4
        %v1314 = vsel %vm585, %v1313, 0
        %1316 = vmatpush.msra.mxu0 0.0
        %1317 = vmatpush.msra.mxu0 0.0
        %1318 = vmatpush.msra.mxu0 0.0
        %1319 = vmatpush.msra.mxu0 0.0
        %1320 = vmatpush.msra.mxu0 0.0
        %1321 = vmatpush.msra.mxu0 0.0
        %1322 = vmatpush.msra.mxu0 0.0
        %1323 = vmatpush.msra.mxu0 0.0
        %1324 = vmatpush.msra.mxu0 0.0
        %1325 = vmatpush.msra.mxu0 0.0
        %1326 = vmatpush.msra.mxu0 0.0
        %1327 = vmatpush.msra.mxu0 0.0
        %1328 = vmatpush.msra.mxu0 %v569
        %1329 = vmatpush.msra.mxu0 %v568
        %1330 = vmatpush.msra.mxu0 %v567
        %1331 = vmatpush.msra.mxu0 %v566
        %1332 = vmatmul.f32.gmra.mxu0 %v1314
        %v1333 = vpop.f32.mrf.mxu0
        %v1334 = vadd.f32 0.0, %v1333
        %1335 = vdwg.mxu0
        %v1336 = vadd.f32 %v486, %v1334
        %v1337 = vadd.f32 %v1336, %v611
        %v1338 = vxor.u32 %v1337, 2147483648
        %v1339 = vmul.f32 %v1338, 1.442695
        %v1340 = vpow.pop %v1339
        %v1341 = vadd.f32 %v1340, 1.0
        %v1342 = vrcp.pop %v1341
        %v1343 = vmul.f32 %v1341, %v1342
        %v1344 = vsub.f32 1.0, %v1343
        %v1345 = vmul.f32 %v1342, %v1344
        %v1346 = vadd.f32 %v1342, %v1345
        %vm1347 = vweird.f32 %v1341
        %vm1348 = vweird.f32 %v1342
        %vm1349 = vmor %vm1347, %vm1348
        %v1350 = vsel %vm1349, %v1342, %v1346
        %v1351 = vand.u32 2147483647, %v1341
        %vm1352 = vcmp.eq.f32.partialorder %v1351, 8.507059e+37
        %v1353 = vand.u32 %v1341, 2147483648
        %v1354 = vor.u32 1.1754944e-38, %v1353
        %v1355 = vsel %vm1352, %v1354, %v1350
        %v1356 = vmul.f32 1.0, %v1355
        %1357 = vmatpush.msra.mxu0 0.0
        %1358 = vmatpush.msra.mxu0 0.0
        %1359 = vmatpush.msra.mxu0 0.0
        %1360 = vmatpush.msra.mxu0 0.0
        %1361 = vmatpush.msra.mxu0 0.0
        %1362 = vmatpush.msra.mxu0 0.0
        %1363 = vmatpush.msra.mxu0 0.0
        %1364 = vmatpush.msra.mxu0 0.0
        %1365 = vmatpush.msra.mxu0 0.0
        %1366 = vmatpush.msra.mxu0 0.0
        %1367 = vmatpush.msra.mxu0 0.0
        %1368 = vmatpush.msra.mxu0 0.0
        %1369 = vmatpush.msra.mxu0 %v574
        %1370 = vmatpush.msra.mxu0 %v573
        %1371 = vmatpush.msra.mxu0 %v572
        %1372 = vmatpush.msra.mxu0 %v571
        %1373 = vmatmul.f32.gmra.mxu0 %v1314
        %v1374 = vpop.f32.mrf.mxu0
        %v1375 = vadd.f32 0.0, %v1374
        %1376 = vdwg.mxu0
        %v1377 = vadd.f32 %v525, %v1375
        %v1378 = vadd.f32 %v1377, %v655
        %v1379 = vxor.u32 %v1378, 2147483648
        %v1380 = vmul.f32 %v1379, 1.442695
        %v1381 = vpow.pop %v1380
        %v1382 = vadd.f32 %v1381, 1.0
        %v1383 = vrcp.pop %v1382
        %v1384 = vmul.f32 %v1382, %v1383
        %v1385 = vsub.f32 1.0, %v1384
        %v1386 = vmul.f32 %v1383, %v1385
        %v1387 = vadd.f32 %v1383, %v1386
        %vm1388 = vweird.f32 %v1382
        %vm1389 = vweird.f32 %v1383
        %vm1390 = vmor %vm1388, %vm1389
        %v1391 = vsel %vm1390, %v1383, %v1387
        %v1392 = vand.u32 2147483647, %v1382
        %vm1393 = vcmp.eq.f32.partialorder %v1392, 8.507059e+37
        %v1394 = vand.u32 %v1382, 2147483648
        %v1395 = vor.u32 1.1754944e-38, %v1394
        %v1396 = vsel %vm1393, %v1395, %v1391
        %v1397 = vmul.f32 1.0, %v1396
        %1398 = vmatpush.msra.mxu0 0.0
        %1399 = vmatpush.msra.mxu0 0.0
        %1400 = vmatpush.msra.mxu0 0.0
        %1401 = vmatpush.msra.mxu0 0.0
        %1402 = vmatpush.msra.mxu0 0.0
        %1403 = vmatpush.msra.mxu0 0.0
        %1404 = vmatpush.msra.mxu0 0.0
        %1405 = vmatpush.msra.mxu0 0.0
        %1406 = vmatpush.msra.mxu0 0.0
        %1407 = vmatpush.msra.mxu0 0.0
        %1408 = vmatpush.msra.mxu0 0.0
        %1409 = vmatpush.msra.mxu0 0.0
        %1410 = vmatpush.msra.mxu0 %v579
        %1411 = vmatpush.msra.mxu0 %v578
        %1412 = vmatpush.msra.mxu0 %v577
        %1413 = vmatpush.msra.mxu0 %v576
        %1414 = vmatmul.f32.gmra.mxu0 %v1314
        %v1415 = vpop.f32.mrf.mxu0
        %v1416 = vadd.f32 %v678, %v1415
        %1417 = vdwg.mxu0
        %v1418 = vmul.f32 %v1356, %v1416
        %v1419 = vadd.f32 %v564, %v1418
        %v1420 = vtanh.pop %v1419
        %v1421 = vsub.f32 1.0, %v1397
        %v1422 = vmul.f32 %v1421, %v1420
        %v1424 = vmul.f32 %v1397, %v1313
        %v1425 = vadd.f32 %v1422, %v1424
        %1426 = vst.msk [vmem:[#allocation2 + $0x18] sm:$0xf] %vm707, %v1425
        %v1428 = vsel %vm585, %v1425, 0
        %1430 = vmatpush.msra.mxu0 0.0
        %1431 = vmatpush.msra.mxu0 0.0
        %1432 = vmatpush.msra.mxu0 0.0
        %1433 = vmatpush.msra.mxu0 0.0
        %1434 = vmatpush.msra.mxu0 0.0
        %1435 = vmatpush.msra.mxu0 0.0
        %1436 = vmatpush.msra.mxu0 0.0
        %1437 = vmatpush.msra.mxu0 0.0
        %1438 = vmatpush.msra.mxu0 0.0
        %1439 = vmatpush.msra.mxu0 0.0
        %1440 = vmatpush.msra.mxu0 0.0
        %1441 = vmatpush.msra.mxu0 0.0
        %1442 = vmatpush.msra.mxu0 %v569
        %1443 = vmatpush.msra.mxu0 %v568
        %1444 = vmatpush.msra.mxu0 %v567
        %1445 = vmatpush.msra.mxu0 %v566
        %1446 = vmatmul.f32.gmra.mxu0 %v1428
        %v1447 = vpop.f32.mrf.mxu0
        %v1448 = vadd.f32 0.0, %v1447
        %1449 = vdwg.mxu0
        %v1451 = vrot.slane %v1448, 4
        %v1453 = vadd.f32 %v486, %v1451
        %v1454 = vadd.f32 %v1453, %v611
        %v1455 = vxor.u32 %v1454, 2147483648
        %v1456 = vmul.f32 %v1455, 1.442695
        %v1457 = vpow.pop %v1456
        %v1458 = vadd.f32 %v1457, 1.0
        %v1459 = vrcp.pop %v1458
        %v1460 = vmul.f32 %v1458, %v1459
        %v1461 = vsub.f32 1.0, %v1460
        %v1462 = vmul.f32 %v1459, %v1461
        %v1463 = vadd.f32 %v1459, %v1462
        %vm1464 = vweird.f32 %v1458
        %vm1465 = vweird.f32 %v1459
        %vm1466 = vmor %vm1464, %vm1465
        %v1467 = vsel %vm1466, %v1459, %v1463
        %v1468 = vand.u32 2147483647, %v1458
        %vm1469 = vcmp.eq.f32.partialorder %v1468, 8.507059e+37
        %v1470 = vand.u32 %v1458, 2147483648
        %v1471 = vor.u32 1.1754944e-38, %v1470
        %v1472 = vsel %vm1469, %v1471, %v1467
        %v1473 = vmul.f32 1.0, %v1472
        %1474 = vmatpush.msra.mxu0 0.0
        %1475 = vmatpush.msra.mxu0 0.0
        %1476 = vmatpush.msra.mxu0 0.0
        %1477 = vmatpush.msra.mxu0 0.0
        %1478 = vmatpush.msra.mxu0 0.0
        %1479 = vmatpush.msra.mxu0 0.0
        %1480 = vmatpush.msra.mxu0 0.0
        %1481 = vmatpush.msra.mxu0 0.0
        %1482 = vmatpush.msra.mxu0 0.0
        %1483 = vmatpush.msra.mxu0 0.0
        %1484 = vmatpush.msra.mxu0 0.0
        %1485 = vmatpush.msra.mxu0 0.0
        %1486 = vmatpush.msra.mxu0 %v574
        %1487 = vmatpush.msra.mxu0 %v573
        %1488 = vmatpush.msra.mxu0 %v572
        %1489 = vmatpush.msra.mxu0 %v571
        %1490 = vmatmul.f32.gmra.mxu0 %v1428
        %v1491 = vpop.f32.mrf.mxu0
        %v1492 = vadd.f32 0.0, %v1491
        %1493 = vdwg.mxu0
        %v1495 = vrot.slane %v1492, 4
        %v1497 = vadd.f32 %v525, %v1495
        %v1498 = vadd.f32 %v1497, %v655
        %v1499 = vxor.u32 %v1498, 2147483648
        %v1500 = vmul.f32 %v1499, 1.442695
        %v1501 = vpow.pop %v1500
        %v1502 = vadd.f32 %v1501, 1.0
        %v1503 = vrcp.pop %v1502
        %v1504 = vmul.f32 %v1502, %v1503
        %v1505 = vsub.f32 1.0, %v1504
        %v1506 = vmul.f32 %v1503, %v1505
        %v1507 = vadd.f32 %v1503, %v1506
        %vm1508 = vweird.f32 %v1502
        %vm1509 = vweird.f32 %v1503
        %vm1510 = vmor %vm1508, %vm1509
        %v1511 = vsel %vm1510, %v1503, %v1507
        %v1512 = vand.u32 2147483647, %v1502
        %vm1513 = vcmp.eq.f32.partialorder %v1512, 8.507059e+37
        %v1514 = vand.u32 %v1502, 2147483648
        %v1515 = vor.u32 1.1754944e-38, %v1514
        %v1516 = vsel %vm1513, %v1515, %v1511
        %v1517 = vmul.f32 1.0, %v1516
        %1518 = vmatpush.msra.mxu0 0.0
        %1519 = vmatpush.msra.mxu0 0.0
        %1520 = vmatpush.msra.mxu0 0.0
        %1521 = vmatpush.msra.mxu0 0.0
        %1522 = vmatpush.msra.mxu0 0.0
        %1523 = vmatpush.msra.mxu0 0.0
        %1524 = vmatpush.msra.mxu0 0.0
        %1525 = vmatpush.msra.mxu0 0.0
        %1526 = vmatpush.msra.mxu0 0.0
        %1527 = vmatpush.msra.mxu0 0.0
        %1528 = vmatpush.msra.mxu0 0.0
        %1529 = vmatpush.msra.mxu0 0.0
        %1530 = vmatpush.msra.mxu0 %v579
        %1531 = vmatpush.msra.mxu0 %v578
        %1532 = vmatpush.msra.mxu0 %v577
        %1533 = vmatpush.msra.mxu0 %v576
        %1534 = vmatmul.f32.gmra.mxu0 %v1428
        %v1535 = vpop.f32.mrf.mxu0
        %v1536 = vadd.f32 %v678, %v1535
        %1537 = vdwg.mxu0
        %v1539 = vrot.slane %v1536, 4
        %v1541 = vmul.f32 %v1473, %v1539
        %v1542 = vadd.f32 %v564, %v1541
        %v1543 = vtanh.pop %v1542
        %v1544 = vsub.f32 1.0, %v1517
        %v1545 = vmul.f32 %v1544, %v1543
        %v1546 = vrot.slane %v1425, 4
        %v1548 = vmul.f32 %v1517, %v1546
        %v1549 = vadd.f32 %v1545, %v1548
        %1550 = vst.msk [vmem:[#allocation2 + $0x18] sm:$0xf0] %vm832, %v1549
        %s1551 = scalar_lea.vmem %s415, 24
        %v1552 = vld [vmem:[%s1551] sm:$0x1f]
        %s1553 = scalar_lea.vmem %s419, 3
        %v1554 = vld [vmem:[%s1553] sm:$0x1]
        %v1556 = vperm.slane %v1554, 0
        %v1559 = vsel %vm455, %v1552, 0
        %1561 = vmatpush.msra.mxu0 0.0
        %1562 = vmatpush.msra.mxu0 0.0
        %1563 = vmatpush.msra.mxu0 0.0
        %1564 = vmatpush.msra.mxu0 0.0
        %1565 = vmatpush.msra.mxu0 0.0
        %1566 = vmatpush.msra.mxu0 0.0
        %1567 = vmatpush.msra.mxu0 0.0
        %1568 = vmatpush.msra.mxu0 0.0
        %1569 = vmatpush.msra.mxu0 0.0
        %1570 = vmatpush.msra.mxu0 0.0
        %1571 = vmatpush.msra.mxu0 0.0
        %1572 = vmatpush.msra.mxu0 0.0
        %1573 = vmatpush.msra.mxu0 0.0
        %1574 = vmatpush.msra.mxu0 0.0
        %1575 = vmatpush.msra.mxu0 0.0
        %1576 = vmatpush.msra.mxu0 %v1559
        %1577 = vmatmul.f32.gmra.mxu0 %v444
        %v1578 = vpop.f32.mrf.mxu0
        %v1579 = vadd.f32 %v1556, %v1578
        %1580 = vmatmul.f32.gmra.mxu0 %v447
        %v1581 = vpop.f32.mrf.mxu0
        %v1582 = vadd.f32 %v1556, %v1581
        %1583 = vmatmul.f32.gmra.mxu0 %v450
        %v1584 = vpop.f32.mrf.mxu0
        %v1585 = vadd.f32 %v1556, %v1584
        %1586 = vmatmul.f32.gmra.mxu0 %v453
        %v1587 = vpop.f32.mrf.mxu0
        %v1588 = vadd.f32 %v1556, %v1587
        %1589 = vdwg.mxu0
        %s1590 = scalar_lea.vmem %s415, 32
        %v1591 = vld [vmem:[%s1590] sm:$0x1f]
        %s1592 = scalar_lea.vmem %s419, 4
        %v1593 = vld [vmem:[%s1592] sm:$0x1]
        %v1595 = vperm.slane %v1593, 0
        %v1598 = vsel %vm455, %v1591, 0
        %1600 = vmatpush.msra.mxu0 0.0
        %1601 = vmatpush.msra.mxu0 0.0
        %1602 = vmatpush.msra.mxu0 0.0
        %1603 = vmatpush.msra.mxu0 0.0
        %1604 = vmatpush.msra.mxu0 0.0
        %1605 = vmatpush.msra.mxu0 0.0
        %1606 = vmatpush.msra.mxu0 0.0
        %1607 = vmatpush.msra.mxu0 0.0
        %1608 = vmatpush.msra.mxu0 0.0
        %1609 = vmatpush.msra.mxu0 0.0
        %1610 = vmatpush.msra.mxu0 0.0
        %1611 = vmatpush.msra.mxu0 0.0
        %1612 = vmatpush.msra.mxu0 0.0
        %1613 = vmatpush.msra.mxu0 0.0
        %1614 = vmatpush.msra.mxu0 0.0
        %1615 = vmatpush.msra.mxu0 %v1598
        %1616 = vmatmul.f32.gmra.mxu0 %v444
        %v1617 = vpop.f32.mrf.mxu0
        %v1618 = vadd.f32 %v1595, %v1617
        %1619 = vmatmul.f32.gmra.mxu0 %v447
        %v1620 = vpop.f32.mrf.mxu0
        %v1621 = vadd.f32 %v1595, %v1620
        %1622 = vmatmul.f32.gmra.mxu0 %v450
        %v1623 = vpop.f32.mrf.mxu0
        %v1624 = vadd.f32 %v1595, %v1623
        %1625 = vmatmul.f32.gmra.mxu0 %v453
        %v1626 = vpop.f32.mrf.mxu0
        %v1627 = vadd.f32 %v1595, %v1626
        %1628 = vdwg.mxu0
        %s1629 = scalar_lea.vmem %s415, 40
        %v1630 = vld [vmem:[%s1629] sm:$0x1f]
        %s1631 = scalar_lea.vmem %s419, 5
        %v1632 = vld [vmem:[%s1631] sm:$0x1]
        %v1634 = vperm.slane %v1632, 0
        %v1637 = vsel %vm455, %v1630, 0
        %1639 = vmatpush.msra.mxu0 0.0
        %1640 = vmatpush.msra.mxu0 0.0
        %1641 = vmatpush.msra.mxu0 0.0
        %1642 = vmatpush.msra.mxu0 0.0
        %1643 = vmatpush.msra.mxu0 0.0
        %1644 = vmatpush.msra.mxu0 0.0
        %1645 = vmatpush.msra.mxu0 0.0
        %1646 = vmatpush.msra.mxu0 0.0
        %1647 = vmatpush.msra.mxu0 0.0
        %1648 = vmatpush.msra.mxu0 0.0
        %1649 = vmatpush.msra.mxu0 0.0
        %1650 = vmatpush.msra.mxu0 0.0
        %1651 = vmatpush.msra.mxu0 0.0
        %1652 = vmatpush.msra.mxu0 0.0
        %1653 = vmatpush.msra.mxu0 0.0
        %1654 = vmatpush.msra.mxu0 %v1637
        %1655 = vmatmul.f32.gmra.mxu0 %v444
        %v1656 = vpop.f32.mrf.mxu0
        %v1657 = vadd.f32 %v1634, %v1656
        %1658 = vmatmul.f32.gmra.mxu0 %v447
        %v1659 = vpop.f32.mrf.mxu0
        %v1660 = vadd.f32 %v1634, %v1659
        %1661 = vmatmul.f32.gmra.mxu0 %v450
        %v1662 = vpop.f32.mrf.mxu0
        %v1663 = vadd.f32 %v1634, %v1662
        %1664 = vmatmul.f32.gmra.mxu0 %v453
        %v1665 = vpop.f32.mrf.mxu0
        %v1666 = vadd.f32 %v1634, %v1665
        %1667 = vdwg.mxu0
        %s1668 = scalar_lea.vmem %s337, 96 [#allocation3]
        %v1669 = vld [vmem:[%s1668] sm:$0xff]
        %v1670 = vld [vmem:[%s1668 + $0x8] sm:$0xff]
        %v1671 = vld [vmem:[%s1668 + $0x10] sm:$0xff]
        %v1672 = vld [vmem:[%s1668 + $0x18] sm:$0xff]
        %s1673 = scalar_lea.vmem %s337, 128 [#allocation3]
        %v1674 = vld [vmem:[%s1673] sm:$0xff]
        %v1675 = vld [vmem:[%s1673 + $0x8] sm:$0xff]
        %v1676 = vld [vmem:[%s1673 + $0x10] sm:$0xff]
        %v1677 = vld [vmem:[%s1673 + $0x18] sm:$0xff]
        %s1678 = scalar_lea.vmem %s337, 160 [#allocation3]
        %v1679 = vld [vmem:[%s1678] sm:$0xff]
        %v1680 = vld [vmem:[%s1678 + $0x8] sm:$0xff]
        %v1681 = vld [vmem:[%s1678 + $0x10] sm:$0xff]
        %v1682 = vld [vmem:[%s1678 + $0x18] sm:$0xff]
        %s1683 = scalar_lea.vmem %s347, 3 [#allocation5]
        %v1684 = vld [vmem:[%s1683] sm:$0x1]
        %s1685 = scalar_lea.vmem %s347, 4 [#allocation5]
        %v1686 = vld [vmem:[%s1685] sm:$0x1]
        %s1687 = scalar_lea.vmem %s347, 5 [#allocation5]
        %v1688 = vld [vmem:[%s1687] sm:$0x1]
        %1689 = vmatpush.msra.mxu0 0.0
        %1690 = vmatpush.msra.mxu0 0.0
        %1691 = vmatpush.msra.mxu0 0.0
        %1692 = vmatpush.msra.mxu0 0.0
        %1693 = vmatpush.msra.mxu0 0.0
        %1694 = vmatpush.msra.mxu0 0.0
        %1695 = vmatpush.msra.mxu0 0.0
        %1696 = vmatpush.msra.mxu0 0.0
        %1697 = vmatpush.msra.mxu0 0.0
        %1698 = vmatpush.msra.mxu0 0.0
        %1699 = vmatpush.msra.mxu0 0.0
        %1700 = vmatpush.msra.mxu0 0.0
        %1701 = vmatpush.msra.mxu0 %v1672
        %1702 = vmatpush.msra.mxu0 %v1671
        %1703 = vmatpush.msra.mxu0 %v1670
        %1704 = vmatpush.msra.mxu0 %v1669
        %1705 = vmatmul.f32.gmra.mxu0 %v587
        %v1706 = vpop.f32.mrf.mxu0
        %v1707 = vadd.f32 0.0, %v1706
        %1708 = vdwg.mxu0
        %v1710 = vrot.slane %v1707, 4
        %v1712 = vadd.f32 %v1588, %v1710
        %v1714 = vperm.slane %v1684, 0
        %v1716 = vadd.f32 %v1712, %v1714
        %v1717 = vxor.u32 %v1716, 2147483648
        %v1718 = vmul.f32 %v1717, 1.442695
        %v1719 = vpow.pop %v1718
        %v1720 = vadd.f32 %v1719, 1.0
        %v1721 = vrcp.pop %v1720
        %v1722 = vmul.f32 %v1720, %v1721
        %v1723 = vsub.f32 1.0, %v1722
        %v1724 = vmul.f32 %v1721, %v1723
        %v1725 = vadd.f32 %v1721, %v1724
        %vm1726 = vweird.f32 %v1720
        %vm1727 = vweird.f32 %v1721
        %vm1728 = vmor %vm1726, %vm1727
        %v1729 = vsel %vm1728, %v1721, %v1725
        %v1730 = vand.u32 2147483647, %v1720
        %vm1731 = vcmp.eq.f32.partialorder %v1730, 8.507059e+37
        %v1732 = vand.u32 %v1720, 2147483648
        %v1733 = vor.u32 1.1754944e-38, %v1732
        %v1734 = vsel %vm1731, %v1733, %v1729
        %v1735 = vmul.f32 1.0, %v1734
        %1736 = vmatpush.msra.mxu0 0.0
        %1737 = vmatpush.msra.mxu0 0.0
        %1738 = vmatpush.msra.mxu0 0.0
        %1739 = vmatpush.msra.mxu0 0.0
        %1740 = vmatpush.msra.mxu0 0.0
        %1741 = vmatpush.msra.mxu0 0.0
        %1742 = vmatpush.msra.mxu0 0.0
        %1743 = vmatpush.msra.mxu0 0.0
        %1744 = vmatpush.msra.mxu0 0.0
        %1745 = vmatpush.msra.mxu0 0.0
        %1746 = vmatpush.msra.mxu0 0.0
        %1747 = vmatpush.msra.mxu0 0.0
        %1748 = vmatpush.msra.mxu0 %v1677
        %1749 = vmatpush.msra.mxu0 %v1676
        %1750 = vmatpush.msra.mxu0 %v1675
        %1751 = vmatpush.msra.mxu0 %v1674
        %1752 = vmatmul.f32.gmra.mxu0 %v587
        %v1753 = vpop.f32.mrf.mxu0
        %v1754 = vadd.f32 0.0, %v1753
        %1755 = vdwg.mxu0
        %v1757 = vrot.slane %v1754, 4
        %v1759 = vadd.f32 %v1627, %v1757
        %v1761 = vperm.slane %v1686, 0
        %v1763 = vadd.f32 %v1759, %v1761
        %v1764 = vxor.u32 %v1763, 2147483648
        %v1765 = vmul.f32 %v1764, 1.442695
        %v1766 = vpow.pop %v1765
        %v1767 = vadd.f32 %v1766, 1.0
        %v1768 = vrcp.pop %v1767
        %v1769 = vmul.f32 %v1767, %v1768
        %v1770 = vsub.f32 1.0, %v1769
        %v1771 = vmul.f32 %v1768, %v1770
        %v1772 = vadd.f32 %v1768, %v1771
        %vm1773 = vweird.f32 %v1767
        %vm1774 = vweird.f32 %v1768
        %vm1775 = vmor %vm1773, %vm1774
        %v1776 = vsel %vm1775, %v1768, %v1772
        %v1777 = vand.u32 2147483647, %v1767
        %vm1778 = vcmp.eq.f32.partialorder %v1777, 8.507059e+37
        %v1779 = vand.u32 %v1767, 2147483648
        %v1780 = vor.u32 1.1754944e-38, %v1779
        %v1781 = vsel %vm1778, %v1780, %v1776
        %v1782 = vmul.f32 1.0, %v1781
        %v1784 = vperm.slane %v1688, 0
        %1786 = vmatpush.msra.mxu0 0.0
        %1787 = vmatpush.msra.mxu0 0.0
        %1788 = vmatpush.msra.mxu0 0.0
        %1789 = vmatpush.msra.mxu0 0.0
        %1790 = vmatpush.msra.mxu0 0.0
        %1791 = vmatpush.msra.mxu0 0.0
        %1792 = vmatpush.msra.mxu0 0.0
        %1793 = vmatpush.msra.mxu0 0.0
        %1794 = vmatpush.msra.mxu0 0.0
        %1795 = vmatpush.msra.mxu0 0.0
        %1796 = vmatpush.msra.mxu0 0.0
        %1797 = vmatpush.msra.mxu0 0.0
        %1798 = vmatpush.msra.mxu0 %v1682
        %1799 = vmatpush.msra.mxu0 %v1681
        %1800 = vmatpush.msra.mxu0 %v1680
        %1801 = vmatpush.msra.mxu0 %v1679
        %1802 = vmatmul.f32.gmra.mxu0 %v587
        %v1803 = vpop.f32.mrf.mxu0
        %v1804 = vadd.f32 %v1784, %v1803
        %1805 = vdwg.mxu0
        %v1807 = vrot.slane %v1804, 4
        %v1809 = vmul.f32 %v1735, %v1807
        %v1810 = vadd.f32 %v1666, %v1809
        %v1811 = vtanh.pop %v1810
        %v1812 = vsub.f32 1.0, %v1782
        %v1813 = vmul.f32 %v1812, %v1811
        %v1814 = vmul.f32 %v1782, 0.0
        %v1815 = vadd.f32 %v1813, %v1814
        %s1816 = scalar_lea.vmem [#allocation2], 32
        %1817 = vst.msk [vmem:[%s1816 + $0x18] sm:$0xf0] %vm832, %v1815
        %v1819 = vrot.slane %v1815, 4
        %v1820 = vsel %vm585, %v1819, 0
        %1822 = vmatpush.msra.mxu0 0.0
        %1823 = vmatpush.msra.mxu0 0.0
        %1824 = vmatpush.msra.mxu0 0.0
        %1825 = vmatpush.msra.mxu0 0.0
        %1826 = vmatpush.msra.mxu0 0.0
        %1827 = vmatpush.msra.mxu0 0.0
        %1828 = vmatpush.msra.mxu0 0.0
        %1829 = vmatpush.msra.mxu0 0.0
        %1830 = vmatpush.msra.mxu0 0.0
        %1831 = vmatpush.msra.mxu0 0.0
        %1832 = vmatpush.msra.mxu0 0.0
        %1833 = vmatpush.msra.mxu0 0.0
        %1834 = vmatpush.msra.mxu0 %v1672
        %1835 = vmatpush.msra.mxu0 %v1671
        %1836 = vmatpush.msra.mxu0 %v1670
        %1837 = vmatpush.msra.mxu0 %v1669
        %1838 = vmatmul.f32.gmra.mxu0 %v1820
        %v1839 = vpop.f32.mrf.mxu0
        %v1840 = vadd.f32 0.0, %v1839
        %1841 = vdwg.mxu0
        %v1842 = vadd.f32 %v1588, %v1840
        %v1843 = vadd.f32 %v1842, %v1714
        %v1844 = vxor.u32 %v1843, 2147483648
        %v1845 = vmul.f32 %v1844, 1.442695
        %v1846 = vpow.pop %v1845
        %v1847 = vadd.f32 %v1846, 1.0
        %v1848 = vrcp.pop %v1847
        %v1849 = vmul.f32 %v1847, %v1848
        %v1850 = vsub.f32 1.0, %v1849
        %v1851 = vmul.f32 %v1848, %v1850
        %v1852 = vadd.f32 %v1848, %v1851
        %vm1853 = vweird.f32 %v1847
        %vm1854 = vweird.f32 %v1848
        %vm1855 = vmor %vm1853, %vm1854
        %v1856 = vsel %vm1855, %v1848, %v1852
        %v1857 = vand.u32 2147483647, %v1847
        %vm1858 = vcmp.eq.f32.partialorder %v1857, 8.507059e+37
        %v1859 = vand.u32 %v1847, 2147483648
        %v1860 = vor.u32 1.1754944e-38, %v1859
        %v1861 = vsel %vm1858, %v1860, %v1856
        %v1862 = vmul.f32 1.0, %v1861
        %1863 = vmatpush.msra.mxu0 0.0
        %1864 = vmatpush.msra.mxu0 0.0
        %1865 = vmatpush.msra.mxu0 0.0
        %1866 = vmatpush.msra.mxu0 0.0
        %1867 = vmatpush.msra.mxu0 0.0
        %1868 = vmatpush.msra.mxu0 0.0
        %1869 = vmatpush.msra.mxu0 0.0
        %1870 = vmatpush.msra.mxu0 0.0
        %1871 = vmatpush.msra.mxu0 0.0
        %1872 = vmatpush.msra.mxu0 0.0
        %1873 = vmatpush.msra.mxu0 0.0
        %1874 = vmatpush.msra.mxu0 0.0
        %1875 = vmatpush.msra.mxu0 %v1677
        %1876 = vmatpush.msra.mxu0 %v1676
        %1877 = vmatpush.msra.mxu0 %v1675
        %1878 = vmatpush.msra.mxu0 %v1674
        %1879 = vmatmul.f32.gmra.mxu0 %v1820
        %v1880 = vpop.f32.mrf.mxu0
        %v1881 = vadd.f32 0.0, %v1880
        %1882 = vdwg.mxu0
        %v1883 = vadd.f32 %v1627, %v1881
        %v1884 = vadd.f32 %v1883, %v1761
        %v1885 = vxor.u32 %v1884, 2147483648
        %v1886 = vmul.f32 %v1885, 1.442695
        %v1887 = vpow.pop %v1886
        %v1888 = vadd.f32 %v1887, 1.0
        %v1889 = vrcp.pop %v1888
        %v1890 = vmul.f32 %v1888, %v1889
        %v1891 = vsub.f32 1.0, %v1890
        %v1892 = vmul.f32 %v1889, %v1891
        %v1893 = vadd.f32 %v1889, %v1892
        %vm1894 = vweird.f32 %v1888
        %vm1895 = vweird.f32 %v1889
        %vm1896 = vmor %vm1894, %vm1895
        %v1897 = vsel %vm1896, %v1889, %v1893
        %v1898 = vand.u32 2147483647, %v1888
        %vm1899 = vcmp.eq.f32.partialorder %v1898, 8.507059e+37
        %v1900 = vand.u32 %v1888, 2147483648
        %v1901 = vor.u32 1.1754944e-38, %v1900
        %v1902 = vsel %vm1899, %v1901, %v1897
        %v1903 = vmul.f32 1.0, %v1902
        %1904 = vmatpush.msra.mxu0 0.0
        %1905 = vmatpush.msra.mxu0 0.0
        %1906 = vmatpush.msra.mxu0 0.0
        %1907 = vmatpush.msra.mxu0 0.0
        %1908 = vmatpush.msra.mxu0 0.0
        %1909 = vmatpush.msra.mxu0 0.0
        %1910 = vmatpush.msra.mxu0 0.0
        %1911 = vmatpush.msra.mxu0 0.0
        %1912 = vmatpush.msra.mxu0 0.0
        %1913 = vmatpush.msra.mxu0 0.0
        %1914 = vmatpush.msra.mxu0 0.0
        %1915 = vmatpush.msra.mxu0 0.0
        %1916 = vmatpush.msra.mxu0 %v1682
        %1917 = vmatpush.msra.mxu0 %v1681
        %1918 = vmatpush.msra.mxu0 %v1680
        %1919 = vmatpush.msra.mxu0 %v1679
        %1920 = vmatmul.f32.gmra.mxu0 %v1820
        %v1921 = vpop.f32.mrf.mxu0
        %v1922 = vadd.f32 %v1784, %v1921
        %1923 = vdwg.mxu0
        %v1924 = vmul.f32 %v1862, %v1922
        %v1925 = vadd.f32 %v1666, %v1924
        %v1926 = vtanh.pop %v1925
        %v1927 = vsub.f32 1.0, %v1903
        %v1928 = vmul.f32 %v1927, %v1926
        %v1930 = vmul.f32 %v1903, %v1819
        %v1931 = vadd.f32 %v1928, %v1930
        %1932 = vst.msk [vmem:[%s1816 + $0x18] sm:$0xf] %vm707, %v1931
        %v1934 = vsel %vm585, %v1931, 0
        %1936 = vmatpush.msra.mxu0 0.0
        %1937 = vmatpush.msra.mxu0 0.0
        %1938 = vmatpush.msra.mxu0 0.0
        %1939 = vmatpush.msra.mxu0 0.0
        %1940 = vmatpush.msra.mxu0 0.0
        %1941 = vmatpush.msra.mxu0 0.0
        %1942 = vmatpush.msra.mxu0 0.0
        %1943 = vmatpush.msra.mxu0 0.0
        %1944 = vmatpush.msra.mxu0 0.0
        %1945 = vmatpush.msra.mxu0 0.0
        %1946 = vmatpush.msra.mxu0 0.0
        %1947 = vmatpush.msra.mxu0 0.0
        %1948 = vmatpush.msra.mxu0 %v1672
        %1949 = vmatpush.msra.mxu0 %v1671
        %1950 = vmatpush.msra.mxu0 %v1670
        %1951 = vmatpush.msra.mxu0 %v1669
        %1952 = vmatmul.f32.gmra.mxu0 %v1934
        %v1953 = vpop.f32.mrf.mxu0
        %v1954 = vadd.f32 0.0, %v1953
        %1955 = vdwg.mxu0
        %v1957 = vrot.slane %v1954, 4
        %v1959 = vadd.f32 %v1585, %v1957
        %v1960 = vadd.f32 %v1959, %v1714
        %v1961 = vxor.u32 %v1960, 2147483648
        %v1962 = vmul.f32 %v1961, 1.442695
        %v1963 = vpow.pop %v1962
        %v1964 = vadd.f32 %v1963, 1.0
        %v1965 = vrcp.pop %v1964
        %v1966 = vmul.f32 %v1964, %v1965
        %v1967 = vsub.f32 1.0, %v1966
        %v1968 = vmul.f32 %v1965, %v1967
        %v1969 = vadd.f32 %v1965, %v1968
        %vm1970 = vweird.f32 %v1964
        %vm1971 = vweird.f32 %v1965
        %vm1972 = vmor %vm1970, %vm1971
        %v1973 = vsel %vm1972, %v1965, %v1969
        %v1974 = vand.u32 2147483647, %v1964
        %vm1975 = vcmp.eq.f32.partialorder %v1974, 8.507059e+37
        %v1976 = vand.u32 %v1964, 2147483648
        %v1977 = vor.u32 1.1754944e-38, %v1976
        %v1978 = vsel %vm1975, %v1977, %v1973
        %v1979 = vmul.f32 1.0, %v1978
        %1980 = vmatpush.msra.mxu0 0.0
        %1981 = vmatpush.msra.mxu0 0.0
        %1982 = vmatpush.msra.mxu0 0.0
        %1983 = vmatpush.msra.mxu0 0.0
        %1984 = vmatpush.msra.mxu0 0.0
        %1985 = vmatpush.msra.mxu0 0.0
        %1986 = vmatpush.msra.mxu0 0.0
        %1987 = vmatpush.msra.mxu0 0.0
        %1988 = vmatpush.msra.mxu0 0.0
        %1989 = vmatpush.msra.mxu0 0.0
        %1990 = vmatpush.msra.mxu0 0.0
        %1991 = vmatpush.msra.mxu0 0.0
        %1992 = vmatpush.msra.mxu0 %v1677
        %1993 = vmatpush.msra.mxu0 %v1676
        %1994 = vmatpush.msra.mxu0 %v1675
        %1995 = vmatpush.msra.mxu0 %v1674
        %1996 = vmatmul.f32.gmra.mxu0 %v1934
        %v1997 = vpop.f32.mrf.mxu0
        %v1998 = vadd.f32 0.0, %v1997
        %1999 = vdwg.mxu0
        %v2001 = vrot.slane %v1998, 4
        %v2003 = vadd.f32 %v1624, %v2001
        %v2004 = vadd.f32 %v2003, %v1761
        %v2005 = vxor.u32 %v2004, 2147483648
        %v2006 = vmul.f32 %v2005, 1.442695
        %v2007 = vpow.pop %v2006
        %v2008 = vadd.f32 %v2007, 1.0
        %v2009 = vrcp.pop %v2008
        %v2010 = vmul.f32 %v2008, %v2009
        %v2011 = vsub.f32 1.0, %v2010
        %v2012 = vmul.f32 %v2009, %v2011
        %v2013 = vadd.f32 %v2009, %v2012
        %vm2014 = vweird.f32 %v2008
        %vm2015 = vweird.f32 %v2009
        %vm2016 = vmor %vm2014, %vm2015
        %v2017 = vsel %vm2016, %v2009, %v2013
        %v2018 = vand.u32 2147483647, %v2008
        %vm2019 = vcmp.eq.f32.partialorder %v2018, 8.507059e+37
        %v2020 = vand.u32 %v2008, 2147483648
        %v2021 = vor.u32 1.1754944e-38, %v2020
        %v2022 = vsel %vm2019, %v2021, %v2017
        %v2023 = vmul.f32 1.0, %v2022
        %2024 = vmatpush.msra.mxu0 0.0
        %2025 = vmatpush.msra.mxu0 0.0
        %2026 = vmatpush.msra.mxu0 0.0
        %2027 = vmatpush.msra.mxu0 0.0
        %2028 = vmatpush.msra.mxu0 0.0
        %2029 = vmatpush.msra.mxu0 0.0
        %2030 = vmatpush.msra.mxu0 0.0
        %2031 = vmatpush.msra.mxu0 0.0
        %2032 = vmatpush.msra.mxu0 0.0
        %2033 = vmatpush.msra.mxu0 0.0
        %2034 = vmatpush.msra.mxu0 0.0
        %2035 = vmatpush.msra.mxu0 0.0
        %2036 = vmatpush.msra.mxu0 %v1682
        %2037 = vmatpush.msra.mxu0 %v1681
        %2038 = vmatpush.msra.mxu0 %v1680
        %2039 = vmatpush.msra.mxu0 %v1679
        %2040 = vmatmul.f32.gmra.mxu0 %v1934
        %v2041 = vpop.f32.mrf.mxu0
        %v2042 = vadd.f32 %v1784, %v2041
        %2043 = vdwg.mxu0
        %v2045 = vrot.slane %v2042, 4
        %v2047 = vmul.f32 %v1979, %v2045
        %v2048 = vadd.f32 %v1663, %v2047
        %v2049 = vtanh.pop %v2048
        %v2050 = vsub.f32 1.0, %v2023
        %v2051 = vmul.f32 %v2050, %v2049
        %v2052 = vrot.slane %v1931, 4
        %v2054 = vmul.f32 %v2023, %v2052
        %v2055 = vadd.f32 %v2051, %v2054
        %2056 = vst.msk [vmem:[%s1816 + $0x10] sm:$0xf0] %vm832, %v2055
        %v2058 = vrot.slane %v2055, 4
        %v2059 = vsel %vm585, %v2058, 0
        %2061 = vmatpush.msra.mxu0 0.0
        %2062 = vmatpush.msra.mxu0 0.0
        %2063 = vmatpush.msra.mxu0 0.0
        %2064 = vmatpush.msra.mxu0 0.0
        %2065 = vmatpush.msra.mxu0 0.0
        %2066 = vmatpush.msra.mxu0 0.0
        %2067 = vmatpush.msra.mxu0 0.0
        %2068 = vmatpush.msra.mxu0 0.0
        %2069 = vmatpush.msra.mxu0 0.0
        %2070 = vmatpush.msra.mxu0 0.0
        %2071 = vmatpush.msra.mxu0 0.0
        %2072 = vmatpush.msra.mxu0 0.0
        %2073 = vmatpush.msra.mxu0 %v1672
        %2074 = vmatpush.msra.mxu0 %v1671
        %2075 = vmatpush.msra.mxu0 %v1670
        %2076 = vmatpush.msra.mxu0 %v1669
        %2077 = vmatmul.f32.gmra.mxu0 %v2059
        %v2078 = vpop.f32.mrf.mxu0
        %v2079 = vadd.f32 0.0, %v2078
        %2080 = vdwg.mxu0
        %v2081 = vadd.f32 %v1585, %v2079
        %v2082 = vadd.f32 %v2081, %v1714
        %v2083 = vxor.u32 %v2082, 2147483648
        %v2084 = vmul.f32 %v2083, 1.442695
        %v2085 = vpow.pop %v2084
        %v2086 = vadd.f32 %v2085, 1.0
        %v2087 = vrcp.pop %v2086
        %v2088 = vmul.f32 %v2086, %v2087
        %v2089 = vsub.f32 1.0, %v2088
        %v2090 = vmul.f32 %v2087, %v2089
        %v2091 = vadd.f32 %v2087, %v2090
        %vm2092 = vweird.f32 %v2086
        %vm2093 = vweird.f32 %v2087
        %vm2094 = vmor %vm2092, %vm2093
        %v2095 = vsel %vm2094, %v2087, %v2091
        %v2096 = vand.u32 2147483647, %v2086
        %vm2097 = vcmp.eq.f32.partialorder %v2096, 8.507059e+37
        %v2098 = vand.u32 %v2086, 2147483648
        %v2099 = vor.u32 1.1754944e-38, %v2098
        %v2100 = vsel %vm2097, %v2099, %v2095
        %v2101 = vmul.f32 1.0, %v2100
        %2102 = vmatpush.msra.mxu0 0.0
        %2103 = vmatpush.msra.mxu0 0.0
        %2104 = vmatpush.msra.mxu0 0.0
        %2105 = vmatpush.msra.mxu0 0.0
        %2106 = vmatpush.msra.mxu0 0.0
        %2107 = vmatpush.msra.mxu0 0.0
        %2108 = vmatpush.msra.mxu0 0.0
        %2109 = vmatpush.msra.mxu0 0.0
        %2110 = vmatpush.msra.mxu0 0.0
        %2111 = vmatpush.msra.mxu0 0.0
        %2112 = vmatpush.msra.mxu0 0.0
        %2113 = vmatpush.msra.mxu0 0.0
        %2114 = vmatpush.msra.mxu0 %v1677
        %2115 = vmatpush.msra.mxu0 %v1676
        %2116 = vmatpush.msra.mxu0 %v1675
        %2117 = vmatpush.msra.mxu0 %v1674
        %2118 = vmatmul.f32.gmra.mxu0 %v2059
        %v2119 = vpop.f32.mrf.mxu0
        %v2120 = vadd.f32 0.0, %v2119
        %2121 = vdwg.mxu0
        %v2122 = vadd.f32 %v1624, %v2120
        %v2123 = vadd.f32 %v2122, %v1761
        %v2124 = vxor.u32 %v2123, 2147483648
        %v2125 = vmul.f32 %v2124, 1.442695
        %v2126 = vpow.pop %v2125
        %v2127 = vadd.f32 %v2126, 1.0
        %v2128 = vrcp.pop %v2127
        %v2129 = vmul.f32 %v2127, %v2128
        %v2130 = vsub.f32 1.0, %v2129
        %v2131 = vmul.f32 %v2128, %v2130
        %v2132 = vadd.f32 %v2128, %v2131
        %vm2133 = vweird.f32 %v2127
        %vm2134 = vweird.f32 %v2128
        %vm2135 = vmor %vm2133, %vm2134
        %v2136 = vsel %vm2135, %v2128, %v2132
        %v2137 = vand.u32 2147483647, %v2127
        %vm2138 = vcmp.eq.f32.partialorder %v2137, 8.507059e+37
        %v2139 = vand.u32 %v2127, 2147483648
        %v2140 = vor.u32 1.1754944e-38, %v2139
        %v2141 = vsel %vm2138, %v2140, %v2136
        %v2142 = vmul.f32 1.0, %v2141
        %2143 = vmatpush.msra.mxu0 0.0
        %2144 = vmatpush.msra.mxu0 0.0
        %2145 = vmatpush.msra.mxu0 0.0
        %2146 = vmatpush.msra.mxu0 0.0
        %2147 = vmatpush.msra.mxu0 0.0
        %2148 = vmatpush.msra.mxu0 0.0
        %2149 = vmatpush.msra.mxu0 0.0
        %2150 = vmatpush.msra.mxu0 0.0
        %2151 = vmatpush.msra.mxu0 0.0
        %2152 = vmatpush.msra.mxu0 0.0
        %2153 = vmatpush.msra.mxu0 0.0
        %2154 = vmatpush.msra.mxu0 0.0
        %2155 = vmatpush.msra.mxu0 %v1682
        %2156 = vmatpush.msra.mxu0 %v1681
        %2157 = vmatpush.msra.mxu0 %v1680
        %2158 = vmatpush.msra.mxu0 %v1679
        %2159 = vmatmul.f32.gmra.mxu0 %v2059
        %v2160 = vpop.f32.mrf.mxu0
        %v2161 = vadd.f32 %v1784, %v2160
        %2162 = vdwg.mxu0
        %v2163 = vmul.f32 %v2101, %v2161
        %v2164 = vadd.f32 %v1663, %v2163
        %v2165 = vtanh.pop %v2164
        %v2166 = vsub.f32 1.0, %v2142
        %v2167 = vmul.f32 %v2166, %v2165
        %v2169 = vmul.f32 %v2142, %v2058
        %v2170 = vadd.f32 %v2167, %v2169
        %2171 = vst.msk [vmem:[%s1816 + $0x10] sm:$0xf] %vm707, %v2170
        %v2173 = vsel %vm585, %v2170, 0
        %2175 = vmatpush.msra.mxu0 0.0
        %2176 = vmatpush.msra.mxu0 0.0
        %2177 = vmatpush.msra.mxu0 0.0
        %2178 = vmatpush.msra.mxu0 0.0
        %2179 = vmatpush.msra.mxu0 0.0
        %2180 = vmatpush.msra.mxu0 0.0
        %2181 = vmatpush.msra.mxu0 0.0
        %2182 = vmatpush.msra.mxu0 0.0
        %2183 = vmatpush.msra.mxu0 0.0
        %2184 = vmatpush.msra.mxu0 0.0
        %2185 = vmatpush.msra.mxu0 0.0
        %2186 = vmatpush.msra.mxu0 0.0
        %2187 = vmatpush.msra.mxu0 %v1672
        %2188 = vmatpush.msra.mxu0 %v1671
        %2189 = vmatpush.msra.mxu0 %v1670
        %2190 = vmatpush.msra.mxu0 %v1669
        %2191 = vmatmul.f32.gmra.mxu0 %v2173
        %v2192 = vpop.f32.mrf.mxu0
        %v2193 = vadd.f32 0.0, %v2192
        %2194 = vdwg.mxu0
        %v2196 = vrot.slane %v2193, 4
        %v2198 = vadd.f32 %v1582, %v2196
        %v2199 = vadd.f32 %v2198, %v1714
        %v2200 = vxor.u32 %v2199, 2147483648
        %v2201 = vmul.f32 %v2200, 1.442695
        %v2202 = vpow.pop %v2201
        %v2203 = vadd.f32 %v2202, 1.0
        %v2204 = vrcp.pop %v2203
        %v2205 = vmul.f32 %v2203, %v2204
        %v2206 = vsub.f32 1.0, %v2205
        %v2207 = vmul.f32 %v2204, %v2206
        %v2208 = vadd.f32 %v2204, %v2207
        %vm2209 = vweird.f32 %v2203
        %vm2210 = vweird.f32 %v2204
        %vm2211 = vmor %vm2209, %vm2210
        %v2212 = vsel %vm2211, %v2204, %v2208
        %v2213 = vand.u32 2147483647, %v2203
        %vm2214 = vcmp.eq.f32.partialorder %v2213, 8.507059e+37
        %v2215 = vand.u32 %v2203, 2147483648
        %v2216 = vor.u32 1.1754944e-38, %v2215
        %v2217 = vsel %vm2214, %v2216, %v2212
        %v2218 = vmul.f32 1.0, %v2217
        %2219 = vmatpush.msra.mxu0 0.0
        %2220 = vmatpush.msra.mxu0 0.0
        %2221 = vmatpush.msra.mxu0 0.0
        %2222 = vmatpush.msra.mxu0 0.0
        %2223 = vmatpush.msra.mxu0 0.0
        %2224 = vmatpush.msra.mxu0 0.0
        %2225 = vmatpush.msra.mxu0 0.0
        %2226 = vmatpush.msra.mxu0 0.0
        %2227 = vmatpush.msra.mxu0 0.0
        %2228 = vmatpush.msra.mxu0 0.0
        %2229 = vmatpush.msra.mxu0 0.0
        %2230 = vmatpush.msra.mxu0 0.0
        %2231 = vmatpush.msra.mxu0 %v1677
        %2232 = vmatpush.msra.mxu0 %v1676
        %2233 = vmatpush.msra.mxu0 %v1675
        %2234 = vmatpush.msra.mxu0 %v1674
        %2235 = vmatmul.f32.gmra.mxu0 %v2173
        %v2236 = vpop.f32.mrf.mxu0
        %v2237 = vadd.f32 0.0, %v2236
        %2238 = vdwg.mxu0
        %v2240 = vrot.slane %v2237, 4
        %v2242 = vadd.f32 %v1621, %v2240
        %v2243 = vadd.f32 %v2242, %v1761
        %v2244 = vxor.u32 %v2243, 2147483648
        %v2245 = vmul.f32 %v2244, 1.442695
        %v2246 = vpow.pop %v2245
        %v2247 = vadd.f32 %v2246, 1.0
        %v2248 = vrcp.pop %v2247
        %v2249 = vmul.f32 %v2247, %v2248
        %v2250 = vsub.f32 1.0, %v2249
        %v2251 = vmul.f32 %v2248, %v2250
        %v2252 = vadd.f32 %v2248, %v2251
        %vm2253 = vweird.f32 %v2247
        %vm2254 = vweird.f32 %v2248
        %vm2255 = vmor %vm2253, %vm2254
        %v2256 = vsel %vm2255, %v2248, %v2252
        %v2257 = vand.u32 2147483647, %v2247
        %vm2258 = vcmp.eq.f32.partialorder %v2257, 8.507059e+37
        %v2259 = vand.u32 %v2247, 2147483648
        %v2260 = vor.u32 1.1754944e-38, %v2259
        %v2261 = vsel %vm2258, %v2260, %v2256
        %v2262 = vmul.f32 1.0, %v2261
        %2263 = vmatpush.msra.mxu0 0.0
        %2264 = vmatpush.msra.mxu0 0.0
        %2265 = vmatpush.msra.mxu0 0.0
        %2266 = vmatpush.msra.mxu0 0.0
        %2267 = vmatpush.msra.mxu0 0.0
        %2268 = vmatpush.msra.mxu0 0.0
        %2269 = vmatpush.msra.mxu0 0.0
        %2270 = vmatpush.msra.mxu0 0.0
        %2271 = vmatpush.msra.mxu0 0.0
        %2272 = vmatpush.msra.mxu0 0.0
        %2273 = vmatpush.msra.mxu0 0.0
        %2274 = vmatpush.msra.mxu0 0.0
        %2275 = vmatpush.msra.mxu0 %v1682
        %2276 = vmatpush.msra.mxu0 %v1681
        %2277 = vmatpush.msra.mxu0 %v1680
        %2278 = vmatpush.msra.mxu0 %v1679
        %2279 = vmatmul.f32.gmra.mxu0 %v2173
        %v2280 = vpop.f32.mrf.mxu0
        %v2281 = vadd.f32 %v1784, %v2280
        %2282 = vdwg.mxu0
        %v2284 = vrot.slane %v2281, 4
        %v2286 = vmul.f32 %v2218, %v2284
        %v2287 = vadd.f32 %v1660, %v2286
        %v2288 = vtanh.pop %v2287
        %v2289 = vsub.f32 1.0, %v2262
        %v2290 = vmul.f32 %v2289, %v2288
        %v2291 = vrot.slane %v2170, 4
        %v2293 = vmul.f32 %v2262, %v2291
        %v2294 = vadd.f32 %v2290, %v2293
        %2295 = vst.msk [vmem:[%s1816 + $0x8] sm:$0xf0] %vm832, %v2294
        %v2297 = vrot.slane %v2294, 4
        %v2298 = vsel %vm585, %v2297, 0
        %2300 = vmatpush.msra.mxu0 0.0
        %2301 = vmatpush.msra.mxu0 0.0
        %2302 = vmatpush.msra.mxu0 0.0
        %2303 = vmatpush.msra.mxu0 0.0
        %2304 = vmatpush.msra.mxu0 0.0
        %2305 = vmatpush.msra.mxu0 0.0
        %2306 = vmatpush.msra.mxu0 0.0
        %2307 = vmatpush.msra.mxu0 0.0
        %2308 = vmatpush.msra.mxu0 0.0
        %2309 = vmatpush.msra.mxu0 0.0
        %2310 = vmatpush.msra.mxu0 0.0
        %2311 = vmatpush.msra.mxu0 0.0
        %2312 = vmatpush.msra.mxu0 %v1672
        %2313 = vmatpush.msra.mxu0 %v1671
        %2314 = vmatpush.msra.mxu0 %v1670
        %2315 = vmatpush.msra.mxu0 %v1669
        %2316 = vmatmul.f32.gmra.mxu0 %v2298
        %v2317 = vpop.f32.mrf.mxu0
        %v2318 = vadd.f32 0.0, %v2317
        %2319 = vdwg.mxu0
        %v2320 = vadd.f32 %v1582, %v2318
        %v2321 = vadd.f32 %v2320, %v1714
        %v2322 = vxor.u32 %v2321, 2147483648
        %v2323 = vmul.f32 %v2322, 1.442695
        %v2324 = vpow.pop %v2323
        %v2325 = vadd.f32 %v2324, 1.0
        %v2326 = vrcp.pop %v2325
        %v2327 = vmul.f32 %v2325, %v2326
        %v2328 = vsub.f32 1.0, %v2327
        %v2329 = vmul.f32 %v2326, %v2328
        %v2330 = vadd.f32 %v2326, %v2329
        %vm2331 = vweird.f32 %v2325
        %vm2332 = vweird.f32 %v2326
        %vm2333 = vmor %vm2331, %vm2332
        %v2334 = vsel %vm2333, %v2326, %v2330
        %v2335 = vand.u32 2147483647, %v2325
        %vm2336 = vcmp.eq.f32.partialorder %v2335, 8.507059e+37
        %v2337 = vand.u32 %v2325, 2147483648
        %v2338 = vor.u32 1.1754944e-38, %v2337
        %v2339 = vsel %vm2336, %v2338, %v2334
        %v2340 = vmul.f32 1.0, %v2339
        %2341 = vmatpush.msra.mxu0 0.0
        %2342 = vmatpush.msra.mxu0 0.0
        %2343 = vmatpush.msra.mxu0 0.0
        %2344 = vmatpush.msra.mxu0 0.0
        %2345 = vmatpush.msra.mxu0 0.0
        %2346 = vmatpush.msra.mxu0 0.0
        %2347 = vmatpush.msra.mxu0 0.0
        %2348 = vmatpush.msra.mxu0 0.0
        %2349 = vmatpush.msra.mxu0 0.0
        %2350 = vmatpush.msra.mxu0 0.0
        %2351 = vmatpush.msra.mxu0 0.0
        %2352 = vmatpush.msra.mxu0 0.0
        %2353 = vmatpush.msra.mxu0 %v1677
        %2354 = vmatpush.msra.mxu0 %v1676
        %2355 = vmatpush.msra.mxu0 %v1675
        %2356 = vmatpush.msra.mxu0 %v1674
        %2357 = vmatmul.f32.gmra.mxu0 %v2298
        %v2358 = vpop.f32.mrf.mxu0
        %v2359 = vadd.f32 0.0, %v2358
        %2360 = vdwg.mxu0
        %v2361 = vadd.f32 %v1621, %v2359
        %v2362 = vadd.f32 %v2361, %v1761
        %v2363 = vxor.u32 %v2362, 2147483648
        %v2364 = vmul.f32 %v2363, 1.442695
        %v2365 = vpow.pop %v2364
        %v2366 = vadd.f32 %v2365, 1.0
        %v2367 = vrcp.pop %v2366
        %v2368 = vmul.f32 %v2366, %v2367
        %v2369 = vsub.f32 1.0, %v2368
        %v2370 = vmul.f32 %v2367, %v2369
        %v2371 = vadd.f32 %v2367, %v2370
        %vm2372 = vweird.f32 %v2366
        %vm2373 = vweird.f32 %v2367
        %vm2374 = vmor %vm2372, %vm2373
        %v2375 = vsel %vm2374, %v2367, %v2371
        %v2376 = vand.u32 2147483647, %v2366
        %vm2377 = vcmp.eq.f32.partialorder %v2376, 8.507059e+37
        %v2378 = vand.u32 %v2366, 2147483648
        %v2379 = vor.u32 1.1754944e-38, %v2378
        %v2380 = vsel %vm2377, %v2379, %v2375
        %v2381 = vmul.f32 1.0, %v2380
        %2382 = vmatpush.msra.mxu0 0.0
        %2383 = vmatpush.msra.mxu0 0.0
        %2384 = vmatpush.msra.mxu0 0.0
        %2385 = vmatpush.msra.mxu0 0.0
        %2386 = vmatpush.msra.mxu0 0.0
        %2387 = vmatpush.msra.mxu0 0.0
        %2388 = vmatpush.msra.mxu0 0.0
        %2389 = vmatpush.msra.mxu0 0.0
        %2390 = vmatpush.msra.mxu0 0.0
        %2391 = vmatpush.msra.mxu0 0.0
        %2392 = vmatpush.msra.mxu0 0.0
        %2393 = vmatpush.msra.mxu0 0.0
        %2394 = vmatpush.msra.mxu0 %v1682
        %2395 = vmatpush.msra.mxu0 %v1681
        %2396 = vmatpush.msra.mxu0 %v1680
        %2397 = vmatpush.msra.mxu0 %v1679
        %2398 = vmatmul.f32.gmra.mxu0 %v2298
        %v2399 = vpop.f32.mrf.mxu0
        %v2400 = vadd.f32 %v1784, %v2399
        %2401 = vdwg.mxu0
        %v2402 = vmul.f32 %v2340, %v2400
        %v2403 = vadd.f32 %v1660, %v2402
        %v2404 = vtanh.pop %v2403
        %v2405 = vsub.f32 1.0, %v2381
        %v2406 = vmul.f32 %v2405, %v2404
        %v2408 = vmul.f32 %v2381, %v2297
        %v2409 = vadd.f32 %v2406, %v2408
        %2410 = vst.msk [vmem:[%s1816 + $0x8] sm:$0xf] %vm707, %v2409
        %v2412 = vsel %vm585, %v2409, 0
        %2414 = vmatpush.msra.mxu0 0.0
        %2415 = vmatpush.msra.mxu0 0.0
        %2416 = vmatpush.msra.mxu0 0.0
        %2417 = vmatpush.msra.mxu0 0.0
        %2418 = vmatpush.msra.mxu0 0.0
        %2419 = vmatpush.msra.mxu0 0.0
        %2420 = vmatpush.msra.mxu0 0.0
        %2421 = vmatpush.msra.mxu0 0.0
        %2422 = vmatpush.msra.mxu0 0.0
        %2423 = vmatpush.msra.mxu0 0.0
        %2424 = vmatpush.msra.mxu0 0.0
        %2425 = vmatpush.msra.mxu0 0.0
        %2426 = vmatpush.msra.mxu0 %v1672
        %2427 = vmatpush.msra.mxu0 %v1671
        %2428 = vmatpush.msra.mxu0 %v1670
        %2429 = vmatpush.msra.mxu0 %v1669
        %2430 = vmatmul.f32.gmra.mxu0 %v2412
        %v2431 = vpop.f32.mrf.mxu0
        %v2432 = vadd.f32 0.0, %v2431
        %2433 = vdwg.mxu0
        %v2435 = vrot.slane %v2432, 4
        %v2437 = vadd.f32 %v1579, %v2435
        %v2438 = vadd.f32 %v2437, %v1714
        %v2439 = vxor.u32 %v2438, 2147483648
        %v2440 = vmul.f32 %v2439, 1.442695
        %v2441 = vpow.pop %v2440
        %v2442 = vadd.f32 %v2441, 1.0
        %v2443 = vrcp.pop %v2442
        %v2444 = vmul.f32 %v2442, %v2443
        %v2445 = vsub.f32 1.0, %v2444
        %v2446 = vmul.f32 %v2443, %v2445
        %v2447 = vadd.f32 %v2443, %v2446
        %vm2448 = vweird.f32 %v2442
        %vm2449 = vweird.f32 %v2443
        %vm2450 = vmor %vm2448, %vm2449
        %v2451 = vsel %vm2450, %v2443, %v2447
        %v2452 = vand.u32 2147483647, %v2442
        %vm2453 = vcmp.eq.f32.partialorder %v2452, 8.507059e+37
        %v2454 = vand.u32 %v2442, 2147483648
        %v2455 = vor.u32 1.1754944e-38, %v2454
        %v2456 = vsel %vm2453, %v2455, %v2451
        %v2457 = vmul.f32 1.0, %v2456
        %2458 = vmatpush.msra.mxu0 0.0
        %2459 = vmatpush.msra.mxu0 0.0
        %2460 = vmatpush.msra.mxu0 0.0
        %2461 = vmatpush.msra.mxu0 0.0
        %2462 = vmatpush.msra.mxu0 0.0
        %2463 = vmatpush.msra.mxu0 0.0
        %2464 = vmatpush.msra.mxu0 0.0
        %2465 = vmatpush.msra.mxu0 0.0
        %2466 = vmatpush.msra.mxu0 0.0
        %2467 = vmatpush.msra.mxu0 0.0
        %2468 = vmatpush.msra.mxu0 0.0
        %2469 = vmatpush.msra.mxu0 0.0
        %2470 = vmatpush.msra.mxu0 %v1677
        %2471 = vmatpush.msra.mxu0 %v1676
        %2472 = vmatpush.msra.mxu0 %v1675
        %2473 = vmatpush.msra.mxu0 %v1674
        %2474 = vmatmul.f32.gmra.mxu0 %v2412
        %v2475 = vpop.f32.mrf.mxu0
        %v2476 = vadd.f32 0.0, %v2475
        %2477 = vdwg.mxu0
        %v2479 = vrot.slane %v2476, 4
        %v2481 = vadd.f32 %v1618, %v2479
        %v2482 = vadd.f32 %v2481, %v1761
        %v2483 = vxor.u32 %v2482, 2147483648
        %v2484 = vmul.f32 %v2483, 1.442695
        %v2485 = vpow.pop %v2484
        %v2486 = vadd.f32 %v2485, 1.0
        %v2487 = vrcp.pop %v2486
        %v2488 = vmul.f32 %v2486, %v2487
        %v2489 = vsub.f32 1.0, %v2488
        %v2490 = vmul.f32 %v2487, %v2489
        %v2491 = vadd.f32 %v2487, %v2490
        %vm2492 = vweird.f32 %v2486
        %vm2493 = vweird.f32 %v2487
        %vm2494 = vmor %vm2492, %vm2493
        %v2495 = vsel %vm2494, %v2487, %v2491
        %v2496 = vand.u32 2147483647, %v2486
        %vm2497 = vcmp.eq.f32.partialorder %v2496, 8.507059e+37
        %v2498 = vand.u32 %v2486, 2147483648
        %v2499 = vor.u32 1.1754944e-38, %v2498
        %v2500 = vsel %vm2497, %v2499, %v2495
        %v2501 = vmul.f32 1.0, %v2500
        %2502 = vmatpush.msra.mxu0 0.0
        %2503 = vmatpush.msra.mxu0 0.0
        %2504 = vmatpush.msra.mxu0 0.0
        %2505 = vmatpush.msra.mxu0 0.0
        %2506 = vmatpush.msra.mxu0 0.0
        %2507 = vmatpush.msra.mxu0 0.0
        %2508 = vmatpush.msra.mxu0 0.0
        %2509 = vmatpush.msra.mxu0 0.0
        %2510 = vmatpush.msra.mxu0 0.0
        %2511 = vmatpush.msra.mxu0 0.0
        %2512 = vmatpush.msra.mxu0 0.0
        %2513 = vmatpush.msra.mxu0 0.0
        %2514 = vmatpush.msra.mxu0 %v1682
        %2515 = vmatpush.msra.mxu0 %v1681
        %2516 = vmatpush.msra.mxu0 %v1680
        %2517 = vmatpush.msra.mxu0 %v1679
        %2518 = vmatmul.f32.gmra.mxu0 %v2412
        %v2519 = vpop.f32.mrf.mxu0
        %v2520 = vadd.f32 %v1784, %v2519
        %2521 = vdwg.mxu0
        %v2523 = vrot.slane %v2520, 4
        %v2525 = vmul.f32 %v2457, %v2523
        %v2526 = vadd.f32 %v1657, %v2525
        %v2527 = vtanh.pop %v2526
        %v2528 = vsub.f32 1.0, %v2501
        %v2529 = vmul.f32 %v2528, %v2527
        %v2530 = vrot.slane %v2409, 4
        %v2532 = vmul.f32 %v2501, %v2530
        %v2533 = vadd.f32 %v2529, %v2532
        %2534 = vst.msk [vmem:[%s1816] sm:$0xf0] %vm832, %v2533
        %v2536 = vrot.slane %v2533, 4
        %v2537 = vsel %vm585, %v2536, 0
        %2539 = vmatpush.msra.mxu0 0.0
        %2540 = vmatpush.msra.mxu0 0.0
        %2541 = vmatpush.msra.mxu0 0.0
        %2542 = vmatpush.msra.mxu0 0.0
        %2543 = vmatpush.msra.mxu0 0.0
        %2544 = vmatpush.msra.mxu0 0.0
        %2545 = vmatpush.msra.mxu0 0.0
        %2546 = vmatpush.msra.mxu0 0.0
        %2547 = vmatpush.msra.mxu0 0.0
        %2548 = vmatpush.msra.mxu0 0.0
        %2549 = vmatpush.msra.mxu0 0.0
        %2550 = vmatpush.msra.mxu0 0.0
        %2551 = vmatpush.msra.mxu0 %v1672
        %2552 = vmatpush.msra.mxu0 %v1671
        %2553 = vmatpush.msra.mxu0 %v1670
        %2554 = vmatpush.msra.mxu0 %v1669
        %2555 = vmatmul.f32.gmra.mxu0 %v2537
        %v2556 = vpop.f32.mrf.mxu0
        %v2557 = vadd.f32 0.0, %v2556
        %2558 = vdwg.mxu0
        %v2559 = vadd.f32 %v1579, %v2557
        %v2560 = vadd.f32 %v2559, %v1714
        %v2561 = vxor.u32 %v2560, 2147483648
        %v2562 = vmul.f32 %v2561, 1.442695
        %v2563 = vpow.pop %v2562
        %v2564 = vadd.f32 %v2563, 1.0
        %v2565 = vrcp.pop %v2564
        %v2566 = vmul.f32 %v2564, %v2565
        %v2567 = vsub.f32 1.0, %v2566
        %v2568 = vmul.f32 %v2565, %v2567
        %v2569 = vadd.f32 %v2565, %v2568
        %vm2570 = vweird.f32 %v2564
        %vm2571 = vweird.f32 %v2565
        %vm2572 = vmor %vm2570, %vm2571
        %v2573 = vsel %vm2572, %v2565, %v2569
        %v2574 = vand.u32 2147483647, %v2564
        %vm2575 = vcmp.eq.f32.partialorder %v2574, 8.507059e+37
        %v2576 = vand.u32 %v2564, 2147483648
        %v2577 = vor.u32 1.1754944e-38, %v2576
        %v2578 = vsel %vm2575, %v2577, %v2573
        %v2579 = vmul.f32 1.0, %v2578
        %2580 = vmatpush.msra.mxu0 0.0
        %2581 = vmatpush.msra.mxu0 0.0
        %2582 = vmatpush.msra.mxu0 0.0
        %2583 = vmatpush.msra.mxu0 0.0
        %2584 = vmatpush.msra.mxu0 0.0
        %2585 = vmatpush.msra.mxu0 0.0
        %2586 = vmatpush.msra.mxu0 0.0
        %2587 = vmatpush.msra.mxu0 0.0
        %2588 = vmatpush.msra.mxu0 0.0
        %2589 = vmatpush.msra.mxu0 0.0
        %2590 = vmatpush.msra.mxu0 0.0
        %2591 = vmatpush.msra.mxu0 0.0
        %2592 = vmatpush.msra.mxu0 %v1677
        %2593 = vmatpush.msra.mxu0 %v1676
        %2594 = vmatpush.msra.mxu0 %v1675
        %2595 = vmatpush.msra.mxu0 %v1674
        %2596 = vmatmul.f32.gmra.mxu0 %v2537
        %v2597 = vpop.f32.mrf.mxu0
        %v2598 = vadd.f32 0.0, %v2597
        %2599 = vdwg.mxu0
        %v2600 = vadd.f32 %v1618, %v2598
        %v2601 = vadd.f32 %v2600, %v1761
        %v2602 = vxor.u32 %v2601, 2147483648
        %v2603 = vmul.f32 %v2602, 1.442695
        %v2604 = vpow.pop %v2603
        %v2605 = vadd.f32 %v2604, 1.0
        %v2606 = vrcp.pop %v2605
        %v2607 = vmul.f32 %v2605, %v2606
        %v2608 = vsub.f32 1.0, %v2607
        %v2609 = vmul.f32 %v2606, %v2608
        %v2610 = vadd.f32 %v2606, %v2609
        %vm2611 = vweird.f32 %v2605
        %vm2612 = vweird.f32 %v2606
        %vm2613 = vmor %vm2611, %vm2612
        %v2614 = vsel %vm2613, %v2606, %v2610
        %v2615 = vand.u32 2147483647, %v2605
        %vm2616 = vcmp.eq.f32.partialorder %v2615, 8.507059e+37
        %v2617 = vand.u32 %v2605, 2147483648
        %v2618 = vor.u32 1.1754944e-38, %v2617
        %v2619 = vsel %vm2616, %v2618, %v2614
        %v2620 = vmul.f32 1.0, %v2619
        %2621 = vmatpush.msra.mxu0 0.0
        %2622 = vmatpush.msra.mxu0 0.0
        %2623 = vmatpush.msra.mxu0 0.0
        %2624 = vmatpush.msra.mxu0 0.0
        %2625 = vmatpush.msra.mxu0 0.0
        %2626 = vmatpush.msra.mxu0 0.0
        %2627 = vmatpush.msra.mxu0 0.0
        %2628 = vmatpush.msra.mxu0 0.0
        %2629 = vmatpush.msra.mxu0 0.0
        %2630 = vmatpush.msra.mxu0 0.0
        %2631 = vmatpush.msra.mxu0 0.0
        %2632 = vmatpush.msra.mxu0 0.0
        %2633 = vmatpush.msra.mxu0 %v1682
        %2634 = vmatpush.msra.mxu0 %v1681
        %2635 = vmatpush.msra.mxu0 %v1680
        %2636 = vmatpush.msra.mxu0 %v1679
        %2637 = vmatmul.f32.gmra.mxu0 %v2537
        %v2638 = vpop.f32.mrf.mxu0
        %v2639 = vadd.f32 %v1784, %v2638
        %2640 = vdwg.mxu0
        %v2641 = vmul.f32 %v2579, %v2639
        %v2642 = vadd.f32 %v1657, %v2641
        %v2643 = vtanh.pop %v2642
        %v2644 = vsub.f32 1.0, %v2620
        %v2645 = vmul.f32 %v2644, %v2643
        %v2647 = vmul.f32 %v2620, %v2536
        %v2648 = vadd.f32 %v2645, %v2647
        %2649 = vst.msk [vmem:[%s1816] sm:$0xf] %vm707, %v2648
        %v2650 = vld [vmem:[#allocation2] sm:$0xff]
        %v2651 = vld [vmem:[#allocation2 + $0x8] sm:$0xff]
        %v2652 = vld [vmem:[#allocation2 + $0x10] sm:$0xff]
        %v2653 = vld [vmem:[#allocation2 + $0x18] sm:$0xff]
        %v2654 = vld [vmem:[%s424] sm:$0xff]
        %v2655 = vld [vmem:[%s424 + $0x8] sm:$0xff]
        %v2656 = vld [vmem:[%s424 + $0x10] sm:$0xff]
        %v2657 = vld [vmem:[%s424 + $0x18] sm:$0xff]
        %v2658 = vld [vmem:[%s1816] sm:$0xff]
        %v2659 = vld [vmem:[%s1816 + $0x8] sm:$0xff]
        %v2660 = vld [vmem:[%s1816 + $0x10] sm:$0xff]
        %v2661 = vld [vmem:[%s1816 + $0x18] sm:$0xff]
        %s2662 = scalar_lea.vmem %s424, 32
        %v2663 = vld [vmem:[%s2662] sm:$0xff]
        %v2664 = vld [vmem:[%s2662 + $0x8] sm:$0xff]
        %v2665 = vld [vmem:[%s2662 + $0x10] sm:$0xff]
        %v2666 = vld [vmem:[%s2662 + $0x18] sm:$0xff]
        %v2668 = vsel %vm585, %v2658, 0
        %v2671 = vsel %vm585, %v2659, 0
        %v2674 = vsel %vm585, %v2660, 0
        %v2677 = vsel %vm585, %v2661, 0
        %2679 = vmatpush.msra.mxu0 0.0
        %2680 = vmatpush.msra.mxu0 0.0
        %2681 = vmatpush.msra.mxu0 0.0
        %2682 = vmatpush.msra.mxu0 0.0
        %2683 = vmatpush.msra.mxu0 0.0
        %2684 = vmatpush.msra.mxu0 0.0
        %2685 = vmatpush.msra.mxu0 0.0
        %2686 = vmatpush.msra.mxu0 0.0
        %2687 = vmatpush.msra.mxu0 0.0
        %2688 = vmatpush.msra.mxu0 0.0
        %2689 = vmatpush.msra.mxu0 0.0
        %2690 = vmatpush.msra.mxu0 0.0
        %2691 = vmatpush.msra.mxu0 %v2666
        %2692 = vmatpush.msra.mxu0 %v2665
        %2693 = vmatpush.msra.mxu0 %v2664
        %2694 = vmatpush.msra.mxu0 %v2663
        %2695 = vmatmul.f32.gmra.mxu0 %v2668
        %v2696 = vpop.f32.mrf.mxu0
        %v2697 = vadd.f32 0.0, %v2696
        %2698 = vmatmul.f32.gmra.mxu0 %v2671
        %v2699 = vpop.f32.mrf.mxu0
        %v2700 = vadd.f32 0.0, %v2699
        %2701 = vmatmul.f32.gmra.mxu0 %v2674
        %v2702 = vpop.f32.mrf.mxu0
        %v2703 = vadd.f32 0.0, %v2702
        %2704 = vmatmul.f32.gmra.mxu0 %v2677
        %v2705 = vpop.f32.mrf.mxu0
        %v2706 = vadd.f32 0.0, %v2705
        %2707 = vdwg.mxu0
        %v2709 = vsel %vm585, %v2650, 0
        %v2712 = vsel %vm585, %v2651, 0
        %v2715 = vsel %vm585, %v2652, 0
        %v2718 = vsel %vm585, %v2653, 0
        %2720 = vmatpush.msra.mxu0 0.0
        %2721 = vmatpush.msra.mxu0 0.0
        %2722 = vmatpush.msra.mxu0 0.0
        %2723 = vmatpush.msra.mxu0 0.0
        %2724 = vmatpush.msra.mxu0 0.0
        %2725 = vmatpush.msra.mxu0 0.0
        %2726 = vmatpush.msra.mxu0 0.0
        %2727 = vmatpush.msra.mxu0 0.0
        %2728 = vmatpush.msra.mxu0 0.0
        %2729 = vmatpush.msra.mxu0 0.0
        %2730 = vmatpush.msra.mxu0 0.0
        %2731 = vmatpush.msra.mxu0 0.0
        %2732 = vmatpush.msra.mxu0 %v2657
        %2733 = vmatpush.msra.mxu0 %v2656
        %2734 = vmatpush.msra.mxu0 %v2655
        %2735 = vmatpush.msra.mxu0 %v2654
        %2736 = vmatmul.f32.gmra.mxu0 %v2709
        %v2737 = vpop.f32.mrf.mxu0
        %v2738 = vadd.f32 %v2697, %v2737
        %2739 = vmatmul.f32.gmra.mxu0 %v2712
        %v2740 = vpop.f32.mrf.mxu0
        %v2741 = vadd.f32 %v2700, %v2740
        %2742 = vmatmul.f32.gmra.mxu0 %v2715
        %v2743 = vpop.f32.mrf.mxu0
        %v2744 = vadd.f32 %v2703, %v2743
        %2745 = vmatmul.f32.gmra.mxu0 %v2718
        %v2746 = vpop.f32.mrf.mxu0
        %v2747 = vadd.f32 %v2706, %v2746
        %2748 = vdwg.mxu0
        %v2749 = vld [vmem:[%s427] sm:$0x1]
        %v2751 = vperm.slane %v2749, 0
        %v2753 = vadd.f32 %v2738, %v2751
        %v2754 = vadd.f32 %v2741, %v2751
        %v2755 = vadd.f32 %v2744, %v2751
        %v2756 = vadd.f32 %v2747, %v2751
        %vm2757 = vcmask 130048
        %2758 = vst.msk [vmem:[%s432] sm:$0xff] %vm2757, %v2753
        %2759 = vst.msk [vmem:[%s432 + $0x8] sm:$0xff] %vm2757, %v2754
        %2760 = vst.msk [vmem:[%s432 + $0x10] sm:$0xff] %vm2757, %v2755
        %2761 = vst.msk [vmem:[%s432 + $0x18] sm:$0xff] %vm2757, %v2756
        %p2762 = scmp.lt.s32.totalorder %s24, 2
        %s2763 = scalar_select %p2762, %s24, 2
        %s2764 = smul.addr %s2763, 4
        %s2765 = smul.addr %s2764, 8
        %s2766 = scalar_lea.vmem %s7, %s2765
        // Predicated region
        $region57: #{two_level_gru_forward.2} parent=47 // pred_check
          %p2767 = pneg %p224
        $region58: #{two_level_gru_forward.2} parent=47 // pred_check_branch
          %2769 = sbr.rel (%p2767) target = $region60
        $region59: #{two_level_gru_forward.2} parent=47 // pred_region
          _
        $region60: #{two_level_gru_forward.2} parent=47 // pred_fallthru
          _
      $region48: #{two_level_gru_forward.2} parent=5 // pred_fallthru
        _
      %p2770 = scmp.le.s32.totalorder 2, %s19
      // Predicated region
      $region61: #{two_level_gru_forward.2} parent=5 // pred_check
        %p2771 = pneg %p2770
      $region62: #{two_level_gru_forward.2} parent=5 // pred_check_branch
        %2773 = sbr.rel (%p2771) target = $region64
      $region63: #{two_level_gru_forward.2} parent=5 // pred_region
        %s2774 = ssub.s32 %s19, 2
        // Predicated region
        $region65: #{two_level_gru_forward.2} parent=63 // pred_check
          %p2775 = pneg %p230
        $region66: #{two_level_gru_forward.2} parent=63 // pred_check_branch
          %2777 = sbr.rel (%p2775) target = $region68
        $region67: #{two_level_gru_forward.2} parent=63 // pred_region
          %p2778 = scmp.lt.s32.totalorder %s25, 2
          %s2779 = scalar_select %p2778, %s25, 2
          %s2780 = smul.addr %s2779, 4
          %s2781 = smul.addr %s2780, 8
          %s2782 = scalar_lea.vmem %s7, %s2781
        $region68: #{two_level_gru_forward.2} parent=63 // pred_fallthru
          _
      $region64: #{two_level_gru_forward.2} parent=5 // pred_fallthru
        _
    $region6: #{two_level_gru_forward.2} parent=1 // loop_footer
      %s23 = sadd.s32 1, %s19
    $region7: #{two_level_gru_forward.2} parent=1 // loop_footer_branch
      %18 = sbr.rel target = $region3
    $region8: #{two_level_gru_forward.2} parent=1 // loop_exit
      _
    %2783 = vsyncpa [#allocation4], 1
    %s2784 = scalar_lea.sflag [#allocation4], 1
    %2785 = vsyncpa %s2784, 1
    %2786 = vsyncpa [#allocation6], 1
    %s2787 = scalar_lea.sflag [#allocation6], 1
    %2788 = vsyncpa %s2787, 1

// kernel: two_level_gru_forward.3
$region0: #{two_level_gru_forward.3}
  #allocation0 [shape = 'u32[]', space=smem, size = 0x4, offset = 0x4, fixed_abs, tag = 'smem constant byte address 0x4 - core index']
  #allocation1 [shape = 'u32[72,128]{1,0:T(1,128)}', space=vmem, size = 0x9000, scoped, tag = 'internal scratch']
  #allocation2 [shape = 'f32[2,8,4,32]{3,2,1,0:T(4,128)}', space=vmem, size = 0x8000, scoped, tag = 'scratch operand']
  %s0 = inlined_call_operand.vmem [shape: f32[3,32,16], index: 0, kind: input, shape index: {}]
  %s1 = inlined_call_operand.vmem [shape: f32[18,16,32], index: 1, kind: input, shape index: {}]
  %s2 = inlined_call_operand.vmem [shape: f32[6,32,32], index: 2, kind: input, shape index: {}]
  %s3 = inlined_call_operand.vmem [shape: f32[6,1,32], index: 3, kind: input, shape index: {}]
  %s4 = inlined_call_operand.vmem [shape: f32[6,1,32], index: 4, kind: input, shape index: {}]
  %s5 = inlined_call_operand.vmem [shape: f32[2,32,16], index: 5, kind: input, shape index: {}]
  %s6 = inlined_call_operand.vmem [shape: f32[1,16], index: 6, kind: input, shape index: {}]
  %s7 = inlined_call_operand.vmem [shape: f32[4,16,128], index: 7, kind: input, shape index: {}]
  %s8 = inlined_call_operand.vmem [shape: f32[1,128], index: 8, kind: input, shape index: {}]
  %s9 = inlined_call_operand.hbm [shape: f32[8,128], index: 9, kind: output, shape index: {}]
  %s10 = sld [smem:[#allocation0]]
  $region46: #{two_level_gru_forward.3} parent=0
    _
  %s12 = ssub.s32 1, %s10
  %s13 = scalar_select 0, %s12, %s10
  $region1: #{two_level_gru_forward.3} parent=0
    #allocation3 [shape = 'u8[4096]{0}', space=vmem, size = 0x1000, scoped, tag = 'output window, operand 0, single buffered']
    #allocation4 [shape = 's32[1]{0}', space=sflag, size = 0x4, scoped, tag = 'scoped memory for two_level_gru_forward.3']
    %14 = vsyncpa [#allocation4], 0
    // Predicated region
    $region2: #{two_level_gru_forward.3} parent=1 // pred_check
      _
    $region3: #{two_level_gru_forward.3} parent=1 // pred_check_branch
      %16 = sbr.rel (0) target = $region5
    $region4: #{two_level_gru_forward.3} parent=1 // pred_region
      _
    $region5: #{two_level_gru_forward.3} parent=1 // pred_fallthru
      _
    // Predicated region
    $region6: #{two_level_gru_forward.3} parent=1 // pred_check
      _
    $region7: #{two_level_gru_forward.3} parent=1 // pred_check_branch
      %18 = sbr.rel (0) target = $region9
    $region8: #{two_level_gru_forward.3} parent=1 // pred_region
      _
    $region9: #{two_level_gru_forward.3} parent=1 // pred_fallthru
      _
    // Predicated region
    $region10: #{two_level_gru_forward.3} parent=1 // pred_check
      _
    $region11: #{two_level_gru_forward.3} parent=1 // pred_check_branch
      %20 = sbr.rel (0) target = $region13
    $region12: #{two_level_gru_forward.3} parent=1 // pred_region
      _
    $region13: #{two_level_gru_forward.3} parent=1 // pred_fallthru
      _
    // Predicated region
    $region14: #{two_level_gru_forward.3} parent=1 // pred_check
      _
    $region15: #{two_level_gru_forward.3} parent=1 // pred_check_branch
      %22 = sbr.rel (0) target = $region17
    $region16: #{two_level_gru_forward.3} parent=1 // pred_region
      _
    $region17: #{two_level_gru_forward.3} parent=1 // pred_fallthru
      _
    // Predicated region
    $region18: #{two_level_gru_forward.3} parent=1 // pred_check
      _
    $region19: #{two_level_gru_forward.3} parent=1 // pred_check_branch
      %24 = sbr.rel (0) target = $region21
    $region20: #{two_level_gru_forward.3} parent=1 // pred_region
      _
    $region21: #{two_level_gru_forward.3} parent=1 // pred_fallthru
      _
    // Predicated region
    $region22: #{two_level_gru_forward.3} parent=1 // pred_check
      _
    $region23: #{two_level_gru_forward.3} parent=1 // pred_check_branch
      %26 = sbr.rel (0) target = $region25
    $region24: #{two_level_gru_forward.3} parent=1 // pred_region
      _
    $region25: #{two_level_gru_forward.3} parent=1 // pred_fallthru
      _
    // Predicated region
    $region26: #{two_level_gru_forward.3} parent=1 // pred_check
      _
    $region27: #{two_level_gru_forward.3} parent=1 // pred_check_branch
      %28 = sbr.rel (0) target = $region29
    $region28: #{two_level_gru_forward.3} parent=1 // pred_region
      _
    $region29: #{two_level_gru_forward.3} parent=1 // pred_fallthru
      _
    // Predicated region
    $region30: #{two_level_gru_forward.3} parent=1 // pred_check
      _
    $region31: #{two_level_gru_forward.3} parent=1 // pred_check_branch
      %30 = sbr.rel (0) target = $region33
    $region32: #{two_level_gru_forward.3} parent=1 // pred_region
      _
    $region33: #{two_level_gru_forward.3} parent=1 // pred_fallthru
      _
    // Predicated region
    $region34: #{two_level_gru_forward.3} parent=1 // pred_check
      _
    $region35: #{two_level_gru_forward.3} parent=1 // pred_check_branch
      %32 = sbr.rel (0) target = $region37
    $region36: #{two_level_gru_forward.3} parent=1 // pred_region
      _
    $region37: #{two_level_gru_forward.3} parent=1 // pred_fallthru
      _
    %v33 = vld [vmem:[%s0] sm:$0xff]
    %v34 = vld [vmem:[%s0 + $0x8] sm:$0xff]
    %v35 = vld [vmem:[%s0 + $0x10] sm:$0xff]
    %v36 = vld [vmem:[%s0 + $0x18] sm:$0xff]
    %v37 = vld [vmem:[%s1] sm:$0xff]
    %v38 = vld [vmem:[%s1 + $0x8] sm:$0xff]
    %s39 = scalar_lea.vmem %s0, 32
    %v40 = vld [vmem:[%s39] sm:$0xff]
    %v41 = vld [vmem:[%s39 + $0x8] sm:$0xff]
    %v42 = vld [vmem:[%s39 + $0x10] sm:$0xff]
    %v43 = vld [vmem:[%s39 + $0x18] sm:$0xff]
    %s44 = scalar_lea.vmem %s1, 16
    %v45 = vld [vmem:[%s44] sm:$0xff]
    %v46 = vld [vmem:[%s44 + $0x8] sm:$0xff]
    %vm47 = vcmask 130048
    %v49 = vsel %vm47, %v40, 0
    %v52 = vsel %vm47, %v41, 0
    %v55 = vsel %vm47, %v42, 0
    %v58 = vsel %vm47, %v43, 0
    %60 = vmatpush.msra.mxu0 0.0
    %61 = vmatpush.msra.mxu0 0.0
    %62 = vmatpush.msra.mxu0 0.0
    %63 = vmatpush.msra.mxu0 0.0
    %64 = vmatpush.msra.mxu0 0.0
    %65 = vmatpush.msra.mxu0 0.0
    %66 = vmatpush.msra.mxu0 0.0
    %67 = vmatpush.msra.mxu0 0.0
    %68 = vmatpush.msra.mxu0 0.0
    %69 = vmatpush.msra.mxu0 0.0
    %70 = vmatpush.msra.mxu0 0.0
    %71 = vmatpush.msra.mxu0 0.0
    %72 = vmatpush.msra.mxu0 0.0
    %73 = vmatpush.msra.mxu0 0.0
    %74 = vmatpush.msra.mxu0 %v46
    %75 = vmatpush.msra.mxu0 %v45
    %76 = vmatmul.f32.gmra.mxu0 %v49
    %v77 = vpop.f32.mrf.mxu0
    %v78 = vadd.f32 0.0, %v77
    %79 = vmatmul.f32.gmra.mxu0 %v52
    %v80 = vpop.f32.mrf.mxu0
    %v81 = vadd.f32 0.0, %v80
    %82 = vmatmul.f32.gmra.mxu0 %v55
    %v83 = vpop.f32.mrf.mxu0
    %v84 = vadd.f32 0.0, %v83
    %85 = vmatmul.f32.gmra.mxu0 %v58
    %v86 = vpop.f32.mrf.mxu0
    %v87 = vadd.f32 0.0, %v86
    %88 = vdwg.mxu0
    %v90 = vsel %vm47, %v33, 0
    %v93 = vsel %vm47, %v34, 0
    %v96 = vsel %vm47, %v35, 0
    %v99 = vsel %vm47, %v36, 0
    %101 = vmatpush.msra.mxu0 0.0
    %102 = vmatpush.msra.mxu0 0.0
    %103 = vmatpush.msra.mxu0 0.0
    %104 = vmatpush.msra.mxu0 0.0
    %105 = vmatpush.msra.mxu0 0.0
    %106 = vmatpush.msra.mxu0 0.0
    %107 = vmatpush.msra.mxu0 0.0
    %108 = vmatpush.msra.mxu0 0.0
    %109 = vmatpush.msra.mxu0 0.0
    %110 = vmatpush.msra.mxu0 0.0
    %111 = vmatpush.msra.mxu0 0.0
    %112 = vmatpush.msra.mxu0 0.0
    %113 = vmatpush.msra.mxu0 0.0
    %114 = vmatpush.msra.mxu0 0.0
    %115 = vmatpush.msra.mxu0 %v38
    %116 = vmatpush.msra.mxu0 %v37
    %117 = vmatmul.f32.gmra.mxu0 %v90
    %v118 = vpop.f32.mrf.mxu0
    %v119 = vadd.f32 %v78, %v118
    %120 = vmatmul.f32.gmra.mxu0 %v93
    %v121 = vpop.f32.mrf.mxu0
    %v122 = vadd.f32 %v81, %v121
    %123 = vmatmul.f32.gmra.mxu0 %v96
    %v124 = vpop.f32.mrf.mxu0
    %v125 = vadd.f32 %v84, %v124
    %126 = vmatmul.f32.gmra.mxu0 %v99
    %v127 = vpop.f32.mrf.mxu0
    %v128 = vadd.f32 %v87, %v127
    %129 = vdwg.mxu0
    %s130 = scalar_lea.vmem %s0, 64
    %v131 = vld [vmem:[%s130] sm:$0xff]
    %v132 = vld [vmem:[%s130 + $0x8] sm:$0xff]
    %v133 = vld [vmem:[%s130 + $0x10] sm:$0xff]
    %v134 = vld [vmem:[%s130 + $0x18] sm:$0xff]
    %s135 = scalar_lea.vmem %s1, 32
    %v136 = vld [vmem:[%s135] sm:$0xff]
    %v137 = vld [vmem:[%s135 + $0x8] sm:$0xff]
    %v139 = vsel %vm47, %v131, 0
    %v142 = vsel %vm47, %v132, 0
    %v145 = vsel %vm47, %v133, 0
    %v148 = vsel %vm47, %v134, 0
    %150 = vmatpush.msra.mxu0 0.0
    %151 = vmatpush.msra.mxu0 0.0
    %152 = vmatpush.msra.mxu0 0.0
    %153 = vmatpush.msra.mxu0 0.0
    %154 = vmatpush.msra.mxu0 0.0
    %155 = vmatpush.msra.mxu0 0.0
    %156 = vmatpush.msra.mxu0 0.0
    %157 = vmatpush.msra.mxu0 0.0
    %158 = vmatpush.msra.mxu0 0.0
    %159 = vmatpush.msra.mxu0 0.0
    %160 = vmatpush.msra.mxu0 0.0
    %161 = vmatpush.msra.mxu0 0.0
    %162 = vmatpush.msra.mxu0 0.0
    %163 = vmatpush.msra.mxu0 0.0
    %164 = vmatpush.msra.mxu0 %v137
    %165 = vmatpush.msra.mxu0 %v136
    %166 = vmatmul.f32.gmra.mxu0 %v139
    %v167 = vpop.f32.mrf.mxu0
    %v168 = vadd.f32 0.0, %v167
    %169 = vmatmul.f32.gmra.mxu0 %v142
    %v170 = vpop.f32.mrf.mxu0
    %v171 = vadd.f32 0.0, %v170
    %172 = vmatmul.f32.gmra.mxu0 %v145
    %v173 = vpop.f32.mrf.mxu0
    %v174 = vadd.f32 0.0, %v173
    %175 = vmatmul.f32.gmra.mxu0 %v148
    %v176 = vpop.f32.mrf.mxu0
    %v177 = vadd.f32 0.0, %v176
    %178 = vdwg.mxu0
    %v179 = vadd.f32 %v119, %v168
    %v180 = vadd.f32 %v122, %v171
    %v181 = vadd.f32 %v125, %v174
    %v182 = vadd.f32 %v128, %v177
    %v183 = vld [vmem:[%s3] sm:$0x1]
    %v185 = vperm.slane %v183, 0
    %v187 = vadd.f32 %v179, %v185
    %v188 = vadd.f32 %v180, %v185
    %v189 = vadd.f32 %v181, %v185
    %v190 = vadd.f32 %v182, %v185
    %s191 = scalar_lea.vmem %s1, 48
    %v192 = vld [vmem:[%s191] sm:$0xff]
    %v193 = vld [vmem:[%s191 + $0x8] sm:$0xff]
    %s194 = scalar_lea.vmem %s1, 64
    %v195 = vld [vmem:[%s194] sm:$0xff]
    %v196 = vld [vmem:[%s194 + $0x8] sm:$0xff]
    %197 = vmatpush.msra.mxu0 0.0
    %198 = vmatpush.msra.mxu0 0.0
    %199 = vmatpush.msra.mxu0 0.0
    %200 = vmatpush.msra.mxu0 0.0
    %201 = vmatpush.msra.mxu0 0.0
    %202 = vmatpush.msra.mxu0 0.0
    %203 = vmatpush.msra.mxu0 0.0
    %204 = vmatpush.msra.mxu0 0.0
    %205 = vmatpush.msra.mxu0 0.0
    %206 = vmatpush.msra.mxu0 0.0
    %207 = vmatpush.msra.mxu0 0.0
    %208 = vmatpush.msra.mxu0 0.0
    %209 = vmatpush.msra.mxu0 0.0
    %210 = vmatpush.msra.mxu0 0.0
    %211 = vmatpush.msra.mxu0 %v196
    %212 = vmatpush.msra.mxu0 %v195
    %213 = vmatmul.f32.gmra.mxu0 %v49
    %v214 = vpop.f32.mrf.mxu0
    %v215 = vadd.f32 0.0, %v214
    %216 = vmatmul.f32.gmra.mxu0 %v52
    %v217 = vpop.f32.mrf.mxu0
    %v218 = vadd.f32 0.0, %v217
    %219 = vmatmul.f32.gmra.mxu0 %v55
    %v220 = vpop.f32.mrf.mxu0
    %v221 = vadd.f32 0.0, %v220
    %222 = vmatmul.f32.gmra.mxu0 %v58
    %v223 = vpop.f32.mrf.mxu0
    %v224 = vadd.f32 0.0, %v223
    %225 = vdwg.mxu0
    %226 = vmatpush.msra.mxu0 0.0
    %227 = vmatpush.msra.mxu0 0.0
    %228 = vmatpush.msra.mxu0 0.0
    %229 = vmatpush.msra.mxu0 0.0
    %230 = vmatpush.msra.mxu0 0.0
    %231 = vmatpush.msra.mxu0 0.0
    %232 = vmatpush.msra.mxu0 0.0
    %233 = vmatpush.msra.mxu0 0.0
    %234 = vmatpush.msra.mxu0 0.0
    %235 = vmatpush.msra.mxu0 0.0
    %236 = vmatpush.msra.mxu0 0.0
    %237 = vmatpush.msra.mxu0 0.0
    %238 = vmatpush.msra.mxu0 0.0
    %239 = vmatpush.msra.mxu0 0.0
    %240 = vmatpush.msra.mxu0 %v193
    %241 = vmatpush.msra.mxu0 %v192
    %242 = vmatmul.f32.gmra.mxu0 %v90
    %v243 = vpop.f32.mrf.mxu0
    %v244 = vadd.f32 %v215, %v243
    %245 = vmatmul.f32.gmra.mxu0 %v93
    %v246 = vpop.f32.mrf.mxu0
    %v247 = vadd.f32 %v218, %v246
    %248 = vmatmul.f32.gmra.mxu0 %v96
    %v249 = vpop.f32.mrf.mxu0
    %v250 = vadd.f32 %v221, %v249
    %251 = vmatmul.f32.gmra.mxu0 %v99
    %v252 = vpop.f32.mrf.mxu0
    %v253 = vadd.f32 %v224, %v252
    %254 = vdwg.mxu0
    %s255 = scalar_lea.vmem %s1, 80
    %v256 = vld [vmem:[%s255] sm:$0xff]
    %v257 = vld [vmem:[%s255 + $0x8] sm:$0xff]
    %258 = vmatpush.msra.mxu0 0.0
    %259 = vmatpush.msra.mxu0 0.0
    %260 = vmatpush.msra.mxu0 0.0
    %261 = vmatpush.msra.mxu0 0.0
    %262 = vmatpush.msra.mxu0 0.0
    %263 = vmatpush.msra.mxu0 0.0
    %264 = vmatpush.msra.mxu0 0.0
    %265 = vmatpush.msra.mxu0 0.0
    %266 = vmatpush.msra.mxu0 0.0
    %267 = vmatpush.msra.mxu0 0.0
    %268 = vmatpush.msra.mxu0 0.0
    %269 = vmatpush.msra.mxu0 0.0
    %270 = vmatpush.msra.mxu0 0.0
    %271 = vmatpush.msra.mxu0 0.0
    %272 = vmatpush.msra.mxu0 %v257
    %273 = vmatpush.msra.mxu0 %v256
    %274 = vmatmul.f32.gmra.mxu0 %v139
    %v275 = vpop.f32.mrf.mxu0
    %v276 = vadd.f32 0.0, %v275
    %277 = vmatmul.f32.gmra.mxu0 %v142
    %v278 = vpop.f32.mrf.mxu0
    %v279 = vadd.f32 0.0, %v278
    %280 = vmatmul.f32.gmra.mxu0 %v145
    %v281 = vpop.f32.mrf.mxu0
    %v282 = vadd.f32 0.0, %v281
    %283 = vmatmul.f32.gmra.mxu0 %v148
    %v284 = vpop.f32.mrf.mxu0
    %v285 = vadd.f32 0.0, %v284
    %286 = vdwg.mxu0
    %v287 = vadd.f32 %v244, %v276
    %v288 = vadd.f32 %v247, %v279
    %v289 = vadd.f32 %v250, %v282
    %v290 = vadd.f32 %v253, %v285
    %s291 = scalar_lea.vmem %s3, 1
    %v292 = vld [vmem:[%s291] sm:$0x1]
    %v294 = vperm.slane %v292, 0
    %v296 = vadd.f32 %v287, %v294
    %v297 = vadd.f32 %v288, %v294
    %v298 = vadd.f32 %v289, %v294
    %v299 = vadd.f32 %v290, %v294
    %s300 = scalar_lea.vmem %s1, 96
    %v301 = vld [vmem:[%s300] sm:$0xff]
    %v302 = vld [vmem:[%s300 + $0x8] sm:$0xff]
    %s303 = scalar_lea.vmem %s1, 112
    %v304 = vld [vmem:[%s303] sm:$0xff]
    %v305 = vld [vmem:[%s303 + $0x8] sm:$0xff]
    %306 = vmatpush.msra.mxu0 0.0
    %307 = vmatpush.msra.mxu0 0.0
    %308 = vmatpush.msra.mxu0 0.0
    %309 = vmatpush.msra.mxu0 0.0
    %310 = vmatpush.msra.mxu0 0.0
    %311 = vmatpush.msra.mxu0 0.0
    %312 = vmatpush.msra.mxu0 0.0
    %313 = vmatpush.msra.mxu0 0.0
    %314 = vmatpush.msra.mxu0 0.0
    %315 = vmatpush.msra.mxu0 0.0
    %316 = vmatpush.msra.mxu0 0.0
    %317 = vmatpush.msra.mxu0 0.0
    %318 = vmatpush.msra.mxu0 0.0
    %319 = vmatpush.msra.mxu0 0.0
    %320 = vmatpush.msra.mxu0 %v305
    %321 = vmatpush.msra.mxu0 %v304
    %322 = vmatmul.f32.gmra.mxu0 %v49
    %v323 = vpop.f32.mrf.mxu0
    %v324 = vadd.f32 0.0, %v323
    %325 = vmatmul.f32.gmra.mxu0 %v52
    %v326 = vpop.f32.mrf.mxu0
    %v327 = vadd.f32 0.0, %v326
    %328 = vmatmul.f32.gmra.mxu0 %v55
    %v329 = vpop.f32.mrf.mxu0
    %v330 = vadd.f32 0.0, %v329
    %331 = vmatmul.f32.gmra.mxu0 %v58
    %v332 = vpop.f32.mrf.mxu0
    %v333 = vadd.f32 0.0, %v332
    %334 = vdwg.mxu0
    %335 = vmatpush.msra.mxu0 0.0
    %336 = vmatpush.msra.mxu0 0.0
    %337 = vmatpush.msra.mxu0 0.0
    %338 = vmatpush.msra.mxu0 0.0
    %339 = vmatpush.msra.mxu0 0.0
    %340 = vmatpush.msra.mxu0 0.0
    %341 = vmatpush.msra.mxu0 0.0
    %342 = vmatpush.msra.mxu0 0.0
    %343 = vmatpush.msra.mxu0 0.0
    %344 = vmatpush.msra.mxu0 0.0
    %345 = vmatpush.msra.mxu0 0.0
    %346 = vmatpush.msra.mxu0 0.0
    %347 = vmatpush.msra.mxu0 0.0
    %348 = vmatpush.msra.mxu0 0.0
    %349 = vmatpush.msra.mxu0 %v302
    %350 = vmatpush.msra.mxu0 %v301
    %351 = vmatmul.f32.gmra.mxu0 %v90
    %v352 = vpop.f32.mrf.mxu0
    %v353 = vadd.f32 %v324, %v352
    %354 = vmatmul.f32.gmra.mxu0 %v93
    %v355 = vpop.f32.mrf.mxu0
    %v356 = vadd.f32 %v327, %v355
    %357 = vmatmul.f32.gmra.mxu0 %v96
    %v358 = vpop.f32.mrf.mxu0
    %v359 = vadd.f32 %v330, %v358
    %360 = vmatmul.f32.gmra.mxu0 %v99
    %v361 = vpop.f32.mrf.mxu0
    %v362 = vadd.f32 %v333, %v361
    %363 = vdwg.mxu0
    %s364 = scalar_lea.vmem %s1, 128
    %v365 = vld [vmem:[%s364] sm:$0xff]
    %v366 = vld [vmem:[%s364 + $0x8] sm:$0xff]
    %367 = vmatpush.msra.mxu0 0.0
    %368 = vmatpush.msra.mxu0 0.0
    %369 = vmatpush.msra.mxu0 0.0
    %370 = vmatpush.msra.mxu0 0.0
    %371 = vmatpush.msra.mxu0 0.0
    %372 = vmatpush.msra.mxu0 0.0
    %373 = vmatpush.msra.mxu0 0.0
    %374 = vmatpush.msra.mxu0 0.0
    %375 = vmatpush.msra.mxu0 0.0
    %376 = vmatpush.msra.mxu0 0.0
    %377 = vmatpush.msra.mxu0 0.0
    %378 = vmatpush.msra.mxu0 0.0
    %379 = vmatpush.msra.mxu0 0.0
    %380 = vmatpush.msra.mxu0 0.0
    %381 = vmatpush.msra.mxu0 %v366
    %382 = vmatpush.msra.mxu0 %v365
    %383 = vmatmul.f32.gmra.mxu0 %v139
    %v384 = vpop.f32.mrf.mxu0
    %v385 = vadd.f32 0.0, %v384
    %386 = vmatmul.f32.gmra.mxu0 %v142
    %v387 = vpop.f32.mrf.mxu0
    %v388 = vadd.f32 0.0, %v387
    %389 = vmatmul.f32.gmra.mxu0 %v145
    %v390 = vpop.f32.mrf.mxu0
    %v391 = vadd.f32 0.0, %v390
    %392 = vmatmul.f32.gmra.mxu0 %v148
    %v393 = vpop.f32.mrf.mxu0
    %v394 = vadd.f32 0.0, %v393
    %395 = vdwg.mxu0
    %v396 = vadd.f32 %v353, %v385
    %v397 = vadd.f32 %v356, %v388
    %v398 = vadd.f32 %v359, %v391
    %v399 = vadd.f32 %v362, %v394
    %s400 = scalar_lea.vmem %s3, 2
    %v401 = vld [vmem:[%s400] sm:$0x1]
    %v403 = vperm.slane %v401, 0
    %v405 = vadd.f32 %v396, %v403
    %v406 = vadd.f32 %v397, %v403
    %v407 = vadd.f32 %v398, %v403
    %v408 = vadd.f32 %v399, %v403
    %v409 = vld [vmem:[%s2] sm:$0xff]
    %v410 = vld [vmem:[%s2 + $0x8] sm:$0xff]
    %v411 = vld [vmem:[%s2 + $0x10] sm:$0xff]
    %v412 = vld [vmem:[%s2 + $0x18] sm:$0xff]
    %s413 = scalar_lea.vmem %s2, 32
    %v414 = vld [vmem:[%s413] sm:$0xff]
    %v415 = vld [vmem:[%s413 + $0x8] sm:$0xff]
    %v416 = vld [vmem:[%s413 + $0x10] sm:$0xff]
    %v417 = vld [vmem:[%s413 + $0x18] sm:$0xff]
    %s418 = scalar_lea.vmem %s2, 64
    %v419 = vld [vmem:[%s418] sm:$0xff]
    %v420 = vld [vmem:[%s418 + $0x8] sm:$0xff]
    %v421 = vld [vmem:[%s418 + $0x10] sm:$0xff]
    %v422 = vld [vmem:[%s418 + $0x18] sm:$0xff]
    %v423 = vld [vmem:[%s4] sm:$0x1]
    %s424 = scalar_lea.vmem %s4, 1
    %v425 = vld [vmem:[%s424] sm:$0x1]
    %s426 = scalar_lea.vmem %s4, 2
    %v427 = vld [vmem:[%s426] sm:$0x1]
    %vm428 = vcmask 261120
    %v430 = vsel %vm428, 0.0, 0
    %432 = vmatpush.msra.mxu0 0.0
    %433 = vmatpush.msra.mxu0 0.0
    %434 = vmatpush.msra.mxu0 0.0
    %435 = vmatpush.msra.mxu0 0.0
    %436 = vmatpush.msra.mxu0 0.0
    %437 = vmatpush.msra.mxu0 0.0
    %438 = vmatpush.msra.mxu0 0.0
    %439 = vmatpush.msra.mxu0 0.0
    %440 = vmatpush.msra.mxu0 0.0
    %441 = vmatpush.msra.mxu0 0.0
    %442 = vmatpush.msra.mxu0 0.0
    %443 = vmatpush.msra.mxu0 0.0
    %444 = vmatpush.msra.mxu0 %v412
    %445 = vmatpush.msra.mxu0 %v411
    %446 = vmatpush.msra.mxu0 %v410
    %447 = vmatpush.msra.mxu0 %v409
    %448 = vmatmul.f32.gmra.mxu0 %v430
    %v449 = vpop.f32.mrf.mxu0
    %v450 = vadd.f32 0.0, %v449
    %451 = vdwg.mxu0
    %v452 = vadd.f32 %v187, %v450
    %v454 = vperm.slane %v423, 0
    %v456 = vadd.f32 %v452, %v454
    %v457 = vxor.u32 %v456, 2147483648
    %v458 = vmul.f32 %v457, 1.442695
    %v459 = vpow.pop %v458
    %v460 = vadd.f32 %v459, 1.0
    %v461 = vrcp.pop %v460
    %v462 = vmul.f32 %v460, %v461
    %v463 = vsub.f32 1.0, %v462
    %v464 = vmul.f32 %v461, %v463
    %v465 = vadd.f32 %v461, %v464
    %vm466 = vweird.f32 %v460
    %vm467 = vweird.f32 %v461
    %vm468 = vmor %vm466, %vm467
    %v469 = vsel %vm468, %v461, %v465
    %v470 = vand.u32 2147483647, %v460
    %vm471 = vcmp.eq.f32.partialorder %v470, 8.507059e+37
    %v472 = vand.u32 %v460, 2147483648
    %v473 = vor.u32 1.1754944e-38, %v472
    %v474 = vsel %vm471, %v473, %v469
    %v475 = vmul.f32 1.0, %v474
    %476 = vmatpush.msra.mxu0 0.0
    %477 = vmatpush.msra.mxu0 0.0
    %478 = vmatpush.msra.mxu0 0.0
    %479 = vmatpush.msra.mxu0 0.0
    %480 = vmatpush.msra.mxu0 0.0
    %481 = vmatpush.msra.mxu0 0.0
    %482 = vmatpush.msra.mxu0 0.0
    %483 = vmatpush.msra.mxu0 0.0
    %484 = vmatpush.msra.mxu0 0.0
    %485 = vmatpush.msra.mxu0 0.0
    %486 = vmatpush.msra.mxu0 0.0
    %487 = vmatpush.msra.mxu0 0.0
    %488 = vmatpush.msra.mxu0 %v417
    %489 = vmatpush.msra.mxu0 %v416
    %490 = vmatpush.msra.mxu0 %v415
    %491 = vmatpush.msra.mxu0 %v414
    %492 = vmatmul.f32.gmra.mxu0 %v430
    %v493 = vpop.f32.mrf.mxu0
    %v494 = vadd.f32 0.0, %v493
    %495 = vdwg.mxu0
    %v496 = vadd.f32 %v296, %v494
    %v498 = vperm.slane %v425, 0
    %v500 = vadd.f32 %v496, %v498
    %v501 = vxor.u32 %v500, 2147483648
    %v502 = vmul.f32 %v501, 1.442695
    %v503 = vpow.pop %v502
    %v504 = vadd.f32 %v503, 1.0
    %v505 = vrcp.pop %v504
    %v506 = vmul.f32 %v504, %v505
    %v507 = vsub.f32 1.0, %v506
    %v508 = vmul.f32 %v505, %v507
    %v509 = vadd.f32 %v505, %v508
    %vm510 = vweird.f32 %v504
    %vm511 = vweird.f32 %v505
    %vm512 = vmor %vm510, %vm511
    %v513 = vsel %vm512, %v505, %v509
    %v514 = vand.u32 2147483647, %v504
    %vm515 = vcmp.eq.f32.partialorder %v514, 8.507059e+37
    %v516 = vand.u32 %v504, 2147483648
    %v517 = vor.u32 1.1754944e-38, %v516
    %v518 = vsel %vm515, %v517, %v513
    %v519 = vmul.f32 1.0, %v518
    %v521 = vperm.slane %v427, 0
    %523 = vmatpush.msra.mxu0 0.0
    %524 = vmatpush.msra.mxu0 0.0
    %525 = vmatpush.msra.mxu0 0.0
    %526 = vmatpush.msra.mxu0 0.0
    %527 = vmatpush.msra.mxu0 0.0
    %528 = vmatpush.msra.mxu0 0.0
    %529 = vmatpush.msra.mxu0 0.0
    %530 = vmatpush.msra.mxu0 0.0
    %531 = vmatpush.msra.mxu0 0.0
    %532 = vmatpush.msra.mxu0 0.0
    %533 = vmatpush.msra.mxu0 0.0
    %534 = vmatpush.msra.mxu0 0.0
    %535 = vmatpush.msra.mxu0 %v422
    %536 = vmatpush.msra.mxu0 %v421
    %537 = vmatpush.msra.mxu0 %v420
    %538 = vmatpush.msra.mxu0 %v419
    %539 = vmatmul.f32.gmra.mxu0 %v430
    %v540 = vpop.f32.mrf.mxu0
    %v541 = vadd.f32 %v521, %v540
    %542 = vdwg.mxu0
    %v543 = vmul.f32 %v475, %v541
    %v544 = vadd.f32 %v405, %v543
    %v545 = vtanh.pop %v544
    %v546 = vsub.f32 1.0, %v519
    %v547 = vmul.f32 %v546, %v545
    %v548 = vmul.f32 %v519, 0.0
    %v549 = vadd.f32 %v547, %v548
    %vm550 = vcmask 257024
    %551 = vst.msk [vmem:[#allocation2] sm:$0xf] %vm550, %v549
    %v553 = vsel %vm428, %v549, 0
    %555 = vmatpush.msra.mxu0 0.0
    %556 = vmatpush.msra.mxu0 0.0
    %557 = vmatpush.msra.mxu0 0.0
    %558 = vmatpush.msra.mxu0 0.0
    %559 = vmatpush.msra.mxu0 0.0
    %560 = vmatpush.msra.mxu0 0.0
    %561 = vmatpush.msra.mxu0 0.0
    %562 = vmatpush.msra.mxu0 0.0
    %563 = vmatpush.msra.mxu0 0.0
    %564 = vmatpush.msra.mxu0 0.0
    %565 = vmatpush.msra.mxu0 0.0
    %566 = vmatpush.msra.mxu0 0.0
    %567 = vmatpush.msra.mxu0 %v412
    %568 = vmatpush.msra.mxu0 %v411
    %569 = vmatpush.msra.mxu0 %v410
    %570 = vmatpush.msra.mxu0 %v409
    %571 = vmatmul.f32.gmra.mxu0 %v553
    %v572 = vpop.f32.mrf.mxu0
    %v573 = vadd.f32 0.0, %v572
    %574 = vdwg.mxu0
    %v576 = vrot.slane %v573, 4
    %v578 = vadd.f32 %v187, %v576
    %v579 = vadd.f32 %v578, %v454
    %v580 = vxor.u32 %v579, 2147483648
    %v581 = vmul.f32 %v580, 1.442695
    %v582 = vpow.pop %v581
    %v583 = vadd.f32 %v582, 1.0
    %v584 = vrcp.pop %v583
    %v585 = vmul.f32 %v583, %v584
    %v586 = vsub.f32 1.0, %v585
    %v587 = vmul.f32 %v584, %v586
    %v588 = vadd.f32 %v584, %v587
    %vm589 = vweird.f32 %v583
    %vm590 = vweird.f32 %v584
    %vm591 = vmor %vm589, %vm590
    %v592 = vsel %vm591, %v584, %v588
    %v593 = vand.u32 2147483647, %v583
    %vm594 = vcmp.eq.f32.partialorder %v593, 8.507059e+37
    %v595 = vand.u32 %v583, 2147483648
    %v596 = vor.u32 1.1754944e-38, %v595
    %v597 = vsel %vm594, %v596, %v592
    %v598 = vmul.f32 1.0, %v597
    %599 = vmatpush.msra.mxu0 0.0
    %600 = vmatpush.msra.mxu0 0.0
    %601 = vmatpush.msra.mxu0 0.0
    %602 = vmatpush.msra.mxu0 0.0
    %603 = vmatpush.msra.mxu0 0.0
    %604 = vmatpush.msra.mxu0 0.0
    %605 = vmatpush.msra.mxu0 0.0
    %606 = vmatpush.msra.mxu0 0.0
    %607 = vmatpush.msra.mxu0 0.0
    %608 = vmatpush.msra.mxu0 0.0
    %609 = vmatpush.msra.mxu0 0.0
    %610 = vmatpush.msra.mxu0 0.0
    %611 = vmatpush.msra.mxu0 %v417
    %612 = vmatpush.msra.mxu0 %v416
    %613 = vmatpush.msra.mxu0 %v415
    %614 = vmatpush.msra.mxu0 %v414
    %615 = vmatmul.f32.gmra.mxu0 %v553
    %v616 = vpop.f32.mrf.mxu0
    %v617 = vadd.f32 0.0, %v616
    %618 = vdwg.mxu0
    %v620 = vrot.slane %v617, 4
    %v622 = vadd.f32 %v296, %v620
    %v623 = vadd.f32 %v622, %v498
    %v624 = vxor.u32 %v623, 2147483648
    %v625 = vmul.f32 %v624, 1.442695
    %v626 = vpow.pop %v625
    %v627 = vadd.f32 %v626, 1.0
    %v628 = vrcp.pop %v627
    %v629 = vmul.f32 %v627, %v628
    %v630 = vsub.f32 1.0, %v629
    %v631 = vmul.f32 %v628, %v630
    %v632 = vadd.f32 %v628, %v631
    %vm633 = vweird.f32 %v627
    %vm634 = vweird.f32 %v628
    %vm635 = vmor %vm633, %vm634
    %v636 = vsel %vm635, %v628, %v632
    %v637 = vand.u32 2147483647, %v627
    %vm638 = vcmp.eq.f32.partialorder %v637, 8.507059e+37
    %v639 = vand.u32 %v627, 2147483648
    %v640 = vor.u32 1.1754944e-38, %v639
    %v641 = vsel %vm638, %v640, %v636
    %v642 = vmul.f32 1.0, %v641
    %643 = vmatpush.msra.mxu0 0.0
    %644 = vmatpush.msra.mxu0 0.0
    %645 = vmatpush.msra.mxu0 0.0
    %646 = vmatpush.msra.mxu0 0.0
    %647 = vmatpush.msra.mxu0 0.0
    %648 = vmatpush.msra.mxu0 0.0
    %649 = vmatpush.msra.mxu0 0.0
    %650 = vmatpush.msra.mxu0 0.0
    %651 = vmatpush.msra.mxu0 0.0
    %652 = vmatpush.msra.mxu0 0.0
    %653 = vmatpush.msra.mxu0 0.0
    %654 = vmatpush.msra.mxu0 0.0
    %655 = vmatpush.msra.mxu0 %v422
    %656 = vmatpush.msra.mxu0 %v421
    %657 = vmatpush.msra.mxu0 %v420
    %658 = vmatpush.msra.mxu0 %v419
    %659 = vmatmul.f32.gmra.mxu0 %v553
    %v660 = vpop.f32.mrf.mxu0
    %v661 = vadd.f32 %v521, %v660
    %662 = vdwg.mxu0
    %v664 = vrot.slane %v661, 4
    %v666 = vmul.f32 %v598, %v664
    %v667 = vadd.f32 %v405, %v666
    %v668 = vtanh.pop %v667
    %v669 = vsub.f32 1.0, %v642
    %v670 = vmul.f32 %v669, %v668
    %v671 = vrot.slane %v549, 4
    %v673 = vmul.f32 %v642, %v671
    %v674 = vadd.f32 %v670, %v673
    %s675 = scalar_lea.vmem [#allocation2], 4
    %vm676 = vcmask 261124
    %677 = vst.msk [vmem:[%s675 - $0x4] sm:$0xf0] %vm676, %v674
    %v679 = vrot.slane %v674, 4
    %v680 = vsel %vm428, %v679, 0
    %682 = vmatpush.msra.mxu0 0.0
    %683 = vmatpush.msra.mxu0 0.0
    %684 = vmatpush.msra.mxu0 0.0
    %685 = vmatpush.msra.mxu0 0.0
    %686 = vmatpush.msra.mxu0 0.0
    %687 = vmatpush.msra.mxu0 0.0
    %688 = vmatpush.msra.mxu0 0.0
    %689 = vmatpush.msra.mxu0 0.0
    %690 = vmatpush.msra.mxu0 0.0
    %691 = vmatpush.msra.mxu0 0.0
    %692 = vmatpush.msra.mxu0 0.0
    %693 = vmatpush.msra.mxu0 0.0
    %694 = vmatpush.msra.mxu0 %v412
    %695 = vmatpush.msra.mxu0 %v411
    %696 = vmatpush.msra.mxu0 %v410
    %697 = vmatpush.msra.mxu0 %v409
    %698 = vmatmul.f32.gmra.mxu0 %v680
    %v699 = vpop.f32.mrf.mxu0
    %v700 = vadd.f32 0.0, %v699
    %701 = vdwg.mxu0
    %v702 = vadd.f32 %v188, %v700
    %v703 = vadd.f32 %v702, %v454
    %v704 = vxor.u32 %v703, 2147483648
    %v705 = vmul.f32 %v704, 1.442695
    %v706 = vpow.pop %v705
    %v707 = vadd.f32 %v706, 1.0
    %v708 = vrcp.pop %v707
    %v709 = vmul.f32 %v707, %v708
    %v710 = vsub.f32 1.0, %v709
    %v711 = vmul.f32 %v708, %v710
    %v712 = vadd.f32 %v708, %v711
    %vm713 = vweird.f32 %v707
    %vm714 = vweird.f32 %v708
    %vm715 = vmor %vm713, %vm714
    %v716 = vsel %vm715, %v708, %v712
    %v717 = vand.u32 2147483647, %v707
    %vm718 = vcmp.eq.f32.partialorder %v717, 8.507059e+37
    %v719 = vand.u32 %v707, 2147483648
    %v720 = vor.u32 1.1754944e-38, %v719
    %v721 = vsel %vm718, %v720, %v716
    %v722 = vmul.f32 1.0, %v721
    %723 = vmatpush.msra.mxu0 0.0
    %724 = vmatpush.msra.mxu0 0.0
    %725 = vmatpush.msra.mxu0 0.0
    %726 = vmatpush.msra.mxu0 0.0
    %727 = vmatpush.msra.mxu0 0.0
    %728 = vmatpush.msra.mxu0 0.0
    %729 = vmatpush.msra.mxu0 0.0
    %730 = vmatpush.msra.mxu0 0.0
    %731 = vmatpush.msra.mxu0 0.0
    %732 = vmatpush.msra.mxu0 0.0
    %733 = vmatpush.msra.mxu0 0.0
    %734 = vmatpush.msra.mxu0 0.0
    %735 = vmatpush.msra.mxu0 %v417
    %736 = vmatpush.msra.mxu0 %v416
    %737 = vmatpush.msra.mxu0 %v415
    %738 = vmatpush.msra.mxu0 %v414
    %739 = vmatmul.f32.gmra.mxu0 %v680
    %v740 = vpop.f32.mrf.mxu0
    %v741 = vadd.f32 0.0, %v740
    %742 = vdwg.mxu0
    %v743 = vadd.f32 %v297, %v741
    %v744 = vadd.f32 %v743, %v498
    %v745 = vxor.u32 %v744, 2147483648
    %v746 = vmul.f32 %v745, 1.442695
    %v747 = vpow.pop %v746
    %v748 = vadd.f32 %v747, 1.0
    %v749 = vrcp.pop %v748
    %v750 = vmul.f32 %v748, %v749
    %v751 = vsub.f32 1.0, %v750
    %v752 = vmul.f32 %v749, %v751
    %v753 = vadd.f32 %v749, %v752
    %vm754 = vweird.f32 %v748
    %vm755 = vweird.f32 %v749
    %vm756 = vmor %vm754, %vm755
    %v757 = vsel %vm756, %v749, %v753
    %v758 = vand.u32 2147483647, %v748
    %vm759 = vcmp.eq.f32.partialorder %v758, 8.507059e+37
    %v760 = vand.u32 %v748, 2147483648
    %v761 = vor.u32 1.1754944e-38, %v760
    %v762 = vsel %vm759, %v761, %v757
    %v763 = vmul.f32 1.0, %v762
    %764 = vmatpush.msra.mxu0 0.0
    %765 = vmatpush.msra.mxu0 0.0
    %766 = vmatpush.msra.mxu0 0.0
    %767 = vmatpush.msra.mxu0 0.0
    %768 = vmatpush.msra.mxu0 0.0
    %769 = vmatpush.msra.mxu0 0.0
    %770 = vmatpush.msra.mxu0 0.0
    %771 = vmatpush.msra.mxu0 0.0
    %772 = vmatpush.msra.mxu0 0.0
    %773 = vmatpush.msra.mxu0 0.0
    %774 = vmatpush.msra.mxu0 0.0
    %775 = vmatpush.msra.mxu0 0.0
    %776 = vmatpush.msra.mxu0 %v422
    %777 = vmatpush.msra.mxu0 %v421
    %778 = vmatpush.msra.mxu0 %v420
    %779 = vmatpush.msra.mxu0 %v419
    %780 = vmatmul.f32.gmra.mxu0 %v680
    %v781 = vpop.f32.mrf.mxu0
    %v782 = vadd.f32 %v521, %v781
    %783 = vdwg.mxu0
    %v784 = vmul.f32 %v722, %v782
    %v785 = vadd.f32 %v406, %v784
    %v786 = vtanh.pop %v785
    %v787 = vsub.f32 1.0, %v763
    %v788 = vmul.f32 %v787, %v786
    %v790 = vmul.f32 %v763, %v679
    %v791 = vadd.f32 %v788, %v790
    %s792 = scalar_lea.vmem [#allocation2], 8
    %793 = vst.msk [vmem:[%s792] sm:$0xf] %vm550, %v791
    %v795 = vsel %vm428, %v791, 0
    %797 = vmatpush.msra.mxu0 0.0
    %798 = vmatpush.msra.mxu0 0.0
    %799 = vmatpush.msra.mxu0 0.0
    %800 = vmatpush.msra.mxu0 0.0
    %801 = vmatpush.msra.mxu0 0.0
    %802 = vmatpush.msra.mxu0 0.0
    %803 = vmatpush.msra.mxu0 0.0
    %804 = vmatpush.msra.mxu0 0.0
    %805 = vmatpush.msra.mxu0 0.0
    %806 = vmatpush.msra.mxu0 0.0
    %807 = vmatpush.msra.mxu0 0.0
    %808 = vmatpush.msra.mxu0 0.0
    %809 = vmatpush.msra.mxu0 %v412
    %810 = vmatpush.msra.mxu0 %v411
    %811 = vmatpush.msra.mxu0 %v410
    %812 = vmatpush.msra.mxu0 %v409
    %813 = vmatmul.f32.gmra.mxu0 %v795
    %v814 = vpop.f32.mrf.mxu0
    %v815 = vadd.f32 0.0, %v814
    %816 = vdwg.mxu0
    %v818 = vrot.slane %v815, 4
    %v820 = vadd.f32 %v188, %v818
    %v821 = vadd.f32 %v820, %v454
    %v822 = vxor.u32 %v821, 2147483648
    %v823 = vmul.f32 %v822, 1.442695
    %v824 = vpow.pop %v823
    %v825 = vadd.f32 %v824, 1.0
    %v826 = vrcp.pop %v825
    %v827 = vmul.f32 %v825, %v826
    %v828 = vsub.f32 1.0, %v827
    %v829 = vmul.f32 %v826, %v828
    %v830 = vadd.f32 %v826, %v829
    %vm831 = vweird.f32 %v825
    %vm832 = vweird.f32 %v826
    %vm833 = vmor %vm831, %vm832
    %v834 = vsel %vm833, %v826, %v830
    %v835 = vand.u32 2147483647, %v825
    %vm836 = vcmp.eq.f32.partialorder %v835, 8.507059e+37
    %v837 = vand.u32 %v825, 2147483648
    %v838 = vor.u32 1.1754944e-38, %v837
    %v839 = vsel %vm836, %v838, %v834
    %v840 = vmul.f32 1.0, %v839
    %841 = vmatpush.msra.mxu0 0.0
    %842 = vmatpush.msra.mxu0 0.0
    %843 = vmatpush.msra.mxu0 0.0
    %844 = vmatpush.msra.mxu0 0.0
    %845 = vmatpush.msra.mxu0 0.0
    %846 = vmatpush.msra.mxu0 0.0
    %847 = vmatpush.msra.mxu0 0.0
    %848 = vmatpush.msra.mxu0 0.0
    %849 = vmatpush.msra.mxu0 0.0
    %850 = vmatpush.msra.mxu0 0.0
    %851 = vmatpush.msra.mxu0 0.0
    %852 = vmatpush.msra.mxu0 0.0
    %853 = vmatpush.msra.mxu0 %v417
    %854 = vmatpush.msra.mxu0 %v416
    %855 = vmatpush.msra.mxu0 %v415
    %856 = vmatpush.msra.mxu0 %v414
    %857 = vmatmul.f32.gmra.mxu0 %v795
    %v858 = vpop.f32.mrf.mxu0
    %v859 = vadd.f32 0.0, %v858
    %860 = vdwg.mxu0
    %v862 = vrot.slane %v859, 4
    %v864 = vadd.f32 %v297, %v862
    %v865 = vadd.f32 %v864, %v498
    %v866 = vxor.u32 %v865, 2147483648
    %v867 = vmul.f32 %v866, 1.442695
    %v868 = vpow.pop %v867
    %v869 = vadd.f32 %v868, 1.0
    %v870 = vrcp.pop %v869
    %v871 = vmul.f32 %v869, %v870
    %v872 = vsub.f32 1.0, %v871
    %v873 = vmul.f32 %v870, %v872
    %v874 = vadd.f32 %v870, %v873
    %vm875 = vweird.f32 %v869
    %vm876 = vweird.f32 %v870
    %vm877 = vmor %vm875, %vm876
    %v878 = vsel %vm877, %v870, %v874
    %v879 = vand.u32 2147483647, %v869
    %vm880 = vcmp.eq.f32.partialorder %v879, 8.507059e+37
    %v881 = vand.u32 %v869, 2147483648
    %v882 = vor.u32 1.1754944e-38, %v881
    %v883 = vsel %vm880, %v882, %v878
    %v884 = vmul.f32 1.0, %v883
    %885 = vmatpush.msra.mxu0 0.0
    %886 = vmatpush.msra.mxu0 0.0
    %887 = vmatpush.msra.mxu0 0.0
    %888 = vmatpush.msra.mxu0 0.0
    %889 = vmatpush.msra.mxu0 0.0
    %890 = vmatpush.msra.mxu0 0.0
    %891 = vmatpush.msra.mxu0 0.0
    %892 = vmatpush.msra.mxu0 0.0
    %893 = vmatpush.msra.mxu0 0.0
    %894 = vmatpush.msra.mxu0 0.0
    %895 = vmatpush.msra.mxu0 0.0
    %896 = vmatpush.msra.mxu0 0.0
    %897 = vmatpush.msra.mxu0 %v422
    %898 = vmatpush.msra.mxu0 %v421
    %899 = vmatpush.msra.mxu0 %v420
    %900 = vmatpush.msra.mxu0 %v419
    %901 = vmatmul.f32.gmra.mxu0 %v795
    %v902 = vpop.f32.mrf.mxu0
    %v903 = vadd.f32 %v521, %v902
    %904 = vdwg.mxu0
    %v906 = vrot.slane %v903, 4
    %v908 = vmul.f32 %v840, %v906
    %v909 = vadd.f32 %v406, %v908
    %v910 = vtanh.pop %v909
    %v911 = vsub.f32 1.0, %v884
    %v912 = vmul.f32 %v911, %v910
    %v913 = vrot.slane %v791, 4
    %v915 = vmul.f32 %v884, %v913
    %v916 = vadd.f32 %v912, %v915
    %s917 = scalar_lea.vmem [#allocation2], 12
    %918 = vst.msk [vmem:[%s917 - $0x4] sm:$0xf0] %vm676, %v916
    %v920 = vrot.slane %v916, 4
    %v921 = vsel %vm428, %v920, 0
    %923 = vmatpush.msra.mxu0 0.0
    %924 = vmatpush.msra.mxu0 0.0
    %925 = vmatpush.msra.mxu0 0.0
    %926 = vmatpush.msra.mxu0 0.0
    %927 = vmatpush.msra.mxu0 0.0
    %928 = vmatpush.msra.mxu0 0.0
    %929 = vmatpush.msra.mxu0 0.0
    %930 = vmatpush.msra.mxu0 0.0
    %931 = vmatpush.msra.mxu0 0.0
    %932 = vmatpush.msra.mxu0 0.0
    %933 = vmatpush.msra.mxu0 0.0
    %934 = vmatpush.msra.mxu0 0.0
    %935 = vmatpush.msra.mxu0 %v412
    %936 = vmatpush.msra.mxu0 %v411
    %937 = vmatpush.msra.mxu0 %v410
    %938 = vmatpush.msra.mxu0 %v409
    %939 = vmatmul.f32.gmra.mxu0 %v921
    %v940 = vpop.f32.mrf.mxu0
    %v941 = vadd.f32 0.0, %v940
    %942 = vdwg.mxu0
    %v943 = vadd.f32 %v189, %v941
    %v944 = vadd.f32 %v943, %v454
    %v945 = vxor.u32 %v944, 2147483648
    %v946 = vmul.f32 %v945, 1.442695
    %v947 = vpow.pop %v946
    %v948 = vadd.f32 %v947, 1.0
    %v949 = vrcp.pop %v948
    %v950 = vmul.f32 %v948, %v949
    %v951 = vsub.f32 1.0, %v950
    %v952 = vmul.f32 %v949, %v951
    %v953 = vadd.f32 %v949, %v952
    %vm954 = vweird.f32 %v948
    %vm955 = vweird.f32 %v949
    %vm956 = vmor %vm954, %vm955
    %v957 = vsel %vm956, %v949, %v953
    %v958 = vand.u32 2147483647, %v948
    %vm959 = vcmp.eq.f32.partialorder %v958, 8.507059e+37
    %v960 = vand.u32 %v948, 2147483648
    %v961 = vor.u32 1.1754944e-38, %v960
    %v962 = vsel %vm959, %v961, %v957
    %v963 = vmul.f32 1.0, %v962
    %964 = vmatpush.msra.mxu0 0.0
    %965 = vmatpush.msra.mxu0 0.0
    %966 = vmatpush.msra.mxu0 0.0
    %967 = vmatpush.msra.mxu0 0.0
    %968 = vmatpush.msra.mxu0 0.0
    %969 = vmatpush.msra.mxu0 0.0
    %970 = vmatpush.msra.mxu0 0.0
    %971 = vmatpush.msra.mxu0 0.0
    %972 = vmatpush.msra.mxu0 0.0
    %973 = vmatpush.msra.mxu0 0.0
    %974 = vmatpush.msra.mxu0 0.0
    %975 = vmatpush.msra.mxu0 0.0
    %976 = vmatpush.msra.mxu0 %v417
    %977 = vmatpush.msra.mxu0 %v416
    %978 = vmatpush.msra.mxu0 %v415
    %979 = vmatpush.msra.mxu0 %v414
    %980 = vmatmul.f32.gmra.mxu0 %v921
    %v981 = vpop.f32.mrf.mxu0
    %v982 = vadd.f32 0.0, %v981
    %983 = vdwg.mxu0
    %v984 = vadd.f32 %v298, %v982
    %v985 = vadd.f32 %v984, %v498
    %v986 = vxor.u32 %v985, 2147483648
    %v987 = vmul.f32 %v986, 1.442695
    %v988 = vpow.pop %v987
    %v989 = vadd.f32 %v988, 1.0
    %v990 = vrcp.pop %v989
    %v991 = vmul.f32 %v989, %v990
    %v992 = vsub.f32 1.0, %v991
    %v993 = vmul.f32 %v990, %v992
    %v994 = vadd.f32 %v990, %v993
    %vm995 = vweird.f32 %v989
    %vm996 = vweird.f32 %v990
    %vm997 = vmor %vm995, %vm996
    %v998 = vsel %vm997, %v990, %v994
    %v999 = vand.u32 2147483647, %v989
    %vm1000 = vcmp.eq.f32.partialorder %v999, 8.507059e+37
    %v1001 = vand.u32 %v989, 2147483648
    %v1002 = vor.u32 1.1754944e-38, %v1001
    %v1003 = vsel %vm1000, %v1002, %v998
    %v1004 = vmul.f32 1.0, %v1003
    %1005 = vmatpush.msra.mxu0 0.0
    %1006 = vmatpush.msra.mxu0 0.0
    %1007 = vmatpush.msra.mxu0 0.0
    %1008 = vmatpush.msra.mxu0 0.0
    %1009 = vmatpush.msra.mxu0 0.0
    %1010 = vmatpush.msra.mxu0 0.0
    %1011 = vmatpush.msra.mxu0 0.0
    %1012 = vmatpush.msra.mxu0 0.0
    %1013 = vmatpush.msra.mxu0 0.0
    %1014 = vmatpush.msra.mxu0 0.0
    %1015 = vmatpush.msra.mxu0 0.0
    %1016 = vmatpush.msra.mxu0 0.0
    %1017 = vmatpush.msra.mxu0 %v422
    %1018 = vmatpush.msra.mxu0 %v421
    %1019 = vmatpush.msra.mxu0 %v420
    %1020 = vmatpush.msra.mxu0 %v419
    %1021 = vmatmul.f32.gmra.mxu0 %v921
    %v1022 = vpop.f32.mrf.mxu0
    %v1023 = vadd.f32 %v521, %v1022
    %1024 = vdwg.mxu0
    %v1025 = vmul.f32 %v963, %v1023
    %v1026 = vadd.f32 %v407, %v1025
    %v1027 = vtanh.pop %v1026
    %v1028 = vsub.f32 1.0, %v1004
    %v1029 = vmul.f32 %v1028, %v1027
    %v1031 = vmul.f32 %v1004, %v920
    %v1032 = vadd.f32 %v1029, %v1031
    %s1033 = scalar_lea.vmem [#allocation2], 16
    %1034 = vst.msk [vmem:[%s1033] sm:$0xf] %vm550, %v1032
    %v1036 = vsel %vm428, %v1032, 0
    %1038 = vmatpush.msra.mxu0 0.0
    %1039 = vmatpush.msra.mxu0 0.0
    %1040 = vmatpush.msra.mxu0 0.0
    %1041 = vmatpush.msra.mxu0 0.0
    %1042 = vmatpush.msra.mxu0 0.0
    %1043 = vmatpush.msra.mxu0 0.0
    %1044 = vmatpush.msra.mxu0 0.0
    %1045 = vmatpush.msra.mxu0 0.0
    %1046 = vmatpush.msra.mxu0 0.0
    %1047 = vmatpush.msra.mxu0 0.0
    %1048 = vmatpush.msra.mxu0 0.0
    %1049 = vmatpush.msra.mxu0 0.0
    %1050 = vmatpush.msra.mxu0 %v412
    %1051 = vmatpush.msra.mxu0 %v411
    %1052 = vmatpush.msra.mxu0 %v410
    %1053 = vmatpush.msra.mxu0 %v409
    %1054 = vmatmul.f32.gmra.mxu0 %v1036
    %v1055 = vpop.f32.mrf.mxu0
    %v1056 = vadd.f32 0.0, %v1055
    %1057 = vdwg.mxu0
    %v1059 = vrot.slane %v1056, 4
    %v1061 = vadd.f32 %v189, %v1059
    %v1062 = vadd.f32 %v1061, %v454
    %v1063 = vxor.u32 %v1062, 2147483648
    %v1064 = vmul.f32 %v1063, 1.442695
    %v1065 = vpow.pop %v1064
    %v1066 = vadd.f32 %v1065, 1.0
    %v1067 = vrcp.pop %v1066
    %v1068 = vmul.f32 %v1066, %v1067
    %v1069 = vsub.f32 1.0, %v1068
    %v1070 = vmul.f32 %v1067, %v1069
    %v1071 = vadd.f32 %v1067, %v1070
    %vm1072 = vweird.f32 %v1066
    %vm1073 = vweird.f32 %v1067
    %vm1074 = vmor %vm1072, %vm1073
    %v1075 = vsel %vm1074, %v1067, %v1071
    %v1076 = vand.u32 2147483647, %v1066
    %vm1077 = vcmp.eq.f32.partialorder %v1076, 8.507059e+37
    %v1078 = vand.u32 %v1066, 2147483648
    %v1079 = vor.u32 1.1754944e-38, %v1078
    %v1080 = vsel %vm1077, %v1079, %v1075
    %v1081 = vmul.f32 1.0, %v1080
    %1082 = vmatpush.msra.mxu0 0.0
    %1083 = vmatpush.msra.mxu0 0.0
    %1084 = vmatpush.msra.mxu0 0.0
    %1085 = vmatpush.msra.mxu0 0.0
    %1086 = vmatpush.msra.mxu0 0.0
    %1087 = vmatpush.msra.mxu0 0.0
    %1088 = vmatpush.msra.mxu0 0.0
    %1089 = vmatpush.msra.mxu0 0.0
    %1090 = vmatpush.msra.mxu0 0.0
    %1091 = vmatpush.msra.mxu0 0.0
    %1092 = vmatpush.msra.mxu0 0.0
    %1093 = vmatpush.msra.mxu0 0.0
    %1094 = vmatpush.msra.mxu0 %v417
    %1095 = vmatpush.msra.mxu0 %v416
    %1096 = vmatpush.msra.mxu0 %v415
    %1097 = vmatpush.msra.mxu0 %v414
    %1098 = vmatmul.f32.gmra.mxu0 %v1036
    %v1099 = vpop.f32.mrf.mxu0
    %v1100 = vadd.f32 0.0, %v1099
    %1101 = vdwg.mxu0
    %v1103 = vrot.slane %v1100, 4
    %v1105 = vadd.f32 %v298, %v1103
    %v1106 = vadd.f32 %v1105, %v498
    %v1107 = vxor.u32 %v1106, 2147483648
    %v1108 = vmul.f32 %v1107, 1.442695
    %v1109 = vpow.pop %v1108
    %v1110 = vadd.f32 %v1109, 1.0
    %v1111 = vrcp.pop %v1110
    %v1112 = vmul.f32 %v1110, %v1111
    %v1113 = vsub.f32 1.0, %v1112
    %v1114 = vmul.f32 %v1111, %v1113
    %v1115 = vadd.f32 %v1111, %v1114
    %vm1116 = vweird.f32 %v1110
    %vm1117 = vweird.f32 %v1111
    %vm1118 = vmor %vm1116, %vm1117
    %v1119 = vsel %vm1118, %v1111, %v1115
    %v1120 = vand.u32 2147483647, %v1110
    %vm1121 = vcmp.eq.f32.partialorder %v1120, 8.507059e+37
    %v1122 = vand.u32 %v1110, 2147483648
    %v1123 = vor.u32 1.1754944e-38, %v1122
    %v1124 = vsel %vm1121, %v1123, %v1119
    %v1125 = vmul.f32 1.0, %v1124
    %1126 = vmatpush.msra.mxu0 0.0
    %1127 = vmatpush.msra.mxu0 0.0
    %1128 = vmatpush.msra.mxu0 0.0
    %1129 = vmatpush.msra.mxu0 0.0
    %1130 = vmatpush.msra.mxu0 0.0
    %1131 = vmatpush.msra.mxu0 0.0
    %1132 = vmatpush.msra.mxu0 0.0
    %1133 = vmatpush.msra.mxu0 0.0
    %1134 = vmatpush.msra.mxu0 0.0
    %1135 = vmatpush.msra.mxu0 0.0
    %1136 = vmatpush.msra.mxu0 0.0
    %1137 = vmatpush.msra.mxu0 0.0
    %1138 = vmatpush.msra.mxu0 %v422
    %1139 = vmatpush.msra.mxu0 %v421
    %1140 = vmatpush.msra.mxu0 %v420
    %1141 = vmatpush.msra.mxu0 %v419
    %1142 = vmatmul.f32.gmra.mxu0 %v1036
    %v1143 = vpop.f32.mrf.mxu0
    %v1144 = vadd.f32 %v521, %v1143
    %1145 = vdwg.mxu0
    %v1147 = vrot.slane %v1144, 4
    %v1149 = vmul.f32 %v1081, %v1147
    %v1150 = vadd.f32 %v407, %v1149
    %v1151 = vtanh.pop %v1150
    %v1152 = vsub.f32 1.0, %v1125
    %v1153 = vmul.f32 %v1152, %v1151
    %v1154 = vrot.slane %v1032, 4
    %v1156 = vmul.f32 %v1125, %v1154
    %v1157 = vadd.f32 %v1153, %v1156
    %s1158 = scalar_lea.vmem [#allocation2], 20
    %1159 = vst.msk [vmem:[%s1158 - $0x4] sm:$0xf0] %vm676, %v1157
    %v1161 = vrot.slane %v1157, 4
    %v1162 = vsel %vm428, %v1161, 0
    %1164 = vmatpush.msra.mxu0 0.0
    %1165 = vmatpush.msra.mxu0 0.0
    %1166 = vmatpush.msra.mxu0 0.0
    %1167 = vmatpush.msra.mxu0 0.0
    %1168 = vmatpush.msra.mxu0 0.0
    %1169 = vmatpush.msra.mxu0 0.0
    %1170 = vmatpush.msra.mxu0 0.0
    %1171 = vmatpush.msra.mxu0 0.0
    %1172 = vmatpush.msra.mxu0 0.0
    %1173 = vmatpush.msra.mxu0 0.0
    %1174 = vmatpush.msra.mxu0 0.0
    %1175 = vmatpush.msra.mxu0 0.0
    %1176 = vmatpush.msra.mxu0 %v412
    %1177 = vmatpush.msra.mxu0 %v411
    %1178 = vmatpush.msra.mxu0 %v410
    %1179 = vmatpush.msra.mxu0 %v409
    %1180 = vmatmul.f32.gmra.mxu0 %v1162
    %v1181 = vpop.f32.mrf.mxu0
    %v1182 = vadd.f32 0.0, %v1181
    %1183 = vdwg.mxu0
    %v1184 = vadd.f32 %v190, %v1182
    %v1185 = vadd.f32 %v1184, %v454
    %v1186 = vxor.u32 %v1185, 2147483648
    %v1187 = vmul.f32 %v1186, 1.442695
    %v1188 = vpow.pop %v1187
    %v1189 = vadd.f32 %v1188, 1.0
    %v1190 = vrcp.pop %v1189
    %v1191 = vmul.f32 %v1189, %v1190
    %v1192 = vsub.f32 1.0, %v1191
    %v1193 = vmul.f32 %v1190, %v1192
    %v1194 = vadd.f32 %v1190, %v1193
    %vm1195 = vweird.f32 %v1189
    %vm1196 = vweird.f32 %v1190
    %vm1197 = vmor %vm1195, %vm1196
    %v1198 = vsel %vm1197, %v1190, %v1194
    %v1199 = vand.u32 2147483647, %v1189
    %vm1200 = vcmp.eq.f32.partialorder %v1199, 8.507059e+37
    %v1201 = vand.u32 %v1189, 2147483648
    %v1202 = vor.u32 1.1754944e-38, %v1201
    %v1203 = vsel %vm1200, %v1202, %v1198
    %v1204 = vmul.f32 1.0, %v1203
    %1205 = vmatpush.msra.mxu0 0.0
    %1206 = vmatpush.msra.mxu0 0.0
    %1207 = vmatpush.msra.mxu0 0.0
    %1208 = vmatpush.msra.mxu0 0.0
    %1209 = vmatpush.msra.mxu0 0.0
    %1210 = vmatpush.msra.mxu0 0.0
    %1211 = vmatpush.msra.mxu0 0.0
    %1212 = vmatpush.msra.mxu0 0.0
    %1213 = vmatpush.msra.mxu0 0.0
    %1214 = vmatpush.msra.mxu0 0.0
    %1215 = vmatpush.msra.mxu0 0.0
    %1216 = vmatpush.msra.mxu0 0.0
    %1217 = vmatpush.msra.mxu0 %v417
    %1218 = vmatpush.msra.mxu0 %v416
    %1219 = vmatpush.msra.mxu0 %v415
    %1220 = vmatpush.msra.mxu0 %v414
    %1221 = vmatmul.f32.gmra.mxu0 %v1162
    %v1222 = vpop.f32.mrf.mxu0
    %v1223 = vadd.f32 0.0, %v1222
    %1224 = vdwg.mxu0
    %v1225 = vadd.f32 %v299, %v1223
    %v1226 = vadd.f32 %v1225, %v498
    %v1227 = vxor.u32 %v1226, 2147483648
    %v1228 = vmul.f32 %v1227, 1.442695
    %v1229 = vpow.pop %v1228
    %v1230 = vadd.f32 %v1229, 1.0
    %v1231 = vrcp.pop %v1230
    %v1232 = vmul.f32 %v1230, %v1231
    %v1233 = vsub.f32 1.0, %v1232
    %v1234 = vmul.f32 %v1231, %v1233
    %v1235 = vadd.f32 %v1231, %v1234
    %vm1236 = vweird.f32 %v1230
    %vm1237 = vweird.f32 %v1231
    %vm1238 = vmor %vm1236, %vm1237
    %v1239 = vsel %vm1238, %v1231, %v1235
    %v1240 = vand.u32 2147483647, %v1230
    %vm1241 = vcmp.eq.f32.partialorder %v1240, 8.507059e+37
    %v1242 = vand.u32 %v1230, 2147483648
    %v1243 = vor.u32 1.1754944e-38, %v1242
    %v1244 = vsel %vm1241, %v1243, %v1239
    %v1245 = vmul.f32 1.0, %v1244
    %1246 = vmatpush.msra.mxu0 0.0
    %1247 = vmatpush.msra.mxu0 0.0
    %1248 = vmatpush.msra.mxu0 0.0
    %1249 = vmatpush.msra.mxu0 0.0
    %1250 = vmatpush.msra.mxu0 0.0
    %1251 = vmatpush.msra.mxu0 0.0
    %1252 = vmatpush.msra.mxu0 0.0
    %1253 = vmatpush.msra.mxu0 0.0
    %1254 = vmatpush.msra.mxu0 0.0
    %1255 = vmatpush.msra.mxu0 0.0
    %1256 = vmatpush.msra.mxu0 0.0
    %1257 = vmatpush.msra.mxu0 0.0
    %1258 = vmatpush.msra.mxu0 %v422
    %1259 = vmatpush.msra.mxu0 %v421
    %1260 = vmatpush.msra.mxu0 %v420
    %1261 = vmatpush.msra.mxu0 %v419
    %1262 = vmatmul.f32.gmra.mxu0 %v1162
    %v1263 = vpop.f32.mrf.mxu0
    %v1264 = vadd.f32 %v521, %v1263
    %1265 = vdwg.mxu0
    %v1266 = vmul.f32 %v1204, %v1264
    %v1267 = vadd.f32 %v408, %v1266
    %v1268 = vtanh.pop %v1267
    %v1269 = vsub.f32 1.0, %v1245
    %v1270 = vmul.f32 %v1269, %v1268
    %v1272 = vmul.f32 %v1245, %v1161
    %v1273 = vadd.f32 %v1270, %v1272
    %s1274 = scalar_lea.vmem [#allocation2], 24
    %1275 = vst.msk [vmem:[%s1274] sm:$0xf] %vm550, %v1273
    %v1277 = vsel %vm428, %v1273, 0
    %1279 = vmatpush.msra.mxu0 0.0
    %1280 = vmatpush.msra.mxu0 0.0
    %1281 = vmatpush.msra.mxu0 0.0
    %1282 = vmatpush.msra.mxu0 0.0
    %1283 = vmatpush.msra.mxu0 0.0
    %1284 = vmatpush.msra.mxu0 0.0
    %1285 = vmatpush.msra.mxu0 0.0
    %1286 = vmatpush.msra.mxu0 0.0
    %1287 = vmatpush.msra.mxu0 0.0
    %1288 = vmatpush.msra.mxu0 0.0
    %1289 = vmatpush.msra.mxu0 0.0
    %1290 = vmatpush.msra.mxu0 0.0
    %1291 = vmatpush.msra.mxu0 %v412
    %1292 = vmatpush.msra.mxu0 %v411
    %1293 = vmatpush.msra.mxu0 %v410
    %1294 = vmatpush.msra.mxu0 %v409
    %1295 = vmatmul.f32.gmra.mxu0 %v1277
    %v1296 = vpop.f32.mrf.mxu0
    %v1297 = vadd.f32 0.0, %v1296
    %1298 = vdwg.mxu0
    %v1300 = vrot.slane %v1297, 4
    %v1302 = vadd.f32 %v190, %v1300
    %v1303 = vadd.f32 %v1302, %v454
    %v1304 = vxor.u32 %v1303, 2147483648
    %v1305 = vmul.f32 %v1304, 1.442695
    %v1306 = vpow.pop %v1305
    %v1307 = vadd.f32 %v1306, 1.0
    %v1308 = vrcp.pop %v1307
    %v1309 = vmul.f32 %v1307, %v1308
    %v1310 = vsub.f32 1.0, %v1309
    %v1311 = vmul.f32 %v1308, %v1310
    %v1312 = vadd.f32 %v1308, %v1311
    %vm1313 = vweird.f32 %v1307
    %vm1314 = vweird.f32 %v1308
    %vm1315 = vmor %vm1313, %vm1314
    %v1316 = vsel %vm1315, %v1308, %v1312
    %v1317 = vand.u32 2147483647, %v1307
    %vm1318 = vcmp.eq.f32.partialorder %v1317, 8.507059e+37
    %v1319 = vand.u32 %v1307, 2147483648
    %v1320 = vor.u32 1.1754944e-38, %v1319
    %v1321 = vsel %vm1318, %v1320, %v1316
    %v1322 = vmul.f32 1.0, %v1321
    %1323 = vmatpush.msra.mxu0 0.0
    %1324 = vmatpush.msra.mxu0 0.0
    %1325 = vmatpush.msra.mxu0 0.0
    %1326 = vmatpush.msra.mxu0 0.0
    %1327 = vmatpush.msra.mxu0 0.0
    %1328 = vmatpush.msra.mxu0 0.0
    %1329 = vmatpush.msra.mxu0 0.0
    %1330 = vmatpush.msra.mxu0 0.0
    %1331 = vmatpush.msra.mxu0 0.0
    %1332 = vmatpush.msra.mxu0 0.0
    %1333 = vmatpush.msra.mxu0 0.0
    %1334 = vmatpush.msra.mxu0 0.0
    %1335 = vmatpush.msra.mxu0 %v417
    %1336 = vmatpush.msra.mxu0 %v416
    %1337 = vmatpush.msra.mxu0 %v415
    %1338 = vmatpush.msra.mxu0 %v414
    %1339 = vmatmul.f32.gmra.mxu0 %v1277
    %v1340 = vpop.f32.mrf.mxu0
    %v1341 = vadd.f32 0.0, %v1340
    %1342 = vdwg.mxu0
    %v1344 = vrot.slane %v1341, 4
    %v1346 = vadd.f32 %v299, %v1344
    %v1347 = vadd.f32 %v1346, %v498
    %v1348 = vxor.u32 %v1347, 2147483648
    %v1349 = vmul.f32 %v1348, 1.442695
    %v1350 = vpow.pop %v1349
    %v1351 = vadd.f32 %v1350, 1.0
    %v1352 = vrcp.pop %v1351
    %v1353 = vmul.f32 %v1351, %v1352
    %v1354 = vsub.f32 1.0, %v1353
    %v1355 = vmul.f32 %v1352, %v1354
    %v1356 = vadd.f32 %v1352, %v1355
    %vm1357 = vweird.f32 %v1351
    %vm1358 = vweird.f32 %v1352
    %vm1359 = vmor %vm1357, %vm1358
    %v1360 = vsel %vm1359, %v1352, %v1356
    %v1361 = vand.u32 2147483647, %v1351
    %vm1362 = vcmp.eq.f32.partialorder %v1361, 8.507059e+37
    %v1363 = vand.u32 %v1351, 2147483648
    %v1364 = vor.u32 1.1754944e-38, %v1363
    %v1365 = vsel %vm1362, %v1364, %v1360
    %v1366 = vmul.f32 1.0, %v1365
    %1367 = vmatpush.msra.mxu0 0.0
    %1368 = vmatpush.msra.mxu0 0.0
    %1369 = vmatpush.msra.mxu0 0.0
    %1370 = vmatpush.msra.mxu0 0.0
    %1371 = vmatpush.msra.mxu0 0.0
    %1372 = vmatpush.msra.mxu0 0.0
    %1373 = vmatpush.msra.mxu0 0.0
    %1374 = vmatpush.msra.mxu0 0.0
    %1375 = vmatpush.msra.mxu0 0.0
    %1376 = vmatpush.msra.mxu0 0.0
    %1377 = vmatpush.msra.mxu0 0.0
    %1378 = vmatpush.msra.mxu0 0.0
    %1379 = vmatpush.msra.mxu0 %v422
    %1380 = vmatpush.msra.mxu0 %v421
    %1381 = vmatpush.msra.mxu0 %v420
    %1382 = vmatpush.msra.mxu0 %v419
    %1383 = vmatmul.f32.gmra.mxu0 %v1277
    %v1384 = vpop.f32.mrf.mxu0
    %v1385 = vadd.f32 %v521, %v1384
    %1386 = vdwg.mxu0
    %v1388 = vrot.slane %v1385, 4
    %v1390 = vmul.f32 %v1322, %v1388
    %v1391 = vadd.f32 %v408, %v1390
    %v1392 = vtanh.pop %v1391
    %v1393 = vsub.f32 1.0, %v1366
    %v1394 = vmul.f32 %v1393, %v1392
    %v1395 = vrot.slane %v1273, 4
    %v1397 = vmul.f32 %v1366, %v1395
    %v1398 = vadd.f32 %v1394, %v1397
    %s1399 = scalar_lea.vmem [#allocation2], 28
    %1400 = vst.msk [vmem:[%s1399 - $0x4] sm:$0xf0] %vm676, %v1398
    %v1401 = vld [vmem:[%s0] sm:$0xff]
    %v1402 = vld [vmem:[%s0 + $0x8] sm:$0xff]
    %v1403 = vld [vmem:[%s0 + $0x10] sm:$0xff]
    %v1404 = vld [vmem:[%s0 + $0x18] sm:$0xff]
    %s1405 = scalar_lea.vmem %s1, 144
    %v1406 = vld [vmem:[%s1405] sm:$0xff]
    %v1407 = vld [vmem:[%s1405 + $0x8] sm:$0xff]
    %v1408 = vld [vmem:[%s39] sm:$0xff]
    %v1409 = vld [vmem:[%s39 + $0x8] sm:$0xff]
    %v1410 = vld [vmem:[%s39 + $0x10] sm:$0xff]
    %v1411 = vld [vmem:[%s39 + $0x18] sm:$0xff]
    %s1412 = scalar_lea.vmem %s1, 160
    %v1413 = vld [vmem:[%s1412] sm:$0xff]
    %v1414 = vld [vmem:[%s1412 + $0x8] sm:$0xff]
    %v1416 = vsel %vm47, %v1408, 0
    %v1419 = vsel %vm47, %v1409, 0
    %v1422 = vsel %vm47, %v1410, 0
    %v1425 = vsel %vm47, %v1411, 0
    %1427 = vmatpush.msra.mxu0 0.0
    %1428 = vmatpush.msra.mxu0 0.0
    %1429 = vmatpush.msra.mxu0 0.0
    %1430 = vmatpush.msra.mxu0 0.0
    %1431 = vmatpush.msra.mxu0 0.0
    %1432 = vmatpush.msra.mxu0 0.0
    %1433 = vmatpush.msra.mxu0 0.0
    %1434 = vmatpush.msra.mxu0 0.0
    %1435 = vmatpush.msra.mxu0 0.0
    %1436 = vmatpush.msra.mxu0 0.0
    %1437 = vmatpush.msra.mxu0 0.0
    %1438 = vmatpush.msra.mxu0 0.0
    %1439 = vmatpush.msra.mxu0 0.0
    %1440 = vmatpush.msra.mxu0 0.0
    %1441 = vmatpush.msra.mxu0 %v1414
    %1442 = vmatpush.msra.mxu0 %v1413
    %1443 = vmatmul.f32.gmra.mxu0 %v1416
    %v1444 = vpop.f32.mrf.mxu0
    %v1445 = vadd.f32 0.0, %v1444
    %1446 = vmatmul.f32.gmra.mxu0 %v1419
    %v1447 = vpop.f32.mrf.mxu0
    %v1448 = vadd.f32 0.0, %v1447
    %1449 = vmatmul.f32.gmra.mxu0 %v1422
    %v1450 = vpop.f32.mrf.mxu0
    %v1451 = vadd.f32 0.0, %v1450
    %1452 = vmatmul.f32.gmra.mxu0 %v1425
    %v1453 = vpop.f32.mrf.mxu0
    %v1454 = vadd.f32 0.0, %v1453
    %1455 = vdwg.mxu0
    %v1457 = vsel %vm47, %v1401, 0
    %v1460 = vsel %vm47, %v1402, 0
    %v1463 = vsel %vm47, %v1403, 0
    %v1466 = vsel %vm47, %v1404, 0
    %1468 = vmatpush.msra.mxu0 0.0
    %1469 = vmatpush.msra.mxu0 0.0
    %1470 = vmatpush.msra.mxu0 0.0
    %1471 = vmatpush.msra.mxu0 0.0
    %1472 = vmatpush.msra.mxu0 0.0
    %1473 = vmatpush.msra.mxu0 0.0
    %1474 = vmatpush.msra.mxu0 0.0
    %1475 = vmatpush.msra.mxu0 0.0
    %1476 = vmatpush.msra.mxu0 0.0
    %1477 = vmatpush.msra.mxu0 0.0
    %1478 = vmatpush.msra.mxu0 0.0
    %1479 = vmatpush.msra.mxu0 0.0
    %1480 = vmatpush.msra.mxu0 0.0
    %1481 = vmatpush.msra.mxu0 0.0
    %1482 = vmatpush.msra.mxu0 %v1407
    %1483 = vmatpush.msra.mxu0 %v1406
    %1484 = vmatmul.f32.gmra.mxu0 %v1457
    %v1485 = vpop.f32.mrf.mxu0
    %v1486 = vadd.f32 %v1445, %v1485
    %1487 = vmatmul.f32.gmra.mxu0 %v1460
    %v1488 = vpop.f32.mrf.mxu0
    %v1489 = vadd.f32 %v1448, %v1488
    %1490 = vmatmul.f32.gmra.mxu0 %v1463
    %v1491 = vpop.f32.mrf.mxu0
    %v1492 = vadd.f32 %v1451, %v1491
    %1493 = vmatmul.f32.gmra.mxu0 %v1466
    %v1494 = vpop.f32.mrf.mxu0
    %v1495 = vadd.f32 %v1454, %v1494
    %1496 = vdwg.mxu0
    %v1497 = vld [vmem:[%s130] sm:$0xff]
    %v1498 = vld [vmem:[%s130 + $0x8] sm:$0xff]
    %v1499 = vld [vmem:[%s130 + $0x10] sm:$0xff]
    %v1500 = vld [vmem:[%s130 + $0x18] sm:$0xff]
    %s1501 = scalar_lea.vmem %s1, 176
    %v1502 = vld [vmem:[%s1501] sm:$0xff]
    %v1503 = vld [vmem:[%s1501 + $0x8] sm:$0xff]
    %v1505 = vsel %vm47, %v1497, 0
    %v1508 = vsel %vm47, %v1498, 0
    %v1511 = vsel %vm47, %v1499, 0
    %v1514 = vsel %vm47, %v1500, 0
    %1516 = vmatpush.msra.mxu0 0.0
    %1517 = vmatpush.msra.mxu0 0.0
    %1518 = vmatpush.msra.mxu0 0.0
    %1519 = vmatpush.msra.mxu0 0.0
    %1520 = vmatpush.msra.mxu0 0.0
    %1521 = vmatpush.msra.mxu0 0.0
    %1522 = vmatpush.msra.mxu0 0.0
    %1523 = vmatpush.msra.mxu0 0.0
    %1524 = vmatpush.msra.mxu0 0.0
    %1525 = vmatpush.msra.mxu0 0.0
    %1526 = vmatpush.msra.mxu0 0.0
    %1527 = vmatpush.msra.mxu0 0.0
    %1528 = vmatpush.msra.mxu0 0.0
    %1529 = vmatpush.msra.mxu0 0.0
    %1530 = vmatpush.msra.mxu0 %v1503
    %1531 = vmatpush.msra.mxu0 %v1502
    %1532 = vmatmul.f32.gmra.mxu0 %v1505
    %v1533 = vpop.f32.mrf.mxu0
    %v1534 = vadd.f32 0.0, %v1533
    %1535 = vmatmul.f32.gmra.mxu0 %v1508
    %v1536 = vpop.f32.mrf.mxu0
    %v1537 = vadd.f32 0.0, %v1536
    %1538 = vmatmul.f32.gmra.mxu0 %v1511
    %v1539 = vpop.f32.mrf.mxu0
    %v1540 = vadd.f32 0.0, %v1539
    %1541 = vmatmul.f32.gmra.mxu0 %v1514
    %v1542 = vpop.f32.mrf.mxu0
    %v1543 = vadd.f32 0.0, %v1542
    %1544 = vdwg.mxu0
    %v1545 = vadd.f32 %v1486, %v1534
    %v1546 = vadd.f32 %v1489, %v1537
    %v1547 = vadd.f32 %v1492, %v1540
    %v1548 = vadd.f32 %v1495, %v1543
    %s1549 = scalar_lea.vmem %s3, 3
    %v1550 = vld [vmem:[%s1549] sm:$0x1]
    %v1552 = vperm.slane %v1550, 0
    %v1554 = vadd.f32 %v1545, %v1552
    %v1555 = vadd.f32 %v1546, %v1552
    %v1556 = vadd.f32 %v1547, %v1552
    %v1557 = vadd.f32 %v1548, %v1552
    %s1558 = scalar_lea.vmem %s1, 192
    %v1559 = vld [vmem:[%s1558] sm:$0xff]
    %v1560 = vld [vmem:[%s1558 + $0x8] sm:$0xff]
    %s1561 = scalar_lea.vmem %s1, 208
    %v1562 = vld [vmem:[%s1561] sm:$0xff]
    %v1563 = vld [vmem:[%s1561 + $0x8] sm:$0xff]
    %1564 = vmatpush.msra.mxu0 0.0
    %1565 = vmatpush.msra.mxu0 0.0
    %1566 = vmatpush.msra.mxu0 0.0
    %1567 = vmatpush.msra.mxu0 0.0
    %1568 = vmatpush.msra.mxu0 0.0
    %1569 = vmatpush.msra.mxu0 0.0
    %1570 = vmatpush.msra.mxu0 0.0
    %1571 = vmatpush.msra.mxu0 0.0
    %1572 = vmatpush.msra.mxu0 0.0
    %1573 = vmatpush.msra.mxu0 0.0
    %1574 = vmatpush.msra.mxu0 0.0
    %1575 = vmatpush.msra.mxu0 0.0
    %1576 = vmatpush.msra.mxu0 0.0
    %1577 = vmatpush.msra.mxu0 0.0
    %1578 = vmatpush.msra.mxu0 %v1563
    %1579 = vmatpush.msra.mxu0 %v1562
    %1580 = vmatmul.f32.gmra.mxu0 %v1416
    %v1581 = vpop.f32.mrf.mxu0
    %v1582 = vadd.f32 0.0, %v1581
    %1583 = vmatmul.f32.gmra.mxu0 %v1419
    %v1584 = vpop.f32.mrf.mxu0
    %v1585 = vadd.f32 0.0, %v1584
    %1586 = vmatmul.f32.gmra.mxu0 %v1422
    %v1587 = vpop.f32.mrf.mxu0
    %v1588 = vadd.f32 0.0, %v1587
    %1589 = vmatmul.f32.gmra.mxu0 %v1425
    %v1590 = vpop.f32.mrf.mxu0
    %v1591 = vadd.f32 0.0, %v1590
    %1592 = vdwg.mxu0
    %1593 = vmatpush.msra.mxu0 0.0
    %1594 = vmatpush.msra.mxu0 0.0
    %1595 = vmatpush.msra.mxu0 0.0
    %1596 = vmatpush.msra.mxu0 0.0
    %1597 = vmatpush.msra.mxu0 0.0
    %1598 = vmatpush.msra.mxu0 0.0
    %1599 = vmatpush.msra.mxu0 0.0
    %1600 = vmatpush.msra.mxu0 0.0
    %1601 = vmatpush.msra.mxu0 0.0
    %1602 = vmatpush.msra.mxu0 0.0
    %1603 = vmatpush.msra.mxu0 0.0
    %1604 = vmatpush.msra.mxu0 0.0
    %1605 = vmatpush.msra.mxu0 0.0
    %1606 = vmatpush.msra.mxu0 0.0
    %1607 = vmatpush.msra.mxu0 %v1560
    %1608 = vmatpush.msra.mxu0 %v1559
    %1609 = vmatmul.f32.gmra.mxu0 %v1457
    %v1610 = vpop.f32.mrf.mxu0
    %v1611 = vadd.f32 %v1582, %v1610
    %1612 = vmatmul.f32.gmra.mxu0 %v1460
    %v1613 = vpop.f32.mrf.mxu0
    %v1614 = vadd.f32 %v1585, %v1613
    %1615 = vmatmul.f32.gmra.mxu0 %v1463
    %v1616 = vpop.f32.mrf.mxu0
    %v1617 = vadd.f32 %v1588, %v1616
    %1618 = vmatmul.f32.gmra.mxu0 %v1466
    %v1619 = vpop.f32.mrf.mxu0
    %v1620 = vadd.f32 %v1591, %v1619
    %1621 = vdwg.mxu0
    %s1622 = scalar_lea.vmem %s1, 224
    %v1623 = vld [vmem:[%s1622] sm:$0xff]
    %v1624 = vld [vmem:[%s1622 + $0x8] sm:$0xff]
    %1625 = vmatpush.msra.mxu0 0.0
    %1626 = vmatpush.msra.mxu0 0.0
    %1627 = vmatpush.msra.mxu0 0.0
    %1628 = vmatpush.msra.mxu0 0.0
    %1629 = vmatpush.msra.mxu0 0.0
    %1630 = vmatpush.msra.mxu0 0.0
    %1631 = vmatpush.msra.mxu0 0.0
    %1632 = vmatpush.msra.mxu0 0.0
    %1633 = vmatpush.msra.mxu0 0.0
    %1634 = vmatpush.msra.mxu0 0.0
    %1635 = vmatpush.msra.mxu0 0.0
    %1636 = vmatpush.msra.mxu0 0.0
    %1637 = vmatpush.msra.mxu0 0.0
    %1638 = vmatpush.msra.mxu0 0.0
    %1639 = vmatpush.msra.mxu0 %v1624
    %1640 = vmatpush.msra.mxu0 %v1623
    %1641 = vmatmul.f32.gmra.mxu0 %v1505
    %v1642 = vpop.f32.mrf.mxu0
    %v1643 = vadd.f32 0.0, %v1642
    %1644 = vmatmul.f32.gmra.mxu0 %v1508
    %v1645 = vpop.f32.mrf.mxu0
    %v1646 = vadd.f32 0.0, %v1645
    %1647 = vmatmul.f32.gmra.mxu0 %v1511
    %v1648 = vpop.f32.mrf.mxu0
    %v1649 = vadd.f32 0.0, %v1648
    %1650 = vmatmul.f32.gmra.mxu0 %v1514
    %v1651 = vpop.f32.mrf.mxu0
    %v1652 = vadd.f32 0.0, %v1651
    %1653 = vdwg.mxu0
    %v1654 = vadd.f32 %v1611, %v1643
    %v1655 = vadd.f32 %v1614, %v1646
    %v1656 = vadd.f32 %v1617, %v1649
    %v1657 = vadd.f32 %v1620, %v1652
    %s1658 = scalar_lea.vmem %s3, 4
    %v1659 = vld [vmem:[%s1658] sm:$0x1]
    %v1661 = vperm.slane %v1659, 0
    %v1663 = vadd.f32 %v1654, %v1661
    %v1664 = vadd.f32 %v1655, %v1661
    %v1665 = vadd.f32 %v1656, %v1661
    %v1666 = vadd.f32 %v1657, %v1661
    %s1667 = scalar_lea.vmem %s1, 240
    %v1668 = vld [vmem:[%s1667] sm:$0xff]
    %v1669 = vld [vmem:[%s1667 + $0x8] sm:$0xff]
    %s1670 = scalar_lea.vmem %s1, 256
    %v1671 = vld [vmem:[%s1670] sm:$0xff]
    %v1672 = vld [vmem:[%s1670 + $0x8] sm:$0xff]
    %1673 = vmatpush.msra.mxu0 0.0
    %1674 = vmatpush.msra.mxu0 0.0
    %1675 = vmatpush.msra.mxu0 0.0
    %1676 = vmatpush.msra.mxu0 0.0
    %1677 = vmatpush.msra.mxu0 0.0
    %1678 = vmatpush.msra.mxu0 0.0
    %1679 = vmatpush.msra.mxu0 0.0
    %1680 = vmatpush.msra.mxu0 0.0
    %1681 = vmatpush.msra.mxu0 0.0
    %1682 = vmatpush.msra.mxu0 0.0
    %1683 = vmatpush.msra.mxu0 0.0
    %1684 = vmatpush.msra.mxu0 0.0
    %1685 = vmatpush.msra.mxu0 0.0
    %1686 = vmatpush.msra.mxu0 0.0
    %1687 = vmatpush.msra.mxu0 %v1672
    %1688 = vmatpush.msra.mxu0 %v1671
    %1689 = vmatmul.f32.gmra.mxu0 %v1416
    %v1690 = vpop.f32.mrf.mxu0
    %v1691 = vadd.f32 0.0, %v1690
    %1692 = vmatmul.f32.gmra.mxu0 %v1419
    %v1693 = vpop.f32.mrf.mxu0
    %v1694 = vadd.f32 0.0, %v1693
    %1695 = vmatmul.f32.gmra.mxu0 %v1422
    %v1696 = vpop.f32.mrf.mxu0
    %v1697 = vadd.f32 0.0, %v1696
    %1698 = vmatmul.f32.gmra.mxu0 %v1425
    %v1699 = vpop.f32.mrf.mxu0
    %v1700 = vadd.f32 0.0, %v1699
    %1701 = vdwg.mxu0
    %1702 = vmatpush.msra.mxu0 0.0
    %1703 = vmatpush.msra.mxu0 0.0
    %1704 = vmatpush.msra.mxu0 0.0
    %1705 = vmatpush.msra.mxu0 0.0
    %1706 = vmatpush.msra.mxu0 0.0
    %1707 = vmatpush.msra.mxu0 0.0
    %1708 = vmatpush.msra.mxu0 0.0
    %1709 = vmatpush.msra.mxu0 0.0
    %1710 = vmatpush.msra.mxu0 0.0
    %1711 = vmatpush.msra.mxu0 0.0
    %1712 = vmatpush.msra.mxu0 0.0
    %1713 = vmatpush.msra.mxu0 0.0
    %1714 = vmatpush.msra.mxu0 0.0
    %1715 = vmatpush.msra.mxu0 0.0
    %1716 = vmatpush.msra.mxu0 %v1669
    %1717 = vmatpush.msra.mxu0 %v1668
    %1718 = vmatmul.f32.gmra.mxu0 %v1457
    %v1719 = vpop.f32.mrf.mxu0
    %v1720 = vadd.f32 %v1691, %v1719
    %1721 = vmatmul.f32.gmra.mxu0 %v1460
    %v1722 = vpop.f32.mrf.mxu0
    %v1723 = vadd.f32 %v1694, %v1722
    %1724 = vmatmul.f32.gmra.mxu0 %v1463
    %v1725 = vpop.f32.mrf.mxu0
    %v1726 = vadd.f32 %v1697, %v1725
    %1727 = vmatmul.f32.gmra.mxu0 %v1466
    %v1728 = vpop.f32.mrf.mxu0
    %v1729 = vadd.f32 %v1700, %v1728
    %1730 = vdwg.mxu0
    %s1731 = scalar_lea.vmem %s1, 272
    %v1732 = vld [vmem:[%s1731] sm:$0xff]
    %v1733 = vld [vmem:[%s1731 + $0x8] sm:$0xff]
    %1734 = vmatpush.msra.mxu0 0.0
    %1735 = vmatpush.msra.mxu0 0.0
    %1736 = vmatpush.msra.mxu0 0.0
    %1737 = vmatpush.msra.mxu0 0.0
    %1738 = vmatpush.msra.mxu0 0.0
    %1739 = vmatpush.msra.mxu0 0.0
    %1740 = vmatpush.msra.mxu0 0.0
    %1741 = vmatpush.msra.mxu0 0.0
    %1742 = vmatpush.msra.mxu0 0.0
    %1743 = vmatpush.msra.mxu0 0.0
    %1744 = vmatpush.msra.mxu0 0.0
    %1745 = vmatpush.msra.mxu0 0.0
    %1746 = vmatpush.msra.mxu0 0.0
    %1747 = vmatpush.msra.mxu0 0.0
    %1748 = vmatpush.msra.mxu0 %v1733
    %1749 = vmatpush.msra.mxu0 %v1732
    %1750 = vmatmul.f32.gmra.mxu0 %v1505
    %v1751 = vpop.f32.mrf.mxu0
    %v1752 = vadd.f32 0.0, %v1751
    %1753 = vmatmul.f32.gmra.mxu0 %v1508
    %v1754 = vpop.f32.mrf.mxu0
    %v1755 = vadd.f32 0.0, %v1754
    %1756 = vmatmul.f32.gmra.mxu0 %v1511
    %v1757 = vpop.f32.mrf.mxu0
    %v1758 = vadd.f32 0.0, %v1757
    %1759 = vmatmul.f32.gmra.mxu0 %v1514
    %v1760 = vpop.f32.mrf.mxu0
    %v1761 = vadd.f32 0.0, %v1760
    %1762 = vdwg.mxu0
    %v1763 = vadd.f32 %v1720, %v1752
    %v1764 = vadd.f32 %v1723, %v1755
    %v1765 = vadd.f32 %v1726, %v1758
    %v1766 = vadd.f32 %v1729, %v1761
    %s1767 = scalar_lea.vmem %s3, 5
    %v1768 = vld [vmem:[%s1767] sm:$0x1]
    %v1770 = vperm.slane %v1768, 0
    %v1772 = vadd.f32 %v1763, %v1770
    %v1773 = vadd.f32 %v1764, %v1770
    %v1774 = vadd.f32 %v1765, %v1770
    %v1775 = vadd.f32 %v1766, %v1770
    %s1776 = scalar_lea.vmem %s2, 96
    %v1777 = vld [vmem:[%s1776] sm:$0xff]
    %v1778 = vld [vmem:[%s1776 + $0x8] sm:$0xff]
    %v1779 = vld [vmem:[%s1776 + $0x10] sm:$0xff]
    %v1780 = vld [vmem:[%s1776 + $0x18] sm:$0xff]
    %s1781 = scalar_lea.vmem %s2, 128
    %v1782 = vld [vmem:[%s1781] sm:$0xff]
    %v1783 = vld [vmem:[%s1781 + $0x8] sm:$0xff]
    %v1784 = vld [vmem:[%s1781 + $0x10] sm:$0xff]
    %v1785 = vld [vmem:[%s1781 + $0x18] sm:$0xff]
    %s1786 = scalar_lea.vmem %s2, 160
    %v1787 = vld [vmem:[%s1786] sm:$0xff]
    %v1788 = vld [vmem:[%s1786 + $0x8] sm:$0xff]
    %v1789 = vld [vmem:[%s1786 + $0x10] sm:$0xff]
    %v1790 = vld [vmem:[%s1786 + $0x18] sm:$0xff]
    %s1791 = scalar_lea.vmem %s4, 3
    %v1792 = vld [vmem:[%s1791] sm:$0x1]
    %s1793 = scalar_lea.vmem %s4, 4
    %v1794 = vld [vmem:[%s1793] sm:$0x1]
    %s1795 = scalar_lea.vmem %s4, 5
    %v1796 = vld [vmem:[%s1795] sm:$0x1]
    %1797 = vmatpush.msra.mxu0 0.0
    %1798 = vmatpush.msra.mxu0 0.0
    %1799 = vmatpush.msra.mxu0 0.0
    %1800 = vmatpush.msra.mxu0 0.0
    %1801 = vmatpush.msra.mxu0 0.0
    %1802 = vmatpush.msra.mxu0 0.0
    %1803 = vmatpush.msra.mxu0 0.0
    %1804 = vmatpush.msra.mxu0 0.0
    %1805 = vmatpush.msra.mxu0 0.0
    %1806 = vmatpush.msra.mxu0 0.0
    %1807 = vmatpush.msra.mxu0 0.0
    %1808 = vmatpush.msra.mxu0 0.0
    %1809 = vmatpush.msra.mxu0 %v1780
    %1810 = vmatpush.msra.mxu0 %v1779
    %1811 = vmatpush.msra.mxu0 %v1778
    %1812 = vmatpush.msra.mxu0 %v1777
    %1813 = vmatmul.f32.gmra.mxu0 %v430
    %v1814 = vpop.f32.mrf.mxu0
    %v1815 = vadd.f32 0.0, %v1814
    %1816 = vdwg.mxu0
    %v1818 = vrot.slane %v1815, 4
    %v1820 = vadd.f32 %v1557, %v1818
    %v1822 = vperm.slane %v1792, 0
    %v1824 = vadd.f32 %v1820, %v1822
    %v1825 = vxor.u32 %v1824, 2147483648
    %v1826 = vmul.f32 %v1825, 1.442695
    %v1827 = vpow.pop %v1826
    %v1828 = vadd.f32 %v1827, 1.0
    %v1829 = vrcp.pop %v1828
    %v1830 = vmul.f32 %v1828, %v1829
    %v1831 = vsub.f32 1.0, %v1830
    %v1832 = vmul.f32 %v1829, %v1831
    %v1833 = vadd.f32 %v1829, %v1832
    %vm1834 = vweird.f32 %v1828
    %vm1835 = vweird.f32 %v1829
    %vm1836 = vmor %vm1834, %vm1835
    %v1837 = vsel %vm1836, %v1829, %v1833
    %v1838 = vand.u32 2147483647, %v1828
    %vm1839 = vcmp.eq.f32.partialorder %v1838, 8.507059e+37
    %v1840 = vand.u32 %v1828, 2147483648
    %v1841 = vor.u32 1.1754944e-38, %v1840
    %v1842 = vsel %vm1839, %v1841, %v1837
    %v1843 = vmul.f32 1.0, %v1842
    %1844 = vmatpush.msra.mxu0 0.0
    %1845 = vmatpush.msra.mxu0 0.0
    %1846 = vmatpush.msra.mxu0 0.0
    %1847 = vmatpush.msra.mxu0 0.0
    %1848 = vmatpush.msra.mxu0 0.0
    %1849 = vmatpush.msra.mxu0 0.0
    %1850 = vmatpush.msra.mxu0 0.0
    %1851 = vmatpush.msra.mxu0 0.0
    %1852 = vmatpush.msra.mxu0 0.0
    %1853 = vmatpush.msra.mxu0 0.0
    %1854 = vmatpush.msra.mxu0 0.0
    %1855 = vmatpush.msra.mxu0 0.0
    %1856 = vmatpush.msra.mxu0 %v1785
    %1857 = vmatpush.msra.mxu0 %v1784
    %1858 = vmatpush.msra.mxu0 %v1783
    %1859 = vmatpush.msra.mxu0 %v1782
    %1860 = vmatmul.f32.gmra.mxu0 %v430
    %v1861 = vpop.f32.mrf.mxu0
    %v1862 = vadd.f32 0.0, %v1861
    %1863 = vdwg.mxu0
    %v1865 = vrot.slane %v1862, 4
    %v1867 = vadd.f32 %v1666, %v1865
    %v1869 = vperm.slane %v1794, 0
    %v1871 = vadd.f32 %v1867, %v1869
    %v1872 = vxor.u32 %v1871, 2147483648
    %v1873 = vmul.f32 %v1872, 1.442695
    %v1874 = vpow.pop %v1873
    %v1875 = vadd.f32 %v1874, 1.0
    %v1876 = vrcp.pop %v1875
    %v1877 = vmul.f32 %v1875, %v1876
    %v1878 = vsub.f32 1.0, %v1877
    %v1879 = vmul.f32 %v1876, %v1878
    %v1880 = vadd.f32 %v1876, %v1879
    %vm1881 = vweird.f32 %v1875
    %vm1882 = vweird.f32 %v1876
    %vm1883 = vmor %vm1881, %vm1882
    %v1884 = vsel %vm1883, %v1876, %v1880
    %v1885 = vand.u32 2147483647, %v1875
    %vm1886 = vcmp.eq.f32.partialorder %v1885, 8.507059e+37
    %v1887 = vand.u32 %v1875, 2147483648
    %v1888 = vor.u32 1.1754944e-38, %v1887
    %v1889 = vsel %vm1886, %v1888, %v1884
    %v1890 = vmul.f32 1.0, %v1889
    %v1892 = vperm.slane %v1796, 0
    %1894 = vmatpush.msra.mxu0 0.0
    %1895 = vmatpush.msra.mxu0 0.0
    %1896 = vmatpush.msra.mxu0 0.0
    %1897 = vmatpush.msra.mxu0 0.0
    %1898 = vmatpush.msra.mxu0 0.0
    %1899 = vmatpush.msra.mxu0 0.0
    %1900 = vmatpush.msra.mxu0 0.0
    %1901 = vmatpush.msra.mxu0 0.0
    %1902 = vmatpush.msra.mxu0 0.0
    %1903 = vmatpush.msra.mxu0 0.0
    %1904 = vmatpush.msra.mxu0 0.0
    %1905 = vmatpush.msra.mxu0 0.0
    %1906 = vmatpush.msra.mxu0 %v1790
    %1907 = vmatpush.msra.mxu0 %v1789
    %1908 = vmatpush.msra.mxu0 %v1788
    %1909 = vmatpush.msra.mxu0 %v1787
    %1910 = vmatmul.f32.gmra.mxu0 %v430
    %v1911 = vpop.f32.mrf.mxu0
    %v1912 = vadd.f32 %v1892, %v1911
    %1913 = vdwg.mxu0
    %v1915 = vrot.slane %v1912, 4
    %v1917 = vmul.f32 %v1843, %v1915
    %v1918 = vadd.f32 %v1775, %v1917
    %v1919 = vtanh.pop %v1918
    %v1920 = vsub.f32 1.0, %v1890
    %v1921 = vmul.f32 %v1920, %v1919
    %v1922 = vmul.f32 %v1890, 0.0
    %v1923 = vadd.f32 %v1921, %v1922
    %s1924 = scalar_lea.vmem [#allocation2], 60
    %1925 = vst.msk [vmem:[%s1924 - $0x4] sm:$0xf0] %vm676, %v1923
    %v1927 = vrot.slane %v1923, 4
    %v1928 = vsel %vm428, %v1927, 0
    %1930 = vmatpush.msra.mxu0 0.0
    %1931 = vmatpush.msra.mxu0 0.0
    %1932 = vmatpush.msra.mxu0 0.0
    %1933 = vmatpush.msra.mxu0 0.0
    %1934 = vmatpush.msra.mxu0 0.0
    %1935 = vmatpush.msra.mxu0 0.0
    %1936 = vmatpush.msra.mxu0 0.0
    %1937 = vmatpush.msra.mxu0 0.0
    %1938 = vmatpush.msra.mxu0 0.0
    %1939 = vmatpush.msra.mxu0 0.0
    %1940 = vmatpush.msra.mxu0 0.0
    %1941 = vmatpush.msra.mxu0 0.0
    %1942 = vmatpush.msra.mxu0 %v1780
    %1943 = vmatpush.msra.mxu0 %v1779
    %1944 = vmatpush.msra.mxu0 %v1778
    %1945 = vmatpush.msra.mxu0 %v1777
    %1946 = vmatmul.f32.gmra.mxu0 %v1928
    %v1947 = vpop.f32.mrf.mxu0
    %v1948 = vadd.f32 0.0, %v1947
    %1949 = vdwg.mxu0
    %v1950 = vadd.f32 %v1557, %v1948
    %v1951 = vadd.f32 %v1950, %v1822
    %v1952 = vxor.u32 %v1951, 2147483648
    %v1953 = vmul.f32 %v1952, 1.442695
    %v1954 = vpow.pop %v1953
    %v1955 = vadd.f32 %v1954, 1.0
    %v1956 = vrcp.pop %v1955
    %v1957 = vmul.f32 %v1955, %v1956
    %v1958 = vsub.f32 1.0, %v1957
    %v1959 = vmul.f32 %v1956, %v1958
    %v1960 = vadd.f32 %v1956, %v1959
    %vm1961 = vweird.f32 %v1955
    %vm1962 = vweird.f32 %v1956
    %vm1963 = vmor %vm1961, %vm1962
    %v1964 = vsel %vm1963, %v1956, %v1960
    %v1965 = vand.u32 2147483647, %v1955
    %vm1966 = vcmp.eq.f32.partialorder %v1965, 8.507059e+37
    %v1967 = vand.u32 %v1955, 2147483648
    %v1968 = vor.u32 1.1754944e-38, %v1967
    %v1969 = vsel %vm1966, %v1968, %v1964
    %v1970 = vmul.f32 1.0, %v1969
    %1971 = vmatpush.msra.mxu0 0.0
    %1972 = vmatpush.msra.mxu0 0.0
    %1973 = vmatpush.msra.mxu0 0.0
    %1974 = vmatpush.msra.mxu0 0.0
    %1975 = vmatpush.msra.mxu0 0.0
    %1976 = vmatpush.msra.mxu0 0.0
    %1977 = vmatpush.msra.mxu0 0.0
    %1978 = vmatpush.msra.mxu0 0.0
    %1979 = vmatpush.msra.mxu0 0.0
    %1980 = vmatpush.msra.mxu0 0.0
    %1981 = vmatpush.msra.mxu0 0.0
    %1982 = vmatpush.msra.mxu0 0.0
    %1983 = vmatpush.msra.mxu0 %v1785
    %1984 = vmatpush.msra.mxu0 %v1784
    %1985 = vmatpush.msra.mxu0 %v1783
    %1986 = vmatpush.msra.mxu0 %v1782
    %1987 = vmatmul.f32.gmra.mxu0 %v1928
    %v1988 = vpop.f32.mrf.mxu0
    %v1989 = vadd.f32 0.0, %v1988
    %1990 = vdwg.mxu0
    %v1991 = vadd.f32 %v1666, %v1989
    %v1992 = vadd.f32 %v1991, %v1869
    %v1993 = vxor.u32 %v1992, 2147483648
    %v1994 = vmul.f32 %v1993, 1.442695
    %v1995 = vpow.pop %v1994
    %v1996 = vadd.f32 %v1995, 1.0
    %v1997 = vrcp.pop %v1996
    %v1998 = vmul.f32 %v1996, %v1997
    %v1999 = vsub.f32 1.0, %v1998
    %v2000 = vmul.f32 %v1997, %v1999
    %v2001 = vadd.f32 %v1997, %v2000
    %vm2002 = vweird.f32 %v1996
    %vm2003 = vweird.f32 %v1997
    %vm2004 = vmor %vm2002, %vm2003
    %v2005 = vsel %vm2004, %v1997, %v2001
    %v2006 = vand.u32 2147483647, %v1996
    %vm2007 = vcmp.eq.f32.partialorder %v2006, 8.507059e+37
    %v2008 = vand.u32 %v1996, 2147483648
    %v2009 = vor.u32 1.1754944e-38, %v2008
    %v2010 = vsel %vm2007, %v2009, %v2005
    %v2011 = vmul.f32 1.0, %v2010
    %2012 = vmatpush.msra.mxu0 0.0
    %2013 = vmatpush.msra.mxu0 0.0
    %2014 = vmatpush.msra.mxu0 0.0
    %2015 = vmatpush.msra.mxu0 0.0
    %2016 = vmatpush.msra.mxu0 0.0
    %2017 = vmatpush.msra.mxu0 0.0
    %2018 = vmatpush.msra.mxu0 0.0
    %2019 = vmatpush.msra.mxu0 0.0
    %2020 = vmatpush.msra.mxu0 0.0
    %2021 = vmatpush.msra.mxu0 0.0
    %2022 = vmatpush.msra.mxu0 0.0
    %2023 = vmatpush.msra.mxu0 0.0
    %2024 = vmatpush.msra.mxu0 %v1790
    %2025 = vmatpush.msra.mxu0 %v1789
    %2026 = vmatpush.msra.mxu0 %v1788
    %2027 = vmatpush.msra.mxu0 %v1787
    %2028 = vmatmul.f32.gmra.mxu0 %v1928
    %v2029 = vpop.f32.mrf.mxu0
    %v2030 = vadd.f32 %v1892, %v2029
    %2031 = vdwg.mxu0
    %v2032 = vmul.f32 %v1970, %v2030
    %v2033 = vadd.f32 %v1775, %v2032
    %v2034 = vtanh.pop %v2033
    %v2035 = vsub.f32 1.0, %v2011
    %v2036 = vmul.f32 %v2035, %v2034
    %v2038 = vmul.f32 %v2011, %v1927
    %v2039 = vadd.f32 %v2036, %v2038
    %s2040 = scalar_lea.vmem [#allocation2], 56
    %2041 = vst.msk [vmem:[%s2040] sm:$0xf] %vm550, %v2039
    %v2043 = vsel %vm428, %v2039, 0
    %2045 = vmatpush.msra.mxu0 0.0
    %2046 = vmatpush.msra.mxu0 0.0
    %2047 = vmatpush.msra.mxu0 0.0
    %2048 = vmatpush.msra.mxu0 0.0
    %2049 = vmatpush.msra.mxu0 0.0
    %2050 = vmatpush.msra.mxu0 0.0
    %2051 = vmatpush.msra.mxu0 0.0
    %2052 = vmatpush.msra.mxu0 0.0
    %2053 = vmatpush.msra.mxu0 0.0
    %2054 = vmatpush.msra.mxu0 0.0
    %2055 = vmatpush.msra.mxu0 0.0
    %2056 = vmatpush.msra.mxu0 0.0
    %2057 = vmatpush.msra.mxu0 %v1780
    %2058 = vmatpush.msra.mxu0 %v1779
    %2059 = vmatpush.msra.mxu0 %v1778
    %2060 = vmatpush.msra.mxu0 %v1777
    %2061 = vmatmul.f32.gmra.mxu0 %v2043
    %v2062 = vpop.f32.mrf.mxu0
    %v2063 = vadd.f32 0.0, %v2062
    %2064 = vdwg.mxu0
    %v2066 = vrot.slane %v2063, 4
    %v2068 = vadd.f32 %v1556, %v2066
    %v2069 = vadd.f32 %v2068, %v1822
    %v2070 = vxor.u32 %v2069, 2147483648
    %v2071 = vmul.f32 %v2070, 1.442695
    %v2072 = vpow.pop %v2071
    %v2073 = vadd.f32 %v2072, 1.0
    %v2074 = vrcp.pop %v2073
    %v2075 = vmul.f32 %v2073, %v2074
    %v2076 = vsub.f32 1.0, %v2075
    %v2077 = vmul.f32 %v2074, %v2076
    %v2078 = vadd.f32 %v2074, %v2077
    %vm2079 = vweird.f32 %v2073
    %vm2080 = vweird.f32 %v2074
    %vm2081 = vmor %vm2079, %vm2080
    %v2082 = vsel %vm2081, %v2074, %v2078
    %v2083 = vand.u32 2147483647, %v2073
    %vm2084 = vcmp.eq.f32.partialorder %v2083, 8.507059e+37
    %v2085 = vand.u32 %v2073, 2147483648
    %v2086 = vor.u32 1.1754944e-38, %v2085
    %v2087 = vsel %vm2084, %v2086, %v2082
    %v2088 = vmul.f32 1.0, %v2087
    %2089 = vmatpush.msra.mxu0 0.0
    %2090 = vmatpush.msra.mxu0 0.0
    %2091 = vmatpush.msra.mxu0 0.0
    %2092 = vmatpush.msra.mxu0 0.0
    %2093 = vmatpush.msra.mxu0 0.0
    %2094 = vmatpush.msra.mxu0 0.0
    %2095 = vmatpush.msra.mxu0 0.0
    %2096 = vmatpush.msra.mxu0 0.0
    %2097 = vmatpush.msra.mxu0 0.0
    %2098 = vmatpush.msra.mxu0 0.0
    %2099 = vmatpush.msra.mxu0 0.0
    %2100 = vmatpush.msra.mxu0 0.0
    %2101 = vmatpush.msra.mxu0 %v1785
    %2102 = vmatpush.msra.mxu0 %v1784
    %2103 = vmatpush.msra.mxu0 %v1783
    %2104 = vmatpush.msra.mxu0 %v1782
    %2105 = vmatmul.f32.gmra.mxu0 %v2043
    %v2106 = vpop.f32.mrf.mxu0
    %v2107 = vadd.f32 0.0, %v2106
    %2108 = vdwg.mxu0
    %v2110 = vrot.slane %v2107, 4
    %v2112 = vadd.f32 %v1665, %v2110
    %v2113 = vadd.f32 %v2112, %v1869
    %v2114 = vxor.u32 %v2113, 2147483648
    %v2115 = vmul.f32 %v2114, 1.442695
    %v2116 = vpow.pop %v2115
    %v2117 = vadd.f32 %v2116, 1.0
    %v2118 = vrcp.pop %v2117
    %v2119 = vmul.f32 %v2117, %v2118
    %v2120 = vsub.f32 1.0, %v2119
    %v2121 = vmul.f32 %v2118, %v2120
    %v2122 = vadd.f32 %v2118, %v2121
    %vm2123 = vweird.f32 %v2117
    %vm2124 = vweird.f32 %v2118
    %vm2125 = vmor %vm2123, %vm2124
    %v2126 = vsel %vm2125, %v2118, %v2122
    %v2127 = vand.u32 2147483647, %v2117
    %vm2128 = vcmp.eq.f32.partialorder %v2127, 8.507059e+37
    %v2129 = vand.u32 %v2117, 2147483648
    %v2130 = vor.u32 1.1754944e-38, %v2129
    %v2131 = vsel %vm2128, %v2130, %v2126
    %v2132 = vmul.f32 1.0, %v2131
    %2133 = vmatpush.msra.mxu0 0.0
    %2134 = vmatpush.msra.mxu0 0.0
    %2135 = vmatpush.msra.mxu0 0.0
    %2136 = vmatpush.msra.mxu0 0.0
    %2137 = vmatpush.msra.mxu0 0.0
    %2138 = vmatpush.msra.mxu0 0.0
    %2139 = vmatpush.msra.mxu0 0.0
    %2140 = vmatpush.msra.mxu0 0.0
    %2141 = vmatpush.msra.mxu0 0.0
    %2142 = vmatpush.msra.mxu0 0.0
    %2143 = vmatpush.msra.mxu0 0.0
    %2144 = vmatpush.msra.mxu0 0.0
    %2145 = vmatpush.msra.mxu0 %v1790
    %2146 = vmatpush.msra.mxu0 %v1789
    %2147 = vmatpush.msra.mxu0 %v1788
    %2148 = vmatpush.msra.mxu0 %v1787
    %2149 = vmatmul.f32.gmra.mxu0 %v2043
    %v2150 = vpop.f32.mrf.mxu0
    %v2151 = vadd.f32 %v1892, %v2150
    %2152 = vdwg.mxu0
    %v2154 = vrot.slane %v2151, 4
    %v2156 = vmul.f32 %v2088, %v2154
    %v2157 = vadd.f32 %v1774, %v2156
    %v2158 = vtanh.pop %v2157
    %v2159 = vsub.f32 1.0, %v2132
    %v2160 = vmul.f32 %v2159, %v2158
    %v2161 = vrot.slane %v2039, 4
    %v2163 = vmul.f32 %v2132, %v2161
    %v2164 = vadd.f32 %v2160, %v2163
    %s2165 = scalar_lea.vmem [#allocation2], 52
    %2166 = vst.msk [vmem:[%s2165 - $0x4] sm:$0xf0] %vm676, %v2164
    %v2168 = vrot.slane %v2164, 4
    %v2169 = vsel %vm428, %v2168, 0
    %2171 = vmatpush.msra.mxu0 0.0
    %2172 = vmatpush.msra.mxu0 0.0
    %2173 = vmatpush.msra.mxu0 0.0
    %2174 = vmatpush.msra.mxu0 0.0
    %2175 = vmatpush.msra.mxu0 0.0
    %2176 = vmatpush.msra.mxu0 0.0
    %2177 = vmatpush.msra.mxu0 0.0
    %2178 = vmatpush.msra.mxu0 0.0
    %2179 = vmatpush.msra.mxu0 0.0
    %2180 = vmatpush.msra.mxu0 0.0
    %2181 = vmatpush.msra.mxu0 0.0
    %2182 = vmatpush.msra.mxu0 0.0
    %2183 = vmatpush.msra.mxu0 %v1780
    %2184 = vmatpush.msra.mxu0 %v1779
    %2185 = vmatpush.msra.mxu0 %v1778
    %2186 = vmatpush.msra.mxu0 %v1777
    %2187 = vmatmul.f32.gmra.mxu0 %v2169
    %v2188 = vpop.f32.mrf.mxu0
    %v2189 = vadd.f32 0.0, %v2188
    %2190 = vdwg.mxu0
    %v2191 = vadd.f32 %v1556, %v2189
    %v2192 = vadd.f32 %v2191, %v1822
    %v2193 = vxor.u32 %v2192, 2147483648
    %v2194 = vmul.f32 %v2193, 1.442695
    %v2195 = vpow.pop %v2194
    %v2196 = vadd.f32 %v2195, 1.0
    %v2197 = vrcp.pop %v2196
    %v2198 = vmul.f32 %v2196, %v2197
    %v2199 = vsub.f32 1.0, %v2198
    %v2200 = vmul.f32 %v2197, %v2199
    %v2201 = vadd.f32 %v2197, %v2200
    %vm2202 = vweird.f32 %v2196
    %vm2203 = vweird.f32 %v2197
    %vm2204 = vmor %vm2202, %vm2203
    %v2205 = vsel %vm2204, %v2197, %v2201
    %v2206 = vand.u32 2147483647, %v2196
    %vm2207 = vcmp.eq.f32.partialorder %v2206, 8.507059e+37
    %v2208 = vand.u32 %v2196, 2147483648
    %v2209 = vor.u32 1.1754944e-38, %v2208
    %v2210 = vsel %vm2207, %v2209, %v2205
    %v2211 = vmul.f32 1.0, %v2210
    %2212 = vmatpush.msra.mxu0 0.0
    %2213 = vmatpush.msra.mxu0 0.0
    %2214 = vmatpush.msra.mxu0 0.0
    %2215 = vmatpush.msra.mxu0 0.0
    %2216 = vmatpush.msra.mxu0 0.0
    %2217 = vmatpush.msra.mxu0 0.0
    %2218 = vmatpush.msra.mxu0 0.0
    %2219 = vmatpush.msra.mxu0 0.0
    %2220 = vmatpush.msra.mxu0 0.0
    %2221 = vmatpush.msra.mxu0 0.0
    %2222 = vmatpush.msra.mxu0 0.0
    %2223 = vmatpush.msra.mxu0 0.0
    %2224 = vmatpush.msra.mxu0 %v1785
    %2225 = vmatpush.msra.mxu0 %v1784
    %2226 = vmatpush.msra.mxu0 %v1783
    %2227 = vmatpush.msra.mxu0 %v1782
    %2228 = vmatmul.f32.gmra.mxu0 %v2169
    %v2229 = vpop.f32.mrf.mxu0
    %v2230 = vadd.f32 0.0, %v2229
    %2231 = vdwg.mxu0
    %v2232 = vadd.f32 %v1665, %v2230
    %v2233 = vadd.f32 %v2232, %v1869
    %v2234 = vxor.u32 %v2233, 2147483648
    %v2235 = vmul.f32 %v2234, 1.442695
    %v2236 = vpow.pop %v2235
    %v2237 = vadd.f32 %v2236, 1.0
    %v2238 = vrcp.pop %v2237
    %v2239 = vmul.f32 %v2237, %v2238
    %v2240 = vsub.f32 1.0, %v2239
    %v2241 = vmul.f32 %v2238, %v2240
    %v2242 = vadd.f32 %v2238, %v2241
    %vm2243 = vweird.f32 %v2237
    %vm2244 = vweird.f32 %v2238
    %vm2245 = vmor %vm2243, %vm2244
    %v2246 = vsel %vm2245, %v2238, %v2242
    %v2247 = vand.u32 2147483647, %v2237
    %vm2248 = vcmp.eq.f32.partialorder %v2247, 8.507059e+37
    %v2249 = vand.u32 %v2237, 2147483648
    %v2250 = vor.u32 1.1754944e-38, %v2249
    %v2251 = vsel %vm2248, %v2250, %v2246
    %v2252 = vmul.f32 1.0, %v2251
    %2253 = vmatpush.msra.mxu0 0.0
    %2254 = vmatpush.msra.mxu0 0.0
    %2255 = vmatpush.msra.mxu0 0.0
    %2256 = vmatpush.msra.mxu0 0.0
    %2257 = vmatpush.msra.mxu0 0.0
    %2258 = vmatpush.msra.mxu0 0.0
    %2259 = vmatpush.msra.mxu0 0.0
    %2260 = vmatpush.msra.mxu0 0.0
    %2261 = vmatpush.msra.mxu0 0.0
    %2262 = vmatpush.msra.mxu0 0.0
    %2263 = vmatpush.msra.mxu0 0.0
    %2264 = vmatpush.msra.mxu0 0.0
    %2265 = vmatpush.msra.mxu0 %v1790
    %2266 = vmatpush.msra.mxu0 %v1789
    %2267 = vmatpush.msra.mxu0 %v1788
    %2268 = vmatpush.msra.mxu0 %v1787
    %2269 = vmatmul.f32.gmra.mxu0 %v2169
    %v2270 = vpop.f32.mrf.mxu0
    %v2271 = vadd.f32 %v1892, %v2270
    %2272 = vdwg.mxu0
    %v2273 = vmul.f32 %v2211, %v2271
    %v2274 = vadd.f32 %v1774, %v2273
    %v2275 = vtanh.pop %v2274
    %v2276 = vsub.f32 1.0, %v2252
    %v2277 = vmul.f32 %v2276, %v2275
    %v2279 = vmul.f32 %v2252, %v2168
    %v2280 = vadd.f32 %v2277, %v2279
    %s2281 = scalar_lea.vmem [#allocation2], 48
    %2282 = vst.msk [vmem:[%s2281] sm:$0xf] %vm550, %v2280
    %v2284 = vsel %vm428, %v2280, 0
    %2286 = vmatpush.msra.mxu0 0.0
    %2287 = vmatpush.msra.mxu0 0.0
    %2288 = vmatpush.msra.mxu0 0.0
    %2289 = vmatpush.msra.mxu0 0.0
    %2290 = vmatpush.msra.mxu0 0.0
    %2291 = vmatpush.msra.mxu0 0.0
    %2292 = vmatpush.msra.mxu0 0.0
    %2293 = vmatpush.msra.mxu0 0.0
    %2294 = vmatpush.msra.mxu0 0.0
    %2295 = vmatpush.msra.mxu0 0.0
    %2296 = vmatpush.msra.mxu0 0.0
    %2297 = vmatpush.msra.mxu0 0.0
    %2298 = vmatpush.msra.mxu0 %v1780
    %2299 = vmatpush.msra.mxu0 %v1779
    %2300 = vmatpush.msra.mxu0 %v1778
    %2301 = vmatpush.msra.mxu0 %v1777
    %2302 = vmatmul.f32.gmra.mxu0 %v2284
    %v2303 = vpop.f32.mrf.mxu0
    %v2304 = vadd.f32 0.0, %v2303
    %2305 = vdwg.mxu0
    %v2307 = vrot.slane %v2304, 4
    %v2309 = vadd.f32 %v1555, %v2307
    %v2310 = vadd.f32 %v2309, %v1822
    %v2311 = vxor.u32 %v2310, 2147483648
    %v2312 = vmul.f32 %v2311, 1.442695
    %v2313 = vpow.pop %v2312
    %v2314 = vadd.f32 %v2313, 1.0
    %v2315 = vrcp.pop %v2314
    %v2316 = vmul.f32 %v2314, %v2315
    %v2317 = vsub.f32 1.0, %v2316
    %v2318 = vmul.f32 %v2315, %v2317
    %v2319 = vadd.f32 %v2315, %v2318
    %vm2320 = vweird.f32 %v2314
    %vm2321 = vweird.f32 %v2315
    %vm2322 = vmor %vm2320, %vm2321
    %v2323 = vsel %vm2322, %v2315, %v2319
    %v2324 = vand.u32 2147483647, %v2314
    %vm2325 = vcmp.eq.f32.partialorder %v2324, 8.507059e+37
    %v2326 = vand.u32 %v2314, 2147483648
    %v2327 = vor.u32 1.1754944e-38, %v2326
    %v2328 = vsel %vm2325, %v2327, %v2323
    %v2329 = vmul.f32 1.0, %v2328
    %2330 = vmatpush.msra.mxu0 0.0
    %2331 = vmatpush.msra.mxu0 0.0
    %2332 = vmatpush.msra.mxu0 0.0
    %2333 = vmatpush.msra.mxu0 0.0
    %2334 = vmatpush.msra.mxu0 0.0
    %2335 = vmatpush.msra.mxu0 0.0
    %2336 = vmatpush.msra.mxu0 0.0
    %2337 = vmatpush.msra.mxu0 0.0
    %2338 = vmatpush.msra.mxu0 0.0
    %2339 = vmatpush.msra.mxu0 0.0
    %2340 = vmatpush.msra.mxu0 0.0
    %2341 = vmatpush.msra.mxu0 0.0
    %2342 = vmatpush.msra.mxu0 %v1785
    %2343 = vmatpush.msra.mxu0 %v1784
    %2344 = vmatpush.msra.mxu0 %v1783
    %2345 = vmatpush.msra.mxu0 %v1782
    %2346 = vmatmul.f32.gmra.mxu0 %v2284
    %v2347 = vpop.f32.mrf.mxu0
    %v2348 = vadd.f32 0.0, %v2347
    %2349 = vdwg.mxu0
    %v2351 = vrot.slane %v2348, 4
    %v2353 = vadd.f32 %v1664, %v2351
    %v2354 = vadd.f32 %v2353, %v1869
    %v2355 = vxor.u32 %v2354, 2147483648
    %v2356 = vmul.f32 %v2355, 1.442695
    %v2357 = vpow.pop %v2356
    %v2358 = vadd.f32 %v2357, 1.0
    %v2359 = vrcp.pop %v2358
    %v2360 = vmul.f32 %v2358, %v2359
    %v2361 = vsub.f32 1.0, %v2360
    %v2362 = vmul.f32 %v2359, %v2361
    %v2363 = vadd.f32 %v2359, %v2362
    %vm2364 = vweird.f32 %v2358
    %vm2365 = vweird.f32 %v2359
    %vm2366 = vmor %vm2364, %vm2365
    %v2367 = vsel %vm2366, %v2359, %v2363
    %v2368 = vand.u32 2147483647, %v2358
    %vm2369 = vcmp.eq.f32.partialorder %v2368, 8.507059e+37
    %v2370 = vand.u32 %v2358, 2147483648
    %v2371 = vor.u32 1.1754944e-38, %v2370
    %v2372 = vsel %vm2369, %v2371, %v2367
    %v2373 = vmul.f32 1.0, %v2372
    %2374 = vmatpush.msra.mxu0 0.0
    %2375 = vmatpush.msra.mxu0 0.0
    %2376 = vmatpush.msra.mxu0 0.0
    %2377 = vmatpush.msra.mxu0 0.0
    %2378 = vmatpush.msra.mxu0 0.0
    %2379 = vmatpush.msra.mxu0 0.0
    %2380 = vmatpush.msra.mxu0 0.0
    %2381 = vmatpush.msra.mxu0 0.0
    %2382 = vmatpush.msra.mxu0 0.0
    %2383 = vmatpush.msra.mxu0 0.0
    %2384 = vmatpush.msra.mxu0 0.0
    %2385 = vmatpush.msra.mxu0 0.0
    %2386 = vmatpush.msra.mxu0 %v1790
    %2387 = vmatpush.msra.mxu0 %v1789
    %2388 = vmatpush.msra.mxu0 %v1788
    %2389 = vmatpush.msra.mxu0 %v1787
    %2390 = vmatmul.f32.gmra.mxu0 %v2284
    %v2391 = vpop.f32.mrf.mxu0
    %v2392 = vadd.f32 %v1892, %v2391
    %2393 = vdwg.mxu0
    %v2395 = vrot.slane %v2392, 4
    %v2397 = vmul.f32 %v2329, %v2395
    %v2398 = vadd.f32 %v1773, %v2397
    %v2399 = vtanh.pop %v2398
    %v2400 = vsub.f32 1.0, %v2373
    %v2401 = vmul.f32 %v2400, %v2399
    %v2402 = vrot.slane %v2280, 4
    %v2404 = vmul.f32 %v2373, %v2402
    %v2405 = vadd.f32 %v2401, %v2404
    %s2406 = scalar_lea.vmem [#allocation2], 44
    %2407 = vst.msk [vmem:[%s2406 - $0x4] sm:$0xf0] %vm676, %v2405
    %v2409 = vrot.slane %v2405, 4
    %v2410 = vsel %vm428, %v2409, 0
    %2412 = vmatpush.msra.mxu0 0.0
    %2413 = vmatpush.msra.mxu0 0.0
    %2414 = vmatpush.msra.mxu0 0.0
    %2415 = vmatpush.msra.mxu0 0.0
    %2416 = vmatpush.msra.mxu0 0.0
    %2417 = vmatpush.msra.mxu0 0.0
    %2418 = vmatpush.msra.mxu0 0.0
    %2419 = vmatpush.msra.mxu0 0.0
    %2420 = vmatpush.msra.mxu0 0.0
    %2421 = vmatpush.msra.mxu0 0.0
    %2422 = vmatpush.msra.mxu0 0.0
    %2423 = vmatpush.msra.mxu0 0.0
    %2424 = vmatpush.msra.mxu0 %v1780
    %2425 = vmatpush.msra.mxu0 %v1779
    %2426 = vmatpush.msra.mxu0 %v1778
    %2427 = vmatpush.msra.mxu0 %v1777
    %2428 = vmatmul.f32.gmra.mxu0 %v2410
    %v2429 = vpop.f32.mrf.mxu0
    %v2430 = vadd.f32 0.0, %v2429
    %2431 = vdwg.mxu0
    %v2432 = vadd.f32 %v1555, %v2430
    %v2433 = vadd.f32 %v2432, %v1822
    %v2434 = vxor.u32 %v2433, 2147483648
    %v2435 = vmul.f32 %v2434, 1.442695
    %v2436 = vpow.pop %v2435
    %v2437 = vadd.f32 %v2436, 1.0
    %v2438 = vrcp.pop %v2437
    %v2439 = vmul.f32 %v2437, %v2438
    %v2440 = vsub.f32 1.0, %v2439
    %v2441 = vmul.f32 %v2438, %v2440
    %v2442 = vadd.f32 %v2438, %v2441
    %vm2443 = vweird.f32 %v2437
    %vm2444 = vweird.f32 %v2438
    %vm2445 = vmor %vm2443, %vm2444
    %v2446 = vsel %vm2445, %v2438, %v2442
    %v2447 = vand.u32 2147483647, %v2437
    %vm2448 = vcmp.eq.f32.partialorder %v2447, 8.507059e+37
    %v2449 = vand.u32 %v2437, 2147483648
    %v2450 = vor.u32 1.1754944e-38, %v2449
    %v2451 = vsel %vm2448, %v2450, %v2446
    %v2452 = vmul.f32 1.0, %v2451
    %2453 = vmatpush.msra.mxu0 0.0
    %2454 = vmatpush.msra.mxu0 0.0
    %2455 = vmatpush.msra.mxu0 0.0
    %2456 = vmatpush.msra.mxu0 0.0
    %2457 = vmatpush.msra.mxu0 0.0
    %2458 = vmatpush.msra.mxu0 0.0
    %2459 = vmatpush.msra.mxu0 0.0
    %2460 = vmatpush.msra.mxu0 0.0
    %2461 = vmatpush.msra.mxu0 0.0
    %2462 = vmatpush.msra.mxu0 0.0
    %2463 = vmatpush.msra.mxu0 0.0
    %2464 = vmatpush.msra.mxu0 0.0
    %2465 = vmatpush.msra.mxu0 %v1785
    %2466 = vmatpush.msra.mxu0 %v1784
    %2467 = vmatpush.msra.mxu0 %v1783
    %2468 = vmatpush.msra.mxu0 %v1782
    %2469 = vmatmul.f32.gmra.mxu0 %v2410
    %v2470 = vpop.f32.mrf.mxu0
    %v2471 = vadd.f32 0.0, %v2470
    %2472 = vdwg.mxu0
    %v2473 = vadd.f32 %v1664, %v2471
    %v2474 = vadd.f32 %v2473, %v1869
    %v2475 = vxor.u32 %v2474, 2147483648
    %v2476 = vmul.f32 %v2475, 1.442695
    %v2477 = vpow.pop %v2476
    %v2478 = vadd.f32 %v2477, 1.0
    %v2479 = vrcp.pop %v2478
    %v2480 = vmul.f32 %v2478, %v2479
    %v2481 = vsub.f32 1.0, %v2480
    %v2482 = vmul.f32 %v2479, %v2481
    %v2483 = vadd.f32 %v2479, %v2482
    %vm2484 = vweird.f32 %v2478
    %vm2485 = vweird.f32 %v2479
    %vm2486 = vmor %vm2484, %vm2485
    %v2487 = vsel %vm2486, %v2479, %v2483
    %v2488 = vand.u32 2147483647, %v2478
    %vm2489 = vcmp.eq.f32.partialorder %v2488, 8.507059e+37
    %v2490 = vand.u32 %v2478, 2147483648
    %v2491 = vor.u32 1.1754944e-38, %v2490
    %v2492 = vsel %vm2489, %v2491, %v2487
    %v2493 = vmul.f32 1.0, %v2492
    %2494 = vmatpush.msra.mxu0 0.0
    %2495 = vmatpush.msra.mxu0 0.0
    %2496 = vmatpush.msra.mxu0 0.0
    %2497 = vmatpush.msra.mxu0 0.0
    %2498 = vmatpush.msra.mxu0 0.0
    %2499 = vmatpush.msra.mxu0 0.0
    %2500 = vmatpush.msra.mxu0 0.0
    %2501 = vmatpush.msra.mxu0 0.0
    %2502 = vmatpush.msra.mxu0 0.0
    %2503 = vmatpush.msra.mxu0 0.0
    %2504 = vmatpush.msra.mxu0 0.0
    %2505 = vmatpush.msra.mxu0 0.0
    %2506 = vmatpush.msra.mxu0 %v1790
    %2507 = vmatpush.msra.mxu0 %v1789
    %2508 = vmatpush.msra.mxu0 %v1788
    %2509 = vmatpush.msra.mxu0 %v1787
    %2510 = vmatmul.f32.gmra.mxu0 %v2410
    %v2511 = vpop.f32.mrf.mxu0
    %v2512 = vadd.f32 %v1892, %v2511
    %2513 = vdwg.mxu0
    %v2514 = vmul.f32 %v2452, %v2512
    %v2515 = vadd.f32 %v1773, %v2514
    %v2516 = vtanh.pop %v2515
    %v2517 = vsub.f32 1.0, %v2493
    %v2518 = vmul.f32 %v2517, %v2516
    %v2520 = vmul.f32 %v2493, %v2409
    %v2521 = vadd.f32 %v2518, %v2520
    %s2522 = scalar_lea.vmem [#allocation2], 40
    %2523 = vst.msk [vmem:[%s2522] sm:$0xf] %vm550, %v2521
    %v2525 = vsel %vm428, %v2521, 0
    %2527 = vmatpush.msra.mxu0 0.0
    %2528 = vmatpush.msra.mxu0 0.0
    %2529 = vmatpush.msra.mxu0 0.0
    %2530 = vmatpush.msra.mxu0 0.0
    %2531 = vmatpush.msra.mxu0 0.0
    %2532 = vmatpush.msra.mxu0 0.0
    %2533 = vmatpush.msra.mxu0 0.0
    %2534 = vmatpush.msra.mxu0 0.0
    %2535 = vmatpush.msra.mxu0 0.0
    %2536 = vmatpush.msra.mxu0 0.0
    %2537 = vmatpush.msra.mxu0 0.0
    %2538 = vmatpush.msra.mxu0 0.0
    %2539 = vmatpush.msra.mxu0 %v1780
    %2540 = vmatpush.msra.mxu0 %v1779
    %2541 = vmatpush.msra.mxu0 %v1778
    %2542 = vmatpush.msra.mxu0 %v1777
    %2543 = vmatmul.f32.gmra.mxu0 %v2525
    %v2544 = vpop.f32.mrf.mxu0
    %v2545 = vadd.f32 0.0, %v2544
    %2546 = vdwg.mxu0
    %v2548 = vrot.slane %v2545, 4
    %v2550 = vadd.f32 %v1554, %v2548
    %v2551 = vadd.f32 %v2550, %v1822
    %v2552 = vxor.u32 %v2551, 2147483648
    %v2553 = vmul.f32 %v2552, 1.442695
    %v2554 = vpow.pop %v2553
    %v2555 = vadd.f32 %v2554, 1.0
    %v2556 = vrcp.pop %v2555
    %v2557 = vmul.f32 %v2555, %v2556
    %v2558 = vsub.f32 1.0, %v2557
    %v2559 = vmul.f32 %v2556, %v2558
    %v2560 = vadd.f32 %v2556, %v2559
    %vm2561 = vweird.f32 %v2555
    %vm2562 = vweird.f32 %v2556
    %vm2563 = vmor %vm2561, %vm2562
    %v2564 = vsel %vm2563, %v2556, %v2560
    %v2565 = vand.u32 2147483647, %v2555
    %vm2566 = vcmp.eq.f32.partialorder %v2565, 8.507059e+37
    %v2567 = vand.u32 %v2555, 2147483648
    %v2568 = vor.u32 1.1754944e-38, %v2567
    %v2569 = vsel %vm2566, %v2568, %v2564
    %v2570 = vmul.f32 1.0, %v2569
    %2571 = vmatpush.msra.mxu0 0.0
    %2572 = vmatpush.msra.mxu0 0.0
    %2573 = vmatpush.msra.mxu0 0.0
    %2574 = vmatpush.msra.mxu0 0.0
    %2575 = vmatpush.msra.mxu0 0.0
    %2576 = vmatpush.msra.mxu0 0.0
    %2577 = vmatpush.msra.mxu0 0.0
    %2578 = vmatpush.msra.mxu0 0.0
    %2579 = vmatpush.msra.mxu0 0.0
    %2580 = vmatpush.msra.mxu0 0.0
    %2581 = vmatpush.msra.mxu0 0.0
    %2582 = vmatpush.msra.mxu0 0.0
    %2583 = vmatpush.msra.mxu0 %v1785
    %2584 = vmatpush.msra.mxu0 %v1784
    %2585 = vmatpush.msra.mxu0 %v1783
    %2586 = vmatpush.msra.mxu0 %v1782
    %2587 = vmatmul.f32.gmra.mxu0 %v2525
    %v2588 = vpop.f32.mrf.mxu0
    %v2589 = vadd.f32 0.0, %v2588
    %2590 = vdwg.mxu0
    %v2592 = vrot.slane %v2589, 4
    %v2594 = vadd.f32 %v1663, %v2592
    %v2595 = vadd.f32 %v2594, %v1869
    %v2596 = vxor.u32 %v2595, 2147483648
    %v2597 = vmul.f32 %v2596, 1.442695
    %v2598 = vpow.pop %v2597
    %v2599 = vadd.f32 %v2598, 1.0
    %v2600 = vrcp.pop %v2599
    %v2601 = vmul.f32 %v2599, %v2600
    %v2602 = vsub.f32 1.0, %v2601
    %v2603 = vmul.f32 %v2600, %v2602
    %v2604 = vadd.f32 %v2600, %v2603
    %vm2605 = vweird.f32 %v2599
    %vm2606 = vweird.f32 %v2600
    %vm2607 = vmor %vm2605, %vm2606
    %v2608 = vsel %vm2607, %v2600, %v2604
    %v2609 = vand.u32 2147483647, %v2599
    %vm2610 = vcmp.eq.f32.partialorder %v2609, 8.507059e+37
    %v2611 = vand.u32 %v2599, 2147483648
    %v2612 = vor.u32 1.1754944e-38, %v2611
    %v2613 = vsel %vm2610, %v2612, %v2608
    %v2614 = vmul.f32 1.0, %v2613
    %2615 = vmatpush.msra.mxu0 0.0
    %2616 = vmatpush.msra.mxu0 0.0
    %2617 = vmatpush.msra.mxu0 0.0
    %2618 = vmatpush.msra.mxu0 0.0
    %2619 = vmatpush.msra.mxu0 0.0
    %2620 = vmatpush.msra.mxu0 0.0
    %2621 = vmatpush.msra.mxu0 0.0
    %2622 = vmatpush.msra.mxu0 0.0
    %2623 = vmatpush.msra.mxu0 0.0
    %2624 = vmatpush.msra.mxu0 0.0
    %2625 = vmatpush.msra.mxu0 0.0
    %2626 = vmatpush.msra.mxu0 0.0
    %2627 = vmatpush.msra.mxu0 %v1790
    %2628 = vmatpush.msra.mxu0 %v1789
    %2629 = vmatpush.msra.mxu0 %v1788
    %2630 = vmatpush.msra.mxu0 %v1787
    %2631 = vmatmul.f32.gmra.mxu0 %v2525
    %v2632 = vpop.f32.mrf.mxu0
    %v2633 = vadd.f32 %v1892, %v2632
    %2634 = vdwg.mxu0
    %v2636 = vrot.slane %v2633, 4
    %v2638 = vmul.f32 %v2570, %v2636
    %v2639 = vadd.f32 %v1772, %v2638
    %v2640 = vtanh.pop %v2639
    %v2641 = vsub.f32 1.0, %v2614
    %v2642 = vmul.f32 %v2641, %v2640
    %v2643 = vrot.slane %v2521, 4
    %v2645 = vmul.f32 %v2614, %v2643
    %v2646 = vadd.f32 %v2642, %v2645
    %s2647 = scalar_lea.vmem [#allocation2], 36
    %2648 = vst.msk [vmem:[%s2647 - $0x4] sm:$0xf0] %vm676, %v2646
    %v2650 = vrot.slane %v2646, 4
    %v2651 = vsel %vm428, %v2650, 0
    %2653 = vmatpush.msra.mxu0 0.0
    %2654 = vmatpush.msra.mxu0 0.0
    %2655 = vmatpush.msra.mxu0 0.0
    %2656 = vmatpush.msra.mxu0 0.0
    %2657 = vmatpush.msra.mxu0 0.0
    %2658 = vmatpush.msra.mxu0 0.0
    %2659 = vmatpush.msra.mxu0 0.0
    %2660 = vmatpush.msra.mxu0 0.0
    %2661 = vmatpush.msra.mxu0 0.0
    %2662 = vmatpush.msra.mxu0 0.0
    %2663 = vmatpush.msra.mxu0 0.0
    %2664 = vmatpush.msra.mxu0 0.0
    %2665 = vmatpush.msra.mxu0 %v1780
    %2666 = vmatpush.msra.mxu0 %v1779
    %2667 = vmatpush.msra.mxu0 %v1778
    %2668 = vmatpush.msra.mxu0 %v1777
    %2669 = vmatmul.f32.gmra.mxu0 %v2651
    %v2670 = vpop.f32.mrf.mxu0
    %v2671 = vadd.f32 0.0, %v2670
    %2672 = vdwg.mxu0
    %v2673 = vadd.f32 %v1554, %v2671
    %v2674 = vadd.f32 %v2673, %v1822
    %v2675 = vxor.u32 %v2674, 2147483648
    %v2676 = vmul.f32 %v2675, 1.442695
    %v2677 = vpow.pop %v2676
    %v2678 = vadd.f32 %v2677, 1.0
    %v2679 = vrcp.pop %v2678
    %v2680 = vmul.f32 %v2678, %v2679
    %v2681 = vsub.f32 1.0, %v2680
    %v2682 = vmul.f32 %v2679, %v2681
    %v2683 = vadd.f32 %v2679, %v2682
    %vm2684 = vweird.f32 %v2678
    %vm2685 = vweird.f32 %v2679
    %vm2686 = vmor %vm2684, %vm2685
    %v2687 = vsel %vm2686, %v2679, %v2683
    %v2688 = vand.u32 2147483647, %v2678
    %vm2689 = vcmp.eq.f32.partialorder %v2688, 8.507059e+37
    %v2690 = vand.u32 %v2678, 2147483648
    %v2691 = vor.u32 1.1754944e-38, %v2690
    %v2692 = vsel %vm2689, %v2691, %v2687
    %v2693 = vmul.f32 1.0, %v2692
    %2694 = vmatpush.msra.mxu0 0.0
    %2695 = vmatpush.msra.mxu0 0.0
    %2696 = vmatpush.msra.mxu0 0.0
    %2697 = vmatpush.msra.mxu0 0.0
    %2698 = vmatpush.msra.mxu0 0.0
    %2699 = vmatpush.msra.mxu0 0.0
    %2700 = vmatpush.msra.mxu0 0.0
    %2701 = vmatpush.msra.mxu0 0.0
    %2702 = vmatpush.msra.mxu0 0.0
    %2703 = vmatpush.msra.mxu0 0.0
    %2704 = vmatpush.msra.mxu0 0.0
    %2705 = vmatpush.msra.mxu0 0.0
    %2706 = vmatpush.msra.mxu0 %v1785
    %2707 = vmatpush.msra.mxu0 %v1784
    %2708 = vmatpush.msra.mxu0 %v1783
    %2709 = vmatpush.msra.mxu0 %v1782
    %2710 = vmatmul.f32.gmra.mxu0 %v2651
    %v2711 = vpop.f32.mrf.mxu0
    %v2712 = vadd.f32 0.0, %v2711
    %2713 = vdwg.mxu0
    %v2714 = vadd.f32 %v1663, %v2712
    %v2715 = vadd.f32 %v2714, %v1869
    %v2716 = vxor.u32 %v2715, 2147483648
    %v2717 = vmul.f32 %v2716, 1.442695
    %v2718 = vpow.pop %v2717
    %v2719 = vadd.f32 %v2718, 1.0
    %v2720 = vrcp.pop %v2719
    %v2721 = vmul.f32 %v2719, %v2720
    %v2722 = vsub.f32 1.0, %v2721
    %v2723 = vmul.f32 %v2720, %v2722
    %v2724 = vadd.f32 %v2720, %v2723
    %vm2725 = vweird.f32 %v2719
    %vm2726 = vweird.f32 %v2720
    %vm2727 = vmor %vm2725, %vm2726
    %v2728 = vsel %vm2727, %v2720, %v2724
    %v2729 = vand.u32 2147483647, %v2719
    %vm2730 = vcmp.eq.f32.partialorder %v2729, 8.507059e+37
    %v2731 = vand.u32 %v2719, 2147483648
    %v2732 = vor.u32 1.1754944e-38, %v2731
    %v2733 = vsel %vm2730, %v2732, %v2728
    %v2734 = vmul.f32 1.0, %v2733
    %2735 = vmatpush.msra.mxu0 0.0
    %2736 = vmatpush.msra.mxu0 0.0
    %2737 = vmatpush.msra.mxu0 0.0
    %2738 = vmatpush.msra.mxu0 0.0
    %2739 = vmatpush.msra.mxu0 0.0
    %2740 = vmatpush.msra.mxu0 0.0
    %2741 = vmatpush.msra.mxu0 0.0
    %2742 = vmatpush.msra.mxu0 0.0
    %2743 = vmatpush.msra.mxu0 0.0
    %2744 = vmatpush.msra.mxu0 0.0
    %2745 = vmatpush.msra.mxu0 0.0
    %2746 = vmatpush.msra.mxu0 0.0
    %2747 = vmatpush.msra.mxu0 %v1790
    %2748 = vmatpush.msra.mxu0 %v1789
    %2749 = vmatpush.msra.mxu0 %v1788
    %2750 = vmatpush.msra.mxu0 %v1787
    %2751 = vmatmul.f32.gmra.mxu0 %v2651
    %v2752 = vpop.f32.mrf.mxu0
    %v2753 = vadd.f32 %v1892, %v2752
    %2754 = vdwg.mxu0
    %v2755 = vmul.f32 %v2693, %v2753
    %v2756 = vadd.f32 %v1772, %v2755
    %v2757 = vtanh.pop %v2756
    %v2758 = vsub.f32 1.0, %v2734
    %v2759 = vmul.f32 %v2758, %v2757
    %v2761 = vmul.f32 %v2734, %v2650
    %v2762 = vadd.f32 %v2759, %v2761
    %s2763 = scalar_lea.vmem [#allocation2], 32
    %2764 = vst.msk [vmem:[%s2763] sm:$0xf] %vm550, %v2762
    %v2765 = vld [vmem:[#allocation2] sm:$0xf]
    %v2766 = vld [vmem:[#allocation2 + $0x4] sm:$0xf]
    %v2767 = vld [vmem:[#allocation2 + $0x8] sm:$0xf]
    %v2768 = vld [vmem:[#allocation2 + $0xc] sm:$0xf]
    %v2769 = vld [vmem:[#allocation2 + $0x10] sm:$0xf]
    %v2770 = vld [vmem:[#allocation2 + $0x14] sm:$0xf]
    %v2771 = vld [vmem:[#allocation2 + $0x18] sm:$0xf]
    %v2772 = vld [vmem:[#allocation2 + $0x1c] sm:$0xf]
    %v2773 = vld [vmem:[%s2763] sm:$0xf]
    %v2774 = vld [vmem:[%s2763 + $0x4] sm:$0xf]
    %v2775 = vld [vmem:[%s2763 + $0x8] sm:$0xf]
    %v2776 = vld [vmem:[%s2763 + $0xc] sm:$0xf]
    %v2777 = vld [vmem:[%s2763 + $0x10] sm:$0xf]
    %v2778 = vld [vmem:[%s2763 + $0x14] sm:$0xf]
    %v2779 = vld [vmem:[%s2763 + $0x18] sm:$0xf]
    %v2780 = vld [vmem:[%s2763 + $0x1c] sm:$0xf]
    %v2781 = vld [vmem:[%s5] sm:$0xff]
    %v2782 = vld [vmem:[%s5 + $0x8] sm:$0xff]
    %v2783 = vld [vmem:[%s5 + $0x10] sm:$0xff]
    %v2784 = vld [vmem:[%s5 + $0x18] sm:$0xff]
    %s2785 = scalar_lea.vmem %s5, 32
    %v2786 = vld [vmem:[%s2785] sm:$0xff]
    %v2787 = vld [vmem:[%s2785 + $0x8] sm:$0xff]
    %v2788 = vld [vmem:[%s2785 + $0x10] sm:$0xff]
    %v2789 = vld [vmem:[%s2785 + $0x18] sm:$0xff]
    %v2798 = vrot.slane %v2774, 7
    %vm2799 = vcmask 1041409
    %v2800 = vsel %vm2799, %v2798, %v2773
    %v2801 = vrot.slane %v2775, 6
    %vm2802 = vcmask 1042434
    %v2803 = vsel %vm2802, %v2801, %v2800
    %v2804 = vrot.slane %v2776, 5
    %vm2805 = vcmask 1043459
    %v2806 = vsel %vm2805, %v2804, %v2803
    %v2807 = vrot.slane %v2777, 4
    %vm2808 = vcmask 1044484
    %v2809 = vsel %vm2808, %v2807, %v2806
    %v2810 = vrot.slane %v2778, 3
    %vm2811 = vcmask 1045509
    %v2812 = vsel %vm2811, %v2810, %v2809
    %v2813 = vrot.slane %v2779, 2
    %vm2814 = vcmask 1046534
    %v2815 = vsel %vm2814, %v2813, %v2812
    %v2816 = vrot.slane %v2780, 1
    %vm2817 = vcmask 1047559
    %v2818 = vsel %vm2817, %v2816, %v2815
    %v2819 = vsel %vm428, %v2818, 0
    %2821 = vmatpush.msra.mxu0 0.0
    %2822 = vmatpush.msra.mxu0 0.0
    %2823 = vmatpush.msra.mxu0 0.0
    %2824 = vmatpush.msra.mxu0 0.0
    %2825 = vmatpush.msra.mxu0 0.0
    %2826 = vmatpush.msra.mxu0 0.0
    %2827 = vmatpush.msra.mxu0 0.0
    %2828 = vmatpush.msra.mxu0 0.0
    %2829 = vmatpush.msra.mxu0 0.0
    %2830 = vmatpush.msra.mxu0 0.0
    %2831 = vmatpush.msra.mxu0 0.0
    %2832 = vmatpush.msra.mxu0 0.0
    %2833 = vmatpush.msra.mxu0 %v2789
    %2834 = vmatpush.msra.mxu0 %v2788
    %2835 = vmatpush.msra.mxu0 %v2787
    %2836 = vmatpush.msra.mxu0 %v2786
    %2837 = vmatmul.f32.gmra.mxu0 %v2819
    %v2838 = vpop.f32.mrf.mxu0
    %v2839 = vadd.f32 0.0, %v2838
    %2840 = vdwg.mxu0
    %v2849 = vrot.slane %v2766, 7
    %v2850 = vsel %vm2799, %v2849, %v2765
    %v2851 = vrot.slane %v2767, 6
    %v2852 = vsel %vm2802, %v2851, %v2850
    %v2853 = vrot.slane %v2768, 5
    %v2854 = vsel %vm2805, %v2853, %v2852
    %v2855 = vrot.slane %v2769, 4
    %v2856 = vsel %vm2808, %v2855, %v2854
    %v2857 = vrot.slane %v2770, 3
    %v2858 = vsel %vm2811, %v2857, %v2856
    %v2859 = vrot.slane %v2771, 2
    %v2860 = vsel %vm2814, %v2859, %v2858
    %v2861 = vrot.slane %v2772, 1
    %v2862 = vsel %vm2817, %v2861, %v2860
    %v2863 = vsel %vm428, %v2862, 0
    %2865 = vmatpush.msra.mxu0 0.0
    %2866 = vmatpush.msra.mxu0 0.0
    %2867 = vmatpush.msra.mxu0 0.0
    %2868 = vmatpush.msra.mxu0 0.0
    %2869 = vmatpush.msra.mxu0 0.0
    %2870 = vmatpush.msra.mxu0 0.0
    %2871 = vmatpush.msra.mxu0 0.0
    %2872 = vmatpush.msra.mxu0 0.0
    %2873 = vmatpush.msra.mxu0 0.0
    %2874 = vmatpush.msra.mxu0 0.0
    %2875 = vmatpush.msra.mxu0 0.0
    %2876 = vmatpush.msra.mxu0 0.0
    %2877 = vmatpush.msra.mxu0 %v2784
    %2878 = vmatpush.msra.mxu0 %v2783
    %2879 = vmatpush.msra.mxu0 %v2782
    %2880 = vmatpush.msra.mxu0 %v2781
    %2881 = vmatmul.f32.gmra.mxu0 %v2863
    %v2882 = vpop.f32.mrf.mxu0
    %v2883 = vadd.f32 %v2839, %v2882
    %2884 = vdwg.mxu0
    %v2885 = vld [vmem:[%s6] sm:$0x1]
    %v2887 = vperm.slane %v2885, 0
    %v2889 = vadd.f32 %v2883, %v2887
    %v2890 = vld [vmem:[%s7] sm:$0xff]
    %v2891 = vld [vmem:[%s7 + $0x8] sm:$0xff]
    %v2892 = vrot.slane %v2773, 1
    %v2893 = vsel %vm2799, %v2774, %v2892
    %v2894 = vrot.slane %v2775, 7
    %v2895 = vsel %vm2802, %v2894, %v2893
    %v2896 = vrot.slane %v2776, 6
    %v2897 = vsel %vm2805, %v2896, %v2895
    %v2898 = vrot.slane %v2777, 5
    %v2899 = vsel %vm2808, %v2898, %v2897
    %v2900 = vrot.slane %v2778, 4
    %v2901 = vsel %vm2811, %v2900, %v2899
    %v2902 = vrot.slane %v2779, 3
    %v2903 = vsel %vm2814, %v2902, %v2901
    %v2904 = vrot.slane %v2780, 2
    %v2905 = vsel %vm2817, %v2904, %v2903
    %v2906 = vsel %vm428, %v2905, 0
    %2908 = vmatpush.msra.mxu0 0.0
    %2909 = vmatpush.msra.mxu0 0.0
    %2910 = vmatpush.msra.mxu0 0.0
    %2911 = vmatpush.msra.mxu0 0.0
    %2912 = vmatpush.msra.mxu0 0.0
    %2913 = vmatpush.msra.mxu0 0.0
    %2914 = vmatpush.msra.mxu0 0.0
    %2915 = vmatpush.msra.mxu0 0.0
    %2916 = vmatpush.msra.mxu0 0.0
    %2917 = vmatpush.msra.mxu0 0.0
    %2918 = vmatpush.msra.mxu0 0.0
    %2919 = vmatpush.msra.mxu0 0.0
    %2920 = vmatpush.msra.mxu0 %v2789
    %2921 = vmatpush.msra.mxu0 %v2788
    %2922 = vmatpush.msra.mxu0 %v2787
    %2923 = vmatpush.msra.mxu0 %v2786
    %2924 = vmatmul.f32.gmra.mxu0 %v2906
    %v2925 = vpop.f32.mrf.mxu0
    %v2926 = vadd.f32 0.0, %v2925
    %2927 = vdwg.mxu0
    %v2928 = vrot.slane %v2765, 1
    %v2929 = vsel %vm2799, %v2766, %v2928
    %v2930 = vrot.slane %v2767, 7
    %v2931 = vsel %vm2802, %v2930, %v2929
    %v2932 = vrot.slane %v2768, 6
    %v2933 = vsel %vm2805, %v2932, %v2931
    %v2934 = vrot.slane %v2769, 5
    %v2935 = vsel %vm2808, %v2934, %v2933
    %v2936 = vrot.slane %v2770, 4
    %v2937 = vsel %vm2811, %v2936, %v2935
    %v2938 = vrot.slane %v2771, 3
    %v2939 = vsel %vm2814, %v2938, %v2937
    %v2940 = vrot.slane %v2772, 2
    %v2941 = vsel %vm2817, %v2940, %v2939
    %v2942 = vsel %vm428, %v2941, 0
    %2944 = vmatpush.msra.mxu0 0.0
    %2945 = vmatpush.msra.mxu0 0.0
    %2946 = vmatpush.msra.mxu0 0.0
    %2947 = vmatpush.msra.mxu0 0.0
    %2948 = vmatpush.msra.mxu0 0.0
    %2949 = vmatpush.msra.mxu0 0.0
    %2950 = vmatpush.msra.mxu0 0.0
    %2951 = vmatpush.msra.mxu0 0.0
    %2952 = vmatpush.msra.mxu0 0.0
    %2953 = vmatpush.msra.mxu0 0.0
    %2954 = vmatpush.msra.mxu0 0.0
    %2955 = vmatpush.msra.mxu0 0.0
    %2956 = vmatpush.msra.mxu0 %v2784
    %2957 = vmatpush.msra.mxu0 %v2783
    %2958 = vmatpush.msra.mxu0 %v2782
    %2959 = vmatpush.msra.mxu0 %v2781
    %2960 = vmatmul.f32.gmra.mxu0 %v2942
    %v2961 = vpop.f32.mrf.mxu0
    %v2962 = vadd.f32 %v2926, %v2961
    %2963 = vdwg.mxu0
    %v2964 = vadd.f32 %v2962, %v2887
    %s2965 = scalar_lea.vmem %s7, 16
    %v2966 = vld [vmem:[%s2965] sm:$0xff]
    %v2967 = vld [vmem:[%s2965 + $0x8] sm:$0xff]
    %v2969 = vsel %vm47, %v2964, 0
    %2971 = vmatpush.msra.mxu0 0.0
    %2972 = vmatpush.msra.mxu0 0.0
    %2973 = vmatpush.msra.mxu0 0.0
    %2974 = vmatpush.msra.mxu0 0.0
    %2975 = vmatpush.msra.mxu0 0.0
    %2976 = vmatpush.msra.mxu0 0.0
    %2977 = vmatpush.msra.mxu0 0.0
    %2978 = vmatpush.msra.mxu0 0.0
    %2979 = vmatpush.msra.mxu0 0.0
    %2980 = vmatpush.msra.mxu0 0.0
    %2981 = vmatpush.msra.mxu0 0.0
    %2982 = vmatpush.msra.mxu0 0.0
    %2983 = vmatpush.msra.mxu0 0.0
    %2984 = vmatpush.msra.mxu0 0.0
    %2985 = vmatpush.msra.mxu0 %v2967
    %2986 = vmatpush.msra.mxu0 %v2966
    %2987 = vmatmul.f32.gmra.mxu0 %v2969
    %v2988 = vpop.f32.mrf.mxu0
    %v2989 = vadd.f32 0.0, %v2988
    %2990 = vdwg.mxu0
    %v2992 = vsel %vm47, %v2889, 0
    %2994 = vmatpush.msra.mxu0 0.0
    %2995 = vmatpush.msra.mxu0 0.0
    %2996 = vmatpush.msra.mxu0 0.0
    %2997 = vmatpush.msra.mxu0 0.0
    %2998 = vmatpush.msra.mxu0 0.0
    %2999 = vmatpush.msra.mxu0 0.0
    %3000 = vmatpush.msra.mxu0 0.0
    %3001 = vmatpush.msra.mxu0 0.0
    %3002 = vmatpush.msra.mxu0 0.0
    %3003 = vmatpush.msra.mxu0 0.0
    %3004 = vmatpush.msra.mxu0 0.0
    %3005 = vmatpush.msra.mxu0 0.0
    %3006 = vmatpush.msra.mxu0 0.0
    %3007 = vmatpush.msra.mxu0 0.0
    %3008 = vmatpush.msra.mxu0 %v2891
    %3009 = vmatpush.msra.mxu0 %v2890
    %3010 = vmatmul.f32.gmra.mxu0 %v2992
    %v3011 = vpop.f32.mrf.mxu0
    %v3012 = vadd.f32 %v2989, %v3011
    %3013 = vdwg.mxu0
    %v3014 = vrot.slane %v2773, 2
    %v3015 = vrot.slane %v2774, 1
    %v3016 = vsel %vm2799, %v3015, %v3014
    %v3017 = vsel %vm2802, %v2775, %v3016
    %v3018 = vrot.slane %v2776, 7
    %v3019 = vsel %vm2805, %v3018, %v3017
    %v3020 = vrot.slane %v2777, 6
    %v3021 = vsel %vm2808, %v3020, %v3019
    %v3022 = vrot.slane %v2778, 5
    %v3023 = vsel %vm2811, %v3022, %v3021
    %v3024 = vrot.slane %v2779, 4
    %v3025 = vsel %vm2814, %v3024, %v3023
    %v3026 = vrot.slane %v2780, 3
    %v3027 = vsel %vm2817, %v3026, %v3025
    %v3028 = vsel %vm428, %v3027, 0
    %3030 = vmatpush.msra.mxu0 0.0
    %3031 = vmatpush.msra.mxu0 0.0
    %3032 = vmatpush.msra.mxu0 0.0
    %3033 = vmatpush.msra.mxu0 0.0
    %3034 = vmatpush.msra.mxu0 0.0
    %3035 = vmatpush.msra.mxu0 0.0
    %3036 = vmatpush.msra.mxu0 0.0
    %3037 = vmatpush.msra.mxu0 0.0
    %3038 = vmatpush.msra.mxu0 0.0
    %3039 = vmatpush.msra.mxu0 0.0
    %3040 = vmatpush.msra.mxu0 0.0
    %3041 = vmatpush.msra.mxu0 0.0
    %3042 = vmatpush.msra.mxu0 %v2789
    %3043 = vmatpush.msra.mxu0 %v2788
    %3044 = vmatpush.msra.mxu0 %v2787
    %3045 = vmatpush.msra.mxu0 %v2786
    %3046 = vmatmul.f32.gmra.mxu0 %v3028
    %v3047 = vpop.f32.mrf.mxu0
    %v3048 = vadd.f32 0.0, %v3047
    %3049 = vdwg.mxu0
    %v3050 = vrot.slane %v2765, 2
    %v3051 = vrot.slane %v2766, 1
    %v3052 = vsel %vm2799, %v3051, %v3050
    %v3053 = vsel %vm2802, %v2767, %v3052
    %v3054 = vrot.slane %v2768, 7
    %v3055 = vsel %vm2805, %v3054, %v3053
    %v3056 = vrot.slane %v2769, 6
    %v3057 = vsel %vm2808, %v3056, %v3055
    %v3058 = vrot.slane %v2770, 5
    %v3059 = vsel %vm2811, %v3058, %v3057
    %v3060 = vrot.slane %v2771, 4
    %v3061 = vsel %vm2814, %v3060, %v3059
    %v3062 = vrot.slane %v2772, 3
    %v3063 = vsel %vm2817, %v3062, %v3061
    %v3064 = vsel %vm428, %v3063, 0
    %3066 = vmatpush.msra.mxu0 0.0
    %3067 = vmatpush.msra.mxu0 0.0
    %3068 = vmatpush.msra.mxu0 0.0
    %3069 = vmatpush.msra.mxu0 0.0
    %3070 = vmatpush.msra.mxu0 0.0
    %3071 = vmatpush.msra.mxu0 0.0
    %3072 = vmatpush.msra.mxu0 0.0
    %3073 = vmatpush.msra.mxu0 0.0
    %3074 = vmatpush.msra.mxu0 0.0
    %3075 = vmatpush.msra.mxu0 0.0
    %3076 = vmatpush.msra.mxu0 0.0
    %3077 = vmatpush.msra.mxu0 0.0
    %3078 = vmatpush.msra.mxu0 %v2784
    %3079 = vmatpush.msra.mxu0 %v2783
    %3080 = vmatpush.msra.mxu0 %v2782
    %3081 = vmatpush.msra.mxu0 %v2781
    %3082 = vmatmul.f32.gmra.mxu0 %v3064
    %v3083 = vpop.f32.mrf.mxu0
    %v3084 = vadd.f32 %v3048, %v3083
    %3085 = vdwg.mxu0
    %v3086 = vadd.f32 %v3084, %v2887
    %s3087 = scalar_lea.vmem %s7, 32
    %v3088 = vld [vmem:[%s3087] sm:$0xff]
    %v3089 = vld [vmem:[%s3087 + $0x8] sm:$0xff]
    %v3091 = vsel %vm47, %v3086, 0
    %3093 = vmatpush.msra.mxu0 0.0
    %3094 = vmatpush.msra.mxu0 0.0
    %3095 = vmatpush.msra.mxu0 0.0
    %3096 = vmatpush.msra.mxu0 0.0
    %3097 = vmatpush.msra.mxu0 0.0
    %3098 = vmatpush.msra.mxu0 0.0
    %3099 = vmatpush.msra.mxu0 0.0
    %3100 = vmatpush.msra.mxu0 0.0
    %3101 = vmatpush.msra.mxu0 0.0
    %3102 = vmatpush.msra.mxu0 0.0
    %3103 = vmatpush.msra.mxu0 0.0
    %3104 = vmatpush.msra.mxu0 0.0
    %3105 = vmatpush.msra.mxu0 0.0
    %3106 = vmatpush.msra.mxu0 0.0
    %3107 = vmatpush.msra.mxu0 %v3089
    %3108 = vmatpush.msra.mxu0 %v3088
    %3109 = vmatmul.f32.gmra.mxu0 %v3091
    %v3110 = vpop.f32.mrf.mxu0
    %v3111 = vadd.f32 0.0, %v3110
    %3112 = vdwg.mxu0
    %v3113 = vadd.f32 %v3012, %v3111
    %v3114 = vrot.slane %v2773, 3
    %v3115 = vrot.slane %v2774, 2
    %v3116 = vsel %vm2799, %v3115, %v3114
    %v3117 = vrot.slane %v2775, 1
    %v3118 = vsel %vm2802, %v3117, %v3116
    %v3119 = vsel %vm2805, %v2776, %v3118
    %v3120 = vrot.slane %v2777, 7
    %v3121 = vsel %vm2808, %v3120, %v3119
    %v3122 = vrot.slane %v2778, 6
    %v3123 = vsel %vm2811, %v3122, %v3121
    %v3124 = vrot.slane %v2779, 5
    %v3125 = vsel %vm2814, %v3124, %v3123
    %v3126 = vrot.slane %v2780, 4
    %v3127 = vsel %vm2817, %v3126, %v3125
    %v3128 = vsel %vm428, %v3127, 0
    %3130 = vmatpush.msra.mxu0 0.0
    %3131 = vmatpush.msra.mxu0 0.0
    %3132 = vmatpush.msra.mxu0 0.0
    %3133 = vmatpush.msra.mxu0 0.0
    %3134 = vmatpush.msra.mxu0 0.0
    %3135 = vmatpush.msra.mxu0 0.0
    %3136 = vmatpush.msra.mxu0 0.0
    %3137 = vmatpush.msra.mxu0 0.0
    %3138 = vmatpush.msra.mxu0 0.0
    %3139 = vmatpush.msra.mxu0 0.0
    %3140 = vmatpush.msra.mxu0 0.0
    %3141 = vmatpush.msra.mxu0 0.0
    %3142 = vmatpush.msra.mxu0 %v2789
    %3143 = vmatpush.msra.mxu0 %v2788
    %3144 = vmatpush.msra.mxu0 %v2787
    %3145 = vmatpush.msra.mxu0 %v2786
    %3146 = vmatmul.f32.gmra.mxu0 %v3128
    %v3147 = vpop.f32.mrf.mxu0
    %v3148 = vadd.f32 0.0, %v3147
    %3149 = vdwg.mxu0
    %v3150 = vrot.slane %v2765, 3
    %v3151 = vrot.slane %v2766, 2
    %v3152 = vsel %vm2799, %v3151, %v3150
    %v3153 = vrot.slane %v2767, 1
    %v3154 = vsel %vm2802, %v3153, %v3152
    %v3155 = vsel %vm2805, %v2768, %v3154
    %v3156 = vrot.slane %v2769, 7
    %v3157 = vsel %vm2808, %v3156, %v3155
    %v3158 = vrot.slane %v2770, 6
    %v3159 = vsel %vm2811, %v3158, %v3157
    %v3160 = vrot.slane %v2771, 5
    %v3161 = vsel %vm2814, %v3160, %v3159
    %v3162 = vrot.slane %v2772, 4
    %v3163 = vsel %vm2817, %v3162, %v3161
    %v3164 = vsel %vm428, %v3163, 0
    %3166 = vmatpush.msra.mxu0 0.0
    %3167 = vmatpush.msra.mxu0 0.0
    %3168 = vmatpush.msra.mxu0 0.0
    %3169 = vmatpush.msra.mxu0 0.0
    %3170 = vmatpush.msra.mxu0 0.0
    %3171 = vmatpush.msra.mxu0 0.0
    %3172 = vmatpush.msra.mxu0 0.0
    %3173 = vmatpush.msra.mxu0 0.0
    %3174 = vmatpush.msra.mxu0 0.0
    %3175 = vmatpush.msra.mxu0 0.0
    %3176 = vmatpush.msra.mxu0 0.0
    %3177 = vmatpush.msra.mxu0 0.0
    %3178 = vmatpush.msra.mxu0 %v2784
    %3179 = vmatpush.msra.mxu0 %v2783
    %3180 = vmatpush.msra.mxu0 %v2782
    %3181 = vmatpush.msra.mxu0 %v2781
    %3182 = vmatmul.f32.gmra.mxu0 %v3164
    %v3183 = vpop.f32.mrf.mxu0
    %v3184 = vadd.f32 %v3148, %v3183
    %3185 = vdwg.mxu0
    %v3186 = vadd.f32 %v3184, %v2887
    %s3187 = scalar_lea.vmem %s7, 48
    %v3188 = vld [vmem:[%s3187] sm:$0xff]
    %v3189 = vld [vmem:[%s3187 + $0x8] sm:$0xff]
    %v3191 = vsel %vm47, %v3186, 0
    %3193 = vmatpush.msra.mxu0 0.0
    %3194 = vmatpush.msra.mxu0 0.0
    %3195 = vmatpush.msra.mxu0 0.0
    %3196 = vmatpush.msra.mxu0 0.0
    %3197 = vmatpush.msra.mxu0 0.0
    %3198 = vmatpush.msra.mxu0 0.0
    %3199 = vmatpush.msra.mxu0 0.0
    %3200 = vmatpush.msra.mxu0 0.0
    %3201 = vmatpush.msra.mxu0 0.0
    %3202 = vmatpush.msra.mxu0 0.0
    %3203 = vmatpush.msra.mxu0 0.0
    %3204 = vmatpush.msra.mxu0 0.0
    %3205 = vmatpush.msra.mxu0 0.0
    %3206 = vmatpush.msra.mxu0 0.0
    %3207 = vmatpush.msra.mxu0 %v3189
    %3208 = vmatpush.msra.mxu0 %v3188
    %3209 = vmatmul.f32.gmra.mxu0 %v3191
    %v3210 = vpop.f32.mrf.mxu0
    %v3211 = vadd.f32 0.0, %v3210
    %3212 = vdwg.mxu0
    %v3213 = vadd.f32 %v3113, %v3211
    %v3214 = vld [vmem:[%s8] sm:$0x1]
    %v3216 = vperm.slane %v3214, 0
    %v3218 = vadd.f32 %v3213, %v3216
    %3219 = vst [vmem:[#allocation3] sm:$0xff] %v3218
    // Predicated region
    $region38: #{two_level_gru_forward.3} parent=1 // pred_check
      _
    $region39: #{two_level_gru_forward.3} parent=1 // pred_check_branch
      %3221 = sbr.rel (0) target = $region41
    $region40: #{two_level_gru_forward.3} parent=1 // pred_region
      %3223 = vsyncadd [#allocation4], 0
      %s3225 = sshll.u32 [#allocation3], 4
      %s3226 = int_to_ptr.vmem [resolvable:$true] %s3225
      %s3227 = sshll.u32 %s9, 4
      %s3228 = int_to_ptr.hbm [resolvable:$true] %s3227
      %3230 = dma.vmem_to_hbm [thread:$0]  %s3226, 128, %s3228, [#allocation4]
    $region41: #{two_level_gru_forward.3} parent=1 // pred_fallthru
      _
    // Predicated region
    $region42: #{two_level_gru_forward.3} parent=1 // pred_check
      _
    $region43: #{two_level_gru_forward.3} parent=1 // pred_check_branch
      %3232 = sbr.rel (0) target = $region45
    $region44: #{two_level_gru_forward.3} parent=1 // pred_region
      %3234 = dma.done [#allocation4], 128
    $region45: #{two_level_gru_forward.3} parent=1 // pred_fallthru
      _
    %3235 = vsyncpa [#allocation4], 1

</llo_original>
